<compile_context>
chip_gen: v6e
topology: v6e:2x2x1
jax: 0.10.0
libtpu: 0.0.40
codegen_flags: <defaults>
</compile_context>

<pallas_src>
import jax
import jax.numpy as jnp
from jax.experimental import pallas as pl
from jax.experimental.pallas import tpu as pltpu

HIDDEN_DIM = 1024   # self.hidden_dim in DepthClsModel
MLP_DIM    = 2048   # cls_d[0] output dim
MID_DIM    = 64     # cls_d[2] output dim (folded away at param-prep time)
NUM_CLASS  = 25     # config['setting']['num_class'] (NVGesture)
OUT_PAD    = 128    # lane-dense padded output width


def _round_up(a, m):
    return -(-a // m) * m


def _pad2d(a, rows, cols):
    r, c = a.shape
    if (r, c) == (rows, cols):
        return a
    return jnp.zeros((rows, cols), a.dtype).at[:r, :c].set(a)


def depth_cls_kernel(x_ref, wp_ref, bp_ref, w1_ref, b1_ref, w23_ref, b23_ref,
                     out_ref, feat_acc):
    """One grid step of the K (=F) reduction of the encoder projection.

    x_ref   : (Bp, blk)     bf16  pooled depth features, K tile
    wp_ref  : (blk, 1024)   bf16  encoder stand-in projection, K tile (streamed)
    bp_ref  : (1, 1024)     f32
    w1_ref  : (1024, 2048)  bf16  cls_d[0] (VMEM resident)
    b1_ref  : (1, 2048)     f32
    w23_ref : (2048, 128)   bf16  folded cls_d[2] @ cls_d[3], padded to 128 lanes
    b23_ref : (1, 128)      f32
    out_ref : (Bp, 128)     f32   lane-dense output slab
    feat_acc: (Bp, 1024)    f32   VMEM scratch accumulator
    """
    k = pl.program_id(0)

    @pl.when(k == 0)
    def _():
        feat_acc[...] = jnp.zeros_like(feat_acc)

    # encoder stand-in projection: accumulate over K tiles (f32 accumulation)
    feat_acc[...] += jnp.dot(x_ref[...], wp_ref[...],
                             preferred_element_type=jnp.float32)

    @pl.when(k == pl.num_programs(0) - 1)
    def _():
        feat = feat_acc[...] + bp_ref[...]                        # (Bp, 1024)
        # cls_d: Linear -> ReLU -> (folded Linear.Linear)
        h1 = jnp.dot(feat.astype(jnp.bfloat16), w1_ref[...],
                     preferred_element_type=jnp.float32) + b1_ref[...]
        h1 = jnp.maximum(h1, 0.0)                                 # ReLU
        out = jnp.dot(h1.astype(jnp.bfloat16), w23_ref[...],
                      preferred_element_type=jnp.float32) + b23_ref[...]
        out_ref[...] = out.astype(out_ref.dtype)


def depth_cls_forward(x_ncthw, kparams, *, block_k=512):
    """x_ncthw: (B, C, T, H, W) float32 — same layout as the PyTorch module."""
    B, C, T, H, W = x_ncthw.shape
    F = C * H * W
    wp, bp, w1, b1, w23, b23 = kparams

    # Temporal mean-pool in the wrapper: mean over T commutes with the
    # channel/spatial flatten, so this is exact and removes the NCTHW->BTF
    # transpose plus a T x larger input DMA.
    pooled = jnp.mean(x_ncthw, axis=2).reshape(B, F)              # (B, F)

    # Layout padding: batch -> sublane multiple of 8, F -> multiple of the
    # K block (zero-padded rows/cols contribute nothing -> exact).
    Bp  = _round_up(max(B, 8), 8)
    blk = min(block_k, _round_up(F, 128))
    Fp  = _round_up(F, blk)
    nk  = Fp // blk

    x_p  = _pad2d(pooled.astype(jnp.bfloat16), Bp, Fp)
    wp_p = _pad2d(wp, Fp, HIDDEN_DIM)

    out_p = pl.pallas_call(
        depth_cls_kernel,
        out_shape=jax.ShapeDtypeStruct((Bp, OUT_PAD), jnp.float32),
        grid_spec=pltpu.PrefetchScalarGridSpec(
            num_scalar_prefetch=0,
            grid=(nk,),
            in_specs=[
                pl.BlockSpec((Bp, blk),             lambda k: (0, k)),  # pooled x (K tile)
                pl.BlockSpec((blk, HIDDEN_DIM),     lambda k: (k, 0)),  # wp (streamed)
                pl.BlockSpec((1, HIDDEN_DIM),       lambda k: (0, 0)),  # bp
                pl.BlockSpec((HIDDEN_DIM, MLP_DIM), lambda k: (0, 0)),  # w1 (resident)
                pl.BlockSpec((1, MLP_DIM),          lambda k: (0, 0)),  # b1
                pl.BlockSpec((MLP_DIM, OUT_PAD),    lambda k: (0, 0)),  # w23 (resident)
                pl.BlockSpec((1, OUT_PAD),          lambda k: (0, 0)),  # b23
            ],
            out_specs=pl.BlockSpec((Bp, OUT_PAD),   lambda k: (0, 0)),
            scratch_shapes=[pltpu.VMEM((Bp, HIDDEN_DIM), jnp.float32)],
        ),
        compiler_params=pltpu.CompilerParams(
            dimension_semantics=("arbitrary",),     # K reduction axis, placed last
            vmem_limit_bytes=32 << 20,              # leaves headroom on v7x (64 MiB phys.)
        ),
    )(x_p, wp_p, bp, w1, b1, w23, b23)

    return out_p[:B, :NUM_CLASS]


def init_params(key, feat_in):
    """Raw (PyTorch-like) f32 parameters; weights stored as (in, out)."""
    ks = jax.random.split(key, 4)

    def lin(kw, fan_in, fan_out):
        scale = 1.0 / jnp.sqrt(fan_in)
        w = jax.random.uniform(kw, (fan_in, fan_out), jnp.float32, -scale, scale)
        b = jnp.zeros((1, fan_out), jnp.float32)
        return w, b

    wp, bp = lin(ks[0], feat_in, HIDDEN_DIM)       # encoder stand-in projection
    w1, b1 = lin(ks[1], HIDDEN_DIM, MLP_DIM)       # cls_d[0]
    w2, b2 = lin(ks[2], MLP_DIM, MID_DIM)          # cls_d[2]
    w3, b3 = lin(ks[3], MID_DIM, NUM_CLASS)        # cls_d[3]
    return (wp, bp, w1, b1, w2, b2, w3, b3)


def prepare_params(raw):
    """Param-prep: fold cls_d[2]/cls_d[3] (exact), pad output to 128 lanes,
    cast weights to bf16 (biases stay f32)."""
    wp, bp, w1, b1, w2, b2, w3, b3 = raw
    w23 = w2 @ w3                                  # (2048, NUM_CLASS), exact fold
    b23 = b2 @ w3 + b3                             # (1, NUM_CLASS)
    w23p = _pad2d(w23, MLP_DIM, OUT_PAD)
    b23p = _pad2d(b23, 1, OUT_PAD)
    return (wp.astype(jnp.bfloat16), bp,
            w1.astype(jnp.bfloat16), b1,
            w23p.astype(jnp.bfloat16), b23p)


def reference_forward(x_ncthw, kparams):
    """Pure-JAX mirror of the kernel math (same bf16/f32 precision choices)."""
    B, C, T, H, W = x_ncthw.shape
    F = C * H * W
    pooled = jnp.mean(x_ncthw, axis=2).reshape(B, F)
    wp, bp, w1, b1, w23, b23 = kparams
    feat = jnp.dot(pooled.astype(jnp.bfloat16), wp,
                   preferred_element_type=jnp.float32) + bp
    h1 = jnp.maximum(jnp.dot(feat.astype(jnp.bfloat16), w1,
                             preferred_element_type=jnp.float32) + b1, 0.0)
    out = jnp.dot(h1.astype(jnp.bfloat16), w23,
                  preferred_element_type=jnp.float32) + b23
    return out[:, :NUM_CLASS]


if __name__ == "__main__":
    key = jax.random.PRNGKey(0)
    kx, kp = jax.random.split(key)

    # small depth clip: batch=2, channels=1 (depth), T=8 frames, 16x16 spatial
    B, C, T, H, W = 2, 1, 8, 16, 16
    x = jax.random.normal(kx, (B, C, T, H, W), jnp.float32)

    raw_params = init_params(kp, C * H * W)
    kparams = prepare_params(raw_params)

    out = depth_cls_forward(x, kparams)
    out = jax.block_until_ready(out)

    ref = reference_forward(x, kparams)
    assert out.shape == (B, NUM_CLASS)
    assert jnp.allclose(out, ref, atol=1e-3, rtol=1e-3)

    print("KERNEL_OK")
</pallas_src>

<mosaic_0001>
module attributes {stable_mosaic.version = 11 : i64} {
  func.func @depth_cls_kernel(%arg0: i32, %arg1: memref<8x256xbf16, #tpu.memory_space<vmem>>, %arg2: memref<256x1024xbf16, #tpu.memory_space<vmem>>, %arg3: memref<1x1024xf32, #tpu.memory_space<vmem>>, %arg4: memref<1024x2048xbf16, #tpu.memory_space<vmem>>, %arg5: memref<1x2048xf32, #tpu.memory_space<vmem>>, %arg6: memref<2048x128xbf16, #tpu.memory_space<vmem>>, %arg7: memref<1x128xf32, #tpu.memory_space<vmem>>, %arg8: memref<8x128xf32, #tpu.memory_space<vmem>>, %arg9: memref<8x1024xf32, #tpu.memory_space<vmem>>) attributes {dimension_semantics = [#tpu.dimension_semantics<arbitrary>], iteration_bounds = array<i64: 1>, scalar_prefetch = 0 : i64, scratch_operands = 1 : i64, tpu.core_type = #tpu.core_type<tc>, window_params = [{transform_indices = @transform_0, window_bounds = array<i64: 8, 256>}, {transform_indices = @transform_1, window_bounds = array<i64: 256, 1024>}, {pipeline_mode = #tpu.pipeline_mode<synchronous>, transform_indices = @transform_2, window_bounds = array<i64: 1, 1024>}, {pipeline_mode = #tpu.pipeline_mode<synchronous>, transform_indices = @transform_3, window_bounds = array<i64: 1024, 2048>}, {pipeline_mode = #tpu.pipeline_mode<synchronous>, transform_indices = @transform_4, window_bounds = array<i64: 1, 2048>}, {pipeline_mode = #tpu.pipeline_mode<synchronous>, transform_indices = @transform_5, window_bounds = array<i64: 2048, 128>}, {pipeline_mode = #tpu.pipeline_mode<synchronous>, transform_indices = @transform_6, window_bounds = array<i64: 1, 128>}, {pipeline_mode = #tpu.pipeline_mode<synchronous>, transform_indices = @transform_7, window_bounds = array<i64: 8, 128>}]} {
    %c0_i32 = arith.constant 0 : i32
    %0 = arith.cmpi eq, %arg0, %c0_i32 : i32
    %1 = arith.extui %0 : i1 to i32
    %c0_i32_0 = arith.constant 0 : i32
    %2 = arith.cmpi ne, %1, %c0_i32_0 : i32
    scf.if %2 {
      %cst_10 = arith.constant 0.000000e+00 : f32
      %12 = vector.broadcast %cst_10 : f32 to vector<8x1024xf32>
      %c0_11 = arith.constant 0 : index
      %c0_12 = arith.constant 0 : index
      %13 = vector.load %arg9[%c0_11, %c0_12] : memref<8x1024xf32, #tpu.memory_space<vmem>>, vector<8x1024xf32>
      tpu.vector_store %arg9[%c0_11, %c0_12], %12 {strides = array<i32>} : memref<8x1024xf32, #tpu.memory_space<vmem>>, vector<8x1024xf32>,
    } else {
    }
    %c0 = arith.constant 0 : index
    %c0_1 = arith.constant 0 : index
    %3 = vector.load %arg9[%c0, %c0_1] : memref<8x1024xf32, #tpu.memory_space<vmem>>, vector<8x1024xf32>
    %c0_2 = arith.constant 0 : index
    %c0_3 = arith.constant 0 : index
    %4 = vector.load %arg1[%c0_2, %c0_3] : memref<8x256xbf16, #tpu.memory_space<vmem>>, vector<8x256xbf16>
    %c0_4 = arith.constant 0 : index
    %c0_5 = arith.constant 0 : index
    %5 = vector.load %arg2[%c0_4, %c0_5] : memref<256x1024xbf16, #tpu.memory_space<vmem>>, vector<256x1024xbf16>
    %cst = arith.constant dense<0.000000e+00> : vector<8x1024xf32>
    %6 = tpu.matmul %4, %5, %cst {dimension_numbers = #tpu.dot_dimension_numbers<[1], [0], [0], [1], [0, 0, 1, 1], [], []>} : vector<8x256xbf16>, vector<256x1024xbf16>, vector<8x1024xf32> -> vector<8x1024xf32>
    %7 = arith.addf %3, %6 : vector<8x1024xf32>
    %c0_6 = arith.constant 0 : index
    %c0_7 = arith.constant 0 : index
    %8 = vector.load %arg9[%c0_6, %c0_7] : memref<8x1024xf32, #tpu.memory_space<vmem>>, vector<8x1024xf32>
    tpu.vector_store %arg9[%c0_6, %c0_7], %7 {strides = array<i32>} : memref<8x1024xf32, #tpu.memory_space<vmem>>, vector<8x1024xf32>,
    %c0_i32_8 = arith.constant 0 : i32
    %9 = arith.cmpi eq, %arg0, %c0_i32_8 : i32
    %10 = arith.extui %9 : i1 to i32
    %c0_i32_9 = arith.constant 0 : i32
    %11 = arith.cmpi ne, %10, %c0_i32_9 : i32
    scf.if %11 {
      %c0_10 = arith.constant 0 : index
      %c0_11 = arith.constant 0 : index
      %12 = vector.load %arg9[%c0_10, %c0_11] : memref<8x1024xf32, #tpu.memory_space<vmem>>, vector<8x1024xf32>
      %c0_12 = arith.constant 0 : index
      %c0_13 = arith.constant 0 : index
      %13 = vector.load %arg3[%c0_12, %c0_13] : memref<1x1024xf32, #tpu.memory_space<vmem>>, vector<1x1024xf32>
      %14 = vector.broadcast %13 : vector<1x1024xf32> to vector<8x1024xf32>
      %15 = arith.addf %12, %14 : vector<8x1024xf32>
      %16 = arith.truncf %15 : vector<8x1024xf32> to vector<8x1024xbf16>
      %c0_14 = arith.constant 0 : index
      %c0_15 = arith.constant 0 : index
      %17 = vector.load %arg4[%c0_14, %c0_15] : memref<1024x2048xbf16, #tpu.memory_space<vmem>>, vector<1024x2048xbf16>
      %cst_16 = arith.constant dense<0.000000e+00> : vector<8x2048xf32>
      %18 = tpu.matmul %16, %17, %cst_16 {dimension_numbers = #tpu.dot_dimension_numbers<[1], [0], [0], [1], [0, 0, 1, 1], [], []>} : vector<8x1024xbf16>, vector<1024x2048xbf16>, vector<8x2048xf32> -> vector<8x2048xf32>
      %c0_17 = arith.constant 0 : index
      %c0_18 = arith.constant 0 : index
      %19 = vector.load %arg5[%c0_17, %c0_18] : memref<1x2048xf32, #tpu.memory_space<vmem>>, vector<1x2048xf32>
      %20 = vector.broadcast %19 : vector<1x2048xf32> to vector<8x2048xf32>
      %21 = arith.addf %18, %20 : vector<8x2048xf32>
      %cst_19 = arith.constant 0.000000e+00 : f32
      %22 = vector.broadcast %cst_19 : f32 to vector<8x2048xf32>
      %23 = arith.maximumf %21, %22 : vector<8x2048xf32>
      %24 = arith.truncf %23 : vector<8x2048xf32> to vector<8x2048xbf16>
      %c0_20 = arith.constant 0 : index
      %c0_21 = arith.constant 0 : index
      %25 = vector.load %arg6[%c0_20, %c0_21] : memref<2048x128xbf16, #tpu.memory_space<vmem>>, vector<2048x128xbf16>
      %cst_22 = arith.constant dense<0.000000e+00> : vector<8x128xf32>
      %26 = tpu.matmul %24, %25, %cst_22 {dimension_numbers = #tpu.dot_dimension_numbers<[1], [0], [0], [1], [0, 0, 1, 1], [], []>} : vector<8x2048xbf16>, vector<2048x128xbf16>, vector<8x128xf32> -> vector<8x128xf32>
      %c0_23 = arith.constant 0 : index
      %c0_24 = arith.constant 0 : index
      %27 = vector.load %arg7[%c0_23, %c0_24] : memref<1x128xf32, #tpu.memory_space<vmem>>, vector<1x128xf32>
      %28 = vector.broadcast %27 : vector<1x128xf32> to vector<8x128xf32>
      %29 = arith.addf %26, %28 : vector<8x128xf32>
      %c0_25 = arith.constant 0 : index
      %c0_26 = arith.constant 0 : index
      %30 = vector.load %arg8[%c0_25, %c0_26] : memref<8x128xf32, #tpu.memory_space<vmem>>, vector<8x128xf32>
      tpu.vector_store %arg8[%c0_25, %c0_26], %29 {strides = array<i32>} : memref<8x128xf32, #tpu.memory_space<vmem>>, vector<8x128xf32>,
    } else {
    }
    return
  }
  func.func @transform_0(%arg0: i32) -> (i32, i32) {
    %c0_i32 = arith.constant 0 : i32
    %c0_i32_0 = arith.constant 0 : i32
    return %c0_i32, %arg0 : i32, i32
  }
  func.func @transform_1(%arg0: i32) -> (i32, i32) {
    %c0_i32 = arith.constant 0 : i32
    %c0_i32_0 = arith.constant 0 : i32
    return %arg0, %c0_i32 : i32, i32
  }
  func.func @transform_2(%arg0: i32) -> (i32, i32) {
    %c0_i32 = arith.constant 0 : i32
    %c0_i32_0 = arith.constant 0 : i32
    %c0_i32_1 = arith.constant 0 : i32
    return %c0_i32, %c0_i32_0 : i32, i32
  }
  func.func @transform_3(%arg0: i32) -> (i32, i32) {
    %c0_i32 = arith.constant 0 : i32
    %c0_i32_0 = arith.constant 0 : i32
    %c0_i32_1 = arith.constant 0 : i32
    return %c0_i32, %c0_i32_0 : i32, i32
  }
  func.func @transform_4(%arg0: i32) -> (i32, i32) {
    %c0_i32 = arith.constant 0 : i32
    %c0_i32_0 = arith.constant 0 : i32
    %c0_i32_1 = arith.constant 0 : i32
    return %c0_i32, %c0_i32_0 : i32, i32
  }
  func.func @transform_5(%arg0: i32) -> (i32, i32) {
    %c0_i32 = arith.constant 0 : i32
    %c0_i32_0 = arith.constant 0 : i32
    %c0_i32_1 = arith.constant 0 : i32
    return %c0_i32, %c0_i32_0 : i32, i32
  }
  func.func @transform_6(%arg0: i32) -> (i32, i32) {
    %c0_i32 = arith.constant 0 : i32
    %c0_i32_0 = arith.constant 0 : i32
    %c0_i32_1 = arith.constant 0 : i32
    return %c0_i32, %c0_i32_0 : i32, i32
  }
  func.func @transform_7(%arg0: i32) -> (i32, i32) {
    %c0_i32 = arith.constant 0 : i32
    %c0_i32_0 = arith.constant 0 : i32
    %c0_i32_1 = arith.constant 0 : i32
    return %c0_i32, %c0_i32_0 : i32, i32
  }
}

</mosaic_0001>

<llo_original>
// kernel: tpu_custom_call.1
$region0: #{tpu_custom_call.1}
  #allocation0 [shape = 'u32[]', space=smem, size = 0x4, offset = 0x4, fixed_abs, tag = 'smem constant byte address 0x4 - core index']
  #allocation1 [shape = 'u32[144,128]{1,0:T(1,128)}', space=vmem, size = 0x12000, scoped, tag = 'internal scratch']
  #allocation2 [shape = 'f32[8,1024]{1,0:T(8,128)}', space=vmem, size = 0x8000, scoped, tag = 'scratch operand']
  %s0 = inlined_call_operand.hbm [shape: bf16[8,256], index: 0, kind: input, shape index: {}]
  %s1 = inlined_call_operand.hbm [shape: bf16[256,1024], index: 1, kind: input, shape index: {}]
  %s2 = inlined_call_operand.hbm [shape: f32[1,1024], index: 2, kind: input, shape index: {}]
  %s3 = inlined_call_operand.hbm [shape: bf16[1024,2048], index: 3, kind: input, shape index: {}]
  %s4 = inlined_call_operand.hbm [shape: f32[1,2048], index: 4, kind: input, shape index: {}]
  %s5 = inlined_call_operand.hbm [shape: bf16[2048,128], index: 5, kind: input, shape index: {}]
  %s6 = inlined_call_operand.hbm [shape: f32[1,128], index: 6, kind: input, shape index: {}]
  %s7 = inlined_call_operand.hbm [shape: f32[8,128], index: 7, kind: output, shape index: {}]
  %s8 = sld [smem:[#allocation0]]
  $region74: #{tpu_custom_call.1} parent=0
    _
  %s10 = ssub.s32 1, %s8
  %s11 = scalar_select 0, %s10, %s8
  $region1: #{tpu_custom_call.1} parent=0
    #allocation3 [shape = 'u8[4096]{0}', space=vmem, size = 0x1000, scoped, tag = 'input window, operand 0, single buffered']
    #allocation4 [shape = 's32[1]{0}', space=sflag, size = 0x4, scoped, tag = 'scoped memory for tpu_custom_call.1']
    #allocation5 [shape = 's32[1]{0}', space=sflag, size = 0x4, scoped, tag = 'scoped memory for tpu_custom_call.1']
    #allocation6 [shape = 'u8[524288]{0}', space=vmem, size = 0x80000, scoped, tag = 'input window, operand 1, single buffered']
    #allocation7 [shape = 's32[1]{0}', space=sflag, size = 0x4, scoped, tag = 'scoped memory for tpu_custom_call.1']
    #allocation8 [shape = 'u8[4096]{0}', space=vmem, size = 0x1000, scoped, tag = 'input window, operand 2, single buffered']
    #allocation9 [shape = 'u8[4194304]{0}', space=vmem, size = 0x400000, scoped, tag = 'input window, operand 3, single buffered']
    #allocation10 [shape = 's32[1]{0}', space=sflag, size = 0x4, scoped, tag = 'scoped memory for tpu_custom_call.1']
    #allocation11 [shape = 'u8[8192]{0}', space=vmem, size = 0x2000, scoped, tag = 'input window, operand 4, single buffered']
    #allocation12 [shape = 'u8[524288]{0}', space=vmem, size = 0x80000, scoped, tag = 'input window, operand 5, single buffered']
    #allocation13 [shape = 's32[1]{0}', space=sflag, size = 0x4, scoped, tag = 'scoped memory for tpu_custom_call.1']
    #allocation14 [shape = 'u8[512]{0}', space=vmem, size = 0x400, scoped, tag = 'input window, operand 6, single buffered']
    #allocation15 [shape = 'u8[4096]{0}', space=vmem, size = 0x1000, scoped, tag = 'output window, operand 0, single buffered']
    %12 = vsyncpa [#allocation4], 0
    %13 = vsyncpa [#allocation7], 0
    %14 = vsyncpa [#allocation10], 0
    %15 = vsyncpa [#allocation13], 0
    %16 = vsyncpa [#allocation5], 0
    // Predicated region
    $region2: #{tpu_custom_call.1} parent=1 // pred_check
      _
    $region3: #{tpu_custom_call.1} parent=1 // pred_check_branch
      %18 = sbr.rel (0) target = $region5
    $region4: #{tpu_custom_call.1} parent=1 // pred_region
      %s20 = ssub.s32 128, 128
      %21 = vsyncadd [#allocation4], %s20
      %s23 = sshll.u32 [#allocation3], 4
      %s24 = int_to_ptr.vmem [resolvable:$true] %s23
      %26 = dma.hbm_to_vmem [thread:$0]  %s0, 128, %s24, [#allocation4]
    $region5: #{tpu_custom_call.1} parent=1 // pred_fallthru
      _
    // Predicated region
    $region6: #{tpu_custom_call.1} parent=1 // pred_check
      _
    $region7: #{tpu_custom_call.1} parent=1 // pred_check_branch
      %28 = sbr.rel (0) target = $region9
    $region8: #{tpu_custom_call.1} parent=1 // pred_region
      %s30 = ssub.s32 16384, 16384
      %31 = vsyncadd [#allocation7], %s30
      %s32 = sshll.u32 [#allocation6], 4
      %s33 = int_to_ptr.vmem [resolvable:$true] %s32
      %38 = dma.hbm_to_vmem [thread:$0]  %s1, 16384, %s33, [#allocation7], 512, 512, 32
    $region9: #{tpu_custom_call.1} parent=1 // pred_fallthru
      _
    // Predicated region
    $region10: #{tpu_custom_call.1} parent=1 // pred_check
      _
    $region11: #{tpu_custom_call.1} parent=1 // pred_check_branch
      %40 = sbr.rel (0) target = $region13
    $region12: #{tpu_custom_call.1} parent=1 // pred_region
      %s42 = ssub.s32 128, 128
      %43 = vsyncadd [#allocation7], %s42
      %s45 = sshll.u32 [#allocation8], 4
      %s46 = int_to_ptr.vmem [resolvable:$true] %s45
      %48 = dma.hbm_to_vmem [thread:$0]  %s2, 128, %s46, [#allocation7]
    $region13: #{tpu_custom_call.1} parent=1 // pred_fallthru
      _
    // Predicated region
    $region14: #{tpu_custom_call.1} parent=1 // pred_check
      _
    $region15: #{tpu_custom_call.1} parent=1 // pred_check_branch
      %50 = sbr.rel (0) target = $region17
    $region16: #{tpu_custom_call.1} parent=1 // pred_region
      %s52 = ssub.s32 131072, 131072
      %53 = vsyncadd [#allocation10], %s52
      %s54 = sshll.u32 [#allocation9], 4
      %s55 = int_to_ptr.vmem [resolvable:$true] %s54
      %60 = dma.hbm_to_vmem [thread:$0]  %s3, 131072, %s55, [#allocation10], 1024, 1024, 64
    $region17: #{tpu_custom_call.1} parent=1 // pred_fallthru
      _
    // Predicated region
    $region18: #{tpu_custom_call.1} parent=1 // pred_check
      _
    $region19: #{tpu_custom_call.1} parent=1 // pred_check_branch
      %62 = sbr.rel (0) target = $region21
    $region20: #{tpu_custom_call.1} parent=1 // pred_region
      %s64 = ssub.s32 256, 256
      %65 = vsyncadd [#allocation10], %s64
      %s67 = sshll.u32 [#allocation11], 4
      %s68 = int_to_ptr.vmem [resolvable:$true] %s67
      %70 = dma.hbm_to_vmem [thread:$0]  %s4, 256, %s68, [#allocation10]
    $region21: #{tpu_custom_call.1} parent=1 // pred_fallthru
      _
    // Predicated region
    $region22: #{tpu_custom_call.1} parent=1 // pred_check
      _
    $region23: #{tpu_custom_call.1} parent=1 // pred_check_branch
      %72 = sbr.rel (0) target = $region25
    $region24: #{tpu_custom_call.1} parent=1 // pred_region
      %s74 = ssub.s32 16384, 16384
      %75 = vsyncadd [#allocation13], %s74
      %s76 = sshll.u32 [#allocation12], 4
      %s77 = int_to_ptr.vmem [resolvable:$true] %s76
      %82 = dma.hbm_to_vmem [thread:$0]  %s5, 16384, %s77, [#allocation13], 64, 64, 4
    $region25: #{tpu_custom_call.1} parent=1 // pred_fallthru
      _
    // Predicated region
    $region26: #{tpu_custom_call.1} parent=1 // pred_check
      _
    $region27: #{tpu_custom_call.1} parent=1 // pred_check_branch
      %84 = sbr.rel (0) target = $region29
    $region28: #{tpu_custom_call.1} parent=1 // pred_region
      %s86 = ssub.s32 16, 16
      %87 = vsyncadd [#allocation13], %s86
      %s89 = sshll.u32 [#allocation14], 4
      %s90 = int_to_ptr.vmem [resolvable:$true] %s89
      %92 = dma.hbm_to_vmem [thread:$0]  %s6, 16, %s90, [#allocation13]
    $region29: #{tpu_custom_call.1} parent=1 // pred_fallthru
      _
    // Predicated region
    $region30: #{tpu_custom_call.1} parent=1 // pred_check
      _
    $region31: #{tpu_custom_call.1} parent=1 // pred_check_branch
      %94 = sbr.rel (0) target = $region33
    $region32: #{tpu_custom_call.1} parent=1 // pred_region
      %95 = dma.done [#allocation4], 128
    $region33: #{tpu_custom_call.1} parent=1 // pred_fallthru
      _
    // Predicated region
    $region34: #{tpu_custom_call.1} parent=1 // pred_check
      _
    $region35: #{tpu_custom_call.1} parent=1 // pred_check_branch
      %97 = sbr.rel (0) target = $region37
    $region36: #{tpu_custom_call.1} parent=1 // pred_region
      %98 = dma.done [#allocation7], 16384
    $region37: #{tpu_custom_call.1} parent=1 // pred_fallthru
      _
    // Predicated region
    $region38: #{tpu_custom_call.1} parent=1 // pred_check
      _
    $region39: #{tpu_custom_call.1} parent=1 // pred_check_branch
      %100 = sbr.rel (0) target = $region41
    $region40: #{tpu_custom_call.1} parent=1 // pred_region
      %101 = dma.done [#allocation7], 128
    $region41: #{tpu_custom_call.1} parent=1 // pred_fallthru
      _
    // Predicated region
    $region42: #{tpu_custom_call.1} parent=1 // pred_check
      _
    $region43: #{tpu_custom_call.1} parent=1 // pred_check_branch
      %103 = sbr.rel (0) target = $region45
    $region44: #{tpu_custom_call.1} parent=1 // pred_region
      %104 = dma.done [#allocation10], 131072
    $region45: #{tpu_custom_call.1} parent=1 // pred_fallthru
      _
    // Predicated region
    $region46: #{tpu_custom_call.1} parent=1 // pred_check
      _
    $region47: #{tpu_custom_call.1} parent=1 // pred_check_branch
      %106 = sbr.rel (0) target = $region49
    $region48: #{tpu_custom_call.1} parent=1 // pred_region
      %107 = dma.done [#allocation10], 256
    $region49: #{tpu_custom_call.1} parent=1 // pred_fallthru
      _
    // Predicated region
    $region50: #{tpu_custom_call.1} parent=1 // pred_check
      _
    $region51: #{tpu_custom_call.1} parent=1 // pred_check_branch
      %109 = sbr.rel (0) target = $region53
    $region52: #{tpu_custom_call.1} parent=1 // pred_region
      %110 = dma.done [#allocation13], 16384
    $region53: #{tpu_custom_call.1} parent=1 // pred_fallthru
      _
    // Predicated region
    $region54: #{tpu_custom_call.1} parent=1 // pred_check
      _
    $region55: #{tpu_custom_call.1} parent=1 // pred_check_branch
      %112 = sbr.rel (0) target = $region57
    $region56: #{tpu_custom_call.1} parent=1 // pred_region
      %113 = dma.done [#allocation13], 16
    $region57: #{tpu_custom_call.1} parent=1 // pred_fallthru
      _
    %p115 = scmp.eq.s32.totalorder 0, 0
    // Predicated region
    $region58: #{tpu_custom_call.1} parent=1 // pred_check
      %p116 = pneg %p115
    $region59: #{tpu_custom_call.1} parent=1 // pred_check_branch
      %118 = sbr.rel (%p116) target = $region61
    $region60: #{tpu_custom_call.1} parent=1 // pred_region
      %119 = vst [vmem:[#allocation2] sm:$0xff] 0.0
      %120 = vst [vmem:[#allocation2 + $0x8] sm:$0xff] 0.0
      %121 = vst [vmem:[#allocation2 + $0x10] sm:$0xff] 0.0
      %122 = vst [vmem:[#allocation2 + $0x18] sm:$0xff] 0.0
      %123 = vst [vmem:[#allocation2 + $0x20] sm:$0xff] 0.0
      %124 = vst [vmem:[#allocation2 + $0x28] sm:$0xff] 0.0
      %125 = vst [vmem:[#allocation2 + $0x30] sm:$0xff] 0.0
      %126 = vst [vmem:[#allocation2 + $0x38] sm:$0xff] 0.0
    $region61: #{tpu_custom_call.1} parent=1 // pred_fallthru
      _
    %v127 = vld [vmem:[#allocation2] sm:$0xff]
    %v128 = vld [vmem:[#allocation2 + $0x8] sm:$0xff]
    %v129 = vld [vmem:[#allocation2 + $0x10] sm:$0xff]
    %v130 = vld [vmem:[#allocation2 + $0x18] sm:$0xff]
    %v131 = vld [vmem:[#allocation2 + $0x20] sm:$0xff]
    %v132 = vld [vmem:[#allocation2 + $0x28] sm:$0xff]
    %v133 = vld [vmem:[#allocation2 + $0x30] sm:$0xff]
    %v134 = vld [vmem:[#allocation2 + $0x38] sm:$0xff]
    %v135 = vld [vmem:[#allocation3] sm:$0xff]
    %v136 = vld [vmem:[#allocation6] sm:$0xff]
    %v137 = vld [vmem:[#allocation6 + $0x8] sm:$0xff]
    %v138 = vld [vmem:[#allocation6 + $0x10] sm:$0xff]
    %v139 = vld [vmem:[#allocation6 + $0x18] sm:$0xff]
    %v140 = vld [vmem:[#allocation6 + $0x20] sm:$0xff]
    %v141 = vld [vmem:[#allocation6 + $0x28] sm:$0xff]
    %v142 = vld [vmem:[#allocation6 + $0x30] sm:$0xff]
    %v143 = vld [vmem:[#allocation6 + $0x38] sm:$0xff]
    %v144 = vld [vmem:[#allocation6 + $0x40] sm:$0xff]
    %v145 = vld [vmem:[#allocation6 + $0x48] sm:$0xff]
    %v146 = vld [vmem:[#allocation6 + $0x50] sm:$0xff]
    %v147 = vld [vmem:[#allocation6 + $0x58] sm:$0xff]
    %v148 = vld [vmem:[#allocation6 + $0x60] sm:$0xff]
    %v149 = vld [vmem:[#allocation6 + $0x68] sm:$0xff]
    %v150 = vld [vmem:[#allocation6 + $0x70] sm:$0xff]
    %v151 = vld [vmem:[#allocation6 + $0x78] sm:$0xff]
    %v152 = vld [vmem:[#allocation6 + $0x80] sm:$0xff]
    %v153 = vld [vmem:[#allocation6 + $0x88] sm:$0xff]
    %v154 = vld [vmem:[#allocation6 + $0x90] sm:$0xff]
    %v155 = vld [vmem:[#allocation6 + $0x98] sm:$0xff]
    %v156 = vld [vmem:[#allocation6 + $0xa0] sm:$0xff]
    %v157 = vld [vmem:[#allocation6 + $0xa8] sm:$0xff]
    %v158 = vld [vmem:[#allocation6 + $0xb0] sm:$0xff]
    %v159 = vld [vmem:[#allocation6 + $0xb8] sm:$0xff]
    %v160 = vld [vmem:[#allocation6 + $0xc0] sm:$0xff]
    %v161 = vld [vmem:[#allocation6 + $0xc8] sm:$0xff]
    %v162 = vld [vmem:[#allocation6 + $0xd0] sm:$0xff]
    %v163 = vld [vmem:[#allocation6 + $0xd8] sm:$0xff]
    %v164 = vld [vmem:[#allocation6 + $0xe0] sm:$0xff]
    %v165 = vld [vmem:[#allocation6 + $0xe8] sm:$0xff]
    %v166 = vld [vmem:[#allocation6 + $0xf0] sm:$0xff]
    %v167 = vld [vmem:[#allocation6 + $0xf8] sm:$0xff]
    %v168 = vld [vmem:[#allocation6 + $0x100] sm:$0xff]
    %v169 = vld [vmem:[#allocation6 + $0x108] sm:$0xff]
    %v170 = vld [vmem:[#allocation6 + $0x110] sm:$0xff]
    %v171 = vld [vmem:[#allocation6 + $0x118] sm:$0xff]
    %v172 = vld [vmem:[#allocation6 + $0x120] sm:$0xff]
    %v173 = vld [vmem:[#allocation6 + $0x128] sm:$0xff]
    %v174 = vld [vmem:[#allocation6 + $0x130] sm:$0xff]
    %v175 = vld [vmem:[#allocation6 + $0x138] sm:$0xff]
    %v176 = vld [vmem:[#allocation6 + $0x140] sm:$0xff]
    %v177 = vld [vmem:[#allocation6 + $0x148] sm:$0xff]
    %v178 = vld [vmem:[#allocation6 + $0x150] sm:$0xff]
    %v179 = vld [vmem:[#allocation6 + $0x158] sm:$0xff]
    %v180 = vld [vmem:[#allocation6 + $0x160] sm:$0xff]
    %v181 = vld [vmem:[#allocation6 + $0x168] sm:$0xff]
    %v182 = vld [vmem:[#allocation6 + $0x170] sm:$0xff]
    %v183 = vld [vmem:[#allocation6 + $0x178] sm:$0xff]
    %v184 = vld [vmem:[#allocation6 + $0x180] sm:$0xff]
    %v185 = vld [vmem:[#allocation6 + $0x188] sm:$0xff]
    %v186 = vld [vmem:[#allocation6 + $0x190] sm:$0xff]
    %v187 = vld [vmem:[#allocation6 + $0x198] sm:$0xff]
    %v188 = vld [vmem:[#allocation6 + $0x1a0] sm:$0xff]
    %v189 = vld [vmem:[#allocation6 + $0x1a8] sm:$0xff]
    %v190 = vld [vmem:[#allocation6 + $0x1b0] sm:$0xff]
    %v191 = vld [vmem:[#allocation6 + $0x1b8] sm:$0xff]
    %v192 = vld [vmem:[#allocation6 + $0x1c0] sm:$0xff]
    %v193 = vld [vmem:[#allocation6 + $0x1c8] sm:$0xff]
    %v194 = vld [vmem:[#allocation6 + $0x1d0] sm:$0xff]
    %v195 = vld [vmem:[#allocation6 + $0x1d8] sm:$0xff]
    %v196 = vld [vmem:[#allocation6 + $0x1e0] sm:$0xff]
    %v197 = vld [vmem:[#allocation6 + $0x1e8] sm:$0xff]
    %v198 = vld [vmem:[#allocation6 + $0x1f0] sm:$0xff]
    %v199 = vld [vmem:[#allocation6 + $0x1f8] sm:$0xff]
    %v200 = vld [vmem:[#allocation6 + $0x200] sm:$0xff]
    %v201 = vld [vmem:[#allocation6 + $0x208] sm:$0xff]
    %v202 = vld [vmem:[#allocation6 + $0x210] sm:$0xff]
    %v203 = vld [vmem:[#allocation6 + $0x218] sm:$0xff]
    %v204 = vld [vmem:[#allocation6 + $0x220] sm:$0xff]
    %v205 = vld [vmem:[#allocation6 + $0x228] sm:$0xff]
    %v206 = vld [vmem:[#allocation6 + $0x230] sm:$0xff]
    %v207 = vld [vmem:[#allocation6 + $0x238] sm:$0xff]
    %v208 = vld [vmem:[#allocation6 + $0x240] sm:$0xff]
    %v209 = vld [vmem:[#allocation6 + $0x248] sm:$0xff]
    %v210 = vld [vmem:[#allocation6 + $0x250] sm:$0xff]
    %v211 = vld [vmem:[#allocation6 + $0x258] sm:$0xff]
    %v212 = vld [vmem:[#allocation6 + $0x260] sm:$0xff]
    %v213 = vld [vmem:[#allocation6 + $0x268] sm:$0xff]
    %v214 = vld [vmem:[#allocation6 + $0x270] sm:$0xff]
    %v215 = vld [vmem:[#allocation6 + $0x278] sm:$0xff]
    %v216 = vld [vmem:[#allocation6 + $0x280] sm:$0xff]
    %v217 = vld [vmem:[#allocation6 + $0x288] sm:$0xff]
    %v218 = vld [vmem:[#allocation6 + $0x290] sm:$0xff]
    %v219 = vld [vmem:[#allocation6 + $0x298] sm:$0xff]
    %v220 = vld [vmem:[#allocation6 + $0x2a0] sm:$0xff]
    %v221 = vld [vmem:[#allocation6 + $0x2a8] sm:$0xff]
    %v222 = vld [vmem:[#allocation6 + $0x2b0] sm:$0xff]
    %v223 = vld [vmem:[#allocation6 + $0x2b8] sm:$0xff]
    %v224 = vld [vmem:[#allocation6 + $0x2c0] sm:$0xff]
    %v225 = vld [vmem:[#allocation6 + $0x2c8] sm:$0xff]
    %v226 = vld [vmem:[#allocation6 + $0x2d0] sm:$0xff]
    %v227 = vld [vmem:[#allocation6 + $0x2d8] sm:$0xff]
    %v228 = vld [vmem:[#allocation6 + $0x2e0] sm:$0xff]
    %v229 = vld [vmem:[#allocation6 + $0x2e8] sm:$0xff]
    %v230 = vld [vmem:[#allocation6 + $0x2f0] sm:$0xff]
    %v231 = vld [vmem:[#allocation6 + $0x2f8] sm:$0xff]
    %v232 = vld [vmem:[#allocation6 + $0x300] sm:$0xff]
    %v233 = vld [vmem:[#allocation6 + $0x308] sm:$0xff]
    %v234 = vld [vmem:[#allocation6 + $0x310] sm:$0xff]
    %v235 = vld [vmem:[#allocation6 + $0x318] sm:$0xff]
    %v236 = vld [vmem:[#allocation6 + $0x320] sm:$0xff]
    %v237 = vld [vmem:[#allocation6 + $0x328] sm:$0xff]
    %v238 = vld [vmem:[#allocation6 + $0x330] sm:$0xff]
    %v239 = vld [vmem:[#allocation6 + $0x338] sm:$0xff]
    %v240 = vld [vmem:[#allocation6 + $0x340] sm:$0xff]
    %v241 = vld [vmem:[#allocation6 + $0x348] sm:$0xff]
    %v242 = vld [vmem:[#allocation6 + $0x350] sm:$0xff]
    %v243 = vld [vmem:[#allocation6 + $0x358] sm:$0xff]
    %v244 = vld [vmem:[#allocation6 + $0x360] sm:$0xff]
    %v245 = vld [vmem:[#allocation6 + $0x368] sm:$0xff]
    %v246 = vld [vmem:[#allocation6 + $0x370] sm:$0xff]
    %v247 = vld [vmem:[#allocation6 + $0x378] sm:$0xff]
    %v248 = vld [vmem:[#allocation6 + $0x380] sm:$0xff]
    %v249 = vld [vmem:[#allocation6 + $0x388] sm:$0xff]
    %v250 = vld [vmem:[#allocation6 + $0x390] sm:$0xff]
    %v251 = vld [vmem:[#allocation6 + $0x398] sm:$0xff]
    %v252 = vld [vmem:[#allocation6 + $0x3a0] sm:$0xff]
    %v253 = vld [vmem:[#allocation6 + $0x3a8] sm:$0xff]
    %v254 = vld [vmem:[#allocation6 + $0x3b0] sm:$0xff]
    %v255 = vld [vmem:[#allocation6 + $0x3b8] sm:$0xff]
    %v256 = vld [vmem:[#allocation6 + $0x3c0] sm:$0xff]
    %v257 = vld [vmem:[#allocation6 + $0x3c8] sm:$0xff]
    %v258 = vld [vmem:[#allocation6 + $0x3d0] sm:$0xff]
    %v259 = vld [vmem:[#allocation6 + $0x3d8] sm:$0xff]
    %v260 = vld [vmem:[#allocation6 + $0x3e0] sm:$0xff]
    %v261 = vld [vmem:[#allocation6 + $0x3e8] sm:$0xff]
    %v262 = vld [vmem:[#allocation6 + $0x3f0] sm:$0xff]
    %v263 = vld [vmem:[#allocation6 + $0x3f8] sm:$0xff]
    %v265 = vunpack.c.l.b16 %v135
    %v266 = vunpack.c.h.b16 %v135
    %v267 = vpack.c.b16 %v265, %v265
    %v268 = vpack.c.b16 %v266, %v266
    %v399 = vunpack.c.l.b16 %v136
    %v400 = vunpack.c.h.b16 %v136
    %v401 = vunpack.c.l.b16 %v137
    %v402 = vunpack.c.h.b16 %v137
    %v403 = vunpack.c.l.b16 %v138
    %v404 = vunpack.c.h.b16 %v138
    %v405 = vunpack.c.l.b16 %v139
    %v406 = vunpack.c.h.b16 %v139
    %v407 = vunpack.c.l.b16 %v140
    %v408 = vunpack.c.h.b16 %v140
    %v409 = vunpack.c.l.b16 %v141
    %v410 = vunpack.c.h.b16 %v141
    %v411 = vunpack.c.l.b16 %v142
    %v412 = vunpack.c.h.b16 %v142
    %v413 = vunpack.c.l.b16 %v143
    %v414 = vunpack.c.h.b16 %v143
    %v415 = vunpack.c.l.b16 %v144
    %v416 = vunpack.c.h.b16 %v144
    %v417 = vunpack.c.l.b16 %v145
    %v418 = vunpack.c.h.b16 %v145
    %v419 = vunpack.c.l.b16 %v146
    %v420 = vunpack.c.h.b16 %v146
    %v421 = vunpack.c.l.b16 %v147
    %v422 = vunpack.c.h.b16 %v147
    %v423 = vunpack.c.l.b16 %v148
    %v424 = vunpack.c.h.b16 %v148
    %v425 = vunpack.c.l.b16 %v149
    %v426 = vunpack.c.h.b16 %v149
    %v427 = vunpack.c.l.b16 %v150
    %v428 = vunpack.c.h.b16 %v150
    %v429 = vunpack.c.l.b16 %v151
    %v430 = vunpack.c.h.b16 %v151
    %v431 = vunpack.c.l.b16 %v152
    %v432 = vunpack.c.h.b16 %v152
    %v433 = vunpack.c.l.b16 %v153
    %v434 = vunpack.c.h.b16 %v153
    %v435 = vunpack.c.l.b16 %v154
    %v436 = vunpack.c.h.b16 %v154
    %v437 = vunpack.c.l.b16 %v155
    %v438 = vunpack.c.h.b16 %v155
    %v439 = vunpack.c.l.b16 %v156
    %v440 = vunpack.c.h.b16 %v156
    %v441 = vunpack.c.l.b16 %v157
    %v442 = vunpack.c.h.b16 %v157
    %v443 = vunpack.c.l.b16 %v158
    %v444 = vunpack.c.h.b16 %v158
    %v445 = vunpack.c.l.b16 %v159
    %v446 = vunpack.c.h.b16 %v159
    %v447 = vunpack.c.l.b16 %v160
    %v448 = vunpack.c.h.b16 %v160
    %v449 = vunpack.c.l.b16 %v161
    %v450 = vunpack.c.h.b16 %v161
    %v451 = vunpack.c.l.b16 %v162
    %v452 = vunpack.c.h.b16 %v162
    %v453 = vunpack.c.l.b16 %v163
    %v454 = vunpack.c.h.b16 %v163
    %v455 = vunpack.c.l.b16 %v164
    %v456 = vunpack.c.h.b16 %v164
    %v457 = vunpack.c.l.b16 %v165
    %v458 = vunpack.c.h.b16 %v165
    %v459 = vunpack.c.l.b16 %v166
    %v460 = vunpack.c.h.b16 %v166
    %v461 = vunpack.c.l.b16 %v167
    %v462 = vunpack.c.h.b16 %v167
    %v463 = vunpack.c.l.b16 %v168
    %v464 = vunpack.c.h.b16 %v168
    %v465 = vunpack.c.l.b16 %v169
    %v466 = vunpack.c.h.b16 %v169
    %v467 = vunpack.c.l.b16 %v170
    %v468 = vunpack.c.h.b16 %v170
    %v469 = vunpack.c.l.b16 %v171
    %v470 = vunpack.c.h.b16 %v171
    %v471 = vunpack.c.l.b16 %v172
    %v472 = vunpack.c.h.b16 %v172
    %v473 = vunpack.c.l.b16 %v173
    %v474 = vunpack.c.h.b16 %v173
    %v475 = vunpack.c.l.b16 %v174
    %v476 = vunpack.c.h.b16 %v174
    %v477 = vunpack.c.l.b16 %v175
    %v478 = vunpack.c.h.b16 %v175
    %v479 = vunpack.c.l.b16 %v176
    %v480 = vunpack.c.h.b16 %v176
    %v481 = vunpack.c.l.b16 %v177
    %v482 = vunpack.c.h.b16 %v177
    %v483 = vunpack.c.l.b16 %v178
    %v484 = vunpack.c.h.b16 %v178
    %v485 = vunpack.c.l.b16 %v179
    %v486 = vunpack.c.h.b16 %v179
    %v487 = vunpack.c.l.b16 %v180
    %v488 = vunpack.c.h.b16 %v180
    %v489 = vunpack.c.l.b16 %v181
    %v490 = vunpack.c.h.b16 %v181
    %v491 = vunpack.c.l.b16 %v182
    %v492 = vunpack.c.h.b16 %v182
    %v493 = vunpack.c.l.b16 %v183
    %v494 = vunpack.c.h.b16 %v183
    %v495 = vunpack.c.l.b16 %v184
    %v496 = vunpack.c.h.b16 %v184
    %v497 = vunpack.c.l.b16 %v185
    %v498 = vunpack.c.h.b16 %v185
    %v499 = vunpack.c.l.b16 %v186
    %v500 = vunpack.c.h.b16 %v186
    %v501 = vunpack.c.l.b16 %v187
    %v502 = vunpack.c.h.b16 %v187
    %v503 = vunpack.c.l.b16 %v188
    %v504 = vunpack.c.h.b16 %v188
    %v505 = vunpack.c.l.b16 %v189
    %v506 = vunpack.c.h.b16 %v189
    %v507 = vunpack.c.l.b16 %v190
    %v508 = vunpack.c.h.b16 %v190
    %v509 = vunpack.c.l.b16 %v191
    %v510 = vunpack.c.h.b16 %v191
    %v511 = vunpack.c.l.b16 %v192
    %v512 = vunpack.c.h.b16 %v192
    %v513 = vunpack.c.l.b16 %v193
    %v514 = vunpack.c.h.b16 %v193
    %v515 = vunpack.c.l.b16 %v194
    %v516 = vunpack.c.h.b16 %v194
    %v517 = vunpack.c.l.b16 %v195
    %v518 = vunpack.c.h.b16 %v195
    %v519 = vunpack.c.l.b16 %v196
    %v520 = vunpack.c.h.b16 %v196
    %v521 = vunpack.c.l.b16 %v197
    %v522 = vunpack.c.h.b16 %v197
    %v523 = vunpack.c.l.b16 %v198
    %v524 = vunpack.c.h.b16 %v198
    %v525 = vunpack.c.l.b16 %v199
    %v526 = vunpack.c.h.b16 %v199
    %v527 = vunpack.c.l.b16 %v200
    %v528 = vunpack.c.h.b16 %v200
    %v529 = vunpack.c.l.b16 %v201
    %v530 = vunpack.c.h.b16 %v201
    %v531 = vunpack.c.l.b16 %v202
    %v532 = vunpack.c.h.b16 %v202
    %v533 = vunpack.c.l.b16 %v203
    %v534 = vunpack.c.h.b16 %v203
    %v535 = vunpack.c.l.b16 %v204
    %v536 = vunpack.c.h.b16 %v204
    %v537 = vunpack.c.l.b16 %v205
    %v538 = vunpack.c.h.b16 %v205
    %v539 = vunpack.c.l.b16 %v206
    %v540 = vunpack.c.h.b16 %v206
    %v541 = vunpack.c.l.b16 %v207
    %v542 = vunpack.c.h.b16 %v207
    %v543 = vunpack.c.l.b16 %v208
    %v544 = vunpack.c.h.b16 %v208
    %v545 = vunpack.c.l.b16 %v209
    %v546 = vunpack.c.h.b16 %v209
    %v547 = vunpack.c.l.b16 %v210
    %v548 = vunpack.c.h.b16 %v210
    %v549 = vunpack.c.l.b16 %v211
    %v550 = vunpack.c.h.b16 %v211
    %v551 = vunpack.c.l.b16 %v212
    %v552 = vunpack.c.h.b16 %v212
    %v553 = vunpack.c.l.b16 %v213
    %v554 = vunpack.c.h.b16 %v213
    %v555 = vunpack.c.l.b16 %v214
    %v556 = vunpack.c.h.b16 %v214
    %v557 = vunpack.c.l.b16 %v215
    %v558 = vunpack.c.h.b16 %v215
    %v559 = vunpack.c.l.b16 %v216
    %v560 = vunpack.c.h.b16 %v216
    %v561 = vunpack.c.l.b16 %v217
    %v562 = vunpack.c.h.b16 %v217
    %v563 = vunpack.c.l.b16 %v218
    %v564 = vunpack.c.h.b16 %v218
    %v565 = vunpack.c.l.b16 %v219
    %v566 = vunpack.c.h.b16 %v219
    %v567 = vunpack.c.l.b16 %v220
    %v568 = vunpack.c.h.b16 %v220
    %v569 = vunpack.c.l.b16 %v221
    %v570 = vunpack.c.h.b16 %v221
    %v571 = vunpack.c.l.b16 %v222
    %v572 = vunpack.c.h.b16 %v222
    %v573 = vunpack.c.l.b16 %v223
    %v574 = vunpack.c.h.b16 %v223
    %v575 = vunpack.c.l.b16 %v224
    %v576 = vunpack.c.h.b16 %v224
    %v577 = vunpack.c.l.b16 %v225
    %v578 = vunpack.c.h.b16 %v225
    %v579 = vunpack.c.l.b16 %v226
    %v580 = vunpack.c.h.b16 %v226
    %v581 = vunpack.c.l.b16 %v227
    %v582 = vunpack.c.h.b16 %v227
    %v583 = vunpack.c.l.b16 %v228
    %v584 = vunpack.c.h.b16 %v228
    %v585 = vunpack.c.l.b16 %v229
    %v586 = vunpack.c.h.b16 %v229
    %v587 = vunpack.c.l.b16 %v230
    %v588 = vunpack.c.h.b16 %v230
    %v589 = vunpack.c.l.b16 %v231
    %v590 = vunpack.c.h.b16 %v231
    %v591 = vunpack.c.l.b16 %v232
    %v592 = vunpack.c.h.b16 %v232
    %v593 = vunpack.c.l.b16 %v233
    %v594 = vunpack.c.h.b16 %v233
    %v595 = vunpack.c.l.b16 %v234
    %v596 = vunpack.c.h.b16 %v234
    %v597 = vunpack.c.l.b16 %v235
    %v598 = vunpack.c.h.b16 %v235
    %v599 = vunpack.c.l.b16 %v236
    %v600 = vunpack.c.h.b16 %v236
    %v601 = vunpack.c.l.b16 %v237
    %v602 = vunpack.c.h.b16 %v237
    %v603 = vunpack.c.l.b16 %v238
    %v604 = vunpack.c.h.b16 %v238
    %v605 = vunpack.c.l.b16 %v239
    %v606 = vunpack.c.h.b16 %v239
    %v607 = vunpack.c.l.b16 %v240
    %v608 = vunpack.c.h.b16 %v240
    %v609 = vunpack.c.l.b16 %v241
    %v610 = vunpack.c.h.b16 %v241
    %v611 = vunpack.c.l.b16 %v242
    %v612 = vunpack.c.h.b16 %v242
    %v613 = vunpack.c.l.b16 %v243
    %v614 = vunpack.c.h.b16 %v243
    %v615 = vunpack.c.l.b16 %v244
    %v616 = vunpack.c.h.b16 %v244
    %v617 = vunpack.c.l.b16 %v245
    %v618 = vunpack.c.h.b16 %v245
    %v619 = vunpack.c.l.b16 %v246
    %v620 = vunpack.c.h.b16 %v246
    %v621 = vunpack.c.l.b16 %v247
    %v622 = vunpack.c.h.b16 %v247
    %v623 = vunpack.c.l.b16 %v248
    %v624 = vunpack.c.h.b16 %v248
    %v625 = vunpack.c.l.b16 %v249
    %v626 = vunpack.c.h.b16 %v249
    %v627 = vunpack.c.l.b16 %v250
    %v628 = vunpack.c.h.b16 %v250
    %v629 = vunpack.c.l.b16 %v251
    %v630 = vunpack.c.h.b16 %v251
    %v631 = vunpack.c.l.b16 %v252
    %v632 = vunpack.c.h.b16 %v252
    %v633 = vunpack.c.l.b16 %v253
    %v634 = vunpack.c.h.b16 %v253
    %v635 = vunpack.c.l.b16 %v254
    %v636 = vunpack.c.h.b16 %v254
    %v637 = vunpack.c.l.b16 %v255
    %v638 = vunpack.c.h.b16 %v255
    %v639 = vunpack.c.l.b16 %v256
    %v640 = vunpack.c.h.b16 %v256
    %v641 = vunpack.c.l.b16 %v257
    %v642 = vunpack.c.h.b16 %v257
    %v643 = vunpack.c.l.b16 %v258
    %v644 = vunpack.c.h.b16 %v258
    %v645 = vunpack.c.l.b16 %v259
    %v646 = vunpack.c.h.b16 %v259
    %v647 = vunpack.c.l.b16 %v260
    %v648 = vunpack.c.h.b16 %v260
    %v649 = vunpack.c.l.b16 %v261
    %v650 = vunpack.c.h.b16 %v261
    %v651 = vunpack.c.l.b16 %v262
    %v652 = vunpack.c.h.b16 %v262
    %v653 = vunpack.c.l.b16 %v263
    %v654 = vunpack.c.h.b16 %v263
    %v655 = vpack.c.b16 %v407, %v399
    %v656 = vpack.c.b16 %v408, %v400
    %v657 = vpack.c.b16 %v409, %v401
    %v658 = vpack.c.b16 %v410, %v402
    %v659 = vpack.c.b16 %v411, %v403
    %v660 = vpack.c.b16 %v412, %v404
    %v661 = vpack.c.b16 %v413, %v405
    %v662 = vpack.c.b16 %v414, %v406
    %v663 = vpack.c.b16 %v423, %v415
    %v664 = vpack.c.b16 %v424, %v416
    %v665 = vpack.c.b16 %v425, %v417
    %v666 = vpack.c.b16 %v426, %v418
    %v667 = vpack.c.b16 %v427, %v419
    %v668 = vpack.c.b16 %v428, %v420
    %v669 = vpack.c.b16 %v429, %v421
    %v670 = vpack.c.b16 %v430, %v422
    %v671 = vpack.c.b16 %v439, %v431
    %v672 = vpack.c.b16 %v440, %v432
    %v673 = vpack.c.b16 %v441, %v433
    %v674 = vpack.c.b16 %v442, %v434
    %v675 = vpack.c.b16 %v443, %v435
    %v676 = vpack.c.b16 %v444, %v436
    %v677 = vpack.c.b16 %v445, %v437
    %v678 = vpack.c.b16 %v446, %v438
    %v679 = vpack.c.b16 %v455, %v447
    %v680 = vpack.c.b16 %v456, %v448
    %v681 = vpack.c.b16 %v457, %v449
    %v682 = vpack.c.b16 %v458, %v450
    %v683 = vpack.c.b16 %v459, %v451
    %v684 = vpack.c.b16 %v460, %v452
    %v685 = vpack.c.b16 %v461, %v453
    %v686 = vpack.c.b16 %v462, %v454
    %v687 = vpack.c.b16 %v471, %v463
    %v688 = vpack.c.b16 %v472, %v464
    %v689 = vpack.c.b16 %v473, %v465
    %v690 = vpack.c.b16 %v474, %v466
    %v691 = vpack.c.b16 %v475, %v467
    %v692 = vpack.c.b16 %v476, %v468
    %v693 = vpack.c.b16 %v477, %v469
    %v694 = vpack.c.b16 %v478, %v470
    %v695 = vpack.c.b16 %v487, %v479
    %v696 = vpack.c.b16 %v488, %v480
    %v697 = vpack.c.b16 %v489, %v481
    %v698 = vpack.c.b16 %v490, %v482
    %v699 = vpack.c.b16 %v491, %v483
    %v700 = vpack.c.b16 %v492, %v484
    %v701 = vpack.c.b16 %v493, %v485
    %v702 = vpack.c.b16 %v494, %v486
    %v703 = vpack.c.b16 %v503, %v495
    %v704 = vpack.c.b16 %v504, %v496
    %v705 = vpack.c.b16 %v505, %v497
    %v706 = vpack.c.b16 %v506, %v498
    %v707 = vpack.c.b16 %v507, %v499
    %v708 = vpack.c.b16 %v508, %v500
    %v709 = vpack.c.b16 %v509, %v501
    %v710 = vpack.c.b16 %v510, %v502
    %v711 = vpack.c.b16 %v519, %v511
    %v712 = vpack.c.b16 %v520, %v512
    %v713 = vpack.c.b16 %v521, %v513
    %v714 = vpack.c.b16 %v522, %v514
    %v715 = vpack.c.b16 %v523, %v515
    %v716 = vpack.c.b16 %v524, %v516
    %v717 = vpack.c.b16 %v525, %v517
    %v718 = vpack.c.b16 %v526, %v518
    %v719 = vpack.c.b16 %v535, %v527
    %v720 = vpack.c.b16 %v536, %v528
    %v721 = vpack.c.b16 %v537, %v529
    %v722 = vpack.c.b16 %v538, %v530
    %v723 = vpack.c.b16 %v539, %v531
    %v724 = vpack.c.b16 %v540, %v532
    %v725 = vpack.c.b16 %v541, %v533
    %v726 = vpack.c.b16 %v542, %v534
    %v727 = vpack.c.b16 %v551, %v543
    %v728 = vpack.c.b16 %v552, %v544
    %v729 = vpack.c.b16 %v553, %v545
    %v730 = vpack.c.b16 %v554, %v546
    %v731 = vpack.c.b16 %v555, %v547
    %v732 = vpack.c.b16 %v556, %v548
    %v733 = vpack.c.b16 %v557, %v549
    %v734 = vpack.c.b16 %v558, %v550
    %v735 = vpack.c.b16 %v567, %v559
    %v736 = vpack.c.b16 %v568, %v560
    %v737 = vpack.c.b16 %v569, %v561
    %v738 = vpack.c.b16 %v570, %v562
    %v739 = vpack.c.b16 %v571, %v563
    %v740 = vpack.c.b16 %v572, %v564
    %v741 = vpack.c.b16 %v573, %v565
    %v742 = vpack.c.b16 %v574, %v566
    %v743 = vpack.c.b16 %v583, %v575
    %v744 = vpack.c.b16 %v584, %v576
    %v745 = vpack.c.b16 %v585, %v577
    %v746 = vpack.c.b16 %v586, %v578
    %v747 = vpack.c.b16 %v587, %v579
    %v748 = vpack.c.b16 %v588, %v580
    %v749 = vpack.c.b16 %v589, %v581
    %v750 = vpack.c.b16 %v590, %v582
    %v751 = vpack.c.b16 %v599, %v591
    %v752 = vpack.c.b16 %v600, %v592
    %v753 = vpack.c.b16 %v601, %v593
    %v754 = vpack.c.b16 %v602, %v594
    %v755 = vpack.c.b16 %v603, %v595
    %v756 = vpack.c.b16 %v604, %v596
    %v757 = vpack.c.b16 %v605, %v597
    %v758 = vpack.c.b16 %v606, %v598
    %v759 = vpack.c.b16 %v615, %v607
    %v760 = vpack.c.b16 %v616, %v608
    %v761 = vpack.c.b16 %v617, %v609
    %v762 = vpack.c.b16 %v618, %v610
    %v763 = vpack.c.b16 %v619, %v611
    %v764 = vpack.c.b16 %v620, %v612
    %v765 = vpack.c.b16 %v621, %v613
    %v766 = vpack.c.b16 %v622, %v614
    %v767 = vpack.c.b16 %v631, %v623
    %v768 = vpack.c.b16 %v632, %v624
    %v769 = vpack.c.b16 %v633, %v625
    %v770 = vpack.c.b16 %v634, %v626
    %v771 = vpack.c.b16 %v635, %v627
    %v772 = vpack.c.b16 %v636, %v628
    %v773 = vpack.c.b16 %v637, %v629
    %v774 = vpack.c.b16 %v638, %v630
    %v775 = vpack.c.b16 %v647, %v639
    %v776 = vpack.c.b16 %v648, %v640
    %v777 = vpack.c.b16 %v649, %v641
    %v778 = vpack.c.b16 %v650, %v642
    %v779 = vpack.c.b16 %v651, %v643
    %v780 = vpack.c.b16 %v652, %v644
    %v781 = vpack.c.b16 %v653, %v645
    %v782 = vpack.c.b16 %v654, %v646
    %911 = vmatprep.subr.bf16.mxu0 %v712
    %912 = vmatpush1.bf16.msra.mxu0 %v711
    %913 = vmatprep.subr.bf16.mxu0 %v704
    %914 = vmatpush1.bf16.msra.mxu0 %v703
    %915 = vmatprep.subr.bf16.mxu0 %v696
    %916 = vmatpush1.bf16.msra.mxu0 %v695
    %917 = vmatprep.subr.bf16.mxu0 %v688
    %918 = vmatpush1.bf16.msra.mxu0 %v687
    %919 = vmatprep.subr.bf16.mxu0 %v680
    %920 = vmatpush1.bf16.msra.mxu0 %v679
    %921 = vmatprep.subr.bf16.mxu0 %v672
    %922 = vmatpush1.bf16.msra.mxu0 %v671
    %923 = vmatprep.subr.bf16.mxu0 %v664
    %924 = vmatpush1.bf16.msra.mxu0 %v663
    %925 = vmatprep.subr.bf16.mxu0 %v656
    %926 = vmatpush1.bf16.msra.mxu0 %v655
    %927 = vmatprep.subr.bf16.mxu0 %v776
    %928 = vmatpush2.bf16.msra.mxu0 %v775
    %929 = vmatprep.subr.bf16.mxu0 %v768
    %930 = vmatpush2.bf16.msra.mxu0 %v767
    %931 = vmatprep.subr.bf16.mxu0 %v760
    %932 = vmatpush2.bf16.msra.mxu0 %v759
    %933 = vmatprep.subr.bf16.mxu0 %v752
    %934 = vmatpush2.bf16.msra.mxu0 %v751
    %935 = vmatprep.subr.bf16.mxu0 %v744
    %936 = vmatpush2.bf16.msra.mxu0 %v743
    %937 = vmatprep.subr.bf16.mxu0 %v736
    %938 = vmatpush2.bf16.msra.mxu0 %v735
    %939 = vmatprep.subr.bf16.mxu0 %v728
    %940 = vmatpush2.bf16.msra.mxu0 %v727
    %941 = vmatprep.subr.bf16.mxu0 %v720
    %942 = vmatpush2.bf16.msra.mxu0 %v719
    %943 = vmatprep.mubr.bf16.mxu0 %v268
    %944 = vmatmul.mubr.bf16.gmra.mxu0 %v267
    %v945 = vpop.f32.mrf.mxu0
    %v946 = vadd.f32 0.0, %v945
    %v947 = vpop.f32.mrf.mxu0
    %v948 = vadd.f32 0.0, %v947
    %v949 = vpop.f32.mrf.mxu0
    %v950 = vpop.f32.mrf.mxu0
    %951 = vdwg.mxu0
    %952 = vmatprep.subr.bf16.mxu0 %v714
    %953 = vmatpush1.bf16.msra.mxu0 %v713
    %954 = vmatprep.subr.bf16.mxu0 %v706
    %955 = vmatpush1.bf16.msra.mxu0 %v705
    %956 = vmatprep.subr.bf16.mxu0 %v698
    %957 = vmatpush1.bf16.msra.mxu0 %v697
    %958 = vmatprep.subr.bf16.mxu0 %v690
    %959 = vmatpush1.bf16.msra.mxu0 %v689
    %960 = vmatprep.subr.bf16.mxu0 %v682
    %961 = vmatpush1.bf16.msra.mxu0 %v681
    %962 = vmatprep.subr.bf16.mxu0 %v674
    %963 = vmatpush1.bf16.msra.mxu0 %v673
    %964 = vmatprep.subr.bf16.mxu0 %v666
    %965 = vmatpush1.bf16.msra.mxu0 %v665
    %966 = vmatprep.subr.bf16.mxu0 %v658
    %967 = vmatpush1.bf16.msra.mxu0 %v657
    %968 = vmatprep.subr.bf16.mxu0 %v778
    %969 = vmatpush2.bf16.msra.mxu0 %v777
    %970 = vmatprep.subr.bf16.mxu0 %v770
    %971 = vmatpush2.bf16.msra.mxu0 %v769
    %972 = vmatprep.subr.bf16.mxu0 %v762
    %973 = vmatpush2.bf16.msra.mxu0 %v761
    %974 = vmatprep.subr.bf16.mxu0 %v754
    %975 = vmatpush2.bf16.msra.mxu0 %v753
    %976 = vmatprep.subr.bf16.mxu0 %v746
    %977 = vmatpush2.bf16.msra.mxu0 %v745
    %978 = vmatprep.subr.bf16.mxu0 %v738
    %979 = vmatpush2.bf16.msra.mxu0 %v737
    %980 = vmatprep.subr.bf16.mxu0 %v730
    %981 = vmatpush2.bf16.msra.mxu0 %v729
    %982 = vmatprep.subr.bf16.mxu0 %v722
    %983 = vmatpush2.bf16.msra.mxu0 %v721
    %984 = vmatprep.mubr.bf16.mxu0 %v268
    %985 = vmatmul.mubr.bf16.gmra.mxu0 %v267
    %v986 = vpop.f32.mrf.mxu0
    %v987 = vadd.f32 0.0, %v986
    %v988 = vpop.f32.mrf.mxu0
    %v989 = vadd.f32 0.0, %v988
    %v990 = vpop.f32.mrf.mxu0
    %v991 = vpop.f32.mrf.mxu0
    %992 = vdwg.mxu0
    %993 = vmatprep.subr.bf16.mxu0 %v716
    %994 = vmatpush1.bf16.msra.mxu0 %v715
    %995 = vmatprep.subr.bf16.mxu0 %v708
    %996 = vmatpush1.bf16.msra.mxu0 %v707
    %997 = vmatprep.subr.bf16.mxu0 %v700
    %998 = vmatpush1.bf16.msra.mxu0 %v699
    %999 = vmatprep.subr.bf16.mxu0 %v692
    %1000 = vmatpush1.bf16.msra.mxu0 %v691
    %1001 = vmatprep.subr.bf16.mxu0 %v684
    %1002 = vmatpush1.bf16.msra.mxu0 %v683
    %1003 = vmatprep.subr.bf16.mxu0 %v676
    %1004 = vmatpush1.bf16.msra.mxu0 %v675
    %1005 = vmatprep.subr.bf16.mxu0 %v668
    %1006 = vmatpush1.bf16.msra.mxu0 %v667
    %1007 = vmatprep.subr.bf16.mxu0 %v660
    %1008 = vmatpush1.bf16.msra.mxu0 %v659
    %1009 = vmatprep.subr.bf16.mxu0 %v780
    %1010 = vmatpush2.bf16.msra.mxu0 %v779
    %1011 = vmatprep.subr.bf16.mxu0 %v772
    %1012 = vmatpush2.bf16.msra.mxu0 %v771
    %1013 = vmatprep.subr.bf16.mxu0 %v764
    %1014 = vmatpush2.bf16.msra.mxu0 %v763
    %1015 = vmatprep.subr.bf16.mxu0 %v756
    %1016 = vmatpush2.bf16.msra.mxu0 %v755
    %1017 = vmatprep.subr.bf16.mxu0 %v748
    %1018 = vmatpush2.bf16.msra.mxu0 %v747
    %1019 = vmatprep.subr.bf16.mxu0 %v740
    %1020 = vmatpush2.bf16.msra.mxu0 %v739
    %1021 = vmatprep.subr.bf16.mxu0 %v732
    %1022 = vmatpush2.bf16.msra.mxu0 %v731
    %1023 = vmatprep.subr.bf16.mxu0 %v724
    %1024 = vmatpush2.bf16.msra.mxu0 %v723
    %1025 = vmatprep.mubr.bf16.mxu0 %v268
    %1026 = vmatmul.mubr.bf16.gmra.mxu0 %v267
    %v1027 = vpop.f32.mrf.mxu0
    %v1028 = vadd.f32 0.0, %v1027
    %v1029 = vpop.f32.mrf.mxu0
    %v1030 = vadd.f32 0.0, %v1029
    %v1031 = vpop.f32.mrf.mxu0
    %v1032 = vpop.f32.mrf.mxu0
    %1033 = vdwg.mxu0
    %1034 = vmatprep.subr.bf16.mxu0 %v718
    %1035 = vmatpush1.bf16.msra.mxu0 %v717
    %1036 = vmatprep.subr.bf16.mxu0 %v710
    %1037 = vmatpush1.bf16.msra.mxu0 %v709
    %1038 = vmatprep.subr.bf16.mxu0 %v702
    %1039 = vmatpush1.bf16.msra.mxu0 %v701
    %1040 = vmatprep.subr.bf16.mxu0 %v694
    %1041 = vmatpush1.bf16.msra.mxu0 %v693
    %1042 = vmatprep.subr.bf16.mxu0 %v686
    %1043 = vmatpush1.bf16.msra.mxu0 %v685
    %1044 = vmatprep.subr.bf16.mxu0 %v678
    %1045 = vmatpush1.bf16.msra.mxu0 %v677
    %1046 = vmatprep.subr.bf16.mxu0 %v670
    %1047 = vmatpush1.bf16.msra.mxu0 %v669
    %1048 = vmatprep.subr.bf16.mxu0 %v662
    %1049 = vmatpush1.bf16.msra.mxu0 %v661
    %1050 = vmatprep.subr.bf16.mxu0 %v782
    %1051 = vmatpush2.bf16.msra.mxu0 %v781
    %1052 = vmatprep.subr.bf16.mxu0 %v774
    %1053 = vmatpush2.bf16.msra.mxu0 %v773
    %1054 = vmatprep.subr.bf16.mxu0 %v766
    %1055 = vmatpush2.bf16.msra.mxu0 %v765
    %1056 = vmatprep.subr.bf16.mxu0 %v758
    %1057 = vmatpush2.bf16.msra.mxu0 %v757
    %1058 = vmatprep.subr.bf16.mxu0 %v750
    %1059 = vmatpush2.bf16.msra.mxu0 %v749
    %1060 = vmatprep.subr.bf16.mxu0 %v742
    %1061 = vmatpush2.bf16.msra.mxu0 %v741
    %1062 = vmatprep.subr.bf16.mxu0 %v734
    %1063 = vmatpush2.bf16.msra.mxu0 %v733
    %1064 = vmatprep.subr.bf16.mxu0 %v726
    %1065 = vmatpush2.bf16.msra.mxu0 %v725
    %1066 = vmatprep.mubr.bf16.mxu0 %v268
    %1067 = vmatmul.mubr.bf16.gmra.mxu0 %v267
    %v1068 = vpop.f32.mrf.mxu0
    %v1069 = vadd.f32 0.0, %v1068
    %v1070 = vpop.f32.mrf.mxu0
    %v1071 = vadd.f32 0.0, %v1070
    %v1072 = vpop.f32.mrf.mxu0
    %v1073 = vpop.f32.mrf.mxu0
    %1074 = vdwg.mxu0
    %v1075 = vadd.f32 %v127, %v946
    %v1076 = vadd.f32 %v128, %v948
    %v1077 = vadd.f32 %v129, %v987
    %v1078 = vadd.f32 %v130, %v989
    %v1079 = vadd.f32 %v131, %v1028
    %v1080 = vadd.f32 %v132, %v1030
    %v1081 = vadd.f32 %v133, %v1069
    %v1082 = vadd.f32 %v134, %v1071
    %1083 = vst [vmem:[#allocation2] sm:$0xff] %v1075
    %1084 = vst [vmem:[#allocation2 + $0x8] sm:$0xff] %v1076
    %1085 = vst [vmem:[#allocation2 + $0x10] sm:$0xff] %v1077
    %1086 = vst [vmem:[#allocation2 + $0x18] sm:$0xff] %v1078
    %1087 = vst [vmem:[#allocation2 + $0x20] sm:$0xff] %v1079
    %1088 = vst [vmem:[#allocation2 + $0x28] sm:$0xff] %v1080
    %1089 = vst [vmem:[#allocation2 + $0x30] sm:$0xff] %v1081
    %1090 = vst [vmem:[#allocation2 + $0x38] sm:$0xff] %v1082
    // Predicated region
    $region62: #{tpu_custom_call.1} parent=1 // pred_check
      %p1091 = pneg %p115
    $region63: #{tpu_custom_call.1} parent=1 // pred_check_branch
      %1093 = sbr.rel (%p1091) target = $region65
    $region64: #{tpu_custom_call.1} parent=1 // pred_region
      %v1094 = vld [vmem:[#allocation2] sm:$0xff]
      %v1095 = vld [vmem:[#allocation2 + $0x8] sm:$0xff]
      %v1096 = vld [vmem:[#allocation2 + $0x10] sm:$0xff]
      %v1097 = vld [vmem:[#allocation2 + $0x18] sm:$0xff]
      %v1098 = vld [vmem:[#allocation2 + $0x20] sm:$0xff]
      %v1099 = vld [vmem:[#allocation2 + $0x28] sm:$0xff]
      %v1100 = vld [vmem:[#allocation2 + $0x30] sm:$0xff]
      %v1101 = vld [vmem:[#allocation2 + $0x38] sm:$0xff]
      %v1102 = vld [vmem:[#allocation8] sm:$0xff]
      %v1104 = vlaneseq
      %v1105 = vshrl.u32 %v1104, 7
      %v1106 = vsub.s32 0, %v1105
      %v1107 = vrot.slane %v1102, %v1106
      %v1108 = vlaneseq
      %v1109 = vshrl.u32 %v1108, 7
      %v1110 = vsub.s32 1, %v1109
      %v1111 = vrot.slane %v1102, %v1110
      %v1112 = vlaneseq
      %v1113 = vshrl.u32 %v1112, 7
      %v1114 = vsub.s32 2, %v1113
      %v1115 = vrot.slane %v1102, %v1114
      %v1116 = vlaneseq
      %v1117 = vshrl.u32 %v1116, 7
      %v1118 = vsub.s32 3, %v1117
      %v1119 = vrot.slane %v1102, %v1118
      %v1120 = vlaneseq
      %v1121 = vshrl.u32 %v1120, 7
      %v1122 = vsub.s32 4, %v1121
      %v1123 = vrot.slane %v1102, %v1122
      %v1124 = vlaneseq
      %v1125 = vshrl.u32 %v1124, 7
      %v1126 = vsub.s32 5, %v1125
      %v1127 = vrot.slane %v1102, %v1126
      %v1128 = vlaneseq
      %v1129 = vshrl.u32 %v1128, 7
      %v1130 = vsub.s32 6, %v1129
      %v1131 = vrot.slane %v1102, %v1130
      %v1132 = vlaneseq
      %v1133 = vshrl.u32 %v1132, 7
      %v1134 = vsub.s32 7, %v1133
      %v1135 = vrot.slane %v1102, %v1134
      %v1144 = vadd.f32 %v1094, %v1107
      %v1145 = vadd.f32 %v1095, %v1111
      %v1146 = vadd.f32 %v1096, %v1115
      %v1147 = vadd.f32 %v1097, %v1119
      %v1148 = vadd.f32 %v1098, %v1123
      %v1149 = vadd.f32 %v1099, %v1127
      %v1150 = vadd.f32 %v1100, %v1131
      %v1151 = vadd.f32 %v1101, %v1135
      %v1152 = vpack.c.bf16 %v1144, %v1144
      %v1153 = vpack.c.bf16 %v1145, %v1145
      %v1154 = vpack.c.bf16 %v1146, %v1146
      %v1155 = vpack.c.bf16 %v1147, %v1147
      %v1156 = vpack.c.bf16 %v1148, %v1148
      %v1157 = vpack.c.bf16 %v1149, %v1149
      %v1158 = vpack.c.bf16 %v1150, %v1150
      %v1159 = vpack.c.bf16 %v1151, %v1151
      %v1160 = vld [vmem:[#allocation9] sm:$0xff]
      %v1161 = vld [vmem:[#allocation9 + $0x8] sm:$0xff]
      %v1162 = vld [vmem:[#allocation9 + $0x10] sm:$0xff]
      %v1163 = vld [vmem:[#allocation9 + $0x18] sm:$0xff]
      %v1164 = vld [vmem:[#allocation9 + $0x20] sm:$0xff]
      %v1165 = vld [vmem:[#allocation9 + $0x28] sm:$0xff]
      %v1166 = vld [vmem:[#allocation9 + $0x30] sm:$0xff]
      %v1167 = vld [vmem:[#allocation9 + $0x38] sm:$0xff]
      %v1168 = vld [vmem:[#allocation9 + $0x40] sm:$0xff]
      %v1169 = vld [vmem:[#allocation9 + $0x48] sm:$0xff]
      %v1170 = vld [vmem:[#allocation9 + $0x50] sm:$0xff]
      %v1171 = vld [vmem:[#allocation9 + $0x58] sm:$0xff]
      %v1172 = vld [vmem:[#allocation9 + $0x60] sm:$0xff]
      %v1173 = vld [vmem:[#allocation9 + $0x68] sm:$0xff]
      %v1174 = vld [vmem:[#allocation9 + $0x70] sm:$0xff]
      %v1175 = vld [vmem:[#allocation9 + $0x78] sm:$0xff]
      %v1176 = vld [vmem:[#allocation9 + $0x80] sm:$0xff]
      %v1177 = vld [vmem:[#allocation9 + $0x88] sm:$0xff]
      %v1178 = vld [vmem:[#allocation9 + $0x90] sm:$0xff]
      %v1179 = vld [vmem:[#allocation9 + $0x98] sm:$0xff]
      %v1180 = vld [vmem:[#allocation9 + $0xa0] sm:$0xff]
      %v1181 = vld [vmem:[#allocation9 + $0xa8] sm:$0xff]
      %v1182 = vld [vmem:[#allocation9 + $0xb0] sm:$0xff]
      %v1183 = vld [vmem:[#allocation9 + $0xb8] sm:$0xff]
      %v1184 = vld [vmem:[#allocation9 + $0xc0] sm:$0xff]
      %v1185 = vld [vmem:[#allocation9 + $0xc8] sm:$0xff]
      %v1186 = vld [vmem:[#allocation9 + $0xd0] sm:$0xff]
      %v1187 = vld [vmem:[#allocation9 + $0xd8] sm:$0xff]
      %v1188 = vld [vmem:[#allocation9 + $0xe0] sm:$0xff]
      %v1189 = vld [vmem:[#allocation9 + $0xe8] sm:$0xff]
      %v1190 = vld [vmem:[#allocation9 + $0xf0] sm:$0xff]
      %v1191 = vld [vmem:[#allocation9 + $0xf8] sm:$0xff]
      %v1192 = vld [vmem:[#allocation9 + $0x100] sm:$0xff]
      %v1193 = vld [vmem:[#allocation9 + $0x108] sm:$0xff]
      %v1194 = vld [vmem:[#allocation9 + $0x110] sm:$0xff]
      %v1195 = vld [vmem:[#allocation9 + $0x118] sm:$0xff]
      %v1196 = vld [vmem:[#allocation9 + $0x120] sm:$0xff]
      %v1197 = vld [vmem:[#allocation9 + $0x128] sm:$0xff]
      %v1198 = vld [vmem:[#allocation9 + $0x130] sm:$0xff]
      %v1199 = vld [vmem:[#allocation9 + $0x138] sm:$0xff]
      %v1200 = vld [vmem:[#allocation9 + $0x140] sm:$0xff]
      %v1201 = vld [vmem:[#allocation9 + $0x148] sm:$0xff]
      %v1202 = vld [vmem:[#allocation9 + $0x150] sm:$0xff]
      %v1203 = vld [vmem:[#allocation9 + $0x158] sm:$0xff]
      %v1204 = vld [vmem:[#allocation9 + $0x160] sm:$0xff]
      %v1205 = vld [vmem:[#allocation9 + $0x168] sm:$0xff]
      %v1206 = vld [vmem:[#allocation9 + $0x170] sm:$0xff]
      %v1207 = vld [vmem:[#allocation9 + $0x178] sm:$0xff]
      %v1208 = vld [vmem:[#allocation9 + $0x180] sm:$0xff]
      %v1209 = vld [vmem:[#allocation9 + $0x188] sm:$0xff]
      %v1210 = vld [vmem:[#allocation9 + $0x190] sm:$0xff]
      %v1211 = vld [vmem:[#allocation9 + $0x198] sm:$0xff]
      %v1212 = vld [vmem:[#allocation9 + $0x1a0] sm:$0xff]
      %v1213 = vld [vmem:[#allocation9 + $0x1a8] sm:$0xff]
      %v1214 = vld [vmem:[#allocation9 + $0x1b0] sm:$0xff]
      %v1215 = vld [vmem:[#allocation9 + $0x1b8] sm:$0xff]
      %v1216 = vld [vmem:[#allocation9 + $0x1c0] sm:$0xff]
      %v1217 = vld [vmem:[#allocation9 + $0x1c8] sm:$0xff]
      %v1218 = vld [vmem:[#allocation9 + $0x1d0] sm:$0xff]
      %v1219 = vld [vmem:[#allocation9 + $0x1d8] sm:$0xff]
      %v1220 = vld [vmem:[#allocation9 + $0x1e0] sm:$0xff]
      %v1221 = vld [vmem:[#allocation9 + $0x1e8] sm:$0xff]
      %v1222 = vld [vmem:[#allocation9 + $0x1f0] sm:$0xff]
      %v1223 = vld [vmem:[#allocation9 + $0x1f8] sm:$0xff]
      %v1224 = vld [vmem:[#allocation9 + $0x200] sm:$0xff]
      %v1225 = vld [vmem:[#allocation9 + $0x208] sm:$0xff]
      %v1226 = vld [vmem:[#allocation9 + $0x210] sm:$0xff]
      %v1227 = vld [vmem:[#allocation9 + $0x218] sm:$0xff]
      %v1228 = vld [vmem:[#allocation9 + $0x220] sm:$0xff]
      %v1229 = vld [vmem:[#allocation9 + $0x228] sm:$0xff]
      %v1230 = vld [vmem:[#allocation9 + $0x230] sm:$0xff]
      %v1231 = vld [vmem:[#allocation9 + $0x238] sm:$0xff]
      %v1232 = vld [vmem:[#allocation9 + $0x240] sm:$0xff]
      %v1233 = vld [vmem:[#allocation9 + $0x248] sm:$0xff]
      %v1234 = vld [vmem:[#allocation9 + $0x250] sm:$0xff]
      %v1235 = vld [vmem:[#allocation9 + $0x258] sm:$0xff]
      %v1236 = vld [vmem:[#allocation9 + $0x260] sm:$0xff]
      %v1237 = vld [vmem:[#allocation9 + $0x268] sm:$0xff]
      %v1238 = vld [vmem:[#allocation9 + $0x270] sm:$0xff]
      %v1239 = vld [vmem:[#allocation9 + $0x278] sm:$0xff]
      %v1240 = vld [vmem:[#allocation9 + $0x280] sm:$0xff]
      %v1241 = vld [vmem:[#allocation9 + $0x288] sm:$0xff]
      %v1242 = vld [vmem:[#allocation9 + $0x290] sm:$0xff]
      %v1243 = vld [vmem:[#allocation9 + $0x298] sm:$0xff]
      %v1244 = vld [vmem:[#allocation9 + $0x2a0] sm:$0xff]
      %v1245 = vld [vmem:[#allocation9 + $0x2a8] sm:$0xff]
      %v1246 = vld [vmem:[#allocation9 + $0x2b0] sm:$0xff]
      %v1247 = vld [vmem:[#allocation9 + $0x2b8] sm:$0xff]
      %v1248 = vld [vmem:[#allocation9 + $0x2c0] sm:$0xff]
      %v1249 = vld [vmem:[#allocation9 + $0x2c8] sm:$0xff]
      %v1250 = vld [vmem:[#allocation9 + $0x2d0] sm:$0xff]
      %v1251 = vld [vmem:[#allocation9 + $0x2d8] sm:$0xff]
      %v1252 = vld [vmem:[#allocation9 + $0x2e0] sm:$0xff]
      %v1253 = vld [vmem:[#allocation9 + $0x2e8] sm:$0xff]
      %v1254 = vld [vmem:[#allocation9 + $0x2f0] sm:$0xff]
      %v1255 = vld [vmem:[#allocation9 + $0x2f8] sm:$0xff]
      %v1256 = vld [vmem:[#allocation9 + $0x300] sm:$0xff]
      %v1257 = vld [vmem:[#allocation9 + $0x308] sm:$0xff]
      %v1258 = vld [vmem:[#allocation9 + $0x310] sm:$0xff]
      %v1259 = vld [vmem:[#allocation9 + $0x318] sm:$0xff]
      %v1260 = vld [vmem:[#allocation9 + $0x320] sm:$0xff]
      %v1261 = vld [vmem:[#allocation9 + $0x328] sm:$0xff]
      %v1262 = vld [vmem:[#allocation9 + $0x330] sm:$0xff]
      %v1263 = vld [vmem:[#allocation9 + $0x338] sm:$0xff]
      %v1264 = vld [vmem:[#allocation9 + $0x340] sm:$0xff]
      %v1265 = vld [vmem:[#allocation9 + $0x348] sm:$0xff]
      %v1266 = vld [vmem:[#allocation9 + $0x350] sm:$0xff]
      %v1267 = vld [vmem:[#allocation9 + $0x358] sm:$0xff]
      %v1268 = vld [vmem:[#allocation9 + $0x360] sm:$0xff]
      %v1269 = vld [vmem:[#allocation9 + $0x368] sm:$0xff]
      %v1270 = vld [vmem:[#allocation9 + $0x370] sm:$0xff]
      %v1271 = vld [vmem:[#allocation9 + $0x378] sm:$0xff]
      %v1272 = vld [vmem:[#allocation9 + $0x380] sm:$0xff]
      %v1273 = vld [vmem:[#allocation9 + $0x388] sm:$0xff]
      %v1274 = vld [vmem:[#allocation9 + $0x390] sm:$0xff]
      %v1275 = vld [vmem:[#allocation9 + $0x398] sm:$0xff]
      %v1276 = vld [vmem:[#allocation9 + $0x3a0] sm:$0xff]
      %v1277 = vld [vmem:[#allocation9 + $0x3a8] sm:$0xff]
      %v1278 = vld [vmem:[#allocation9 + $0x3b0] sm:$0xff]
      %v1279 = vld [vmem:[#allocation9 + $0x3b8] sm:$0xff]
      %v1280 = vld [vmem:[#allocation9 + $0x3c0] sm:$0xff]
      %v1281 = vld [vmem:[#allocation9 + $0x3c8] sm:$0xff]
      %v1282 = vld [vmem:[#allocation9 + $0x3d0] sm:$0xff]
      %v1283 = vld [vmem:[#allocation9 + $0x3d8] sm:$0xff]
      %v1284 = vld [vmem:[#allocation9 + $0x3e0] sm:$0xff]
      %v1285 = vld [vmem:[#allocation9 + $0x3e8] sm:$0xff]
      %v1286 = vld [vmem:[#allocation9 + $0x3f0] sm:$0xff]
      %v1287 = vld [vmem:[#allocation9 + $0x3f8] sm:$0xff]
      %v1288 = vld [vmem:[#allocation9 + $0x400] sm:$0xff]
      %v1289 = vld [vmem:[#allocation9 + $0x408] sm:$0xff]
      %v1290 = vld [vmem:[#allocation9 + $0x410] sm:$0xff]
      %v1291 = vld [vmem:[#allocation9 + $0x418] sm:$0xff]
      %v1292 = vld [vmem:[#allocation9 + $0x420] sm:$0xff]
      %v1293 = vld [vmem:[#allocation9 + $0x428] sm:$0xff]
      %v1294 = vld [vmem:[#allocation9 + $0x430] sm:$0xff]
      %v1295 = vld [vmem:[#allocation9 + $0x438] sm:$0xff]
      %v1296 = vld [vmem:[#allocation9 + $0x440] sm:$0xff]
      %v1297 = vld [vmem:[#allocation9 + $0x448] sm:$0xff]
      %v1298 = vld [vmem:[#allocation9 + $0x450] sm:$0xff]
      %v1299 = vld [vmem:[#allocation9 + $0x458] sm:$0xff]
      %v1300 = vld [vmem:[#allocation9 + $0x460] sm:$0xff]
      %v1301 = vld [vmem:[#allocation9 + $0x468] sm:$0xff]
      %v1302 = vld [vmem:[#allocation9 + $0x470] sm:$0xff]
      %v1303 = vld [vmem:[#allocation9 + $0x478] sm:$0xff]
      %v1304 = vld [vmem:[#allocation9 + $0x480] sm:$0xff]
      %v1305 = vld [vmem:[#allocation9 + $0x488] sm:$0xff]
      %v1306 = vld [vmem:[#allocation9 + $0x490] sm:$0xff]
      %v1307 = vld [vmem:[#allocation9 + $0x498] sm:$0xff]
      %v1308 = vld [vmem:[#allocation9 + $0x4a0] sm:$0xff]
      %v1309 = vld [vmem:[#allocation9 + $0x4a8] sm:$0xff]
      %v1310 = vld [vmem:[#allocation9 + $0x4b0] sm:$0xff]
      %v1311 = vld [vmem:[#allocation9 + $0x4b8] sm:$0xff]
      %v1312 = vld [vmem:[#allocation9 + $0x4c0] sm:$0xff]
      %v1313 = vld [vmem:[#allocation9 + $0x4c8] sm:$0xff]
      %v1314 = vld [vmem:[#allocation9 + $0x4d0] sm:$0xff]
      %v1315 = vld [vmem:[#allocation9 + $0x4d8] sm:$0xff]
      %v1316 = vld [vmem:[#allocation9 + $0x4e0] sm:$0xff]
      %v1317 = vld [vmem:[#allocation9 + $0x4e8] sm:$0xff]
      %v1318 = vld [vmem:[#allocation9 + $0x4f0] sm:$0xff]
      %v1319 = vld [vmem:[#allocation9 + $0x4f8] sm:$0xff]
      %v1320 = vld [vmem:[#allocation9 + $0x500] sm:$0xff]
      %v1321 = vld [vmem:[#allocation9 + $0x508] sm:$0xff]
      %v1322 = vld [vmem:[#allocation9 + $0x510] sm:$0xff]
      %v1323 = vld [vmem:[#allocation9 + $0x518] sm:$0xff]
      %v1324 = vld [vmem:[#allocation9 + $0x520] sm:$0xff]
      %v1325 = vld [vmem:[#allocation9 + $0x528] sm:$0xff]
      %v1326 = vld [vmem:[#allocation9 + $0x530] sm:$0xff]
      %v1327 = vld [vmem:[#allocation9 + $0x538] sm:$0xff]
      %v1328 = vld [vmem:[#allocation9 + $0x540] sm:$0xff]
      %v1329 = vld [vmem:[#allocation9 + $0x548] sm:$0xff]
      %v1330 = vld [vmem:[#allocation9 + $0x550] sm:$0xff]
      %v1331 = vld [vmem:[#allocation9 + $0x558] sm:$0xff]
      %v1332 = vld [vmem:[#allocation9 + $0x560] sm:$0xff]
      %v1333 = vld [vmem:[#allocation9 + $0x568] sm:$0xff]
      %v1334 = vld [vmem:[#allocation9 + $0x570] sm:$0xff]
      %v1335 = vld [vmem:[#allocation9 + $0x578] sm:$0xff]
      %v1336 = vld [vmem:[#allocation9 + $0x580] sm:$0xff]
      %v1337 = vld [vmem:[#allocation9 + $0x588] sm:$0xff]
      %v1338 = vld [vmem:[#allocation9 + $0x590] sm:$0xff]
      %v1339 = vld [vmem:[#allocation9 + $0x598] sm:$0xff]
      %v1340 = vld [vmem:[#allocation9 + $0x5a0] sm:$0xff]
      %v1341 = vld [vmem:[#allocation9 + $0x5a8] sm:$0xff]
      %v1342 = vld [vmem:[#allocation9 + $0x5b0] sm:$0xff]
      %v1343 = vld [vmem:[#allocation9 + $0x5b8] sm:$0xff]
      %v1344 = vld [vmem:[#allocation9 + $0x5c0] sm:$0xff]
      %v1345 = vld [vmem:[#allocation9 + $0x5c8] sm:$0xff]
      %v1346 = vld [vmem:[#allocation9 + $0x5d0] sm:$0xff]
      %v1347 = vld [vmem:[#allocation9 + $0x5d8] sm:$0xff]
      %v1348 = vld [vmem:[#allocation9 + $0x5e0] sm:$0xff]
      %v1349 = vld [vmem:[#allocation9 + $0x5e8] sm:$0xff]
      %v1350 = vld [vmem:[#allocation9 + $0x5f0] sm:$0xff]
      %v1351 = vld [vmem:[#allocation9 + $0x5f8] sm:$0xff]
      %v1352 = vld [vmem:[#allocation9 + $0x600] sm:$0xff]
      %v1353 = vld [vmem:[#allocation9 + $0x608] sm:$0xff]
      %v1354 = vld [vmem:[#allocation9 + $0x610] sm:$0xff]
      %v1355 = vld [vmem:[#allocation9 + $0x618] sm:$0xff]
      %v1356 = vld [vmem:[#allocation9 + $0x620] sm:$0xff]
      %v1357 = vld [vmem:[#allocation9 + $0x628] sm:$0xff]
      %v1358 = vld [vmem:[#allocation9 + $0x630] sm:$0xff]
      %v1359 = vld [vmem:[#allocation9 + $0x638] sm:$0xff]
      %v1360 = vld [vmem:[#allocation9 + $0x640] sm:$0xff]
      %v1361 = vld [vmem:[#allocation9 + $0x648] sm:$0xff]
      %v1362 = vld [vmem:[#allocation9 + $0x650] sm:$0xff]
      %v1363 = vld [vmem:[#allocation9 + $0x658] sm:$0xff]
      %v1364 = vld [vmem:[#allocation9 + $0x660] sm:$0xff]
      %v1365 = vld [vmem:[#allocation9 + $0x668] sm:$0xff]
      %v1366 = vld [vmem:[#allocation9 + $0x670] sm:$0xff]
      %v1367 = vld [vmem:[#allocation9 + $0x678] sm:$0xff]
      %v1368 = vld [vmem:[#allocation9 + $0x680] sm:$0xff]
      %v1369 = vld [vmem:[#allocation9 + $0x688] sm:$0xff]
      %v1370 = vld [vmem:[#allocation9 + $0x690] sm:$0xff]
      %v1371 = vld [vmem:[#allocation9 + $0x698] sm:$0xff]
      %v1372 = vld [vmem:[#allocation9 + $0x6a0] sm:$0xff]
      %v1373 = vld [vmem:[#allocation9 + $0x6a8] sm:$0xff]
      %v1374 = vld [vmem:[#allocation9 + $0x6b0] sm:$0xff]
      %v1375 = vld [vmem:[#allocation9 + $0x6b8] sm:$0xff]
      %v1376 = vld [vmem:[#allocation9 + $0x6c0] sm:$0xff]
      %v1377 = vld [vmem:[#allocation9 + $0x6c8] sm:$0xff]
      %v1378 = vld [vmem:[#allocation9 + $0x6d0] sm:$0xff]
      %v1379 = vld [vmem:[#allocation9 + $0x6d8] sm:$0xff]
      %v1380 = vld [vmem:[#allocation9 + $0x6e0] sm:$0xff]
      %v1381 = vld [vmem:[#allocation9 + $0x6e8] sm:$0xff]
      %v1382 = vld [vmem:[#allocation9 + $0x6f0] sm:$0xff]
      %v1383 = vld [vmem:[#allocation9 + $0x6f8] sm:$0xff]
      %v1384 = vld [vmem:[#allocation9 + $0x700] sm:$0xff]
      %v1385 = vld [vmem:[#allocation9 + $0x708] sm:$0xff]
      %v1386 = vld [vmem:[#allocation9 + $0x710] sm:$0xff]
      %v1387 = vld [vmem:[#allocation9 + $0x718] sm:$0xff]
      %v1388 = vld [vmem:[#allocation9 + $0x720] sm:$0xff]
      %v1389 = vld [vmem:[#allocation9 + $0x728] sm:$0xff]
      %v1390 = vld [vmem:[#allocation9 + $0x730] sm:$0xff]
      %v1391 = vld [vmem:[#allocation9 + $0x738] sm:$0xff]
      %v1392 = vld [vmem:[#allocation9 + $0x740] sm:$0xff]
      %v1393 = vld [vmem:[#allocation9 + $0x748] sm:$0xff]
      %v1394 = vld [vmem:[#allocation9 + $0x750] sm:$0xff]
      %v1395 = vld [vmem:[#allocation9 + $0x758] sm:$0xff]
      %v1396 = vld [vmem:[#allocation9 + $0x760] sm:$0xff]
      %v1397 = vld [vmem:[#allocation9 + $0x768] sm:$0xff]
      %v1398 = vld [vmem:[#allocation9 + $0x770] sm:$0xff]
      %v1399 = vld [vmem:[#allocation9 + $0x778] sm:$0xff]
      %v1400 = vld [vmem:[#allocation9 + $0x780] sm:$0xff]
      %v1401 = vld [vmem:[#allocation9 + $0x788] sm:$0xff]
      %v1402 = vld [vmem:[#allocation9 + $0x790] sm:$0xff]
      %v1403 = vld [vmem:[#allocation9 + $0x798] sm:$0xff]
      %v1404 = vld [vmem:[#allocation9 + $0x7a0] sm:$0xff]
      %v1405 = vld [vmem:[#allocation9 + $0x7a8] sm:$0xff]
      %v1406 = vld [vmem:[#allocation9 + $0x7b0] sm:$0xff]
      %v1407 = vld [vmem:[#allocation9 + $0x7b8] sm:$0xff]
      %v1408 = vld [vmem:[#allocation9 + $0x7c0] sm:$0xff]
      %v1409 = vld [vmem:[#allocation9 + $0x7c8] sm:$0xff]
      %v1410 = vld [vmem:[#allocation9 + $0x7d0] sm:$0xff]
      %v1411 = vld [vmem:[#allocation9 + $0x7d8] sm:$0xff]
      %v1412 = vld [vmem:[#allocation9 + $0x7e0] sm:$0xff]
      %v1413 = vld [vmem:[#allocation9 + $0x7e8] sm:$0xff]
      %v1414 = vld [vmem:[#allocation9 + $0x7f0] sm:$0xff]
      %v1415 = vld [vmem:[#allocation9 + $0x7f8] sm:$0xff]
      %v1416 = vld [vmem:[#allocation9 + $0x800] sm:$0xff]
      %v1417 = vld [vmem:[#allocation9 + $0x808] sm:$0xff]
      %v1418 = vld [vmem:[#allocation9 + $0x810] sm:$0xff]
      %v1419 = vld [vmem:[#allocation9 + $0x818] sm:$0xff]
      %v1420 = vld [vmem:[#allocation9 + $0x820] sm:$0xff]
      %v1421 = vld [vmem:[#allocation9 + $0x828] sm:$0xff]
      %v1422 = vld [vmem:[#allocation9 + $0x830] sm:$0xff]
      %v1423 = vld [vmem:[#allocation9 + $0x838] sm:$0xff]
      %v1424 = vld [vmem:[#allocation9 + $0x840] sm:$0xff]
      %v1425 = vld [vmem:[#allocation9 + $0x848] sm:$0xff]
      %v1426 = vld [vmem:[#allocation9 + $0x850] sm:$0xff]
      %v1427 = vld [vmem:[#allocation9 + $0x858] sm:$0xff]
      %v1428 = vld [vmem:[#allocation9 + $0x860] sm:$0xff]
      %v1429 = vld [vmem:[#allocation9 + $0x868] sm:$0xff]
      %v1430 = vld [vmem:[#allocation9 + $0x870] sm:$0xff]
      %v1431 = vld [vmem:[#allocation9 + $0x878] sm:$0xff]
      %v1432 = vld [vmem:[#allocation9 + $0x880] sm:$0xff]
      %v1433 = vld [vmem:[#allocation9 + $0x888] sm:$0xff]
      %v1434 = vld [vmem:[#allocation9 + $0x890] sm:$0xff]
      %v1435 = vld [vmem:[#allocation9 + $0x898] sm:$0xff]
      %v1436 = vld [vmem:[#allocation9 + $0x8a0] sm:$0xff]
      %v1437 = vld [vmem:[#allocation9 + $0x8a8] sm:$0xff]
      %v1438 = vld [vmem:[#allocation9 + $0x8b0] sm:$0xff]
      %v1439 = vld [vmem:[#allocation9 + $0x8b8] sm:$0xff]
      %v1440 = vld [vmem:[#allocation9 + $0x8c0] sm:$0xff]
      %v1441 = vld [vmem:[#allocation9 + $0x8c8] sm:$0xff]
      %v1442 = vld [vmem:[#allocation9 + $0x8d0] sm:$0xff]
      %v1443 = vld [vmem:[#allocation9 + $0x8d8] sm:$0xff]
      %v1444 = vld [vmem:[#allocation9 + $0x8e0] sm:$0xff]
      %v1445 = vld [vmem:[#allocation9 + $0x8e8] sm:$0xff]
      %v1446 = vld [vmem:[#allocation9 + $0x8f0] sm:$0xff]
      %v1447 = vld [vmem:[#allocation9 + $0x8f8] sm:$0xff]
      %v1448 = vld [vmem:[#allocation9 + $0x900] sm:$0xff]
      %v1449 = vld [vmem:[#allocation9 + $0x908] sm:$0xff]
      %v1450 = vld [vmem:[#allocation9 + $0x910] sm:$0xff]
      %v1451 = vld [vmem:[#allocation9 + $0x918] sm:$0xff]
      %v1452 = vld [vmem:[#allocation9 + $0x920] sm:$0xff]
      %v1453 = vld [vmem:[#allocation9 + $0x928] sm:$0xff]
      %v1454 = vld [vmem:[#allocation9 + $0x930] sm:$0xff]
      %v1455 = vld [vmem:[#allocation9 + $0x938] sm:$0xff]
      %v1456 = vld [vmem:[#allocation9 + $0x940] sm:$0xff]
      %v1457 = vld [vmem:[#allocation9 + $0x948] sm:$0xff]
      %v1458 = vld [vmem:[#allocation9 + $0x950] sm:$0xff]
      %v1459 = vld [vmem:[#allocation9 + $0x958] sm:$0xff]
      %v1460 = vld [vmem:[#allocation9 + $0x960] sm:$0xff]
      %v1461 = vld [vmem:[#allocation9 + $0x968] sm:$0xff]
      %v1462 = vld [vmem:[#allocation9 + $0x970] sm:$0xff]
      %v1463 = vld [vmem:[#allocation9 + $0x978] sm:$0xff]
      %v1464 = vld [vmem:[#allocation9 + $0x980] sm:$0xff]
      %v1465 = vld [vmem:[#allocation9 + $0x988] sm:$0xff]
      %v1466 = vld [vmem:[#allocation9 + $0x990] sm:$0xff]
      %v1467 = vld [vmem:[#allocation9 + $0x998] sm:$0xff]
      %v1468 = vld [vmem:[#allocation9 + $0x9a0] sm:$0xff]
      %v1469 = vld [vmem:[#allocation9 + $0x9a8] sm:$0xff]
      %v1470 = vld [vmem:[#allocation9 + $0x9b0] sm:$0xff]
      %v1471 = vld [vmem:[#allocation9 + $0x9b8] sm:$0xff]
      %v1472 = vld [vmem:[#allocation9 + $0x9c0] sm:$0xff]
      %v1473 = vld [vmem:[#allocation9 + $0x9c8] sm:$0xff]
      %v1474 = vld [vmem:[#allocation9 + $0x9d0] sm:$0xff]
      %v1475 = vld [vmem:[#allocation9 + $0x9d8] sm:$0xff]
      %v1476 = vld [vmem:[#allocation9 + $0x9e0] sm:$0xff]
      %v1477 = vld [vmem:[#allocation9 + $0x9e8] sm:$0xff]
      %v1478 = vld [vmem:[#allocation9 + $0x9f0] sm:$0xff]
      %v1479 = vld [vmem:[#allocation9 + $0x9f8] sm:$0xff]
      %v1480 = vld [vmem:[#allocation9 + $0xa00] sm:$0xff]
      %v1481 = vld [vmem:[#allocation9 + $0xa08] sm:$0xff]
      %v1482 = vld [vmem:[#allocation9 + $0xa10] sm:$0xff]
      %v1483 = vld [vmem:[#allocation9 + $0xa18] sm:$0xff]
      %v1484 = vld [vmem:[#allocation9 + $0xa20] sm:$0xff]
      %v1485 = vld [vmem:[#allocation9 + $0xa28] sm:$0xff]
      %v1486 = vld [vmem:[#allocation9 + $0xa30] sm:$0xff]
      %v1487 = vld [vmem:[#allocation9 + $0xa38] sm:$0xff]
      %v1488 = vld [vmem:[#allocation9 + $0xa40] sm:$0xff]
      %v1489 = vld [vmem:[#allocation9 + $0xa48] sm:$0xff]
      %v1490 = vld [vmem:[#allocation9 + $0xa50] sm:$0xff]
      %v1491 = vld [vmem:[#allocation9 + $0xa58] sm:$0xff]
      %v1492 = vld [vmem:[#allocation9 + $0xa60] sm:$0xff]
      %v1493 = vld [vmem:[#allocation9 + $0xa68] sm:$0xff]
      %v1494 = vld [vmem:[#allocation9 + $0xa70] sm:$0xff]
      %v1495 = vld [vmem:[#allocation9 + $0xa78] sm:$0xff]
      %v1496 = vld [vmem:[#allocation9 + $0xa80] sm:$0xff]
      %v1497 = vld [vmem:[#allocation9 + $0xa88] sm:$0xff]
      %v1498 = vld [vmem:[#allocation9 + $0xa90] sm:$0xff]
      %v1499 = vld [vmem:[#allocation9 + $0xa98] sm:$0xff]
      %v1500 = vld [vmem:[#allocation9 + $0xaa0] sm:$0xff]
      %v1501 = vld [vmem:[#allocation9 + $0xaa8] sm:$0xff]
      %v1502 = vld [vmem:[#allocation9 + $0xab0] sm:$0xff]
      %v1503 = vld [vmem:[#allocation9 + $0xab8] sm:$0xff]
      %v1504 = vld [vmem:[#allocation9 + $0xac0] sm:$0xff]
      %v1505 = vld [vmem:[#allocation9 + $0xac8] sm:$0xff]
      %v1506 = vld [vmem:[#allocation9 + $0xad0] sm:$0xff]
      %v1507 = vld [vmem:[#allocation9 + $0xad8] sm:$0xff]
      %v1508 = vld [vmem:[#allocation9 + $0xae0] sm:$0xff]
      %v1509 = vld [vmem:[#allocation9 + $0xae8] sm:$0xff]
      %v1510 = vld [vmem:[#allocation9 + $0xaf0] sm:$0xff]
      %v1511 = vld [vmem:[#allocation9 + $0xaf8] sm:$0xff]
      %v1512 = vld [vmem:[#allocation9 + $0xb00] sm:$0xff]
      %v1513 = vld [vmem:[#allocation9 + $0xb08] sm:$0xff]
      %v1514 = vld [vmem:[#allocation9 + $0xb10] sm:$0xff]
      %v1515 = vld [vmem:[#allocation9 + $0xb18] sm:$0xff]
      %v1516 = vld [vmem:[#allocation9 + $0xb20] sm:$0xff]
      %v1517 = vld [vmem:[#allocation9 + $0xb28] sm:$0xff]
      %v1518 = vld [vmem:[#allocation9 + $0xb30] sm:$0xff]
      %v1519 = vld [vmem:[#allocation9 + $0xb38] sm:$0xff]
      %v1520 = vld [vmem:[#allocation9 + $0xb40] sm:$0xff]
      %v1521 = vld [vmem:[#allocation9 + $0xb48] sm:$0xff]
      %v1522 = vld [vmem:[#allocation9 + $0xb50] sm:$0xff]
      %v1523 = vld [vmem:[#allocation9 + $0xb58] sm:$0xff]
      %v1524 = vld [vmem:[#allocation9 + $0xb60] sm:$0xff]
      %v1525 = vld [vmem:[#allocation9 + $0xb68] sm:$0xff]
      %v1526 = vld [vmem:[#allocation9 + $0xb70] sm:$0xff]
      %v1527 = vld [vmem:[#allocation9 + $0xb78] sm:$0xff]
      %v1528 = vld [vmem:[#allocation9 + $0xb80] sm:$0xff]
      %v1529 = vld [vmem:[#allocation9 + $0xb88] sm:$0xff]
      %v1530 = vld [vmem:[#allocation9 + $0xb90] sm:$0xff]
      %v1531 = vld [vmem:[#allocation9 + $0xb98] sm:$0xff]
      %v1532 = vld [vmem:[#allocation9 + $0xba0] sm:$0xff]
      %v1533 = vld [vmem:[#allocation9 + $0xba8] sm:$0xff]
      %v1534 = vld [vmem:[#allocation9 + $0xbb0] sm:$0xff]
      %v1535 = vld [vmem:[#allocation9 + $0xbb8] sm:$0xff]
      %v1536 = vld [vmem:[#allocation9 + $0xbc0] sm:$0xff]
      %v1537 = vld [vmem:[#allocation9 + $0xbc8] sm:$0xff]
      %v1538 = vld [vmem:[#allocation9 + $0xbd0] sm:$0xff]
      %v1539 = vld [vmem:[#allocation9 + $0xbd8] sm:$0xff]
      %v1540 = vld [vmem:[#allocation9 + $0xbe0] sm:$0xff]
      %v1541 = vld [vmem:[#allocation9 + $0xbe8] sm:$0xff]
      %v1542 = vld [vmem:[#allocation9 + $0xbf0] sm:$0xff]
      %v1543 = vld [vmem:[#allocation9 + $0xbf8] sm:$0xff]
      %v1544 = vld [vmem:[#allocation9 + $0xc00] sm:$0xff]
      %v1545 = vld [vmem:[#allocation9 + $0xc08] sm:$0xff]
      %v1546 = vld [vmem:[#allocation9 + $0xc10] sm:$0xff]
      %v1547 = vld [vmem:[#allocation9 + $0xc18] sm:$0xff]
      %v1548 = vld [vmem:[#allocation9 + $0xc20] sm:$0xff]
      %v1549 = vld [vmem:[#allocation9 + $0xc28] sm:$0xff]
      %v1550 = vld [vmem:[#allocation9 + $0xc30] sm:$0xff]
      %v1551 = vld [vmem:[#allocation9 + $0xc38] sm:$0xff]
      %v1552 = vld [vmem:[#allocation9 + $0xc40] sm:$0xff]
      %v1553 = vld [vmem:[#allocation9 + $0xc48] sm:$0xff]
      %v1554 = vld [vmem:[#allocation9 + $0xc50] sm:$0xff]
      %v1555 = vld [vmem:[#allocation9 + $0xc58] sm:$0xff]
      %v1556 = vld [vmem:[#allocation9 + $0xc60] sm:$0xff]
      %v1557 = vld [vmem:[#allocation9 + $0xc68] sm:$0xff]
      %v1558 = vld [vmem:[#allocation9 + $0xc70] sm:$0xff]
      %v1559 = vld [vmem:[#allocation9 + $0xc78] sm:$0xff]
      %v1560 = vld [vmem:[#allocation9 + $0xc80] sm:$0xff]
      %v1561 = vld [vmem:[#allocation9 + $0xc88] sm:$0xff]
      %v1562 = vld [vmem:[#allocation9 + $0xc90] sm:$0xff]
      %v1563 = vld [vmem:[#allocation9 + $0xc98] sm:$0xff]
      %v1564 = vld [vmem:[#allocation9 + $0xca0] sm:$0xff]
      %v1565 = vld [vmem:[#allocation9 + $0xca8] sm:$0xff]
      %v1566 = vld [vmem:[#allocation9 + $0xcb0] sm:$0xff]
      %v1567 = vld [vmem:[#allocation9 + $0xcb8] sm:$0xff]
      %v1568 = vld [vmem:[#allocation9 + $0xcc0] sm:$0xff]
      %v1569 = vld [vmem:[#allocation9 + $0xcc8] sm:$0xff]
      %v1570 = vld [vmem:[#allocation9 + $0xcd0] sm:$0xff]
      %v1571 = vld [vmem:[#allocation9 + $0xcd8] sm:$0xff]
      %v1572 = vld [vmem:[#allocation9 + $0xce0] sm:$0xff]
      %v1573 = vld [vmem:[#allocation9 + $0xce8] sm:$0xff]
      %v1574 = vld [vmem:[#allocation9 + $0xcf0] sm:$0xff]
      %v1575 = vld [vmem:[#allocation9 + $0xcf8] sm:$0xff]
      %v1576 = vld [vmem:[#allocation9 + $0xd00] sm:$0xff]
      %v1577 = vld [vmem:[#allocation9 + $0xd08] sm:$0xff]
      %v1578 = vld [vmem:[#allocation9 + $0xd10] sm:$0xff]
      %v1579 = vld [vmem:[#allocation9 + $0xd18] sm:$0xff]
      %v1580 = vld [vmem:[#allocation9 + $0xd20] sm:$0xff]
      %v1581 = vld [vmem:[#allocation9 + $0xd28] sm:$0xff]
      %v1582 = vld [vmem:[#allocation9 + $0xd30] sm:$0xff]
      %v1583 = vld [vmem:[#allocation9 + $0xd38] sm:$0xff]
      %v1584 = vld [vmem:[#allocation9 + $0xd40] sm:$0xff]
      %v1585 = vld [vmem:[#allocation9 + $0xd48] sm:$0xff]
      %v1586 = vld [vmem:[#allocation9 + $0xd50] sm:$0xff]
      %v1587 = vld [vmem:[#allocation9 + $0xd58] sm:$0xff]
      %v1588 = vld [vmem:[#allocation9 + $0xd60] sm:$0xff]
      %v1589 = vld [vmem:[#allocation9 + $0xd68] sm:$0xff]
      %v1590 = vld [vmem:[#allocation9 + $0xd70] sm:$0xff]
      %v1591 = vld [vmem:[#allocation9 + $0xd78] sm:$0xff]
      %v1592 = vld [vmem:[#allocation9 + $0xd80] sm:$0xff]
      %v1593 = vld [vmem:[#allocation9 + $0xd88] sm:$0xff]
      %v1594 = vld [vmem:[#allocation9 + $0xd90] sm:$0xff]
      %v1595 = vld [vmem:[#allocation9 + $0xd98] sm:$0xff]
      %v1596 = vld [vmem:[#allocation9 + $0xda0] sm:$0xff]
      %v1597 = vld [vmem:[#allocation9 + $0xda8] sm:$0xff]
      %v1598 = vld [vmem:[#allocation9 + $0xdb0] sm:$0xff]
      %v1599 = vld [vmem:[#allocation9 + $0xdb8] sm:$0xff]
      %v1600 = vld [vmem:[#allocation9 + $0xdc0] sm:$0xff]
      %v1601 = vld [vmem:[#allocation9 + $0xdc8] sm:$0xff]
      %v1602 = vld [vmem:[#allocation9 + $0xdd0] sm:$0xff]
      %v1603 = vld [vmem:[#allocation9 + $0xdd8] sm:$0xff]
      %v1604 = vld [vmem:[#allocation9 + $0xde0] sm:$0xff]
      %v1605 = vld [vmem:[#allocation9 + $0xde8] sm:$0xff]
      %v1606 = vld [vmem:[#allocation9 + $0xdf0] sm:$0xff]
      %v1607 = vld [vmem:[#allocation9 + $0xdf8] sm:$0xff]
      %v1608 = vld [vmem:[#allocation9 + $0xe00] sm:$0xff]
      %v1609 = vld [vmem:[#allocation9 + $0xe08] sm:$0xff]
      %v1610 = vld [vmem:[#allocation9 + $0xe10] sm:$0xff]
      %v1611 = vld [vmem:[#allocation9 + $0xe18] sm:$0xff]
      %v1612 = vld [vmem:[#allocation9 + $0xe20] sm:$0xff]
      %v1613 = vld [vmem:[#allocation9 + $0xe28] sm:$0xff]
      %v1614 = vld [vmem:[#allocation9 + $0xe30] sm:$0xff]
      %v1615 = vld [vmem:[#allocation9 + $0xe38] sm:$0xff]
      %v1616 = vld [vmem:[#allocation9 + $0xe40] sm:$0xff]
      %v1617 = vld [vmem:[#allocation9 + $0xe48] sm:$0xff]
      %v1618 = vld [vmem:[#allocation9 + $0xe50] sm:$0xff]
      %v1619 = vld [vmem:[#allocation9 + $0xe58] sm:$0xff]
      %v1620 = vld [vmem:[#allocation9 + $0xe60] sm:$0xff]
      %v1621 = vld [vmem:[#allocation9 + $0xe68] sm:$0xff]
      %v1622 = vld [vmem:[#allocation9 + $0xe70] sm:$0xff]
      %v1623 = vld [vmem:[#allocation9 + $0xe78] sm:$0xff]
      %v1624 = vld [vmem:[#allocation9 + $0xe80] sm:$0xff]
      %v1625 = vld [vmem:[#allocation9 + $0xe88] sm:$0xff]
      %v1626 = vld [vmem:[#allocation9 + $0xe90] sm:$0xff]
      %v1627 = vld [vmem:[#allocation9 + $0xe98] sm:$0xff]
      %v1628 = vld [vmem:[#allocation9 + $0xea0] sm:$0xff]
      %v1629 = vld [vmem:[#allocation9 + $0xea8] sm:$0xff]
      %v1630 = vld [vmem:[#allocation9 + $0xeb0] sm:$0xff]
      %v1631 = vld [vmem:[#allocation9 + $0xeb8] sm:$0xff]
      %v1632 = vld [vmem:[#allocation9 + $0xec0] sm:$0xff]
      %v1633 = vld [vmem:[#allocation9 + $0xec8] sm:$0xff]
      %v1634 = vld [vmem:[#allocation9 + $0xed0] sm:$0xff]
      %v1635 = vld [vmem:[#allocation9 + $0xed8] sm:$0xff]
      %v1636 = vld [vmem:[#allocation9 + $0xee0] sm:$0xff]
      %v1637 = vld [vmem:[#allocation9 + $0xee8] sm:$0xff]
      %v1638 = vld [vmem:[#allocation9 + $0xef0] sm:$0xff]
      %v1639 = vld [vmem:[#allocation9 + $0xef8] sm:$0xff]
      %v1640 = vld [vmem:[#allocation9 + $0xf00] sm:$0xff]
      %v1641 = vld [vmem:[#allocation9 + $0xf08] sm:$0xff]
      %v1642 = vld [vmem:[#allocation9 + $0xf10] sm:$0xff]
      %v1643 = vld [vmem:[#allocation9 + $0xf18] sm:$0xff]
      %v1644 = vld [vmem:[#allocation9 + $0xf20] sm:$0xff]
      %v1645 = vld [vmem:[#allocation9 + $0xf28] sm:$0xff]
      %v1646 = vld [vmem:[#allocation9 + $0xf30] sm:$0xff]
      %v1647 = vld [vmem:[#allocation9 + $0xf38] sm:$0xff]
      %v1648 = vld [vmem:[#allocation9 + $0xf40] sm:$0xff]
      %v1649 = vld [vmem:[#allocation9 + $0xf48] sm:$0xff]
      %v1650 = vld [vmem:[#allocation9 + $0xf50] sm:$0xff]
      %v1651 = vld [vmem:[#allocation9 + $0xf58] sm:$0xff]
      %v1652 = vld [vmem:[#allocation9 + $0xf60] sm:$0xff]
      %v1653 = vld [vmem:[#allocation9 + $0xf68] sm:$0xff]
      %v1654 = vld [vmem:[#allocation9 + $0xf70] sm:$0xff]
      %v1655 = vld [vmem:[#allocation9 + $0xf78] sm:$0xff]
      %v1656 = vld [vmem:[#allocation9 + $0xf80] sm:$0xff]
      %v1657 = vld [vmem:[#allocation9 + $0xf88] sm:$0xff]
      %v1658 = vld [vmem:[#allocation9 + $0xf90] sm:$0xff]
      %v1659 = vld [vmem:[#allocation9 + $0xf98] sm:$0xff]
      %v1660 = vld [vmem:[#allocation9 + $0xfa0] sm:$0xff]
      %v1661 = vld [vmem:[#allocation9 + $0xfa8] sm:$0xff]
      %v1662 = vld [vmem:[#allocation9 + $0xfb0] sm:$0xff]
      %v1663 = vld [vmem:[#allocation9 + $0xfb8] sm:$0xff]
      %v1664 = vld [vmem:[#allocation9 + $0xfc0] sm:$0xff]
      %v1665 = vld [vmem:[#allocation9 + $0xfc8] sm:$0xff]
      %v1666 = vld [vmem:[#allocation9 + $0xfd0] sm:$0xff]
      %v1667 = vld [vmem:[#allocation9 + $0xfd8] sm:$0xff]
      %v1668 = vld [vmem:[#allocation9 + $0xfe0] sm:$0xff]
      %v1669 = vld [vmem:[#allocation9 + $0xfe8] sm:$0xff]
      %v1670 = vld [vmem:[#allocation9 + $0xff0] sm:$0xff]
      %v1671 = vld [vmem:[#allocation9 + $0xff8] sm:$0xff]
      %v1672 = vld [vmem:[#allocation9 + $0x1000] sm:$0xff]
      %v1673 = vld [vmem:[#allocation9 + $0x1008] sm:$0xff]
      %v1674 = vld [vmem:[#allocation9 + $0x1010] sm:$0xff]
      %v1675 = vld [vmem:[#allocation9 + $0x1018] sm:$0xff]
      %v1676 = vld [vmem:[#allocation9 + $0x1020] sm:$0xff]
      %v1677 = vld [vmem:[#allocation9 + $0x1028] sm:$0xff]
      %v1678 = vld [vmem:[#allocation9 + $0x1030] sm:$0xff]
      %v1679 = vld [vmem:[#allocation9 + $0x1038] sm:$0xff]
      %v1680 = vld [vmem:[#allocation9 + $0x1040] sm:$0xff]
      %v1681 = vld [vmem:[#allocation9 + $0x1048] sm:$0xff]
      %v1682 = vld [vmem:[#allocation9 + $0x1050] sm:$0xff]
      %v1683 = vld [vmem:[#allocation9 + $0x1058] sm:$0xff]
      %v1684 = vld [vmem:[#allocation9 + $0x1060] sm:$0xff]
      %v1685 = vld [vmem:[#allocation9 + $0x1068] sm:$0xff]
      %v1686 = vld [vmem:[#allocation9 + $0x1070] sm:$0xff]
      %v1687 = vld [vmem:[#allocation9 + $0x1078] sm:$0xff]
      %v1688 = vld [vmem:[#allocation9 + $0x1080] sm:$0xff]
      %v1689 = vld [vmem:[#allocation9 + $0x1088] sm:$0xff]
      %v1690 = vld [vmem:[#allocation9 + $0x1090] sm:$0xff]
      %v1691 = vld [vmem:[#allocation9 + $0x1098] sm:$0xff]
      %v1692 = vld [vmem:[#allocation9 + $0x10a0] sm:$0xff]
      %v1693 = vld [vmem:[#allocation9 + $0x10a8] sm:$0xff]
      %v1694 = vld [vmem:[#allocation9 + $0x10b0] sm:$0xff]
      %v1695 = vld [vmem:[#allocation9 + $0x10b8] sm:$0xff]
      %v1696 = vld [vmem:[#allocation9 + $0x10c0] sm:$0xff]
      %v1697 = vld [vmem:[#allocation9 + $0x10c8] sm:$0xff]
      %v1698 = vld [vmem:[#allocation9 + $0x10d0] sm:$0xff]
      %v1699 = vld [vmem:[#allocation9 + $0x10d8] sm:$0xff]
      %v1700 = vld [vmem:[#allocation9 + $0x10e0] sm:$0xff]
      %v1701 = vld [vmem:[#allocation9 + $0x10e8] sm:$0xff]
      %v1702 = vld [vmem:[#allocation9 + $0x10f0] sm:$0xff]
      %v1703 = vld [vmem:[#allocation9 + $0x10f8] sm:$0xff]
      %v1704 = vld [vmem:[#allocation9 + $0x1100] sm:$0xff]
      %v1705 = vld [vmem:[#allocation9 + $0x1108] sm:$0xff]
      %v1706 = vld [vmem:[#allocation9 + $0x1110] sm:$0xff]
      %v1707 = vld [vmem:[#allocation9 + $0x1118] sm:$0xff]
      %v1708 = vld [vmem:[#allocation9 + $0x1120] sm:$0xff]
      %v1709 = vld [vmem:[#allocation9 + $0x1128] sm:$0xff]
      %v1710 = vld [vmem:[#allocation9 + $0x1130] sm:$0xff]
      %v1711 = vld [vmem:[#allocation9 + $0x1138] sm:$0xff]
      %v1712 = vld [vmem:[#allocation9 + $0x1140] sm:$0xff]
      %v1713 = vld [vmem:[#allocation9 + $0x1148] sm:$0xff]
      %v1714 = vld [vmem:[#allocation9 + $0x1150] sm:$0xff]
      %v1715 = vld [vmem:[#allocation9 + $0x1158] sm:$0xff]
      %v1716 = vld [vmem:[#allocation9 + $0x1160] sm:$0xff]
      %v1717 = vld [vmem:[#allocation9 + $0x1168] sm:$0xff]
      %v1718 = vld [vmem:[#allocation9 + $0x1170] sm:$0xff]
      %v1719 = vld [vmem:[#allocation9 + $0x1178] sm:$0xff]
      %v1720 = vld [vmem:[#allocation9 + $0x1180] sm:$0xff]
      %v1721 = vld [vmem:[#allocation9 + $0x1188] sm:$0xff]
      %v1722 = vld [vmem:[#allocation9 + $0x1190] sm:$0xff]
      %v1723 = vld [vmem:[#allocation9 + $0x1198] sm:$0xff]
      %v1724 = vld [vmem:[#allocation9 + $0x11a0] sm:$0xff]
      %v1725 = vld [vmem:[#allocation9 + $0x11a8] sm:$0xff]
      %v1726 = vld [vmem:[#allocation9 + $0x11b0] sm:$0xff]
      %v1727 = vld [vmem:[#allocation9 + $0x11b8] sm:$0xff]
      %v1728 = vld [vmem:[#allocation9 + $0x11c0] sm:$0xff]
      %v1729 = vld [vmem:[#allocation9 + $0x11c8] sm:$0xff]
      %v1730 = vld [vmem:[#allocation9 + $0x11d0] sm:$0xff]
      %v1731 = vld [vmem:[#allocation9 + $0x11d8] sm:$0xff]
      %v1732 = vld [vmem:[#allocation9 + $0x11e0] sm:$0xff]
      %v1733 = vld [vmem:[#allocation9 + $0x11e8] sm:$0xff]
      %v1734 = vld [vmem:[#allocation9 + $0x11f0] sm:$0xff]
      %v1735 = vld [vmem:[#allocation9 + $0x11f8] sm:$0xff]
      %v1736 = vld [vmem:[#allocation9 + $0x1200] sm:$0xff]
      %v1737 = vld [vmem:[#allocation9 + $0x1208] sm:$0xff]
      %v1738 = vld [vmem:[#allocation9 + $0x1210] sm:$0xff]
      %v1739 = vld [vmem:[#allocation9 + $0x1218] sm:$0xff]
      %v1740 = vld [vmem:[#allocation9 + $0x1220] sm:$0xff]
      %v1741 = vld [vmem:[#allocation9 + $0x1228] sm:$0xff]
      %v1742 = vld [vmem:[#allocation9 + $0x1230] sm:$0xff]
      %v1743 = vld [vmem:[#allocation9 + $0x1238] sm:$0xff]
      %v1744 = vld [vmem:[#allocation9 + $0x1240] sm:$0xff]
      %v1745 = vld [vmem:[#allocation9 + $0x1248] sm:$0xff]
      %v1746 = vld [vmem:[#allocation9 + $0x1250] sm:$0xff]
      %v1747 = vld [vmem:[#allocation9 + $0x1258] sm:$0xff]
      %v1748 = vld [vmem:[#allocation9 + $0x1260] sm:$0xff]
      %v1749 = vld [vmem:[#allocation9 + $0x1268] sm:$0xff]
      %v1750 = vld [vmem:[#allocation9 + $0x1270] sm:$0xff]
      %v1751 = vld [vmem:[#allocation9 + $0x1278] sm:$0xff]
      %v1752 = vld [vmem:[#allocation9 + $0x1280] sm:$0xff]
      %v1753 = vld [vmem:[#allocation9 + $0x1288] sm:$0xff]
      %v1754 = vld [vmem:[#allocation9 + $0x1290] sm:$0xff]
      %v1755 = vld [vmem:[#allocation9 + $0x1298] sm:$0xff]
      %v1756 = vld [vmem:[#allocation9 + $0x12a0] sm:$0xff]
      %v1757 = vld [vmem:[#allocation9 + $0x12a8] sm:$0xff]
      %v1758 = vld [vmem:[#allocation9 + $0x12b0] sm:$0xff]
      %v1759 = vld [vmem:[#allocation9 + $0x12b8] sm:$0xff]
      %v1760 = vld [vmem:[#allocation9 + $0x12c0] sm:$0xff]
      %v1761 = vld [vmem:[#allocation9 + $0x12c8] sm:$0xff]
      %v1762 = vld [vmem:[#allocation9 + $0x12d0] sm:$0xff]
      %v1763 = vld [vmem:[#allocation9 + $0x12d8] sm:$0xff]
      %v1764 = vld [vmem:[#allocation9 + $0x12e0] sm:$0xff]
      %v1765 = vld [vmem:[#allocation9 + $0x12e8] sm:$0xff]
      %v1766 = vld [vmem:[#allocation9 + $0x12f0] sm:$0xff]
      %v1767 = vld [vmem:[#allocation9 + $0x12f8] sm:$0xff]
      %v1768 = vld [vmem:[#allocation9 + $0x1300] sm:$0xff]
      %v1769 = vld [vmem:[#allocation9 + $0x1308] sm:$0xff]
      %v1770 = vld [vmem:[#allocation9 + $0x1310] sm:$0xff]
      %v1771 = vld [vmem:[#allocation9 + $0x1318] sm:$0xff]
      %v1772 = vld [vmem:[#allocation9 + $0x1320] sm:$0xff]
      %v1773 = vld [vmem:[#allocation9 + $0x1328] sm:$0xff]
      %v1774 = vld [vmem:[#allocation9 + $0x1330] sm:$0xff]
      %v1775 = vld [vmem:[#allocation9 + $0x1338] sm:$0xff]
      %v1776 = vld [vmem:[#allocation9 + $0x1340] sm:$0xff]
      %v1777 = vld [vmem:[#allocation9 + $0x1348] sm:$0xff]
      %v1778 = vld [vmem:[#allocation9 + $0x1350] sm:$0xff]
      %v1779 = vld [vmem:[#allocation9 + $0x1358] sm:$0xff]
      %v1780 = vld [vmem:[#allocation9 + $0x1360] sm:$0xff]
      %v1781 = vld [vmem:[#allocation9 + $0x1368] sm:$0xff]
      %v1782 = vld [vmem:[#allocation9 + $0x1370] sm:$0xff]
      %v1783 = vld [vmem:[#allocation9 + $0x1378] sm:$0xff]
      %v1784 = vld [vmem:[#allocation9 + $0x1380] sm:$0xff]
      %v1785 = vld [vmem:[#allocation9 + $0x1388] sm:$0xff]
      %v1786 = vld [vmem:[#allocation9 + $0x1390] sm:$0xff]
      %v1787 = vld [vmem:[#allocation9 + $0x1398] sm:$0xff]
      %v1788 = vld [vmem:[#allocation9 + $0x13a0] sm:$0xff]
      %v1789 = vld [vmem:[#allocation9 + $0x13a8] sm:$0xff]
      %v1790 = vld [vmem:[#allocation9 + $0x13b0] sm:$0xff]
      %v1791 = vld [vmem:[#allocation9 + $0x13b8] sm:$0xff]
      %v1792 = vld [vmem:[#allocation9 + $0x13c0] sm:$0xff]
      %v1793 = vld [vmem:[#allocation9 + $0x13c8] sm:$0xff]
      %v1794 = vld [vmem:[#allocation9 + $0x13d0] sm:$0xff]
      %v1795 = vld [vmem:[#allocation9 + $0x13d8] sm:$0xff]
      %v1796 = vld [vmem:[#allocation9 + $0x13e0] sm:$0xff]
      %v1797 = vld [vmem:[#allocation9 + $0x13e8] sm:$0xff]
      %v1798 = vld [vmem:[#allocation9 + $0x13f0] sm:$0xff]
      %v1799 = vld [vmem:[#allocation9 + $0x13f8] sm:$0xff]
      %v1800 = vld [vmem:[#allocation9 + $0x1400] sm:$0xff]
      %v1801 = vld [vmem:[#allocation9 + $0x1408] sm:$0xff]
      %v1802 = vld [vmem:[#allocation9 + $0x1410] sm:$0xff]
      %v1803 = vld [vmem:[#allocation9 + $0x1418] sm:$0xff]
      %v1804 = vld [vmem:[#allocation9 + $0x1420] sm:$0xff]
      %v1805 = vld [vmem:[#allocation9 + $0x1428] sm:$0xff]
      %v1806 = vld [vmem:[#allocation9 + $0x1430] sm:$0xff]
      %v1807 = vld [vmem:[#allocation9 + $0x1438] sm:$0xff]
      %v1808 = vld [vmem:[#allocation9 + $0x1440] sm:$0xff]
      %v1809 = vld [vmem:[#allocation9 + $0x1448] sm:$0xff]
      %v1810 = vld [vmem:[#allocation9 + $0x1450] sm:$0xff]
      %v1811 = vld [vmem:[#allocation9 + $0x1458] sm:$0xff]
      %v1812 = vld [vmem:[#allocation9 + $0x1460] sm:$0xff]
      %v1813 = vld [vmem:[#allocation9 + $0x1468] sm:$0xff]
      %v1814 = vld [vmem:[#allocation9 + $0x1470] sm:$0xff]
      %v1815 = vld [vmem:[#allocation9 + $0x1478] sm:$0xff]
      %v1816 = vld [vmem:[#allocation9 + $0x1480] sm:$0xff]
      %v1817 = vld [vmem:[#allocation9 + $0x1488] sm:$0xff]
      %v1818 = vld [vmem:[#allocation9 + $0x1490] sm:$0xff]
      %v1819 = vld [vmem:[#allocation9 + $0x1498] sm:$0xff]
      %v1820 = vld [vmem:[#allocation9 + $0x14a0] sm:$0xff]
      %v1821 = vld [vmem:[#allocation9 + $0x14a8] sm:$0xff]
      %v1822 = vld [vmem:[#allocation9 + $0x14b0] sm:$0xff]
      %v1823 = vld [vmem:[#allocation9 + $0x14b8] sm:$0xff]
      %v1824 = vld [vmem:[#allocation9 + $0x14c0] sm:$0xff]
      %v1825 = vld [vmem:[#allocation9 + $0x14c8] sm:$0xff]
      %v1826 = vld [vmem:[#allocation9 + $0x14d0] sm:$0xff]
      %v1827 = vld [vmem:[#allocation9 + $0x14d8] sm:$0xff]
      %v1828 = vld [vmem:[#allocation9 + $0x14e0] sm:$0xff]
      %v1829 = vld [vmem:[#allocation9 + $0x14e8] sm:$0xff]
      %v1830 = vld [vmem:[#allocation9 + $0x14f0] sm:$0xff]
      %v1831 = vld [vmem:[#allocation9 + $0x14f8] sm:$0xff]
      %v1832 = vld [vmem:[#allocation9 + $0x1500] sm:$0xff]
      %v1833 = vld [vmem:[#allocation9 + $0x1508] sm:$0xff]
      %v1834 = vld [vmem:[#allocation9 + $0x1510] sm:$0xff]
      %v1835 = vld [vmem:[#allocation9 + $0x1518] sm:$0xff]
      %v1836 = vld [vmem:[#allocation9 + $0x1520] sm:$0xff]
      %v1837 = vld [vmem:[#allocation9 + $0x1528] sm:$0xff]
      %v1838 = vld [vmem:[#allocation9 + $0x1530] sm:$0xff]
      %v1839 = vld [vmem:[#allocation9 + $0x1538] sm:$0xff]
      %v1840 = vld [vmem:[#allocation9 + $0x1540] sm:$0xff]
      %v1841 = vld [vmem:[#allocation9 + $0x1548] sm:$0xff]
      %v1842 = vld [vmem:[#allocation9 + $0x1550] sm:$0xff]
      %v1843 = vld [vmem:[#allocation9 + $0x1558] sm:$0xff]
      %v1844 = vld [vmem:[#allocation9 + $0x1560] sm:$0xff]
      %v1845 = vld [vmem:[#allocation9 + $0x1568] sm:$0xff]
      %v1846 = vld [vmem:[#allocation9 + $0x1570] sm:$0xff]
      %v1847 = vld [vmem:[#allocation9 + $0x1578] sm:$0xff]
      %v1848 = vld [vmem:[#allocation9 + $0x1580] sm:$0xff]
      %v1849 = vld [vmem:[#allocation9 + $0x1588] sm:$0xff]
      %v1850 = vld [vmem:[#allocation9 + $0x1590] sm:$0xff]
      %v1851 = vld [vmem:[#allocation9 + $0x1598] sm:$0xff]
      %v1852 = vld [vmem:[#allocation9 + $0x15a0] sm:$0xff]
      %v1853 = vld [vmem:[#allocation9 + $0x15a8] sm:$0xff]
      %v1854 = vld [vmem:[#allocation9 + $0x15b0] sm:$0xff]
      %v1855 = vld [vmem:[#allocation9 + $0x15b8] sm:$0xff]
      %v1856 = vld [vmem:[#allocation9 + $0x15c0] sm:$0xff]
      %v1857 = vld [vmem:[#allocation9 + $0x15c8] sm:$0xff]
      %v1858 = vld [vmem:[#allocation9 + $0x15d0] sm:$0xff]
      %v1859 = vld [vmem:[#allocation9 + $0x15d8] sm:$0xff]
      %v1860 = vld [vmem:[#allocation9 + $0x15e0] sm:$0xff]
      %v1861 = vld [vmem:[#allocation9 + $0x15e8] sm:$0xff]
      %v1862 = vld [vmem:[#allocation9 + $0x15f0] sm:$0xff]
      %v1863 = vld [vmem:[#allocation9 + $0x15f8] sm:$0xff]
      %v1864 = vld [vmem:[#allocation9 + $0x1600] sm:$0xff]
      %v1865 = vld [vmem:[#allocation9 + $0x1608] sm:$0xff]
      %v1866 = vld [vmem:[#allocation9 + $0x1610] sm:$0xff]
      %v1867 = vld [vmem:[#allocation9 + $0x1618] sm:$0xff]
      %v1868 = vld [vmem:[#allocation9 + $0x1620] sm:$0xff]
      %v1869 = vld [vmem:[#allocation9 + $0x1628] sm:$0xff]
      %v1870 = vld [vmem:[#allocation9 + $0x1630] sm:$0xff]
      %v1871 = vld [vmem:[#allocation9 + $0x1638] sm:$0xff]
      %v1872 = vld [vmem:[#allocation9 + $0x1640] sm:$0xff]
      %v1873 = vld [vmem:[#allocation9 + $0x1648] sm:$0xff]
      %v1874 = vld [vmem:[#allocation9 + $0x1650] sm:$0xff]
      %v1875 = vld [vmem:[#allocation9 + $0x1658] sm:$0xff]
      %v1876 = vld [vmem:[#allocation9 + $0x1660] sm:$0xff]
      %v1877 = vld [vmem:[#allocation9 + $0x1668] sm:$0xff]
      %v1878 = vld [vmem:[#allocation9 + $0x1670] sm:$0xff]
      %v1879 = vld [vmem:[#allocation9 + $0x1678] sm:$0xff]
      %v1880 = vld [vmem:[#allocation9 + $0x1680] sm:$0xff]
      %v1881 = vld [vmem:[#allocation9 + $0x1688] sm:$0xff]
      %v1882 = vld [vmem:[#allocation9 + $0x1690] sm:$0xff]
      %v1883 = vld [vmem:[#allocation9 + $0x1698] sm:$0xff]
      %v1884 = vld [vmem:[#allocation9 + $0x16a0] sm:$0xff]
      %v1885 = vld [vmem:[#allocation9 + $0x16a8] sm:$0xff]
      %v1886 = vld [vmem:[#allocation9 + $0x16b0] sm:$0xff]
      %v1887 = vld [vmem:[#allocation9 + $0x16b8] sm:$0xff]
      %v1888 = vld [vmem:[#allocation9 + $0x16c0] sm:$0xff]
      %v1889 = vld [vmem:[#allocation9 + $0x16c8] sm:$0xff]
      %v1890 = vld [vmem:[#allocation9 + $0x16d0] sm:$0xff]
      %v1891 = vld [vmem:[#allocation9 + $0x16d8] sm:$0xff]
      %v1892 = vld [vmem:[#allocation9 + $0x16e0] sm:$0xff]
      %v1893 = vld [vmem:[#allocation9 + $0x16e8] sm:$0xff]
      %v1894 = vld [vmem:[#allocation9 + $0x16f0] sm:$0xff]
      %v1895 = vld [vmem:[#allocation9 + $0x16f8] sm:$0xff]
      %v1896 = vld [vmem:[#allocation9 + $0x1700] sm:$0xff]
      %v1897 = vld [vmem:[#allocation9 + $0x1708] sm:$0xff]
      %v1898 = vld [vmem:[#allocation9 + $0x1710] sm:$0xff]
      %v1899 = vld [vmem:[#allocation9 + $0x1718] sm:$0xff]
      %v1900 = vld [vmem:[#allocation9 + $0x1720] sm:$0xff]
      %v1901 = vld [vmem:[#allocation9 + $0x1728] sm:$0xff]
      %v1902 = vld [vmem:[#allocation9 + $0x1730] sm:$0xff]
      %v1903 = vld [vmem:[#allocation9 + $0x1738] sm:$0xff]
      %v1904 = vld [vmem:[#allocation9 + $0x1740] sm:$0xff]
      %v1905 = vld [vmem:[#allocation9 + $0x1748] sm:$0xff]
      %v1906 = vld [vmem:[#allocation9 + $0x1750] sm:$0xff]
      %v1907 = vld [vmem:[#allocation9 + $0x1758] sm:$0xff]
      %v1908 = vld [vmem:[#allocation9 + $0x1760] sm:$0xff]
      %v1909 = vld [vmem:[#allocation9 + $0x1768] sm:$0xff]
      %v1910 = vld [vmem:[#allocation9 + $0x1770] sm:$0xff]
      %v1911 = vld [vmem:[#allocation9 + $0x1778] sm:$0xff]
      %v1912 = vld [vmem:[#allocation9 + $0x1780] sm:$0xff]
      %v1913 = vld [vmem:[#allocation9 + $0x1788] sm:$0xff]
      %v1914 = vld [vmem:[#allocation9 + $0x1790] sm:$0xff]
      %v1915 = vld [vmem:[#allocation9 + $0x1798] sm:$0xff]
      %v1916 = vld [vmem:[#allocation9 + $0x17a0] sm:$0xff]
      %v1917 = vld [vmem:[#allocation9 + $0x17a8] sm:$0xff]
      %v1918 = vld [vmem:[#allocation9 + $0x17b0] sm:$0xff]
      %v1919 = vld [vmem:[#allocation9 + $0x17b8] sm:$0xff]
      %v1920 = vld [vmem:[#allocation9 + $0x17c0] sm:$0xff]
      %v1921 = vld [vmem:[#allocation9 + $0x17c8] sm:$0xff]
      %v1922 = vld [vmem:[#allocation9 + $0x17d0] sm:$0xff]
      %v1923 = vld [vmem:[#allocation9 + $0x17d8] sm:$0xff]
      %v1924 = vld [vmem:[#allocation9 + $0x17e0] sm:$0xff]
      %v1925 = vld [vmem:[#allocation9 + $0x17e8] sm:$0xff]
      %v1926 = vld [vmem:[#allocation9 + $0x17f0] sm:$0xff]
      %v1927 = vld [vmem:[#allocation9 + $0x17f8] sm:$0xff]
      %v1928 = vld [vmem:[#allocation9 + $0x1800] sm:$0xff]
      %v1929 = vld [vmem:[#allocation9 + $0x1808] sm:$0xff]
      %v1930 = vld [vmem:[#allocation9 + $0x1810] sm:$0xff]
      %v1931 = vld [vmem:[#allocation9 + $0x1818] sm:$0xff]
      %v1932 = vld [vmem:[#allocation9 + $0x1820] sm:$0xff]
      %v1933 = vld [vmem:[#allocation9 + $0x1828] sm:$0xff]
      %v1934 = vld [vmem:[#allocation9 + $0x1830] sm:$0xff]
      %v1935 = vld [vmem:[#allocation9 + $0x1838] sm:$0xff]
      %v1936 = vld [vmem:[#allocation9 + $0x1840] sm:$0xff]
      %v1937 = vld [vmem:[#allocation9 + $0x1848] sm:$0xff]
      %v1938 = vld [vmem:[#allocation9 + $0x1850] sm:$0xff]
      %v1939 = vld [vmem:[#allocation9 + $0x1858] sm:$0xff]
      %v1940 = vld [vmem:[#allocation9 + $0x1860] sm:$0xff]
      %v1941 = vld [vmem:[#allocation9 + $0x1868] sm:$0xff]
      %v1942 = vld [vmem:[#allocation9 + $0x1870] sm:$0xff]
      %v1943 = vld [vmem:[#allocation9 + $0x1878] sm:$0xff]
      %v1944 = vld [vmem:[#allocation9 + $0x1880] sm:$0xff]
      %v1945 = vld [vmem:[#allocation9 + $0x1888] sm:$0xff]
      %v1946 = vld [vmem:[#allocation9 + $0x1890] sm:$0xff]
      %v1947 = vld [vmem:[#allocation9 + $0x1898] sm:$0xff]
      %v1948 = vld [vmem:[#allocation9 + $0x18a0] sm:$0xff]
      %v1949 = vld [vmem:[#allocation9 + $0x18a8] sm:$0xff]
      %v1950 = vld [vmem:[#allocation9 + $0x18b0] sm:$0xff]
      %v1951 = vld [vmem:[#allocation9 + $0x18b8] sm:$0xff]
      %v1952 = vld [vmem:[#allocation9 + $0x18c0] sm:$0xff]
      %v1953 = vld [vmem:[#allocation9 + $0x18c8] sm:$0xff]
      %v1954 = vld [vmem:[#allocation9 + $0x18d0] sm:$0xff]
      %v1955 = vld [vmem:[#allocation9 + $0x18d8] sm:$0xff]
      %v1956 = vld [vmem:[#allocation9 + $0x18e0] sm:$0xff]
      %v1957 = vld [vmem:[#allocation9 + $0x18e8] sm:$0xff]
      %v1958 = vld [vmem:[#allocation9 + $0x18f0] sm:$0xff]
      %v1959 = vld [vmem:[#allocation9 + $0x18f8] sm:$0xff]
      %v1960 = vld [vmem:[#allocation9 + $0x1900] sm:$0xff]
      %v1961 = vld [vmem:[#allocation9 + $0x1908] sm:$0xff]
      %v1962 = vld [vmem:[#allocation9 + $0x1910] sm:$0xff]
      %v1963 = vld [vmem:[#allocation9 + $0x1918] sm:$0xff]
      %v1964 = vld [vmem:[#allocation9 + $0x1920] sm:$0xff]
      %v1965 = vld [vmem:[#allocation9 + $0x1928] sm:$0xff]
      %v1966 = vld [vmem:[#allocation9 + $0x1930] sm:$0xff]
      %v1967 = vld [vmem:[#allocation9 + $0x1938] sm:$0xff]
      %v1968 = vld [vmem:[#allocation9 + $0x1940] sm:$0xff]
      %v1969 = vld [vmem:[#allocation9 + $0x1948] sm:$0xff]
      %v1970 = vld [vmem:[#allocation9 + $0x1950] sm:$0xff]
      %v1971 = vld [vmem:[#allocation9 + $0x1958] sm:$0xff]
      %v1972 = vld [vmem:[#allocation9 + $0x1960] sm:$0xff]
      %v1973 = vld [vmem:[#allocation9 + $0x1968] sm:$0xff]
      %v1974 = vld [vmem:[#allocation9 + $0x1970] sm:$0xff]
      %v1975 = vld [vmem:[#allocation9 + $0x1978] sm:$0xff]
      %v1976 = vld [vmem:[#allocation9 + $0x1980] sm:$0xff]
      %v1977 = vld [vmem:[#allocation9 + $0x1988] sm:$0xff]
      %v1978 = vld [vmem:[#allocation9 + $0x1990] sm:$0xff]
      %v1979 = vld [vmem:[#allocation9 + $0x1998] sm:$0xff]
      %v1980 = vld [vmem:[#allocation9 + $0x19a0] sm:$0xff]
      %v1981 = vld [vmem:[#allocation9 + $0x19a8] sm:$0xff]
      %v1982 = vld [vmem:[#allocation9 + $0x19b0] sm:$0xff]
      %v1983 = vld [vmem:[#allocation9 + $0x19b8] sm:$0xff]
      %v1984 = vld [vmem:[#allocation9 + $0x19c0] sm:$0xff]
      %v1985 = vld [vmem:[#allocation9 + $0x19c8] sm:$0xff]
      %v1986 = vld [vmem:[#allocation9 + $0x19d0] sm:$0xff]
      %v1987 = vld [vmem:[#allocation9 + $0x19d8] sm:$0xff]
      %v1988 = vld [vmem:[#allocation9 + $0x19e0] sm:$0xff]
      %v1989 = vld [vmem:[#allocation9 + $0x19e8] sm:$0xff]
      %v1990 = vld [vmem:[#allocation9 + $0x19f0] sm:$0xff]
      %v1991 = vld [vmem:[#allocation9 + $0x19f8] sm:$0xff]
      %v1992 = vld [vmem:[#allocation9 + $0x1a00] sm:$0xff]
      %v1993 = vld [vmem:[#allocation9 + $0x1a08] sm:$0xff]
      %v1994 = vld [vmem:[#allocation9 + $0x1a10] sm:$0xff]
      %v1995 = vld [vmem:[#allocation9 + $0x1a18] sm:$0xff]
      %v1996 = vld [vmem:[#allocation9 + $0x1a20] sm:$0xff]
      %v1997 = vld [vmem:[#allocation9 + $0x1a28] sm:$0xff]
      %v1998 = vld [vmem:[#allocation9 + $0x1a30] sm:$0xff]
      %v1999 = vld [vmem:[#allocation9 + $0x1a38] sm:$0xff]
      %v2000 = vld [vmem:[#allocation9 + $0x1a40] sm:$0xff]
      %v2001 = vld [vmem:[#allocation9 + $0x1a48] sm:$0xff]
      %v2002 = vld [vmem:[#allocation9 + $0x1a50] sm:$0xff]
      %v2003 = vld [vmem:[#allocation9 + $0x1a58] sm:$0xff]
      %v2004 = vld [vmem:[#allocation9 + $0x1a60] sm:$0xff]
      %v2005 = vld [vmem:[#allocation9 + $0x1a68] sm:$0xff]
      %v2006 = vld [vmem:[#allocation9 + $0x1a70] sm:$0xff]
      %v2007 = vld [vmem:[#allocation9 + $0x1a78] sm:$0xff]
      %v2008 = vld [vmem:[#allocation9 + $0x1a80] sm:$0xff]
      %v2009 = vld [vmem:[#allocation9 + $0x1a88] sm:$0xff]
      %v2010 = vld [vmem:[#allocation9 + $0x1a90] sm:$0xff]
      %v2011 = vld [vmem:[#allocation9 + $0x1a98] sm:$0xff]
      %v2012 = vld [vmem:[#allocation9 + $0x1aa0] sm:$0xff]
      %v2013 = vld [vmem:[#allocation9 + $0x1aa8] sm:$0xff]
      %v2014 = vld [vmem:[#allocation9 + $0x1ab0] sm:$0xff]
      %v2015 = vld [vmem:[#allocation9 + $0x1ab8] sm:$0xff]
      %v2016 = vld [vmem:[#allocation9 + $0x1ac0] sm:$0xff]
      %v2017 = vld [vmem:[#allocation9 + $0x1ac8] sm:$0xff]
      %v2018 = vld [vmem:[#allocation9 + $0x1ad0] sm:$0xff]
      %v2019 = vld [vmem:[#allocation9 + $0x1ad8] sm:$0xff]
      %v2020 = vld [vmem:[#allocation9 + $0x1ae0] sm:$0xff]
      %v2021 = vld [vmem:[#allocation9 + $0x1ae8] sm:$0xff]
      %v2022 = vld [vmem:[#allocation9 + $0x1af0] sm:$0xff]
      %v2023 = vld [vmem:[#allocation9 + $0x1af8] sm:$0xff]
      %v2024 = vld [vmem:[#allocation9 + $0x1b00] sm:$0xff]
      %v2025 = vld [vmem:[#allocation9 + $0x1b08] sm:$0xff]
      %v2026 = vld [vmem:[#allocation9 + $0x1b10] sm:$0xff]
      %v2027 = vld [vmem:[#allocation9 + $0x1b18] sm:$0xff]
      %v2028 = vld [vmem:[#allocation9 + $0x1b20] sm:$0xff]
      %v2029 = vld [vmem:[#allocation9 + $0x1b28] sm:$0xff]
      %v2030 = vld [vmem:[#allocation9 + $0x1b30] sm:$0xff]
      %v2031 = vld [vmem:[#allocation9 + $0x1b38] sm:$0xff]
      %v2032 = vld [vmem:[#allocation9 + $0x1b40] sm:$0xff]
      %v2033 = vld [vmem:[#allocation9 + $0x1b48] sm:$0xff]
      %v2034 = vld [vmem:[#allocation9 + $0x1b50] sm:$0xff]
      %v2035 = vld [vmem:[#allocation9 + $0x1b58] sm:$0xff]
      %v2036 = vld [vmem:[#allocation9 + $0x1b60] sm:$0xff]
      %v2037 = vld [vmem:[#allocation9 + $0x1b68] sm:$0xff]
      %v2038 = vld [vmem:[#allocation9 + $0x1b70] sm:$0xff]
      %v2039 = vld [vmem:[#allocation9 + $0x1b78] sm:$0xff]
      %v2040 = vld [vmem:[#allocation9 + $0x1b80] sm:$0xff]
      %v2041 = vld [vmem:[#allocation9 + $0x1b88] sm:$0xff]
      %v2042 = vld [vmem:[#allocation9 + $0x1b90] sm:$0xff]
      %v2043 = vld [vmem:[#allocation9 + $0x1b98] sm:$0xff]
      %v2044 = vld [vmem:[#allocation9 + $0x1ba0] sm:$0xff]
      %v2045 = vld [vmem:[#allocation9 + $0x1ba8] sm:$0xff]
      %v2046 = vld [vmem:[#allocation9 + $0x1bb0] sm:$0xff]
      %v2047 = vld [vmem:[#allocation9 + $0x1bb8] sm:$0xff]
      %v2048 = vld [vmem:[#allocation9 + $0x1bc0] sm:$0xff]
      %v2049 = vld [vmem:[#allocation9 + $0x1bc8] sm:$0xff]
      %v2050 = vld [vmem:[#allocation9 + $0x1bd0] sm:$0xff]
      %v2051 = vld [vmem:[#allocation9 + $0x1bd8] sm:$0xff]
      %v2052 = vld [vmem:[#allocation9 + $0x1be0] sm:$0xff]
      %v2053 = vld [vmem:[#allocation9 + $0x1be8] sm:$0xff]
      %v2054 = vld [vmem:[#allocation9 + $0x1bf0] sm:$0xff]
      %v2055 = vld [vmem:[#allocation9 + $0x1bf8] sm:$0xff]
      %v2056 = vld [vmem:[#allocation9 + $0x1c00] sm:$0xff]
      %v2057 = vld [vmem:[#allocation9 + $0x1c08] sm:$0xff]
      %v2058 = vld [vmem:[#allocation9 + $0x1c10] sm:$0xff]
      %v2059 = vld [vmem:[#allocation9 + $0x1c18] sm:$0xff]
      %v2060 = vld [vmem:[#allocation9 + $0x1c20] sm:$0xff]
      %v2061 = vld [vmem:[#allocation9 + $0x1c28] sm:$0xff]
      %v2062 = vld [vmem:[#allocation9 + $0x1c30] sm:$0xff]
      %v2063 = vld [vmem:[#allocation9 + $0x1c38] sm:$0xff]
      %v2064 = vld [vmem:[#allocation9 + $0x1c40] sm:$0xff]
      %v2065 = vld [vmem:[#allocation9 + $0x1c48] sm:$0xff]
      %v2066 = vld [vmem:[#allocation9 + $0x1c50] sm:$0xff]
      %v2067 = vld [vmem:[#allocation9 + $0x1c58] sm:$0xff]
      %v2068 = vld [vmem:[#allocation9 + $0x1c60] sm:$0xff]
      %v2069 = vld [vmem:[#allocation9 + $0x1c68] sm:$0xff]
      %v2070 = vld [vmem:[#allocation9 + $0x1c70] sm:$0xff]
      %v2071 = vld [vmem:[#allocation9 + $0x1c78] sm:$0xff]
      %v2072 = vld [vmem:[#allocation9 + $0x1c80] sm:$0xff]
      %v2073 = vld [vmem:[#allocation9 + $0x1c88] sm:$0xff]
      %v2074 = vld [vmem:[#allocation9 + $0x1c90] sm:$0xff]
      %v2075 = vld [vmem:[#allocation9 + $0x1c98] sm:$0xff]
      %v2076 = vld [vmem:[#allocation9 + $0x1ca0] sm:$0xff]
      %v2077 = vld [vmem:[#allocation9 + $0x1ca8] sm:$0xff]
      %v2078 = vld [vmem:[#allocation9 + $0x1cb0] sm:$0xff]
      %v2079 = vld [vmem:[#allocation9 + $0x1cb8] sm:$0xff]
      %v2080 = vld [vmem:[#allocation9 + $0x1cc0] sm:$0xff]
      %v2081 = vld [vmem:[#allocation9 + $0x1cc8] sm:$0xff]
      %v2082 = vld [vmem:[#allocation9 + $0x1cd0] sm:$0xff]
      %v2083 = vld [vmem:[#allocation9 + $0x1cd8] sm:$0xff]
      %v2084 = vld [vmem:[#allocation9 + $0x1ce0] sm:$0xff]
      %v2085 = vld [vmem:[#allocation9 + $0x1ce8] sm:$0xff]
      %v2086 = vld [vmem:[#allocation9 + $0x1cf0] sm:$0xff]
      %v2087 = vld [vmem:[#allocation9 + $0x1cf8] sm:$0xff]
      %v2088 = vld [vmem:[#allocation9 + $0x1d00] sm:$0xff]
      %v2089 = vld [vmem:[#allocation9 + $0x1d08] sm:$0xff]
      %v2090 = vld [vmem:[#allocation9 + $0x1d10] sm:$0xff]
      %v2091 = vld [vmem:[#allocation9 + $0x1d18] sm:$0xff]
      %v2092 = vld [vmem:[#allocation9 + $0x1d20] sm:$0xff]
      %v2093 = vld [vmem:[#allocation9 + $0x1d28] sm:$0xff]
      %v2094 = vld [vmem:[#allocation9 + $0x1d30] sm:$0xff]
      %v2095 = vld [vmem:[#allocation9 + $0x1d38] sm:$0xff]
      %v2096 = vld [vmem:[#allocation9 + $0x1d40] sm:$0xff]
      %v2097 = vld [vmem:[#allocation9 + $0x1d48] sm:$0xff]
      %v2098 = vld [vmem:[#allocation9 + $0x1d50] sm:$0xff]
      %v2099 = vld [vmem:[#allocation9 + $0x1d58] sm:$0xff]
      %v2100 = vld [vmem:[#allocation9 + $0x1d60] sm:$0xff]
      %v2101 = vld [vmem:[#allocation9 + $0x1d68] sm:$0xff]
      %v2102 = vld [vmem:[#allocation9 + $0x1d70] sm:$0xff]
      %v2103 = vld [vmem:[#allocation9 + $0x1d78] sm:$0xff]
      %v2104 = vld [vmem:[#allocation9 + $0x1d80] sm:$0xff]
      %v2105 = vld [vmem:[#allocation9 + $0x1d88] sm:$0xff]
      %v2106 = vld [vmem:[#allocation9 + $0x1d90] sm:$0xff]
      %v2107 = vld [vmem:[#allocation9 + $0x1d98] sm:$0xff]
      %v2108 = vld [vmem:[#allocation9 + $0x1da0] sm:$0xff]
      %v2109 = vld [vmem:[#allocation9 + $0x1da8] sm:$0xff]
      %v2110 = vld [vmem:[#allocation9 + $0x1db0] sm:$0xff]
      %v2111 = vld [vmem:[#allocation9 + $0x1db8] sm:$0xff]
      %v2112 = vld [vmem:[#allocation9 + $0x1dc0] sm:$0xff]
      %v2113 = vld [vmem:[#allocation9 + $0x1dc8] sm:$0xff]
      %v2114 = vld [vmem:[#allocation9 + $0x1dd0] sm:$0xff]
      %v2115 = vld [vmem:[#allocation9 + $0x1dd8] sm:$0xff]
      %v2116 = vld [vmem:[#allocation9 + $0x1de0] sm:$0xff]
      %v2117 = vld [vmem:[#allocation9 + $0x1de8] sm:$0xff]
      %v2118 = vld [vmem:[#allocation9 + $0x1df0] sm:$0xff]
      %v2119 = vld [vmem:[#allocation9 + $0x1df8] sm:$0xff]
      %v2120 = vld [vmem:[#allocation9 + $0x1e00] sm:$0xff]
      %v2121 = vld [vmem:[#allocation9 + $0x1e08] sm:$0xff]
      %v2122 = vld [vmem:[#allocation9 + $0x1e10] sm:$0xff]
      %v2123 = vld [vmem:[#allocation9 + $0x1e18] sm:$0xff]
      %v2124 = vld [vmem:[#allocation9 + $0x1e20] sm:$0xff]
      %v2125 = vld [vmem:[#allocation9 + $0x1e28] sm:$0xff]
      %v2126 = vld [vmem:[#allocation9 + $0x1e30] sm:$0xff]
      %v2127 = vld [vmem:[#allocation9 + $0x1e38] sm:$0xff]
      %v2128 = vld [vmem:[#allocation9 + $0x1e40] sm:$0xff]
      %v2129 = vld [vmem:[#allocation9 + $0x1e48] sm:$0xff]
      %v2130 = vld [vmem:[#allocation9 + $0x1e50] sm:$0xff]
      %v2131 = vld [vmem:[#allocation9 + $0x1e58] sm:$0xff]
      %v2132 = vld [vmem:[#allocation9 + $0x1e60] sm:$0xff]
      %v2133 = vld [vmem:[#allocation9 + $0x1e68] sm:$0xff]
      %v2134 = vld [vmem:[#allocation9 + $0x1e70] sm:$0xff]
      %v2135 = vld [vmem:[#allocation9 + $0x1e78] sm:$0xff]
      %v2136 = vld [vmem:[#allocation9 + $0x1e80] sm:$0xff]
      %v2137 = vld [vmem:[#allocation9 + $0x1e88] sm:$0xff]
      %v2138 = vld [vmem:[#allocation9 + $0x1e90] sm:$0xff]
      %v2139 = vld [vmem:[#allocation9 + $0x1e98] sm:$0xff]
      %v2140 = vld [vmem:[#allocation9 + $0x1ea0] sm:$0xff]
      %v2141 = vld [vmem:[#allocation9 + $0x1ea8] sm:$0xff]
      %v2142 = vld [vmem:[#allocation9 + $0x1eb0] sm:$0xff]
      %v2143 = vld [vmem:[#allocation9 + $0x1eb8] sm:$0xff]
      %v2144 = vld [vmem:[#allocation9 + $0x1ec0] sm:$0xff]
      %v2145 = vld [vmem:[#allocation9 + $0x1ec8] sm:$0xff]
      %v2146 = vld [vmem:[#allocation9 + $0x1ed0] sm:$0xff]
      %v2147 = vld [vmem:[#allocation9 + $0x1ed8] sm:$0xff]
      %v2148 = vld [vmem:[#allocation9 + $0x1ee0] sm:$0xff]
      %v2149 = vld [vmem:[#allocation9 + $0x1ee8] sm:$0xff]
      %v2150 = vld [vmem:[#allocation9 + $0x1ef0] sm:$0xff]
      %v2151 = vld [vmem:[#allocation9 + $0x1ef8] sm:$0xff]
      %v2152 = vld [vmem:[#allocation9 + $0x1f00] sm:$0xff]
      %v2153 = vld [vmem:[#allocation9 + $0x1f08] sm:$0xff]
      %v2154 = vld [vmem:[#allocation9 + $0x1f10] sm:$0xff]
      %v2155 = vld [vmem:[#allocation9 + $0x1f18] sm:$0xff]
      %v2156 = vld [vmem:[#allocation9 + $0x1f20] sm:$0xff]
      %v2157 = vld [vmem:[#allocation9 + $0x1f28] sm:$0xff]
      %v2158 = vld [vmem:[#allocation9 + $0x1f30] sm:$0xff]
      %v2159 = vld [vmem:[#allocation9 + $0x1f38] sm:$0xff]
      %v2160 = vld [vmem:[#allocation9 + $0x1f40] sm:$0xff]
      %v2161 = vld [vmem:[#allocation9 + $0x1f48] sm:$0xff]
      %v2162 = vld [vmem:[#allocation9 + $0x1f50] sm:$0xff]
      %v2163 = vld [vmem:[#allocation9 + $0x1f58] sm:$0xff]
      %v2164 = vld [vmem:[#allocation9 + $0x1f60] sm:$0xff]
      %v2165 = vld [vmem:[#allocation9 + $0x1f68] sm:$0xff]
      %v2166 = vld [vmem:[#allocation9 + $0x1f70] sm:$0xff]
      %v2167 = vld [vmem:[#allocation9 + $0x1f78] sm:$0xff]
      %v2168 = vld [vmem:[#allocation9 + $0x1f80] sm:$0xff]
      %v2169 = vld [vmem:[#allocation9 + $0x1f88] sm:$0xff]
      %v2170 = vld [vmem:[#allocation9 + $0x1f90] sm:$0xff]
      %v2171 = vld [vmem:[#allocation9 + $0x1f98] sm:$0xff]
      %v2172 = vld [vmem:[#allocation9 + $0x1fa0] sm:$0xff]
      %v2173 = vld [vmem:[#allocation9 + $0x1fa8] sm:$0xff]
      %v2174 = vld [vmem:[#allocation9 + $0x1fb0] sm:$0xff]
      %v2175 = vld [vmem:[#allocation9 + $0x1fb8] sm:$0xff]
      %v2176 = vld [vmem:[#allocation9 + $0x1fc0] sm:$0xff]
      %v2177 = vld [vmem:[#allocation9 + $0x1fc8] sm:$0xff]
      %v2178 = vld [vmem:[#allocation9 + $0x1fd0] sm:$0xff]
      %v2179 = vld [vmem:[#allocation9 + $0x1fd8] sm:$0xff]
      %v2180 = vld [vmem:[#allocation9 + $0x1fe0] sm:$0xff]
      %v2181 = vld [vmem:[#allocation9 + $0x1fe8] sm:$0xff]
      %v2182 = vld [vmem:[#allocation9 + $0x1ff0] sm:$0xff]
      %v2183 = vld [vmem:[#allocation9 + $0x1ff8] sm:$0xff]
      %v2184 = vld [vmem:[#allocation11] sm:$0xff]
      %v2185 = vld [vmem:[#allocation11 + $0x8] sm:$0xff]
      %v2188 = vlaneseq
      %v2189 = vshrl.u32 %v2188, 7
      %v2190 = vsub.s32 0, %v2189
      %v2191 = vrot.slane %v2184, %v2190
      %v2192 = vlaneseq
      %v2193 = vshrl.u32 %v2192, 7
      %v2194 = vsub.s32 1, %v2193
      %v2195 = vrot.slane %v2184, %v2194
      %v2196 = vlaneseq
      %v2197 = vshrl.u32 %v2196, 7
      %v2198 = vsub.s32 2, %v2197
      %v2199 = vrot.slane %v2184, %v2198
      %v2200 = vlaneseq
      %v2201 = vshrl.u32 %v2200, 7
      %v2202 = vsub.s32 3, %v2201
      %v2203 = vrot.slane %v2184, %v2202
      %v2204 = vlaneseq
      %v2205 = vshrl.u32 %v2204, 7
      %v2206 = vsub.s32 4, %v2205
      %v2207 = vrot.slane %v2184, %v2206
      %v2208 = vlaneseq
      %v2209 = vshrl.u32 %v2208, 7
      %v2210 = vsub.s32 5, %v2209
      %v2211 = vrot.slane %v2184, %v2210
      %v2212 = vlaneseq
      %v2213 = vshrl.u32 %v2212, 7
      %v2214 = vsub.s32 6, %v2213
      %v2215 = vrot.slane %v2184, %v2214
      %v2216 = vlaneseq
      %v2217 = vshrl.u32 %v2216, 7
      %v2218 = vsub.s32 7, %v2217
      %v2219 = vrot.slane %v2184, %v2218
      %v2220 = vlaneseq
      %v2221 = vshrl.u32 %v2220, 7
      %v2222 = vsub.s32 0, %v2221
      %v2223 = vrot.slane %v2185, %v2222
      %v2224 = vlaneseq
      %v2225 = vshrl.u32 %v2224, 7
      %v2226 = vsub.s32 1, %v2225
      %v2227 = vrot.slane %v2185, %v2226
      %v2228 = vlaneseq
      %v2229 = vshrl.u32 %v2228, 7
      %v2230 = vsub.s32 2, %v2229
      %v2231 = vrot.slane %v2185, %v2230
      %v2232 = vlaneseq
      %v2233 = vshrl.u32 %v2232, 7
      %v2234 = vsub.s32 3, %v2233
      %v2235 = vrot.slane %v2185, %v2234
      %v2236 = vlaneseq
      %v2237 = vshrl.u32 %v2236, 7
      %v2238 = vsub.s32 4, %v2237
      %v2239 = vrot.slane %v2185, %v2238
      %v2240 = vlaneseq
      %v2241 = vshrl.u32 %v2240, 7
      %v2242 = vsub.s32 5, %v2241
      %v2243 = vrot.slane %v2185, %v2242
      %v2244 = vlaneseq
      %v2245 = vshrl.u32 %v2244, 7
      %v2246 = vsub.s32 6, %v2245
      %v2247 = vrot.slane %v2185, %v2246
      %v2248 = vlaneseq
      %v2249 = vshrl.u32 %v2248, 7
      %v2250 = vsub.s32 7, %v2249
      %v2251 = vrot.slane %v2185, %v2250
      %v3292 = vunpack.c.l.b16 %v1160
      %v3293 = vunpack.c.h.b16 %v1160
      %v3294 = vunpack.c.l.b16 %v1161
      %v3295 = vunpack.c.h.b16 %v1161
      %v3296 = vunpack.c.l.b16 %v1162
      %v3297 = vunpack.c.h.b16 %v1162
      %v3298 = vunpack.c.l.b16 %v1163
      %v3299 = vunpack.c.h.b16 %v1163
      %v3300 = vunpack.c.l.b16 %v1164
      %v3301 = vunpack.c.h.b16 %v1164
      %v3302 = vunpack.c.l.b16 %v1165
      %v3303 = vunpack.c.h.b16 %v1165
      %v3304 = vunpack.c.l.b16 %v1166
      %v3305 = vunpack.c.h.b16 %v1166
      %v3306 = vunpack.c.l.b16 %v1167
      %v3307 = vunpack.c.h.b16 %v1167
      %v3308 = vunpack.c.l.b16 %v1168
      %v3309 = vunpack.c.h.b16 %v1168
      %v3310 = vunpack.c.l.b16 %v1169
      %v3311 = vunpack.c.h.b16 %v1169
      %v3312 = vunpack.c.l.b16 %v1170
      %v3313 = vunpack.c.h.b16 %v1170
      %v3314 = vunpack.c.l.b16 %v1171
      %v3315 = vunpack.c.h.b16 %v1171
      %v3316 = vunpack.c.l.b16 %v1172
      %v3317 = vunpack.c.h.b16 %v1172
      %v3318 = vunpack.c.l.b16 %v1173
      %v3319 = vunpack.c.h.b16 %v1173
      %v3320 = vunpack.c.l.b16 %v1174
      %v3321 = vunpack.c.h.b16 %v1174
      %v3322 = vunpack.c.l.b16 %v1175
      %v3323 = vunpack.c.h.b16 %v1175
      %v3324 = vunpack.c.l.b16 %v1176
      %v3325 = vunpack.c.h.b16 %v1176
      %v3326 = vunpack.c.l.b16 %v1177
      %v3327 = vunpack.c.h.b16 %v1177
      %v3328 = vunpack.c.l.b16 %v1178
      %v3329 = vunpack.c.h.b16 %v1178
      %v3330 = vunpack.c.l.b16 %v1179
      %v3331 = vunpack.c.h.b16 %v1179
      %v3332 = vunpack.c.l.b16 %v1180
      %v3333 = vunpack.c.h.b16 %v1180
      %v3334 = vunpack.c.l.b16 %v1181
      %v3335 = vunpack.c.h.b16 %v1181
      %v3336 = vunpack.c.l.b16 %v1182
      %v3337 = vunpack.c.h.b16 %v1182
      %v3338 = vunpack.c.l.b16 %v1183
      %v3339 = vunpack.c.h.b16 %v1183
      %v3340 = vunpack.c.l.b16 %v1184
      %v3341 = vunpack.c.h.b16 %v1184
      %v3342 = vunpack.c.l.b16 %v1185
      %v3343 = vunpack.c.h.b16 %v1185
      %v3344 = vunpack.c.l.b16 %v1186
      %v3345 = vunpack.c.h.b16 %v1186
      %v3346 = vunpack.c.l.b16 %v1187
      %v3347 = vunpack.c.h.b16 %v1187
      %v3348 = vunpack.c.l.b16 %v1188
      %v3349 = vunpack.c.h.b16 %v1188
      %v3350 = vunpack.c.l.b16 %v1189
      %v3351 = vunpack.c.h.b16 %v1189
      %v3352 = vunpack.c.l.b16 %v1190
      %v3353 = vunpack.c.h.b16 %v1190
      %v3354 = vunpack.c.l.b16 %v1191
      %v3355 = vunpack.c.h.b16 %v1191
      %v3356 = vunpack.c.l.b16 %v1192
      %v3357 = vunpack.c.h.b16 %v1192
      %v3358 = vunpack.c.l.b16 %v1193
      %v3359 = vunpack.c.h.b16 %v1193
      %v3360 = vunpack.c.l.b16 %v1194
      %v3361 = vunpack.c.h.b16 %v1194
      %v3362 = vunpack.c.l.b16 %v1195
      %v3363 = vunpack.c.h.b16 %v1195
      %v3364 = vunpack.c.l.b16 %v1196
      %v3365 = vunpack.c.h.b16 %v1196
      %v3366 = vunpack.c.l.b16 %v1197
      %v3367 = vunpack.c.h.b16 %v1197
      %v3368 = vunpack.c.l.b16 %v1198
      %v3369 = vunpack.c.h.b16 %v1198
      %v3370 = vunpack.c.l.b16 %v1199
      %v3371 = vunpack.c.h.b16 %v1199
      %v3372 = vunpack.c.l.b16 %v1200
      %v3373 = vunpack.c.h.b16 %v1200
      %v3374 = vunpack.c.l.b16 %v1201
      %v3375 = vunpack.c.h.b16 %v1201
      %v3376 = vunpack.c.l.b16 %v1202
      %v3377 = vunpack.c.h.b16 %v1202
      %v3378 = vunpack.c.l.b16 %v1203
      %v3379 = vunpack.c.h.b16 %v1203
      %v3380 = vunpack.c.l.b16 %v1204
      %v3381 = vunpack.c.h.b16 %v1204
      %v3382 = vunpack.c.l.b16 %v1205
      %v3383 = vunpack.c.h.b16 %v1205
      %v3384 = vunpack.c.l.b16 %v1206
      %v3385 = vunpack.c.h.b16 %v1206
      %v3386 = vunpack.c.l.b16 %v1207
      %v3387 = vunpack.c.h.b16 %v1207
      %v3388 = vunpack.c.l.b16 %v1208
      %v3389 = vunpack.c.h.b16 %v1208
      %v3390 = vunpack.c.l.b16 %v1209
      %v3391 = vunpack.c.h.b16 %v1209
      %v3392 = vunpack.c.l.b16 %v1210
      %v3393 = vunpack.c.h.b16 %v1210
      %v3394 = vunpack.c.l.b16 %v1211
      %v3395 = vunpack.c.h.b16 %v1211
      %v3396 = vunpack.c.l.b16 %v1212
      %v3397 = vunpack.c.h.b16 %v1212
      %v3398 = vunpack.c.l.b16 %v1213
      %v3399 = vunpack.c.h.b16 %v1213
      %v3400 = vunpack.c.l.b16 %v1214
      %v3401 = vunpack.c.h.b16 %v1214
      %v3402 = vunpack.c.l.b16 %v1215
      %v3403 = vunpack.c.h.b16 %v1215
      %v3404 = vunpack.c.l.b16 %v1216
      %v3405 = vunpack.c.h.b16 %v1216
      %v3406 = vunpack.c.l.b16 %v1217
      %v3407 = vunpack.c.h.b16 %v1217
      %v3408 = vunpack.c.l.b16 %v1218
      %v3409 = vunpack.c.h.b16 %v1218
      %v3410 = vunpack.c.l.b16 %v1219
      %v3411 = vunpack.c.h.b16 %v1219
      %v3412 = vunpack.c.l.b16 %v1220
      %v3413 = vunpack.c.h.b16 %v1220
      %v3414 = vunpack.c.l.b16 %v1221
      %v3415 = vunpack.c.h.b16 %v1221
      %v3416 = vunpack.c.l.b16 %v1222
      %v3417 = vunpack.c.h.b16 %v1222
      %v3418 = vunpack.c.l.b16 %v1223
      %v3419 = vunpack.c.h.b16 %v1223
      %v3420 = vunpack.c.l.b16 %v1224
      %v3421 = vunpack.c.h.b16 %v1224
      %v3422 = vunpack.c.l.b16 %v1225
      %v3423 = vunpack.c.h.b16 %v1225
      %v3424 = vunpack.c.l.b16 %v1226
      %v3425 = vunpack.c.h.b16 %v1226
      %v3426 = vunpack.c.l.b16 %v1227
      %v3427 = vunpack.c.h.b16 %v1227
      %v3428 = vunpack.c.l.b16 %v1228
      %v3429 = vunpack.c.h.b16 %v1228
      %v3430 = vunpack.c.l.b16 %v1229
      %v3431 = vunpack.c.h.b16 %v1229
      %v3432 = vunpack.c.l.b16 %v1230
      %v3433 = vunpack.c.h.b16 %v1230
      %v3434 = vunpack.c.l.b16 %v1231
      %v3435 = vunpack.c.h.b16 %v1231
      %v3436 = vunpack.c.l.b16 %v1232
      %v3437 = vunpack.c.h.b16 %v1232
      %v3438 = vunpack.c.l.b16 %v1233
      %v3439 = vunpack.c.h.b16 %v1233
      %v3440 = vunpack.c.l.b16 %v1234
      %v3441 = vunpack.c.h.b16 %v1234
      %v3442 = vunpack.c.l.b16 %v1235
      %v3443 = vunpack.c.h.b16 %v1235
      %v3444 = vunpack.c.l.b16 %v1236
      %v3445 = vunpack.c.h.b16 %v1236
      %v3446 = vunpack.c.l.b16 %v1237
      %v3447 = vunpack.c.h.b16 %v1237
      %v3448 = vunpack.c.l.b16 %v1238
      %v3449 = vunpack.c.h.b16 %v1238
      %v3450 = vunpack.c.l.b16 %v1239
      %v3451 = vunpack.c.h.b16 %v1239
      %v3452 = vunpack.c.l.b16 %v1240
      %v3453 = vunpack.c.h.b16 %v1240
      %v3454 = vunpack.c.l.b16 %v1241
      %v3455 = vunpack.c.h.b16 %v1241
      %v3456 = vunpack.c.l.b16 %v1242
      %v3457 = vunpack.c.h.b16 %v1242
      %v3458 = vunpack.c.l.b16 %v1243
      %v3459 = vunpack.c.h.b16 %v1243
      %v3460 = vunpack.c.l.b16 %v1244
      %v3461 = vunpack.c.h.b16 %v1244
      %v3462 = vunpack.c.l.b16 %v1245
      %v3463 = vunpack.c.h.b16 %v1245
      %v3464 = vunpack.c.l.b16 %v1246
      %v3465 = vunpack.c.h.b16 %v1246
      %v3466 = vunpack.c.l.b16 %v1247
      %v3467 = vunpack.c.h.b16 %v1247
      %v3468 = vunpack.c.l.b16 %v1248
      %v3469 = vunpack.c.h.b16 %v1248
      %v3470 = vunpack.c.l.b16 %v1249
      %v3471 = vunpack.c.h.b16 %v1249
      %v3472 = vunpack.c.l.b16 %v1250
      %v3473 = vunpack.c.h.b16 %v1250
      %v3474 = vunpack.c.l.b16 %v1251
      %v3475 = vunpack.c.h.b16 %v1251
      %v3476 = vunpack.c.l.b16 %v1252
      %v3477 = vunpack.c.h.b16 %v1252
      %v3478 = vunpack.c.l.b16 %v1253
      %v3479 = vunpack.c.h.b16 %v1253
      %v3480 = vunpack.c.l.b16 %v1254
      %v3481 = vunpack.c.h.b16 %v1254
      %v3482 = vunpack.c.l.b16 %v1255
      %v3483 = vunpack.c.h.b16 %v1255
      %v3484 = vunpack.c.l.b16 %v1256
      %v3485 = vunpack.c.h.b16 %v1256
      %v3486 = vunpack.c.l.b16 %v1257
      %v3487 = vunpack.c.h.b16 %v1257
      %v3488 = vunpack.c.l.b16 %v1258
      %v3489 = vunpack.c.h.b16 %v1258
      %v3490 = vunpack.c.l.b16 %v1259
      %v3491 = vunpack.c.h.b16 %v1259
      %v3492 = vunpack.c.l.b16 %v1260
      %v3493 = vunpack.c.h.b16 %v1260
      %v3494 = vunpack.c.l.b16 %v1261
      %v3495 = vunpack.c.h.b16 %v1261
      %v3496 = vunpack.c.l.b16 %v1262
      %v3497 = vunpack.c.h.b16 %v1262
      %v3498 = vunpack.c.l.b16 %v1263
      %v3499 = vunpack.c.h.b16 %v1263
      %v3500 = vunpack.c.l.b16 %v1264
      %v3501 = vunpack.c.h.b16 %v1264
      %v3502 = vunpack.c.l.b16 %v1265
      %v3503 = vunpack.c.h.b16 %v1265
      %v3504 = vunpack.c.l.b16 %v1266
      %v3505 = vunpack.c.h.b16 %v1266
      %v3506 = vunpack.c.l.b16 %v1267
      %v3507 = vunpack.c.h.b16 %v1267
      %v3508 = vunpack.c.l.b16 %v1268
      %v3509 = vunpack.c.h.b16 %v1268
      %v3510 = vunpack.c.l.b16 %v1269
      %v3511 = vunpack.c.h.b16 %v1269
      %v3512 = vunpack.c.l.b16 %v1270
      %v3513 = vunpack.c.h.b16 %v1270
      %v3514 = vunpack.c.l.b16 %v1271
      %v3515 = vunpack.c.h.b16 %v1271
      %v3516 = vunpack.c.l.b16 %v1272
      %v3517 = vunpack.c.h.b16 %v1272
      %v3518 = vunpack.c.l.b16 %v1273
      %v3519 = vunpack.c.h.b16 %v1273
      %v3520 = vunpack.c.l.b16 %v1274
      %v3521 = vunpack.c.h.b16 %v1274
      %v3522 = vunpack.c.l.b16 %v1275
      %v3523 = vunpack.c.h.b16 %v1275
      %v3524 = vunpack.c.l.b16 %v1276
      %v3525 = vunpack.c.h.b16 %v1276
      %v3526 = vunpack.c.l.b16 %v1277
      %v3527 = vunpack.c.h.b16 %v1277
      %v3528 = vunpack.c.l.b16 %v1278
      %v3529 = vunpack.c.h.b16 %v1278
      %v3530 = vunpack.c.l.b16 %v1279
      %v3531 = vunpack.c.h.b16 %v1279
      %v3532 = vunpack.c.l.b16 %v1280
      %v3533 = vunpack.c.h.b16 %v1280
      %v3534 = vunpack.c.l.b16 %v1281
      %v3535 = vunpack.c.h.b16 %v1281
      %v3536 = vunpack.c.l.b16 %v1282
      %v3537 = vunpack.c.h.b16 %v1282
      %v3538 = vunpack.c.l.b16 %v1283
      %v3539 = vunpack.c.h.b16 %v1283
      %v3540 = vunpack.c.l.b16 %v1284
      %v3541 = vunpack.c.h.b16 %v1284
      %v3542 = vunpack.c.l.b16 %v1285
      %v3543 = vunpack.c.h.b16 %v1285
      %v3544 = vunpack.c.l.b16 %v1286
      %v3545 = vunpack.c.h.b16 %v1286
      %v3546 = vunpack.c.l.b16 %v1287
      %v3547 = vunpack.c.h.b16 %v1287
      %v3548 = vunpack.c.l.b16 %v1288
      %v3549 = vunpack.c.h.b16 %v1288
      %v3550 = vunpack.c.l.b16 %v1289
      %v3551 = vunpack.c.h.b16 %v1289
      %v3552 = vunpack.c.l.b16 %v1290
      %v3553 = vunpack.c.h.b16 %v1290
      %v3554 = vunpack.c.l.b16 %v1291
      %v3555 = vunpack.c.h.b16 %v1291
      %v3556 = vunpack.c.l.b16 %v1292
      %v3557 = vunpack.c.h.b16 %v1292
      %v3558 = vunpack.c.l.b16 %v1293
      %v3559 = vunpack.c.h.b16 %v1293
      %v3560 = vunpack.c.l.b16 %v1294
      %v3561 = vunpack.c.h.b16 %v1294
      %v3562 = vunpack.c.l.b16 %v1295
      %v3563 = vunpack.c.h.b16 %v1295
      %v3564 = vunpack.c.l.b16 %v1296
      %v3565 = vunpack.c.h.b16 %v1296
      %v3566 = vunpack.c.l.b16 %v1297
      %v3567 = vunpack.c.h.b16 %v1297
      %v3568 = vunpack.c.l.b16 %v1298
      %v3569 = vunpack.c.h.b16 %v1298
      %v3570 = vunpack.c.l.b16 %v1299
      %v3571 = vunpack.c.h.b16 %v1299
      %v3572 = vunpack.c.l.b16 %v1300
      %v3573 = vunpack.c.h.b16 %v1300
      %v3574 = vunpack.c.l.b16 %v1301
      %v3575 = vunpack.c.h.b16 %v1301
      %v3576 = vunpack.c.l.b16 %v1302
      %v3577 = vunpack.c.h.b16 %v1302
      %v3578 = vunpack.c.l.b16 %v1303
      %v3579 = vunpack.c.h.b16 %v1303
      %v3580 = vunpack.c.l.b16 %v1304
      %v3581 = vunpack.c.h.b16 %v1304
      %v3582 = vunpack.c.l.b16 %v1305
      %v3583 = vunpack.c.h.b16 %v1305
      %v3584 = vunpack.c.l.b16 %v1306
      %v3585 = vunpack.c.h.b16 %v1306
      %v3586 = vunpack.c.l.b16 %v1307
      %v3587 = vunpack.c.h.b16 %v1307
      %v3588 = vunpack.c.l.b16 %v1308
      %v3589 = vunpack.c.h.b16 %v1308
      %v3590 = vunpack.c.l.b16 %v1309
      %v3591 = vunpack.c.h.b16 %v1309
      %v3592 = vunpack.c.l.b16 %v1310
      %v3593 = vunpack.c.h.b16 %v1310
      %v3594 = vunpack.c.l.b16 %v1311
      %v3595 = vunpack.c.h.b16 %v1311
      %v3596 = vunpack.c.l.b16 %v1312
      %v3597 = vunpack.c.h.b16 %v1312
      %v3598 = vunpack.c.l.b16 %v1313
      %v3599 = vunpack.c.h.b16 %v1313
      %v3600 = vunpack.c.l.b16 %v1314
      %v3601 = vunpack.c.h.b16 %v1314
      %v3602 = vunpack.c.l.b16 %v1315
      %v3603 = vunpack.c.h.b16 %v1315
      %v3604 = vunpack.c.l.b16 %v1316
      %v3605 = vunpack.c.h.b16 %v1316
      %v3606 = vunpack.c.l.b16 %v1317
      %v3607 = vunpack.c.h.b16 %v1317
      %v3608 = vunpack.c.l.b16 %v1318
      %v3609 = vunpack.c.h.b16 %v1318
      %v3610 = vunpack.c.l.b16 %v1319
      %v3611 = vunpack.c.h.b16 %v1319
      %v3612 = vunpack.c.l.b16 %v1320
      %v3613 = vunpack.c.h.b16 %v1320
      %v3614 = vunpack.c.l.b16 %v1321
      %v3615 = vunpack.c.h.b16 %v1321
      %v3616 = vunpack.c.l.b16 %v1322
      %v3617 = vunpack.c.h.b16 %v1322
      %v3618 = vunpack.c.l.b16 %v1323
      %v3619 = vunpack.c.h.b16 %v1323
      %v3620 = vunpack.c.l.b16 %v1324
      %v3621 = vunpack.c.h.b16 %v1324
      %v3622 = vunpack.c.l.b16 %v1325
      %v3623 = vunpack.c.h.b16 %v1325
      %v3624 = vunpack.c.l.b16 %v1326
      %v3625 = vunpack.c.h.b16 %v1326
      %v3626 = vunpack.c.l.b16 %v1327
      %v3627 = vunpack.c.h.b16 %v1327
      %v3628 = vunpack.c.l.b16 %v1328
      %v3629 = vunpack.c.h.b16 %v1328
      %v3630 = vunpack.c.l.b16 %v1329
      %v3631 = vunpack.c.h.b16 %v1329
      %v3632 = vunpack.c.l.b16 %v1330
      %v3633 = vunpack.c.h.b16 %v1330
      %v3634 = vunpack.c.l.b16 %v1331
      %v3635 = vunpack.c.h.b16 %v1331
      %v3636 = vunpack.c.l.b16 %v1332
      %v3637 = vunpack.c.h.b16 %v1332
      %v3638 = vunpack.c.l.b16 %v1333
      %v3639 = vunpack.c.h.b16 %v1333
      %v3640 = vunpack.c.l.b16 %v1334
      %v3641 = vunpack.c.h.b16 %v1334
      %v3642 = vunpack.c.l.b16 %v1335
      %v3643 = vunpack.c.h.b16 %v1335
      %v3644 = vunpack.c.l.b16 %v1336
      %v3645 = vunpack.c.h.b16 %v1336
      %v3646 = vunpack.c.l.b16 %v1337
      %v3647 = vunpack.c.h.b16 %v1337
      %v3648 = vunpack.c.l.b16 %v1338
      %v3649 = vunpack.c.h.b16 %v1338
      %v3650 = vunpack.c.l.b16 %v1339
      %v3651 = vunpack.c.h.b16 %v1339
      %v3652 = vunpack.c.l.b16 %v1340
      %v3653 = vunpack.c.h.b16 %v1340
      %v3654 = vunpack.c.l.b16 %v1341
      %v3655 = vunpack.c.h.b16 %v1341
      %v3656 = vunpack.c.l.b16 %v1342
      %v3657 = vunpack.c.h.b16 %v1342
      %v3658 = vunpack.c.l.b16 %v1343
      %v3659 = vunpack.c.h.b16 %v1343
      %v3660 = vunpack.c.l.b16 %v1344
      %v3661 = vunpack.c.h.b16 %v1344
      %v3662 = vunpack.c.l.b16 %v1345
      %v3663 = vunpack.c.h.b16 %v1345
      %v3664 = vunpack.c.l.b16 %v1346
      %v3665 = vunpack.c.h.b16 %v1346
      %v3666 = vunpack.c.l.b16 %v1347
      %v3667 = vunpack.c.h.b16 %v1347
      %v3668 = vunpack.c.l.b16 %v1348
      %v3669 = vunpack.c.h.b16 %v1348
      %v3670 = vunpack.c.l.b16 %v1349
      %v3671 = vunpack.c.h.b16 %v1349
      %v3672 = vunpack.c.l.b16 %v1350
      %v3673 = vunpack.c.h.b16 %v1350
      %v3674 = vunpack.c.l.b16 %v1351
      %v3675 = vunpack.c.h.b16 %v1351
      %v3676 = vunpack.c.l.b16 %v1352
      %v3677 = vunpack.c.h.b16 %v1352
      %v3678 = vunpack.c.l.b16 %v1353
      %v3679 = vunpack.c.h.b16 %v1353
      %v3680 = vunpack.c.l.b16 %v1354
      %v3681 = vunpack.c.h.b16 %v1354
      %v3682 = vunpack.c.l.b16 %v1355
      %v3683 = vunpack.c.h.b16 %v1355
      %v3684 = vunpack.c.l.b16 %v1356
      %v3685 = vunpack.c.h.b16 %v1356
      %v3686 = vunpack.c.l.b16 %v1357
      %v3687 = vunpack.c.h.b16 %v1357
      %v3688 = vunpack.c.l.b16 %v1358
      %v3689 = vunpack.c.h.b16 %v1358
      %v3690 = vunpack.c.l.b16 %v1359
      %v3691 = vunpack.c.h.b16 %v1359
      %v3692 = vunpack.c.l.b16 %v1360
      %v3693 = vunpack.c.h.b16 %v1360
      %v3694 = vunpack.c.l.b16 %v1361
      %v3695 = vunpack.c.h.b16 %v1361
      %v3696 = vunpack.c.l.b16 %v1362
      %v3697 = vunpack.c.h.b16 %v1362
      %v3698 = vunpack.c.l.b16 %v1363
      %v3699 = vunpack.c.h.b16 %v1363
      %v3700 = vunpack.c.l.b16 %v1364
      %v3701 = vunpack.c.h.b16 %v1364
      %v3702 = vunpack.c.l.b16 %v1365
      %v3703 = vunpack.c.h.b16 %v1365
      %v3704 = vunpack.c.l.b16 %v1366
      %v3705 = vunpack.c.h.b16 %v1366
      %v3706 = vunpack.c.l.b16 %v1367
      %v3707 = vunpack.c.h.b16 %v1367
      %v3708 = vunpack.c.l.b16 %v1368
      %v3709 = vunpack.c.h.b16 %v1368
      %v3710 = vunpack.c.l.b16 %v1369
      %v3711 = vunpack.c.h.b16 %v1369
      %v3712 = vunpack.c.l.b16 %v1370
      %v3713 = vunpack.c.h.b16 %v1370
      %v3714 = vunpack.c.l.b16 %v1371
      %v3715 = vunpack.c.h.b16 %v1371
      %v3716 = vunpack.c.l.b16 %v1372
      %v3717 = vunpack.c.h.b16 %v1372
      %v3718 = vunpack.c.l.b16 %v1373
      %v3719 = vunpack.c.h.b16 %v1373
      %v3720 = vunpack.c.l.b16 %v1374
      %v3721 = vunpack.c.h.b16 %v1374
      %v3722 = vunpack.c.l.b16 %v1375
      %v3723 = vunpack.c.h.b16 %v1375
      %v3724 = vunpack.c.l.b16 %v1376
      %v3725 = vunpack.c.h.b16 %v1376
      %v3726 = vunpack.c.l.b16 %v1377
      %v3727 = vunpack.c.h.b16 %v1377
      %v3728 = vunpack.c.l.b16 %v1378
      %v3729 = vunpack.c.h.b16 %v1378
      %v3730 = vunpack.c.l.b16 %v1379
      %v3731 = vunpack.c.h.b16 %v1379
      %v3732 = vunpack.c.l.b16 %v1380
      %v3733 = vunpack.c.h.b16 %v1380
      %v3734 = vunpack.c.l.b16 %v1381
      %v3735 = vunpack.c.h.b16 %v1381
      %v3736 = vunpack.c.l.b16 %v1382
      %v3737 = vunpack.c.h.b16 %v1382
      %v3738 = vunpack.c.l.b16 %v1383
      %v3739 = vunpack.c.h.b16 %v1383
      %v3740 = vunpack.c.l.b16 %v1384
      %v3741 = vunpack.c.h.b16 %v1384
      %v3742 = vunpack.c.l.b16 %v1385
      %v3743 = vunpack.c.h.b16 %v1385
      %v3744 = vunpack.c.l.b16 %v1386
      %v3745 = vunpack.c.h.b16 %v1386
      %v3746 = vunpack.c.l.b16 %v1387
      %v3747 = vunpack.c.h.b16 %v1387
      %v3748 = vunpack.c.l.b16 %v1388
      %v3749 = vunpack.c.h.b16 %v1388
      %v3750 = vunpack.c.l.b16 %v1389
      %v3751 = vunpack.c.h.b16 %v1389
      %v3752 = vunpack.c.l.b16 %v1390
      %v3753 = vunpack.c.h.b16 %v1390
      %v3754 = vunpack.c.l.b16 %v1391
      %v3755 = vunpack.c.h.b16 %v1391
      %v3756 = vunpack.c.l.b16 %v1392
      %v3757 = vunpack.c.h.b16 %v1392
      %v3758 = vunpack.c.l.b16 %v1393
      %v3759 = vunpack.c.h.b16 %v1393
      %v3760 = vunpack.c.l.b16 %v1394
      %v3761 = vunpack.c.h.b16 %v1394
      %v3762 = vunpack.c.l.b16 %v1395
      %v3763 = vunpack.c.h.b16 %v1395
      %v3764 = vunpack.c.l.b16 %v1396
      %v3765 = vunpack.c.h.b16 %v1396
      %v3766 = vunpack.c.l.b16 %v1397
      %v3767 = vunpack.c.h.b16 %v1397
      %v3768 = vunpack.c.l.b16 %v1398
      %v3769 = vunpack.c.h.b16 %v1398
      %v3770 = vunpack.c.l.b16 %v1399
      %v3771 = vunpack.c.h.b16 %v1399
      %v3772 = vunpack.c.l.b16 %v1400
      %v3773 = vunpack.c.h.b16 %v1400
      %v3774 = vunpack.c.l.b16 %v1401
      %v3775 = vunpack.c.h.b16 %v1401
      %v3776 = vunpack.c.l.b16 %v1402
      %v3777 = vunpack.c.h.b16 %v1402
      %v3778 = vunpack.c.l.b16 %v1403
      %v3779 = vunpack.c.h.b16 %v1403
      %v3780 = vunpack.c.l.b16 %v1404
      %v3781 = vunpack.c.h.b16 %v1404
      %v3782 = vunpack.c.l.b16 %v1405
      %v3783 = vunpack.c.h.b16 %v1405
      %v3784 = vunpack.c.l.b16 %v1406
      %v3785 = vunpack.c.h.b16 %v1406
      %v3786 = vunpack.c.l.b16 %v1407
      %v3787 = vunpack.c.h.b16 %v1407
      %v3788 = vunpack.c.l.b16 %v1408
      %v3789 = vunpack.c.h.b16 %v1408
      %v3790 = vunpack.c.l.b16 %v1409
      %v3791 = vunpack.c.h.b16 %v1409
      %v3792 = vunpack.c.l.b16 %v1410
      %v3793 = vunpack.c.h.b16 %v1410
      %v3794 = vunpack.c.l.b16 %v1411
      %v3795 = vunpack.c.h.b16 %v1411
      %v3796 = vunpack.c.l.b16 %v1412
      %v3797 = vunpack.c.h.b16 %v1412
      %v3798 = vunpack.c.l.b16 %v1413
      %v3799 = vunpack.c.h.b16 %v1413
      %v3800 = vunpack.c.l.b16 %v1414
      %v3801 = vunpack.c.h.b16 %v1414
      %v3802 = vunpack.c.l.b16 %v1415
      %v3803 = vunpack.c.h.b16 %v1415
      %v3804 = vunpack.c.l.b16 %v1416
      %v3805 = vunpack.c.h.b16 %v1416
      %v3806 = vunpack.c.l.b16 %v1417
      %v3807 = vunpack.c.h.b16 %v1417
      %v3808 = vunpack.c.l.b16 %v1418
      %v3809 = vunpack.c.h.b16 %v1418
      %v3810 = vunpack.c.l.b16 %v1419
      %v3811 = vunpack.c.h.b16 %v1419
      %v3812 = vunpack.c.l.b16 %v1420
      %v3813 = vunpack.c.h.b16 %v1420
      %v3814 = vunpack.c.l.b16 %v1421
      %v3815 = vunpack.c.h.b16 %v1421
      %v3816 = vunpack.c.l.b16 %v1422
      %v3817 = vunpack.c.h.b16 %v1422
      %v3818 = vunpack.c.l.b16 %v1423
      %v3819 = vunpack.c.h.b16 %v1423
      %v3820 = vunpack.c.l.b16 %v1424
      %v3821 = vunpack.c.h.b16 %v1424
      %v3822 = vunpack.c.l.b16 %v1425
      %v3823 = vunpack.c.h.b16 %v1425
      %v3824 = vunpack.c.l.b16 %v1426
      %v3825 = vunpack.c.h.b16 %v1426
      %v3826 = vunpack.c.l.b16 %v1427
      %v3827 = vunpack.c.h.b16 %v1427
      %v3828 = vunpack.c.l.b16 %v1428
      %v3829 = vunpack.c.h.b16 %v1428
      %v3830 = vunpack.c.l.b16 %v1429
      %v3831 = vunpack.c.h.b16 %v1429
      %v3832 = vunpack.c.l.b16 %v1430
      %v3833 = vunpack.c.h.b16 %v1430
      %v3834 = vunpack.c.l.b16 %v1431
      %v3835 = vunpack.c.h.b16 %v1431
      %v3836 = vunpack.c.l.b16 %v1432
      %v3837 = vunpack.c.h.b16 %v1432
      %v3838 = vunpack.c.l.b16 %v1433
      %v3839 = vunpack.c.h.b16 %v1433
      %v3840 = vunpack.c.l.b16 %v1434
      %v3841 = vunpack.c.h.b16 %v1434
      %v3842 = vunpack.c.l.b16 %v1435
      %v3843 = vunpack.c.h.b16 %v1435
      %v3844 = vunpack.c.l.b16 %v1436
      %v3845 = vunpack.c.h.b16 %v1436
      %v3846 = vunpack.c.l.b16 %v1437
      %v3847 = vunpack.c.h.b16 %v1437
      %v3848 = vunpack.c.l.b16 %v1438
      %v3849 = vunpack.c.h.b16 %v1438
      %v3850 = vunpack.c.l.b16 %v1439
      %v3851 = vunpack.c.h.b16 %v1439
      %v3852 = vunpack.c.l.b16 %v1440
      %v3853 = vunpack.c.h.b16 %v1440
      %v3854 = vunpack.c.l.b16 %v1441
      %v3855 = vunpack.c.h.b16 %v1441
      %v3856 = vunpack.c.l.b16 %v1442
      %v3857 = vunpack.c.h.b16 %v1442
      %v3858 = vunpack.c.l.b16 %v1443
      %v3859 = vunpack.c.h.b16 %v1443
      %v3860 = vunpack.c.l.b16 %v1444
      %v3861 = vunpack.c.h.b16 %v1444
      %v3862 = vunpack.c.l.b16 %v1445
      %v3863 = vunpack.c.h.b16 %v1445
      %v3864 = vunpack.c.l.b16 %v1446
      %v3865 = vunpack.c.h.b16 %v1446
      %v3866 = vunpack.c.l.b16 %v1447
      %v3867 = vunpack.c.h.b16 %v1447
      %v3868 = vunpack.c.l.b16 %v1448
      %v3869 = vunpack.c.h.b16 %v1448
      %v3870 = vunpack.c.l.b16 %v1449
      %v3871 = vunpack.c.h.b16 %v1449
      %v3872 = vunpack.c.l.b16 %v1450
      %v3873 = vunpack.c.h.b16 %v1450
      %v3874 = vunpack.c.l.b16 %v1451
      %v3875 = vunpack.c.h.b16 %v1451
      %v3876 = vunpack.c.l.b16 %v1452
      %v3877 = vunpack.c.h.b16 %v1452
      %v3878 = vunpack.c.l.b16 %v1453
      %v3879 = vunpack.c.h.b16 %v1453
      %v3880 = vunpack.c.l.b16 %v1454
      %v3881 = vunpack.c.h.b16 %v1454
      %v3882 = vunpack.c.l.b16 %v1455
      %v3883 = vunpack.c.h.b16 %v1455
      %v3884 = vunpack.c.l.b16 %v1456
      %v3885 = vunpack.c.h.b16 %v1456
      %v3886 = vunpack.c.l.b16 %v1457
      %v3887 = vunpack.c.h.b16 %v1457
      %v3888 = vunpack.c.l.b16 %v1458
      %v3889 = vunpack.c.h.b16 %v1458
      %v3890 = vunpack.c.l.b16 %v1459
      %v3891 = vunpack.c.h.b16 %v1459
      %v3892 = vunpack.c.l.b16 %v1460
      %v3893 = vunpack.c.h.b16 %v1460
      %v3894 = vunpack.c.l.b16 %v1461
      %v3895 = vunpack.c.h.b16 %v1461
      %v3896 = vunpack.c.l.b16 %v1462
      %v3897 = vunpack.c.h.b16 %v1462
      %v3898 = vunpack.c.l.b16 %v1463
      %v3899 = vunpack.c.h.b16 %v1463
      %v3900 = vunpack.c.l.b16 %v1464
      %v3901 = vunpack.c.h.b16 %v1464
      %v3902 = vunpack.c.l.b16 %v1465
      %v3903 = vunpack.c.h.b16 %v1465
      %v3904 = vunpack.c.l.b16 %v1466
      %v3905 = vunpack.c.h.b16 %v1466
      %v3906 = vunpack.c.l.b16 %v1467
      %v3907 = vunpack.c.h.b16 %v1467
      %v3908 = vunpack.c.l.b16 %v1468
      %v3909 = vunpack.c.h.b16 %v1468
      %v3910 = vunpack.c.l.b16 %v1469
      %v3911 = vunpack.c.h.b16 %v1469
      %v3912 = vunpack.c.l.b16 %v1470
      %v3913 = vunpack.c.h.b16 %v1470
      %v3914 = vunpack.c.l.b16 %v1471
      %v3915 = vunpack.c.h.b16 %v1471
      %v3916 = vunpack.c.l.b16 %v1472
      %v3917 = vunpack.c.h.b16 %v1472
      %v3918 = vunpack.c.l.b16 %v1473
      %v3919 = vunpack.c.h.b16 %v1473
      %v3920 = vunpack.c.l.b16 %v1474
      %v3921 = vunpack.c.h.b16 %v1474
      %v3922 = vunpack.c.l.b16 %v1475
      %v3923 = vunpack.c.h.b16 %v1475
      %v3924 = vunpack.c.l.b16 %v1476
      %v3925 = vunpack.c.h.b16 %v1476
      %v3926 = vunpack.c.l.b16 %v1477
      %v3927 = vunpack.c.h.b16 %v1477
      %v3928 = vunpack.c.l.b16 %v1478
      %v3929 = vunpack.c.h.b16 %v1478
      %v3930 = vunpack.c.l.b16 %v1479
      %v3931 = vunpack.c.h.b16 %v1479
      %v3932 = vunpack.c.l.b16 %v1480
      %v3933 = vunpack.c.h.b16 %v1480
      %v3934 = vunpack.c.l.b16 %v1481
      %v3935 = vunpack.c.h.b16 %v1481
      %v3936 = vunpack.c.l.b16 %v1482
      %v3937 = vunpack.c.h.b16 %v1482
      %v3938 = vunpack.c.l.b16 %v1483
      %v3939 = vunpack.c.h.b16 %v1483
      %v3940 = vunpack.c.l.b16 %v1484
      %v3941 = vunpack.c.h.b16 %v1484
      %v3942 = vunpack.c.l.b16 %v1485
      %v3943 = vunpack.c.h.b16 %v1485
      %v3944 = vunpack.c.l.b16 %v1486
      %v3945 = vunpack.c.h.b16 %v1486
      %v3946 = vunpack.c.l.b16 %v1487
      %v3947 = vunpack.c.h.b16 %v1487
      %v3948 = vunpack.c.l.b16 %v1488
      %v3949 = vunpack.c.h.b16 %v1488
      %v3950 = vunpack.c.l.b16 %v1489
      %v3951 = vunpack.c.h.b16 %v1489
      %v3952 = vunpack.c.l.b16 %v1490
      %v3953 = vunpack.c.h.b16 %v1490
      %v3954 = vunpack.c.l.b16 %v1491
      %v3955 = vunpack.c.h.b16 %v1491
      %v3956 = vunpack.c.l.b16 %v1492
      %v3957 = vunpack.c.h.b16 %v1492
      %v3958 = vunpack.c.l.b16 %v1493
      %v3959 = vunpack.c.h.b16 %v1493
      %v3960 = vunpack.c.l.b16 %v1494
      %v3961 = vunpack.c.h.b16 %v1494
      %v3962 = vunpack.c.l.b16 %v1495
      %v3963 = vunpack.c.h.b16 %v1495
      %v3964 = vunpack.c.l.b16 %v1496
      %v3965 = vunpack.c.h.b16 %v1496
      %v3966 = vunpack.c.l.b16 %v1497
      %v3967 = vunpack.c.h.b16 %v1497
      %v3968 = vunpack.c.l.b16 %v1498
      %v3969 = vunpack.c.h.b16 %v1498
      %v3970 = vunpack.c.l.b16 %v1499
      %v3971 = vunpack.c.h.b16 %v1499
      %v3972 = vunpack.c.l.b16 %v1500
      %v3973 = vunpack.c.h.b16 %v1500
      %v3974 = vunpack.c.l.b16 %v1501
      %v3975 = vunpack.c.h.b16 %v1501
      %v3976 = vunpack.c.l.b16 %v1502
      %v3977 = vunpack.c.h.b16 %v1502
      %v3978 = vunpack.c.l.b16 %v1503
      %v3979 = vunpack.c.h.b16 %v1503
      %v3980 = vunpack.c.l.b16 %v1504
      %v3981 = vunpack.c.h.b16 %v1504
      %v3982 = vunpack.c.l.b16 %v1505
      %v3983 = vunpack.c.h.b16 %v1505
      %v3984 = vunpack.c.l.b16 %v1506
      %v3985 = vunpack.c.h.b16 %v1506
      %v3986 = vunpack.c.l.b16 %v1507
      %v3987 = vunpack.c.h.b16 %v1507
      %v3988 = vunpack.c.l.b16 %v1508
      %v3989 = vunpack.c.h.b16 %v1508
      %v3990 = vunpack.c.l.b16 %v1509
      %v3991 = vunpack.c.h.b16 %v1509
      %v3992 = vunpack.c.l.b16 %v1510
      %v3993 = vunpack.c.h.b16 %v1510
      %v3994 = vunpack.c.l.b16 %v1511
      %v3995 = vunpack.c.h.b16 %v1511
      %v3996 = vunpack.c.l.b16 %v1512
      %v3997 = vunpack.c.h.b16 %v1512
      %v3998 = vunpack.c.l.b16 %v1513
      %v3999 = vunpack.c.h.b16 %v1513
      %v4000 = vunpack.c.l.b16 %v1514
      %v4001 = vunpack.c.h.b16 %v1514
      %v4002 = vunpack.c.l.b16 %v1515
      %v4003 = vunpack.c.h.b16 %v1515
      %v4004 = vunpack.c.l.b16 %v1516
      %v4005 = vunpack.c.h.b16 %v1516
      %v4006 = vunpack.c.l.b16 %v1517
      %v4007 = vunpack.c.h.b16 %v1517
      %v4008 = vunpack.c.l.b16 %v1518
      %v4009 = vunpack.c.h.b16 %v1518
      %v4010 = vunpack.c.l.b16 %v1519
      %v4011 = vunpack.c.h.b16 %v1519
      %v4012 = vunpack.c.l.b16 %v1520
      %v4013 = vunpack.c.h.b16 %v1520
      %v4014 = vunpack.c.l.b16 %v1521
      %v4015 = vunpack.c.h.b16 %v1521
      %v4016 = vunpack.c.l.b16 %v1522
      %v4017 = vunpack.c.h.b16 %v1522
      %v4018 = vunpack.c.l.b16 %v1523
      %v4019 = vunpack.c.h.b16 %v1523
      %v4020 = vunpack.c.l.b16 %v1524
      %v4021 = vunpack.c.h.b16 %v1524
      %v4022 = vunpack.c.l.b16 %v1525
      %v4023 = vunpack.c.h.b16 %v1525
      %v4024 = vunpack.c.l.b16 %v1526
      %v4025 = vunpack.c.h.b16 %v1526
      %v4026 = vunpack.c.l.b16 %v1527
      %v4027 = vunpack.c.h.b16 %v1527
      %v4028 = vunpack.c.l.b16 %v1528
      %v4029 = vunpack.c.h.b16 %v1528
      %v4030 = vunpack.c.l.b16 %v1529
      %v4031 = vunpack.c.h.b16 %v1529
      %v4032 = vunpack.c.l.b16 %v1530
      %v4033 = vunpack.c.h.b16 %v1530
      %v4034 = vunpack.c.l.b16 %v1531
      %v4035 = vunpack.c.h.b16 %v1531
      %v4036 = vunpack.c.l.b16 %v1532
      %v4037 = vunpack.c.h.b16 %v1532
      %v4038 = vunpack.c.l.b16 %v1533
      %v4039 = vunpack.c.h.b16 %v1533
      %v4040 = vunpack.c.l.b16 %v1534
      %v4041 = vunpack.c.h.b16 %v1534
      %v4042 = vunpack.c.l.b16 %v1535
      %v4043 = vunpack.c.h.b16 %v1535
      %v4044 = vunpack.c.l.b16 %v1536
      %v4045 = vunpack.c.h.b16 %v1536
      %v4046 = vunpack.c.l.b16 %v1537
      %v4047 = vunpack.c.h.b16 %v1537
      %v4048 = vunpack.c.l.b16 %v1538
      %v4049 = vunpack.c.h.b16 %v1538
      %v4050 = vunpack.c.l.b16 %v1539
      %v4051 = vunpack.c.h.b16 %v1539
      %v4052 = vunpack.c.l.b16 %v1540
      %v4053 = vunpack.c.h.b16 %v1540
      %v4054 = vunpack.c.l.b16 %v1541
      %v4055 = vunpack.c.h.b16 %v1541
      %v4056 = vunpack.c.l.b16 %v1542
      %v4057 = vunpack.c.h.b16 %v1542
      %v4058 = vunpack.c.l.b16 %v1543
      %v4059 = vunpack.c.h.b16 %v1543
      %v4060 = vunpack.c.l.b16 %v1544
      %v4061 = vunpack.c.h.b16 %v1544
      %v4062 = vunpack.c.l.b16 %v1545
      %v4063 = vunpack.c.h.b16 %v1545
      %v4064 = vunpack.c.l.b16 %v1546
      %v4065 = vunpack.c.h.b16 %v1546
      %v4066 = vunpack.c.l.b16 %v1547
      %v4067 = vunpack.c.h.b16 %v1547
      %v4068 = vunpack.c.l.b16 %v1548
      %v4069 = vunpack.c.h.b16 %v1548
      %v4070 = vunpack.c.l.b16 %v1549
      %v4071 = vunpack.c.h.b16 %v1549
      %v4072 = vunpack.c.l.b16 %v1550
      %v4073 = vunpack.c.h.b16 %v1550
      %v4074 = vunpack.c.l.b16 %v1551
      %v4075 = vunpack.c.h.b16 %v1551
      %v4076 = vunpack.c.l.b16 %v1552
      %v4077 = vunpack.c.h.b16 %v1552
      %v4078 = vunpack.c.l.b16 %v1553
      %v4079 = vunpack.c.h.b16 %v1553
      %v4080 = vunpack.c.l.b16 %v1554
      %v4081 = vunpack.c.h.b16 %v1554
      %v4082 = vunpack.c.l.b16 %v1555
      %v4083 = vunpack.c.h.b16 %v1555
      %v4084 = vunpack.c.l.b16 %v1556
      %v4085 = vunpack.c.h.b16 %v1556
      %v4086 = vunpack.c.l.b16 %v1557
      %v4087 = vunpack.c.h.b16 %v1557
      %v4088 = vunpack.c.l.b16 %v1558
      %v4089 = vunpack.c.h.b16 %v1558
      %v4090 = vunpack.c.l.b16 %v1559
      %v4091 = vunpack.c.h.b16 %v1559
      %v4092 = vunpack.c.l.b16 %v1560
      %v4093 = vunpack.c.h.b16 %v1560
      %v4094 = vunpack.c.l.b16 %v1561
      %v4095 = vunpack.c.h.b16 %v1561
      %v4096 = vunpack.c.l.b16 %v1562
      %v4097 = vunpack.c.h.b16 %v1562
      %v4098 = vunpack.c.l.b16 %v1563
      %v4099 = vunpack.c.h.b16 %v1563
      %v4100 = vunpack.c.l.b16 %v1564
      %v4101 = vunpack.c.h.b16 %v1564
      %v4102 = vunpack.c.l.b16 %v1565
      %v4103 = vunpack.c.h.b16 %v1565
      %v4104 = vunpack.c.l.b16 %v1566
      %v4105 = vunpack.c.h.b16 %v1566
      %v4106 = vunpack.c.l.b16 %v1567
      %v4107 = vunpack.c.h.b16 %v1567
      %v4108 = vunpack.c.l.b16 %v1568
      %v4109 = vunpack.c.h.b16 %v1568
      %v4110 = vunpack.c.l.b16 %v1569
      %v4111 = vunpack.c.h.b16 %v1569
      %v4112 = vunpack.c.l.b16 %v1570
      %v4113 = vunpack.c.h.b16 %v1570
      %v4114 = vunpack.c.l.b16 %v1571
      %v4115 = vunpack.c.h.b16 %v1571
      %v4116 = vunpack.c.l.b16 %v1572
      %v4117 = vunpack.c.h.b16 %v1572
      %v4118 = vunpack.c.l.b16 %v1573
      %v4119 = vunpack.c.h.b16 %v1573
      %v4120 = vunpack.c.l.b16 %v1574
      %v4121 = vunpack.c.h.b16 %v1574
      %v4122 = vunpack.c.l.b16 %v1575
      %v4123 = vunpack.c.h.b16 %v1575
      %v4124 = vunpack.c.l.b16 %v1576
      %v4125 = vunpack.c.h.b16 %v1576
      %v4126 = vunpack.c.l.b16 %v1577
      %v4127 = vunpack.c.h.b16 %v1577
      %v4128 = vunpack.c.l.b16 %v1578
      %v4129 = vunpack.c.h.b16 %v1578
      %v4130 = vunpack.c.l.b16 %v1579
      %v4131 = vunpack.c.h.b16 %v1579
      %v4132 = vunpack.c.l.b16 %v1580
      %v4133 = vunpack.c.h.b16 %v1580
      %v4134 = vunpack.c.l.b16 %v1581
      %v4135 = vunpack.c.h.b16 %v1581
      %v4136 = vunpack.c.l.b16 %v1582
      %v4137 = vunpack.c.h.b16 %v1582
      %v4138 = vunpack.c.l.b16 %v1583
      %v4139 = vunpack.c.h.b16 %v1583
      %v4140 = vunpack.c.l.b16 %v1584
      %v4141 = vunpack.c.h.b16 %v1584
      %v4142 = vunpack.c.l.b16 %v1585
      %v4143 = vunpack.c.h.b16 %v1585
      %v4144 = vunpack.c.l.b16 %v1586
      %v4145 = vunpack.c.h.b16 %v1586
      %v4146 = vunpack.c.l.b16 %v1587
      %v4147 = vunpack.c.h.b16 %v1587
      %v4148 = vunpack.c.l.b16 %v1588
      %v4149 = vunpack.c.h.b16 %v1588
      %v4150 = vunpack.c.l.b16 %v1589
      %v4151 = vunpack.c.h.b16 %v1589
      %v4152 = vunpack.c.l.b16 %v1590
      %v4153 = vunpack.c.h.b16 %v1590
      %v4154 = vunpack.c.l.b16 %v1591
      %v4155 = vunpack.c.h.b16 %v1591
      %v4156 = vunpack.c.l.b16 %v1592
      %v4157 = vunpack.c.h.b16 %v1592
      %v4158 = vunpack.c.l.b16 %v1593
      %v4159 = vunpack.c.h.b16 %v1593
      %v4160 = vunpack.c.l.b16 %v1594
      %v4161 = vunpack.c.h.b16 %v1594
      %v4162 = vunpack.c.l.b16 %v1595
      %v4163 = vunpack.c.h.b16 %v1595
      %v4164 = vunpack.c.l.b16 %v1596
      %v4165 = vunpack.c.h.b16 %v1596
      %v4166 = vunpack.c.l.b16 %v1597
      %v4167 = vunpack.c.h.b16 %v1597
      %v4168 = vunpack.c.l.b16 %v1598
      %v4169 = vunpack.c.h.b16 %v1598
      %v4170 = vunpack.c.l.b16 %v1599
      %v4171 = vunpack.c.h.b16 %v1599
      %v4172 = vunpack.c.l.b16 %v1600
      %v4173 = vunpack.c.h.b16 %v1600
      %v4174 = vunpack.c.l.b16 %v1601
      %v4175 = vunpack.c.h.b16 %v1601
      %v4176 = vunpack.c.l.b16 %v1602
      %v4177 = vunpack.c.h.b16 %v1602
      %v4178 = vunpack.c.l.b16 %v1603
      %v4179 = vunpack.c.h.b16 %v1603
      %v4180 = vunpack.c.l.b16 %v1604
      %v4181 = vunpack.c.h.b16 %v1604
      %v4182 = vunpack.c.l.b16 %v1605
      %v4183 = vunpack.c.h.b16 %v1605
      %v4184 = vunpack.c.l.b16 %v1606
      %v4185 = vunpack.c.h.b16 %v1606
      %v4186 = vunpack.c.l.b16 %v1607
      %v4187 = vunpack.c.h.b16 %v1607
      %v4188 = vunpack.c.l.b16 %v1608
      %v4189 = vunpack.c.h.b16 %v1608
      %v4190 = vunpack.c.l.b16 %v1609
      %v4191 = vunpack.c.h.b16 %v1609
      %v4192 = vunpack.c.l.b16 %v1610
      %v4193 = vunpack.c.h.b16 %v1610
      %v4194 = vunpack.c.l.b16 %v1611
      %v4195 = vunpack.c.h.b16 %v1611
      %v4196 = vunpack.c.l.b16 %v1612
      %v4197 = vunpack.c.h.b16 %v1612
      %v4198 = vunpack.c.l.b16 %v1613
      %v4199 = vunpack.c.h.b16 %v1613
      %v4200 = vunpack.c.l.b16 %v1614
      %v4201 = vunpack.c.h.b16 %v1614
      %v4202 = vunpack.c.l.b16 %v1615
      %v4203 = vunpack.c.h.b16 %v1615
      %v4204 = vunpack.c.l.b16 %v1616
      %v4205 = vunpack.c.h.b16 %v1616
      %v4206 = vunpack.c.l.b16 %v1617
      %v4207 = vunpack.c.h.b16 %v1617
      %v4208 = vunpack.c.l.b16 %v1618
      %v4209 = vunpack.c.h.b16 %v1618
      %v4210 = vunpack.c.l.b16 %v1619
      %v4211 = vunpack.c.h.b16 %v1619
      %v4212 = vunpack.c.l.b16 %v1620
      %v4213 = vunpack.c.h.b16 %v1620
      %v4214 = vunpack.c.l.b16 %v1621
      %v4215 = vunpack.c.h.b16 %v1621
      %v4216 = vunpack.c.l.b16 %v1622
      %v4217 = vunpack.c.h.b16 %v1622
      %v4218 = vunpack.c.l.b16 %v1623
      %v4219 = vunpack.c.h.b16 %v1623
      %v4220 = vunpack.c.l.b16 %v1624
      %v4221 = vunpack.c.h.b16 %v1624
      %v4222 = vunpack.c.l.b16 %v1625
      %v4223 = vunpack.c.h.b16 %v1625
      %v4224 = vunpack.c.l.b16 %v1626
      %v4225 = vunpack.c.h.b16 %v1626
      %v4226 = vunpack.c.l.b16 %v1627
      %v4227 = vunpack.c.h.b16 %v1627
      %v4228 = vunpack.c.l.b16 %v1628
      %v4229 = vunpack.c.h.b16 %v1628
      %v4230 = vunpack.c.l.b16 %v1629
      %v4231 = vunpack.c.h.b16 %v1629
      %v4232 = vunpack.c.l.b16 %v1630
      %v4233 = vunpack.c.h.b16 %v1630
      %v4234 = vunpack.c.l.b16 %v1631
      %v4235 = vunpack.c.h.b16 %v1631
      %v4236 = vunpack.c.l.b16 %v1632
      %v4237 = vunpack.c.h.b16 %v1632
      %v4238 = vunpack.c.l.b16 %v1633
      %v4239 = vunpack.c.h.b16 %v1633
      %v4240 = vunpack.c.l.b16 %v1634
      %v4241 = vunpack.c.h.b16 %v1634
      %v4242 = vunpack.c.l.b16 %v1635
      %v4243 = vunpack.c.h.b16 %v1635
      %v4244 = vunpack.c.l.b16 %v1636
      %v4245 = vunpack.c.h.b16 %v1636
      %v4246 = vunpack.c.l.b16 %v1637
      %v4247 = vunpack.c.h.b16 %v1637
      %v4248 = vunpack.c.l.b16 %v1638
      %v4249 = vunpack.c.h.b16 %v1638
      %v4250 = vunpack.c.l.b16 %v1639
      %v4251 = vunpack.c.h.b16 %v1639
      %v4252 = vunpack.c.l.b16 %v1640
      %v4253 = vunpack.c.h.b16 %v1640
      %v4254 = vunpack.c.l.b16 %v1641
      %v4255 = vunpack.c.h.b16 %v1641
      %v4256 = vunpack.c.l.b16 %v1642
      %v4257 = vunpack.c.h.b16 %v1642
      %v4258 = vunpack.c.l.b16 %v1643
      %v4259 = vunpack.c.h.b16 %v1643
      %v4260 = vunpack.c.l.b16 %v1644
      %v4261 = vunpack.c.h.b16 %v1644
      %v4262 = vunpack.c.l.b16 %v1645
      %v4263 = vunpack.c.h.b16 %v1645
      %v4264 = vunpack.c.l.b16 %v1646
      %v4265 = vunpack.c.h.b16 %v1646
      %v4266 = vunpack.c.l.b16 %v1647
      %v4267 = vunpack.c.h.b16 %v1647
      %v4268 = vunpack.c.l.b16 %v1648
      %v4269 = vunpack.c.h.b16 %v1648
      %v4270 = vunpack.c.l.b16 %v1649
      %v4271 = vunpack.c.h.b16 %v1649
      %v4272 = vunpack.c.l.b16 %v1650
      %v4273 = vunpack.c.h.b16 %v1650
      %v4274 = vunpack.c.l.b16 %v1651
      %v4275 = vunpack.c.h.b16 %v1651
      %v4276 = vunpack.c.l.b16 %v1652
      %v4277 = vunpack.c.h.b16 %v1652
      %v4278 = vunpack.c.l.b16 %v1653
      %v4279 = vunpack.c.h.b16 %v1653
      %v4280 = vunpack.c.l.b16 %v1654
      %v4281 = vunpack.c.h.b16 %v1654
      %v4282 = vunpack.c.l.b16 %v1655
      %v4283 = vunpack.c.h.b16 %v1655
      %v4284 = vunpack.c.l.b16 %v1656
      %v4285 = vunpack.c.h.b16 %v1656
      %v4286 = vunpack.c.l.b16 %v1657
      %v4287 = vunpack.c.h.b16 %v1657
      %v4288 = vunpack.c.l.b16 %v1658
      %v4289 = vunpack.c.h.b16 %v1658
      %v4290 = vunpack.c.l.b16 %v1659
      %v4291 = vunpack.c.h.b16 %v1659
      %v4292 = vunpack.c.l.b16 %v1660
      %v4293 = vunpack.c.h.b16 %v1660
      %v4294 = vunpack.c.l.b16 %v1661
      %v4295 = vunpack.c.h.b16 %v1661
      %v4296 = vunpack.c.l.b16 %v1662
      %v4297 = vunpack.c.h.b16 %v1662
      %v4298 = vunpack.c.l.b16 %v1663
      %v4299 = vunpack.c.h.b16 %v1663
      %v4300 = vunpack.c.l.b16 %v1664
      %v4301 = vunpack.c.h.b16 %v1664
      %v4302 = vunpack.c.l.b16 %v1665
      %v4303 = vunpack.c.h.b16 %v1665
      %v4304 = vunpack.c.l.b16 %v1666
      %v4305 = vunpack.c.h.b16 %v1666
      %v4306 = vunpack.c.l.b16 %v1667
      %v4307 = vunpack.c.h.b16 %v1667
      %v4308 = vunpack.c.l.b16 %v1668
      %v4309 = vunpack.c.h.b16 %v1668
      %v4310 = vunpack.c.l.b16 %v1669
      %v4311 = vunpack.c.h.b16 %v1669
      %v4312 = vunpack.c.l.b16 %v1670
      %v4313 = vunpack.c.h.b16 %v1670
      %v4314 = vunpack.c.l.b16 %v1671
      %v4315 = vunpack.c.h.b16 %v1671
      %v4316 = vunpack.c.l.b16 %v1672
      %v4317 = vunpack.c.h.b16 %v1672
      %v4318 = vunpack.c.l.b16 %v1673
      %v4319 = vunpack.c.h.b16 %v1673
      %v4320 = vunpack.c.l.b16 %v1674
      %v4321 = vunpack.c.h.b16 %v1674
      %v4322 = vunpack.c.l.b16 %v1675
      %v4323 = vunpack.c.h.b16 %v1675
      %v4324 = vunpack.c.l.b16 %v1676
      %v4325 = vunpack.c.h.b16 %v1676
      %v4326 = vunpack.c.l.b16 %v1677
      %v4327 = vunpack.c.h.b16 %v1677
      %v4328 = vunpack.c.l.b16 %v1678
      %v4329 = vunpack.c.h.b16 %v1678
      %v4330 = vunpack.c.l.b16 %v1679
      %v4331 = vunpack.c.h.b16 %v1679
      %v4332 = vunpack.c.l.b16 %v1680
      %v4333 = vunpack.c.h.b16 %v1680
      %v4334 = vunpack.c.l.b16 %v1681
      %v4335 = vunpack.c.h.b16 %v1681
      %v4336 = vunpack.c.l.b16 %v1682
      %v4337 = vunpack.c.h.b16 %v1682
      %v4338 = vunpack.c.l.b16 %v1683
      %v4339 = vunpack.c.h.b16 %v1683
      %v4340 = vunpack.c.l.b16 %v1684
      %v4341 = vunpack.c.h.b16 %v1684
      %v4342 = vunpack.c.l.b16 %v1685
      %v4343 = vunpack.c.h.b16 %v1685
      %v4344 = vunpack.c.l.b16 %v1686
      %v4345 = vunpack.c.h.b16 %v1686
      %v4346 = vunpack.c.l.b16 %v1687
      %v4347 = vunpack.c.h.b16 %v1687
      %v4348 = vunpack.c.l.b16 %v1688
      %v4349 = vunpack.c.h.b16 %v1688
      %v4350 = vunpack.c.l.b16 %v1689
      %v4351 = vunpack.c.h.b16 %v1689
      %v4352 = vunpack.c.l.b16 %v1690
      %v4353 = vunpack.c.h.b16 %v1690
      %v4354 = vunpack.c.l.b16 %v1691
      %v4355 = vunpack.c.h.b16 %v1691
      %v4356 = vunpack.c.l.b16 %v1692
      %v4357 = vunpack.c.h.b16 %v1692
      %v4358 = vunpack.c.l.b16 %v1693
      %v4359 = vunpack.c.h.b16 %v1693
      %v4360 = vunpack.c.l.b16 %v1694
      %v4361 = vunpack.c.h.b16 %v1694
      %v4362 = vunpack.c.l.b16 %v1695
      %v4363 = vunpack.c.h.b16 %v1695
      %v4364 = vunpack.c.l.b16 %v1696
      %v4365 = vunpack.c.h.b16 %v1696
      %v4366 = vunpack.c.l.b16 %v1697
      %v4367 = vunpack.c.h.b16 %v1697
      %v4368 = vunpack.c.l.b16 %v1698
      %v4369 = vunpack.c.h.b16 %v1698
      %v4370 = vunpack.c.l.b16 %v1699
      %v4371 = vunpack.c.h.b16 %v1699
      %v4372 = vunpack.c.l.b16 %v1700
      %v4373 = vunpack.c.h.b16 %v1700
      %v4374 = vunpack.c.l.b16 %v1701
      %v4375 = vunpack.c.h.b16 %v1701
      %v4376 = vunpack.c.l.b16 %v1702
      %v4377 = vunpack.c.h.b16 %v1702
      %v4378 = vunpack.c.l.b16 %v1703
      %v4379 = vunpack.c.h.b16 %v1703
      %v4380 = vunpack.c.l.b16 %v1704
      %v4381 = vunpack.c.h.b16 %v1704
      %v4382 = vunpack.c.l.b16 %v1705
      %v4383 = vunpack.c.h.b16 %v1705
      %v4384 = vunpack.c.l.b16 %v1706
      %v4385 = vunpack.c.h.b16 %v1706
      %v4386 = vunpack.c.l.b16 %v1707
      %v4387 = vunpack.c.h.b16 %v1707
      %v4388 = vunpack.c.l.b16 %v1708
      %v4389 = vunpack.c.h.b16 %v1708
      %v4390 = vunpack.c.l.b16 %v1709
      %v4391 = vunpack.c.h.b16 %v1709
      %v4392 = vunpack.c.l.b16 %v1710
      %v4393 = vunpack.c.h.b16 %v1710
      %v4394 = vunpack.c.l.b16 %v1711
      %v4395 = vunpack.c.h.b16 %v1711
      %v4396 = vunpack.c.l.b16 %v1712
      %v4397 = vunpack.c.h.b16 %v1712
      %v4398 = vunpack.c.l.b16 %v1713
      %v4399 = vunpack.c.h.b16 %v1713
      %v4400 = vunpack.c.l.b16 %v1714
      %v4401 = vunpack.c.h.b16 %v1714
      %v4402 = vunpack.c.l.b16 %v1715
      %v4403 = vunpack.c.h.b16 %v1715
      %v4404 = vunpack.c.l.b16 %v1716
      %v4405 = vunpack.c.h.b16 %v1716
      %v4406 = vunpack.c.l.b16 %v1717
      %v4407 = vunpack.c.h.b16 %v1717
      %v4408 = vunpack.c.l.b16 %v1718
      %v4409 = vunpack.c.h.b16 %v1718
      %v4410 = vunpack.c.l.b16 %v1719
      %v4411 = vunpack.c.h.b16 %v1719
      %v4412 = vunpack.c.l.b16 %v1720
      %v4413 = vunpack.c.h.b16 %v1720
      %v4414 = vunpack.c.l.b16 %v1721
      %v4415 = vunpack.c.h.b16 %v1721
      %v4416 = vunpack.c.l.b16 %v1722
      %v4417 = vunpack.c.h.b16 %v1722
      %v4418 = vunpack.c.l.b16 %v1723
      %v4419 = vunpack.c.h.b16 %v1723
      %v4420 = vunpack.c.l.b16 %v1724
      %v4421 = vunpack.c.h.b16 %v1724
      %v4422 = vunpack.c.l.b16 %v1725
      %v4423 = vunpack.c.h.b16 %v1725
      %v4424 = vunpack.c.l.b16 %v1726
      %v4425 = vunpack.c.h.b16 %v1726
      %v4426 = vunpack.c.l.b16 %v1727
      %v4427 = vunpack.c.h.b16 %v1727
      %v4428 = vunpack.c.l.b16 %v1728
      %v4429 = vunpack.c.h.b16 %v1728
      %v4430 = vunpack.c.l.b16 %v1729
      %v4431 = vunpack.c.h.b16 %v1729
      %v4432 = vunpack.c.l.b16 %v1730
      %v4433 = vunpack.c.h.b16 %v1730
      %v4434 = vunpack.c.l.b16 %v1731
      %v4435 = vunpack.c.h.b16 %v1731
      %v4436 = vunpack.c.l.b16 %v1732
      %v4437 = vunpack.c.h.b16 %v1732
      %v4438 = vunpack.c.l.b16 %v1733
      %v4439 = vunpack.c.h.b16 %v1733
      %v4440 = vunpack.c.l.b16 %v1734
      %v4441 = vunpack.c.h.b16 %v1734
      %v4442 = vunpack.c.l.b16 %v1735
      %v4443 = vunpack.c.h.b16 %v1735
      %v4444 = vunpack.c.l.b16 %v1736
      %v4445 = vunpack.c.h.b16 %v1736
      %v4446 = vunpack.c.l.b16 %v1737
      %v4447 = vunpack.c.h.b16 %v1737
      %v4448 = vunpack.c.l.b16 %v1738
      %v4449 = vunpack.c.h.b16 %v1738
      %v4450 = vunpack.c.l.b16 %v1739
      %v4451 = vunpack.c.h.b16 %v1739
      %v4452 = vunpack.c.l.b16 %v1740
      %v4453 = vunpack.c.h.b16 %v1740
      %v4454 = vunpack.c.l.b16 %v1741
      %v4455 = vunpack.c.h.b16 %v1741
      %v4456 = vunpack.c.l.b16 %v1742
      %v4457 = vunpack.c.h.b16 %v1742
      %v4458 = vunpack.c.l.b16 %v1743
      %v4459 = vunpack.c.h.b16 %v1743
      %v4460 = vunpack.c.l.b16 %v1744
      %v4461 = vunpack.c.h.b16 %v1744
      %v4462 = vunpack.c.l.b16 %v1745
      %v4463 = vunpack.c.h.b16 %v1745
      %v4464 = vunpack.c.l.b16 %v1746
      %v4465 = vunpack.c.h.b16 %v1746
      %v4466 = vunpack.c.l.b16 %v1747
      %v4467 = vunpack.c.h.b16 %v1747
      %v4468 = vunpack.c.l.b16 %v1748
      %v4469 = vunpack.c.h.b16 %v1748
      %v4470 = vunpack.c.l.b16 %v1749
      %v4471 = vunpack.c.h.b16 %v1749
      %v4472 = vunpack.c.l.b16 %v1750
      %v4473 = vunpack.c.h.b16 %v1750
      %v4474 = vunpack.c.l.b16 %v1751
      %v4475 = vunpack.c.h.b16 %v1751
      %v4476 = vunpack.c.l.b16 %v1752
      %v4477 = vunpack.c.h.b16 %v1752
      %v4478 = vunpack.c.l.b16 %v1753
      %v4479 = vunpack.c.h.b16 %v1753
      %v4480 = vunpack.c.l.b16 %v1754
      %v4481 = vunpack.c.h.b16 %v1754
      %v4482 = vunpack.c.l.b16 %v1755
      %v4483 = vunpack.c.h.b16 %v1755
      %v4484 = vunpack.c.l.b16 %v1756
      %v4485 = vunpack.c.h.b16 %v1756
      %v4486 = vunpack.c.l.b16 %v1757
      %v4487 = vunpack.c.h.b16 %v1757
      %v4488 = vunpack.c.l.b16 %v1758
      %v4489 = vunpack.c.h.b16 %v1758
      %v4490 = vunpack.c.l.b16 %v1759
      %v4491 = vunpack.c.h.b16 %v1759
      %v4492 = vunpack.c.l.b16 %v1760
      %v4493 = vunpack.c.h.b16 %v1760
      %v4494 = vunpack.c.l.b16 %v1761
      %v4495 = vunpack.c.h.b16 %v1761
      %v4496 = vunpack.c.l.b16 %v1762
      %v4497 = vunpack.c.h.b16 %v1762
      %v4498 = vunpack.c.l.b16 %v1763
      %v4499 = vunpack.c.h.b16 %v1763
      %v4500 = vunpack.c.l.b16 %v1764
      %v4501 = vunpack.c.h.b16 %v1764
      %v4502 = vunpack.c.l.b16 %v1765
      %v4503 = vunpack.c.h.b16 %v1765
      %v4504 = vunpack.c.l.b16 %v1766
      %v4505 = vunpack.c.h.b16 %v1766
      %v4506 = vunpack.c.l.b16 %v1767
      %v4507 = vunpack.c.h.b16 %v1767
      %v4508 = vunpack.c.l.b16 %v1768
      %v4509 = vunpack.c.h.b16 %v1768
      %v4510 = vunpack.c.l.b16 %v1769
      %v4511 = vunpack.c.h.b16 %v1769
      %v4512 = vunpack.c.l.b16 %v1770
      %v4513 = vunpack.c.h.b16 %v1770
      %v4514 = vunpack.c.l.b16 %v1771
      %v4515 = vunpack.c.h.b16 %v1771
      %v4516 = vunpack.c.l.b16 %v1772
      %v4517 = vunpack.c.h.b16 %v1772
      %v4518 = vunpack.c.l.b16 %v1773
      %v4519 = vunpack.c.h.b16 %v1773
      %v4520 = vunpack.c.l.b16 %v1774
      %v4521 = vunpack.c.h.b16 %v1774
      %v4522 = vunpack.c.l.b16 %v1775
      %v4523 = vunpack.c.h.b16 %v1775
      %v4524 = vunpack.c.l.b16 %v1776
      %v4525 = vunpack.c.h.b16 %v1776
      %v4526 = vunpack.c.l.b16 %v1777
      %v4527 = vunpack.c.h.b16 %v1777
      %v4528 = vunpack.c.l.b16 %v1778
      %v4529 = vunpack.c.h.b16 %v1778
      %v4530 = vunpack.c.l.b16 %v1779
      %v4531 = vunpack.c.h.b16 %v1779
      %v4532 = vunpack.c.l.b16 %v1780
      %v4533 = vunpack.c.h.b16 %v1780
      %v4534 = vunpack.c.l.b16 %v1781
      %v4535 = vunpack.c.h.b16 %v1781
      %v4536 = vunpack.c.l.b16 %v1782
      %v4537 = vunpack.c.h.b16 %v1782
      %v4538 = vunpack.c.l.b16 %v1783
      %v4539 = vunpack.c.h.b16 %v1783
      %v4540 = vunpack.c.l.b16 %v1784
      %v4541 = vunpack.c.h.b16 %v1784
      %v4542 = vunpack.c.l.b16 %v1785
      %v4543 = vunpack.c.h.b16 %v1785
      %v4544 = vunpack.c.l.b16 %v1786
      %v4545 = vunpack.c.h.b16 %v1786
      %v4546 = vunpack.c.l.b16 %v1787
      %v4547 = vunpack.c.h.b16 %v1787
      %v4548 = vunpack.c.l.b16 %v1788
      %v4549 = vunpack.c.h.b16 %v1788
      %v4550 = vunpack.c.l.b16 %v1789
      %v4551 = vunpack.c.h.b16 %v1789
      %v4552 = vunpack.c.l.b16 %v1790
      %v4553 = vunpack.c.h.b16 %v1790
      %v4554 = vunpack.c.l.b16 %v1791
      %v4555 = vunpack.c.h.b16 %v1791
      %v4556 = vunpack.c.l.b16 %v1792
      %v4557 = vunpack.c.h.b16 %v1792
      %v4558 = vunpack.c.l.b16 %v1793
      %v4559 = vunpack.c.h.b16 %v1793
      %v4560 = vunpack.c.l.b16 %v1794
      %v4561 = vunpack.c.h.b16 %v1794
      %v4562 = vunpack.c.l.b16 %v1795
      %v4563 = vunpack.c.h.b16 %v1795
      %v4564 = vunpack.c.l.b16 %v1796
      %v4565 = vunpack.c.h.b16 %v1796
      %v4566 = vunpack.c.l.b16 %v1797
      %v4567 = vunpack.c.h.b16 %v1797
      %v4568 = vunpack.c.l.b16 %v1798
      %v4569 = vunpack.c.h.b16 %v1798
      %v4570 = vunpack.c.l.b16 %v1799
      %v4571 = vunpack.c.h.b16 %v1799
      %v4572 = vunpack.c.l.b16 %v1800
      %v4573 = vunpack.c.h.b16 %v1800
      %v4574 = vunpack.c.l.b16 %v1801
      %v4575 = vunpack.c.h.b16 %v1801
      %v4576 = vunpack.c.l.b16 %v1802
      %v4577 = vunpack.c.h.b16 %v1802
      %v4578 = vunpack.c.l.b16 %v1803
      %v4579 = vunpack.c.h.b16 %v1803
      %v4580 = vunpack.c.l.b16 %v1804
      %v4581 = vunpack.c.h.b16 %v1804
      %v4582 = vunpack.c.l.b16 %v1805
      %v4583 = vunpack.c.h.b16 %v1805
      %v4584 = vunpack.c.l.b16 %v1806
      %v4585 = vunpack.c.h.b16 %v1806
      %v4586 = vunpack.c.l.b16 %v1807
      %v4587 = vunpack.c.h.b16 %v1807
      %v4588 = vunpack.c.l.b16 %v1808
      %v4589 = vunpack.c.h.b16 %v1808
      %v4590 = vunpack.c.l.b16 %v1809
      %v4591 = vunpack.c.h.b16 %v1809
      %v4592 = vunpack.c.l.b16 %v1810
      %v4593 = vunpack.c.h.b16 %v1810
      %v4594 = vunpack.c.l.b16 %v1811
      %v4595 = vunpack.c.h.b16 %v1811
      %v4596 = vunpack.c.l.b16 %v1812
      %v4597 = vunpack.c.h.b16 %v1812
      %v4598 = vunpack.c.l.b16 %v1813
      %v4599 = vunpack.c.h.b16 %v1813
      %v4600 = vunpack.c.l.b16 %v1814
      %v4601 = vunpack.c.h.b16 %v1814
      %v4602 = vunpack.c.l.b16 %v1815
      %v4603 = vunpack.c.h.b16 %v1815
      %v4604 = vunpack.c.l.b16 %v1816
      %v4605 = vunpack.c.h.b16 %v1816
      %v4606 = vunpack.c.l.b16 %v1817
      %v4607 = vunpack.c.h.b16 %v1817
      %v4608 = vunpack.c.l.b16 %v1818
      %v4609 = vunpack.c.h.b16 %v1818
      %v4610 = vunpack.c.l.b16 %v1819
      %v4611 = vunpack.c.h.b16 %v1819
      %v4612 = vunpack.c.l.b16 %v1820
      %v4613 = vunpack.c.h.b16 %v1820
      %v4614 = vunpack.c.l.b16 %v1821
      %v4615 = vunpack.c.h.b16 %v1821
      %v4616 = vunpack.c.l.b16 %v1822
      %v4617 = vunpack.c.h.b16 %v1822
      %v4618 = vunpack.c.l.b16 %v1823
      %v4619 = vunpack.c.h.b16 %v1823
      %v4620 = vunpack.c.l.b16 %v1824
      %v4621 = vunpack.c.h.b16 %v1824
      %v4622 = vunpack.c.l.b16 %v1825
      %v4623 = vunpack.c.h.b16 %v1825
      %v4624 = vunpack.c.l.b16 %v1826
      %v4625 = vunpack.c.h.b16 %v1826
      %v4626 = vunpack.c.l.b16 %v1827
      %v4627 = vunpack.c.h.b16 %v1827
      %v4628 = vunpack.c.l.b16 %v1828
      %v4629 = vunpack.c.h.b16 %v1828
      %v4630 = vunpack.c.l.b16 %v1829
      %v4631 = vunpack.c.h.b16 %v1829
      %v4632 = vunpack.c.l.b16 %v1830
      %v4633 = vunpack.c.h.b16 %v1830
      %v4634 = vunpack.c.l.b16 %v1831
      %v4635 = vunpack.c.h.b16 %v1831
      %v4636 = vunpack.c.l.b16 %v1832
      %v4637 = vunpack.c.h.b16 %v1832
      %v4638 = vunpack.c.l.b16 %v1833
      %v4639 = vunpack.c.h.b16 %v1833
      %v4640 = vunpack.c.l.b16 %v1834
      %v4641 = vunpack.c.h.b16 %v1834
      %v4642 = vunpack.c.l.b16 %v1835
      %v4643 = vunpack.c.h.b16 %v1835
      %v4644 = vunpack.c.l.b16 %v1836
      %v4645 = vunpack.c.h.b16 %v1836
      %v4646 = vunpack.c.l.b16 %v1837
      %v4647 = vunpack.c.h.b16 %v1837
      %v4648 = vunpack.c.l.b16 %v1838
      %v4649 = vunpack.c.h.b16 %v1838
      %v4650 = vunpack.c.l.b16 %v1839
      %v4651 = vunpack.c.h.b16 %v1839
      %v4652 = vunpack.c.l.b16 %v1840
      %v4653 = vunpack.c.h.b16 %v1840
      %v4654 = vunpack.c.l.b16 %v1841
      %v4655 = vunpack.c.h.b16 %v1841
      %v4656 = vunpack.c.l.b16 %v1842
      %v4657 = vunpack.c.h.b16 %v1842
      %v4658 = vunpack.c.l.b16 %v1843
      %v4659 = vunpack.c.h.b16 %v1843
      %v4660 = vunpack.c.l.b16 %v1844
      %v4661 = vunpack.c.h.b16 %v1844
      %v4662 = vunpack.c.l.b16 %v1845
      %v4663 = vunpack.c.h.b16 %v1845
      %v4664 = vunpack.c.l.b16 %v1846
      %v4665 = vunpack.c.h.b16 %v1846
      %v4666 = vunpack.c.l.b16 %v1847
      %v4667 = vunpack.c.h.b16 %v1847
      %v4668 = vunpack.c.l.b16 %v1848
      %v4669 = vunpack.c.h.b16 %v1848
      %v4670 = vunpack.c.l.b16 %v1849
      %v4671 = vunpack.c.h.b16 %v1849
      %v4672 = vunpack.c.l.b16 %v1850
      %v4673 = vunpack.c.h.b16 %v1850
      %v4674 = vunpack.c.l.b16 %v1851
      %v4675 = vunpack.c.h.b16 %v1851
      %v4676 = vunpack.c.l.b16 %v1852
      %v4677 = vunpack.c.h.b16 %v1852
      %v4678 = vunpack.c.l.b16 %v1853
      %v4679 = vunpack.c.h.b16 %v1853
      %v4680 = vunpack.c.l.b16 %v1854
      %v4681 = vunpack.c.h.b16 %v1854
      %v4682 = vunpack.c.l.b16 %v1855
      %v4683 = vunpack.c.h.b16 %v1855
      %v4684 = vunpack.c.l.b16 %v1856
      %v4685 = vunpack.c.h.b16 %v1856
      %v4686 = vunpack.c.l.b16 %v1857
      %v4687 = vunpack.c.h.b16 %v1857
      %v4688 = vunpack.c.l.b16 %v1858
      %v4689 = vunpack.c.h.b16 %v1858
      %v4690 = vunpack.c.l.b16 %v1859
      %v4691 = vunpack.c.h.b16 %v1859
      %v4692 = vunpack.c.l.b16 %v1860
      %v4693 = vunpack.c.h.b16 %v1860
      %v4694 = vunpack.c.l.b16 %v1861
      %v4695 = vunpack.c.h.b16 %v1861
      %v4696 = vunpack.c.l.b16 %v1862
      %v4697 = vunpack.c.h.b16 %v1862
      %v4698 = vunpack.c.l.b16 %v1863
      %v4699 = vunpack.c.h.b16 %v1863
      %v4700 = vunpack.c.l.b16 %v1864
      %v4701 = vunpack.c.h.b16 %v1864
      %v4702 = vunpack.c.l.b16 %v1865
      %v4703 = vunpack.c.h.b16 %v1865
      %v4704 = vunpack.c.l.b16 %v1866
      %v4705 = vunpack.c.h.b16 %v1866
      %v4706 = vunpack.c.l.b16 %v1867
      %v4707 = vunpack.c.h.b16 %v1867
      %v4708 = vunpack.c.l.b16 %v1868
      %v4709 = vunpack.c.h.b16 %v1868
      %v4710 = vunpack.c.l.b16 %v1869
      %v4711 = vunpack.c.h.b16 %v1869
      %v4712 = vunpack.c.l.b16 %v1870
      %v4713 = vunpack.c.h.b16 %v1870
      %v4714 = vunpack.c.l.b16 %v1871
      %v4715 = vunpack.c.h.b16 %v1871
      %v4716 = vunpack.c.l.b16 %v1872
      %v4717 = vunpack.c.h.b16 %v1872
      %v4718 = vunpack.c.l.b16 %v1873
      %v4719 = vunpack.c.h.b16 %v1873
      %v4720 = vunpack.c.l.b16 %v1874
      %v4721 = vunpack.c.h.b16 %v1874
      %v4722 = vunpack.c.l.b16 %v1875
      %v4723 = vunpack.c.h.b16 %v1875
      %v4724 = vunpack.c.l.b16 %v1876
      %v4725 = vunpack.c.h.b16 %v1876
      %v4726 = vunpack.c.l.b16 %v1877
      %v4727 = vunpack.c.h.b16 %v1877
      %v4728 = vunpack.c.l.b16 %v1878
      %v4729 = vunpack.c.h.b16 %v1878
      %v4730 = vunpack.c.l.b16 %v1879
      %v4731 = vunpack.c.h.b16 %v1879
      %v4732 = vunpack.c.l.b16 %v1880
      %v4733 = vunpack.c.h.b16 %v1880
      %v4734 = vunpack.c.l.b16 %v1881
      %v4735 = vunpack.c.h.b16 %v1881
      %v4736 = vunpack.c.l.b16 %v1882
      %v4737 = vunpack.c.h.b16 %v1882
      %v4738 = vunpack.c.l.b16 %v1883
      %v4739 = vunpack.c.h.b16 %v1883
      %v4740 = vunpack.c.l.b16 %v1884
      %v4741 = vunpack.c.h.b16 %v1884
      %v4742 = vunpack.c.l.b16 %v1885
      %v4743 = vunpack.c.h.b16 %v1885
      %v4744 = vunpack.c.l.b16 %v1886
      %v4745 = vunpack.c.h.b16 %v1886
      %v4746 = vunpack.c.l.b16 %v1887
      %v4747 = vunpack.c.h.b16 %v1887
      %v4748 = vunpack.c.l.b16 %v1888
      %v4749 = vunpack.c.h.b16 %v1888
      %v4750 = vunpack.c.l.b16 %v1889
      %v4751 = vunpack.c.h.b16 %v1889
      %v4752 = vunpack.c.l.b16 %v1890
      %v4753 = vunpack.c.h.b16 %v1890
      %v4754 = vunpack.c.l.b16 %v1891
      %v4755 = vunpack.c.h.b16 %v1891
      %v4756 = vunpack.c.l.b16 %v1892
      %v4757 = vunpack.c.h.b16 %v1892
      %v4758 = vunpack.c.l.b16 %v1893
      %v4759 = vunpack.c.h.b16 %v1893
      %v4760 = vunpack.c.l.b16 %v1894
      %v4761 = vunpack.c.h.b16 %v1894
      %v4762 = vunpack.c.l.b16 %v1895
      %v4763 = vunpack.c.h.b16 %v1895
      %v4764 = vunpack.c.l.b16 %v1896
      %v4765 = vunpack.c.h.b16 %v1896
      %v4766 = vunpack.c.l.b16 %v1897
      %v4767 = vunpack.c.h.b16 %v1897
      %v4768 = vunpack.c.l.b16 %v1898
      %v4769 = vunpack.c.h.b16 %v1898
      %v4770 = vunpack.c.l.b16 %v1899
      %v4771 = vunpack.c.h.b16 %v1899
      %v4772 = vunpack.c.l.b16 %v1900
      %v4773 = vunpack.c.h.b16 %v1900
      %v4774 = vunpack.c.l.b16 %v1901
      %v4775 = vunpack.c.h.b16 %v1901
      %v4776 = vunpack.c.l.b16 %v1902
      %v4777 = vunpack.c.h.b16 %v1902
      %v4778 = vunpack.c.l.b16 %v1903
      %v4779 = vunpack.c.h.b16 %v1903
      %v4780 = vunpack.c.l.b16 %v1904
      %v4781 = vunpack.c.h.b16 %v1904
      %v4782 = vunpack.c.l.b16 %v1905
      %v4783 = vunpack.c.h.b16 %v1905
      %v4784 = vunpack.c.l.b16 %v1906
      %v4785 = vunpack.c.h.b16 %v1906
      %v4786 = vunpack.c.l.b16 %v1907
      %v4787 = vunpack.c.h.b16 %v1907
      %v4788 = vunpack.c.l.b16 %v1908
      %v4789 = vunpack.c.h.b16 %v1908
      %v4790 = vunpack.c.l.b16 %v1909
      %v4791 = vunpack.c.h.b16 %v1909
      %v4792 = vunpack.c.l.b16 %v1910
      %v4793 = vunpack.c.h.b16 %v1910
      %v4794 = vunpack.c.l.b16 %v1911
      %v4795 = vunpack.c.h.b16 %v1911
      %v4796 = vunpack.c.l.b16 %v1912
      %v4797 = vunpack.c.h.b16 %v1912
      %v4798 = vunpack.c.l.b16 %v1913
      %v4799 = vunpack.c.h.b16 %v1913
      %v4800 = vunpack.c.l.b16 %v1914
      %v4801 = vunpack.c.h.b16 %v1914
      %v4802 = vunpack.c.l.b16 %v1915
      %v4803 = vunpack.c.h.b16 %v1915
      %v4804 = vunpack.c.l.b16 %v1916
      %v4805 = vunpack.c.h.b16 %v1916
      %v4806 = vunpack.c.l.b16 %v1917
      %v4807 = vunpack.c.h.b16 %v1917
      %v4808 = vunpack.c.l.b16 %v1918
      %v4809 = vunpack.c.h.b16 %v1918
      %v4810 = vunpack.c.l.b16 %v1919
      %v4811 = vunpack.c.h.b16 %v1919
      %v4812 = vunpack.c.l.b16 %v1920
      %v4813 = vunpack.c.h.b16 %v1920
      %v4814 = vunpack.c.l.b16 %v1921
      %v4815 = vunpack.c.h.b16 %v1921
      %v4816 = vunpack.c.l.b16 %v1922
      %v4817 = vunpack.c.h.b16 %v1922
      %v4818 = vunpack.c.l.b16 %v1923
      %v4819 = vunpack.c.h.b16 %v1923
      %v4820 = vunpack.c.l.b16 %v1924
      %v4821 = vunpack.c.h.b16 %v1924
      %v4822 = vunpack.c.l.b16 %v1925
      %v4823 = vunpack.c.h.b16 %v1925
      %v4824 = vunpack.c.l.b16 %v1926
      %v4825 = vunpack.c.h.b16 %v1926
      %v4826 = vunpack.c.l.b16 %v1927
      %v4827 = vunpack.c.h.b16 %v1927
      %v4828 = vunpack.c.l.b16 %v1928
      %v4829 = vunpack.c.h.b16 %v1928
      %v4830 = vunpack.c.l.b16 %v1929
      %v4831 = vunpack.c.h.b16 %v1929
      %v4832 = vunpack.c.l.b16 %v1930
      %v4833 = vunpack.c.h.b16 %v1930
      %v4834 = vunpack.c.l.b16 %v1931
      %v4835 = vunpack.c.h.b16 %v1931
      %v4836 = vunpack.c.l.b16 %v1932
      %v4837 = vunpack.c.h.b16 %v1932
      %v4838 = vunpack.c.l.b16 %v1933
      %v4839 = vunpack.c.h.b16 %v1933
      %v4840 = vunpack.c.l.b16 %v1934
      %v4841 = vunpack.c.h.b16 %v1934
      %v4842 = vunpack.c.l.b16 %v1935
      %v4843 = vunpack.c.h.b16 %v1935
      %v4844 = vunpack.c.l.b16 %v1936
      %v4845 = vunpack.c.h.b16 %v1936
      %v4846 = vunpack.c.l.b16 %v1937
      %v4847 = vunpack.c.h.b16 %v1937
      %v4848 = vunpack.c.l.b16 %v1938
      %v4849 = vunpack.c.h.b16 %v1938
      %v4850 = vunpack.c.l.b16 %v1939
      %v4851 = vunpack.c.h.b16 %v1939
      %v4852 = vunpack.c.l.b16 %v1940
      %v4853 = vunpack.c.h.b16 %v1940
      %v4854 = vunpack.c.l.b16 %v1941
      %v4855 = vunpack.c.h.b16 %v1941
      %v4856 = vunpack.c.l.b16 %v1942
      %v4857 = vunpack.c.h.b16 %v1942
      %v4858 = vunpack.c.l.b16 %v1943
      %v4859 = vunpack.c.h.b16 %v1943
      %v4860 = vunpack.c.l.b16 %v1944
      %v4861 = vunpack.c.h.b16 %v1944
      %v4862 = vunpack.c.l.b16 %v1945
      %v4863 = vunpack.c.h.b16 %v1945
      %v4864 = vunpack.c.l.b16 %v1946
      %v4865 = vunpack.c.h.b16 %v1946
      %v4866 = vunpack.c.l.b16 %v1947
      %v4867 = vunpack.c.h.b16 %v1947
      %v4868 = vunpack.c.l.b16 %v1948
      %v4869 = vunpack.c.h.b16 %v1948
      %v4870 = vunpack.c.l.b16 %v1949
      %v4871 = vunpack.c.h.b16 %v1949
      %v4872 = vunpack.c.l.b16 %v1950
      %v4873 = vunpack.c.h.b16 %v1950
      %v4874 = vunpack.c.l.b16 %v1951
      %v4875 = vunpack.c.h.b16 %v1951
      %v4876 = vunpack.c.l.b16 %v1952
      %v4877 = vunpack.c.h.b16 %v1952
      %v4878 = vunpack.c.l.b16 %v1953
      %v4879 = vunpack.c.h.b16 %v1953
      %v4880 = vunpack.c.l.b16 %v1954
      %v4881 = vunpack.c.h.b16 %v1954
      %v4882 = vunpack.c.l.b16 %v1955
      %v4883 = vunpack.c.h.b16 %v1955
      %v4884 = vunpack.c.l.b16 %v1956
      %v4885 = vunpack.c.h.b16 %v1956
      %v4886 = vunpack.c.l.b16 %v1957
      %v4887 = vunpack.c.h.b16 %v1957
      %v4888 = vunpack.c.l.b16 %v1958
      %v4889 = vunpack.c.h.b16 %v1958
      %v4890 = vunpack.c.l.b16 %v1959
      %v4891 = vunpack.c.h.b16 %v1959
      %v4892 = vunpack.c.l.b16 %v1960
      %v4893 = vunpack.c.h.b16 %v1960
      %v4894 = vunpack.c.l.b16 %v1961
      %v4895 = vunpack.c.h.b16 %v1961
      %v4896 = vunpack.c.l.b16 %v1962
      %v4897 = vunpack.c.h.b16 %v1962
      %v4898 = vunpack.c.l.b16 %v1963
      %v4899 = vunpack.c.h.b16 %v1963
      %v4900 = vunpack.c.l.b16 %v1964
      %v4901 = vunpack.c.h.b16 %v1964
      %v4902 = vunpack.c.l.b16 %v1965
      %v4903 = vunpack.c.h.b16 %v1965
      %v4904 = vunpack.c.l.b16 %v1966
      %v4905 = vunpack.c.h.b16 %v1966
      %v4906 = vunpack.c.l.b16 %v1967
      %v4907 = vunpack.c.h.b16 %v1967
      %v4908 = vunpack.c.l.b16 %v1968
      %v4909 = vunpack.c.h.b16 %v1968
      %v4910 = vunpack.c.l.b16 %v1969
      %v4911 = vunpack.c.h.b16 %v1969
      %v4912 = vunpack.c.l.b16 %v1970
      %v4913 = vunpack.c.h.b16 %v1970
      %v4914 = vunpack.c.l.b16 %v1971
      %v4915 = vunpack.c.h.b16 %v1971
      %v4916 = vunpack.c.l.b16 %v1972
      %v4917 = vunpack.c.h.b16 %v1972
      %v4918 = vunpack.c.l.b16 %v1973
      %v4919 = vunpack.c.h.b16 %v1973
      %v4920 = vunpack.c.l.b16 %v1974
      %v4921 = vunpack.c.h.b16 %v1974
      %v4922 = vunpack.c.l.b16 %v1975
      %v4923 = vunpack.c.h.b16 %v1975
      %v4924 = vunpack.c.l.b16 %v1976
      %v4925 = vunpack.c.h.b16 %v1976
      %v4926 = vunpack.c.l.b16 %v1977
      %v4927 = vunpack.c.h.b16 %v1977
      %v4928 = vunpack.c.l.b16 %v1978
      %v4929 = vunpack.c.h.b16 %v1978
      %v4930 = vunpack.c.l.b16 %v1979
      %v4931 = vunpack.c.h.b16 %v1979
      %v4932 = vunpack.c.l.b16 %v1980
      %v4933 = vunpack.c.h.b16 %v1980
      %v4934 = vunpack.c.l.b16 %v1981
      %v4935 = vunpack.c.h.b16 %v1981
      %v4936 = vunpack.c.l.b16 %v1982
      %v4937 = vunpack.c.h.b16 %v1982
      %v4938 = vunpack.c.l.b16 %v1983
      %v4939 = vunpack.c.h.b16 %v1983
      %v4940 = vunpack.c.l.b16 %v1984
      %v4941 = vunpack.c.h.b16 %v1984
      %v4942 = vunpack.c.l.b16 %v1985
      %v4943 = vunpack.c.h.b16 %v1985
      %v4944 = vunpack.c.l.b16 %v1986
      %v4945 = vunpack.c.h.b16 %v1986
      %v4946 = vunpack.c.l.b16 %v1987
      %v4947 = vunpack.c.h.b16 %v1987
      %v4948 = vunpack.c.l.b16 %v1988
      %v4949 = vunpack.c.h.b16 %v1988
      %v4950 = vunpack.c.l.b16 %v1989
      %v4951 = vunpack.c.h.b16 %v1989
      %v4952 = vunpack.c.l.b16 %v1990
      %v4953 = vunpack.c.h.b16 %v1990
      %v4954 = vunpack.c.l.b16 %v1991
      %v4955 = vunpack.c.h.b16 %v1991
      %v4956 = vunpack.c.l.b16 %v1992
      %v4957 = vunpack.c.h.b16 %v1992
      %v4958 = vunpack.c.l.b16 %v1993
      %v4959 = vunpack.c.h.b16 %v1993
      %v4960 = vunpack.c.l.b16 %v1994
      %v4961 = vunpack.c.h.b16 %v1994
      %v4962 = vunpack.c.l.b16 %v1995
      %v4963 = vunpack.c.h.b16 %v1995
      %v4964 = vunpack.c.l.b16 %v1996
      %v4965 = vunpack.c.h.b16 %v1996
      %v4966 = vunpack.c.l.b16 %v1997
      %v4967 = vunpack.c.h.b16 %v1997
      %v4968 = vunpack.c.l.b16 %v1998
      %v4969 = vunpack.c.h.b16 %v1998
      %v4970 = vunpack.c.l.b16 %v1999
      %v4971 = vunpack.c.h.b16 %v1999
      %v4972 = vunpack.c.l.b16 %v2000
      %v4973 = vunpack.c.h.b16 %v2000
      %v4974 = vunpack.c.l.b16 %v2001
      %v4975 = vunpack.c.h.b16 %v2001
      %v4976 = vunpack.c.l.b16 %v2002
      %v4977 = vunpack.c.h.b16 %v2002
      %v4978 = vunpack.c.l.b16 %v2003
      %v4979 = vunpack.c.h.b16 %v2003
      %v4980 = vunpack.c.l.b16 %v2004
      %v4981 = vunpack.c.h.b16 %v2004
      %v4982 = vunpack.c.l.b16 %v2005
      %v4983 = vunpack.c.h.b16 %v2005
      %v4984 = vunpack.c.l.b16 %v2006
      %v4985 = vunpack.c.h.b16 %v2006
      %v4986 = vunpack.c.l.b16 %v2007
      %v4987 = vunpack.c.h.b16 %v2007
      %v4988 = vunpack.c.l.b16 %v2008
      %v4989 = vunpack.c.h.b16 %v2008
      %v4990 = vunpack.c.l.b16 %v2009
      %v4991 = vunpack.c.h.b16 %v2009
      %v4992 = vunpack.c.l.b16 %v2010
      %v4993 = vunpack.c.h.b16 %v2010
      %v4994 = vunpack.c.l.b16 %v2011
      %v4995 = vunpack.c.h.b16 %v2011
      %v4996 = vunpack.c.l.b16 %v2012
      %v4997 = vunpack.c.h.b16 %v2012
      %v4998 = vunpack.c.l.b16 %v2013
      %v4999 = vunpack.c.h.b16 %v2013
      %v5000 = vunpack.c.l.b16 %v2014
      %v5001 = vunpack.c.h.b16 %v2014
      %v5002 = vunpack.c.l.b16 %v2015
      %v5003 = vunpack.c.h.b16 %v2015
      %v5004 = vunpack.c.l.b16 %v2016
      %v5005 = vunpack.c.h.b16 %v2016
      %v5006 = vunpack.c.l.b16 %v2017
      %v5007 = vunpack.c.h.b16 %v2017
      %v5008 = vunpack.c.l.b16 %v2018
      %v5009 = vunpack.c.h.b16 %v2018
      %v5010 = vunpack.c.l.b16 %v2019
      %v5011 = vunpack.c.h.b16 %v2019
      %v5012 = vunpack.c.l.b16 %v2020
      %v5013 = vunpack.c.h.b16 %v2020
      %v5014 = vunpack.c.l.b16 %v2021
      %v5015 = vunpack.c.h.b16 %v2021
      %v5016 = vunpack.c.l.b16 %v2022
      %v5017 = vunpack.c.h.b16 %v2022
      %v5018 = vunpack.c.l.b16 %v2023
      %v5019 = vunpack.c.h.b16 %v2023
      %v5020 = vunpack.c.l.b16 %v2024
      %v5021 = vunpack.c.h.b16 %v2024
      %v5022 = vunpack.c.l.b16 %v2025
      %v5023 = vunpack.c.h.b16 %v2025
      %v5024 = vunpack.c.l.b16 %v2026
      %v5025 = vunpack.c.h.b16 %v2026
      %v5026 = vunpack.c.l.b16 %v2027
      %v5027 = vunpack.c.h.b16 %v2027
      %v5028 = vunpack.c.l.b16 %v2028
      %v5029 = vunpack.c.h.b16 %v2028
      %v5030 = vunpack.c.l.b16 %v2029
      %v5031 = vunpack.c.h.b16 %v2029
      %v5032 = vunpack.c.l.b16 %v2030
      %v5033 = vunpack.c.h.b16 %v2030
      %v5034 = vunpack.c.l.b16 %v2031
      %v5035 = vunpack.c.h.b16 %v2031
      %v5036 = vunpack.c.l.b16 %v2032
      %v5037 = vunpack.c.h.b16 %v2032
      %v5038 = vunpack.c.l.b16 %v2033
      %v5039 = vunpack.c.h.b16 %v2033
      %v5040 = vunpack.c.l.b16 %v2034
      %v5041 = vunpack.c.h.b16 %v2034
      %v5042 = vunpack.c.l.b16 %v2035
      %v5043 = vunpack.c.h.b16 %v2035
      %v5044 = vunpack.c.l.b16 %v2036
      %v5045 = vunpack.c.h.b16 %v2036
      %v5046 = vunpack.c.l.b16 %v2037
      %v5047 = vunpack.c.h.b16 %v2037
      %v5048 = vunpack.c.l.b16 %v2038
      %v5049 = vunpack.c.h.b16 %v2038
      %v5050 = vunpack.c.l.b16 %v2039
      %v5051 = vunpack.c.h.b16 %v2039
      %v5052 = vunpack.c.l.b16 %v2040
      %v5053 = vunpack.c.h.b16 %v2040
      %v5054 = vunpack.c.l.b16 %v2041
      %v5055 = vunpack.c.h.b16 %v2041
      %v5056 = vunpack.c.l.b16 %v2042
      %v5057 = vunpack.c.h.b16 %v2042
      %v5058 = vunpack.c.l.b16 %v2043
      %v5059 = vunpack.c.h.b16 %v2043
      %v5060 = vunpack.c.l.b16 %v2044
      %v5061 = vunpack.c.h.b16 %v2044
      %v5062 = vunpack.c.l.b16 %v2045
      %v5063 = vunpack.c.h.b16 %v2045
      %v5064 = vunpack.c.l.b16 %v2046
      %v5065 = vunpack.c.h.b16 %v2046
      %v5066 = vunpack.c.l.b16 %v2047
      %v5067 = vunpack.c.h.b16 %v2047
      %v5068 = vunpack.c.l.b16 %v2048
      %v5069 = vunpack.c.h.b16 %v2048
      %v5070 = vunpack.c.l.b16 %v2049
      %v5071 = vunpack.c.h.b16 %v2049
      %v5072 = vunpack.c.l.b16 %v2050
      %v5073 = vunpack.c.h.b16 %v2050
      %v5074 = vunpack.c.l.b16 %v2051
      %v5075 = vunpack.c.h.b16 %v2051
      %v5076 = vunpack.c.l.b16 %v2052
      %v5077 = vunpack.c.h.b16 %v2052
      %v5078 = vunpack.c.l.b16 %v2053
      %v5079 = vunpack.c.h.b16 %v2053
      %v5080 = vunpack.c.l.b16 %v2054
      %v5081 = vunpack.c.h.b16 %v2054
      %v5082 = vunpack.c.l.b16 %v2055
      %v5083 = vunpack.c.h.b16 %v2055
      %v5084 = vunpack.c.l.b16 %v2056
      %v5085 = vunpack.c.h.b16 %v2056
      %v5086 = vunpack.c.l.b16 %v2057
      %v5087 = vunpack.c.h.b16 %v2057
      %v5088 = vunpack.c.l.b16 %v2058
      %v5089 = vunpack.c.h.b16 %v2058
      %v5090 = vunpack.c.l.b16 %v2059
      %v5091 = vunpack.c.h.b16 %v2059
      %v5092 = vunpack.c.l.b16 %v2060
      %v5093 = vunpack.c.h.b16 %v2060
      %v5094 = vunpack.c.l.b16 %v2061
      %v5095 = vunpack.c.h.b16 %v2061
      %v5096 = vunpack.c.l.b16 %v2062
      %v5097 = vunpack.c.h.b16 %v2062
      %v5098 = vunpack.c.l.b16 %v2063
      %v5099 = vunpack.c.h.b16 %v2063
      %v5100 = vunpack.c.l.b16 %v2064
      %v5101 = vunpack.c.h.b16 %v2064
      %v5102 = vunpack.c.l.b16 %v2065
      %v5103 = vunpack.c.h.b16 %v2065
      %v5104 = vunpack.c.l.b16 %v2066
      %v5105 = vunpack.c.h.b16 %v2066
      %v5106 = vunpack.c.l.b16 %v2067
      %v5107 = vunpack.c.h.b16 %v2067
      %v5108 = vunpack.c.l.b16 %v2068
      %v5109 = vunpack.c.h.b16 %v2068
      %v5110 = vunpack.c.l.b16 %v2069
      %v5111 = vunpack.c.h.b16 %v2069
      %v5112 = vunpack.c.l.b16 %v2070
      %v5113 = vunpack.c.h.b16 %v2070
      %v5114 = vunpack.c.l.b16 %v2071
      %v5115 = vunpack.c.h.b16 %v2071
      %v5116 = vunpack.c.l.b16 %v2072
      %v5117 = vunpack.c.h.b16 %v2072
      %v5118 = vunpack.c.l.b16 %v2073
      %v5119 = vunpack.c.h.b16 %v2073
      %v5120 = vunpack.c.l.b16 %v2074
      %v5121 = vunpack.c.h.b16 %v2074
      %v5122 = vunpack.c.l.b16 %v2075
      %v5123 = vunpack.c.h.b16 %v2075
      %v5124 = vunpack.c.l.b16 %v2076
      %v5125 = vunpack.c.h.b16 %v2076
      %v5126 = vunpack.c.l.b16 %v2077
      %v5127 = vunpack.c.h.b16 %v2077
      %v5128 = vunpack.c.l.b16 %v2078
      %v5129 = vunpack.c.h.b16 %v2078
      %v5130 = vunpack.c.l.b16 %v2079
      %v5131 = vunpack.c.h.b16 %v2079
      %v5132 = vunpack.c.l.b16 %v2080
      %v5133 = vunpack.c.h.b16 %v2080
      %v5134 = vunpack.c.l.b16 %v2081
      %v5135 = vunpack.c.h.b16 %v2081
      %v5136 = vunpack.c.l.b16 %v2082
      %v5137 = vunpack.c.h.b16 %v2082
      %v5138 = vunpack.c.l.b16 %v2083
      %v5139 = vunpack.c.h.b16 %v2083
      %v5140 = vunpack.c.l.b16 %v2084
      %v5141 = vunpack.c.h.b16 %v2084
      %v5142 = vunpack.c.l.b16 %v2085
      %v5143 = vunpack.c.h.b16 %v2085
      %v5144 = vunpack.c.l.b16 %v2086
      %v5145 = vunpack.c.h.b16 %v2086
      %v5146 = vunpack.c.l.b16 %v2087
      %v5147 = vunpack.c.h.b16 %v2087
      %v5148 = vunpack.c.l.b16 %v2088
      %v5149 = vunpack.c.h.b16 %v2088
      %v5150 = vunpack.c.l.b16 %v2089
      %v5151 = vunpack.c.h.b16 %v2089
      %v5152 = vunpack.c.l.b16 %v2090
      %v5153 = vunpack.c.h.b16 %v2090
      %v5154 = vunpack.c.l.b16 %v2091
      %v5155 = vunpack.c.h.b16 %v2091
      %v5156 = vunpack.c.l.b16 %v2092
      %v5157 = vunpack.c.h.b16 %v2092
      %v5158 = vunpack.c.l.b16 %v2093
      %v5159 = vunpack.c.h.b16 %v2093
      %v5160 = vunpack.c.l.b16 %v2094
      %v5161 = vunpack.c.h.b16 %v2094
      %v5162 = vunpack.c.l.b16 %v2095
      %v5163 = vunpack.c.h.b16 %v2095
      %v5164 = vunpack.c.l.b16 %v2096
      %v5165 = vunpack.c.h.b16 %v2096
      %v5166 = vunpack.c.l.b16 %v2097
      %v5167 = vunpack.c.h.b16 %v2097
      %v5168 = vunpack.c.l.b16 %v2098
      %v5169 = vunpack.c.h.b16 %v2098
      %v5170 = vunpack.c.l.b16 %v2099
      %v5171 = vunpack.c.h.b16 %v2099
      %v5172 = vunpack.c.l.b16 %v2100
      %v5173 = vunpack.c.h.b16 %v2100
      %v5174 = vunpack.c.l.b16 %v2101
      %v5175 = vunpack.c.h.b16 %v2101
      %v5176 = vunpack.c.l.b16 %v2102
      %v5177 = vunpack.c.h.b16 %v2102
      %v5178 = vunpack.c.l.b16 %v2103
      %v5179 = vunpack.c.h.b16 %v2103
      %v5180 = vunpack.c.l.b16 %v2104
      %v5181 = vunpack.c.h.b16 %v2104
      %v5182 = vunpack.c.l.b16 %v2105
      %v5183 = vunpack.c.h.b16 %v2105
      %v5184 = vunpack.c.l.b16 %v2106
      %v5185 = vunpack.c.h.b16 %v2106
      %v5186 = vunpack.c.l.b16 %v2107
      %v5187 = vunpack.c.h.b16 %v2107
      %v5188 = vunpack.c.l.b16 %v2108
      %v5189 = vunpack.c.h.b16 %v2108
      %v5190 = vunpack.c.l.b16 %v2109
      %v5191 = vunpack.c.h.b16 %v2109
      %v5192 = vunpack.c.l.b16 %v2110
      %v5193 = vunpack.c.h.b16 %v2110
      %v5194 = vunpack.c.l.b16 %v2111
      %v5195 = vunpack.c.h.b16 %v2111
      %v5196 = vunpack.c.l.b16 %v2112
      %v5197 = vunpack.c.h.b16 %v2112
      %v5198 = vunpack.c.l.b16 %v2113
      %v5199 = vunpack.c.h.b16 %v2113
      %v5200 = vunpack.c.l.b16 %v2114
      %v5201 = vunpack.c.h.b16 %v2114
      %v5202 = vunpack.c.l.b16 %v2115
      %v5203 = vunpack.c.h.b16 %v2115
      %v5204 = vunpack.c.l.b16 %v2116
      %v5205 = vunpack.c.h.b16 %v2116
      %v5206 = vunpack.c.l.b16 %v2117
      %v5207 = vunpack.c.h.b16 %v2117
      %v5208 = vunpack.c.l.b16 %v2118
      %v5209 = vunpack.c.h.b16 %v2118
      %v5210 = vunpack.c.l.b16 %v2119
      %v5211 = vunpack.c.h.b16 %v2119
      %v5212 = vunpack.c.l.b16 %v2120
      %v5213 = vunpack.c.h.b16 %v2120
      %v5214 = vunpack.c.l.b16 %v2121
      %v5215 = vunpack.c.h.b16 %v2121
      %v5216 = vunpack.c.l.b16 %v2122
      %v5217 = vunpack.c.h.b16 %v2122
      %v5218 = vunpack.c.l.b16 %v2123
      %v5219 = vunpack.c.h.b16 %v2123
      %v5220 = vunpack.c.l.b16 %v2124
      %v5221 = vunpack.c.h.b16 %v2124
      %v5222 = vunpack.c.l.b16 %v2125
      %v5223 = vunpack.c.h.b16 %v2125
      %v5224 = vunpack.c.l.b16 %v2126
      %v5225 = vunpack.c.h.b16 %v2126
      %v5226 = vunpack.c.l.b16 %v2127
      %v5227 = vunpack.c.h.b16 %v2127
      %v5228 = vunpack.c.l.b16 %v2128
      %v5229 = vunpack.c.h.b16 %v2128
      %v5230 = vunpack.c.l.b16 %v2129
      %v5231 = vunpack.c.h.b16 %v2129
      %v5232 = vunpack.c.l.b16 %v2130
      %v5233 = vunpack.c.h.b16 %v2130
      %v5234 = vunpack.c.l.b16 %v2131
      %v5235 = vunpack.c.h.b16 %v2131
      %v5236 = vunpack.c.l.b16 %v2132
      %v5237 = vunpack.c.h.b16 %v2132
      %v5238 = vunpack.c.l.b16 %v2133
      %v5239 = vunpack.c.h.b16 %v2133
      %v5240 = vunpack.c.l.b16 %v2134
      %v5241 = vunpack.c.h.b16 %v2134
      %v5242 = vunpack.c.l.b16 %v2135
      %v5243 = vunpack.c.h.b16 %v2135
      %v5244 = vunpack.c.l.b16 %v2136
      %v5245 = vunpack.c.h.b16 %v2136
      %v5246 = vunpack.c.l.b16 %v2137
      %v5247 = vunpack.c.h.b16 %v2137
      %v5248 = vunpack.c.l.b16 %v2138
      %v5249 = vunpack.c.h.b16 %v2138
      %v5250 = vunpack.c.l.b16 %v2139
      %v5251 = vunpack.c.h.b16 %v2139
      %v5252 = vunpack.c.l.b16 %v2140
      %v5253 = vunpack.c.h.b16 %v2140
      %v5254 = vunpack.c.l.b16 %v2141
      %v5255 = vunpack.c.h.b16 %v2141
      %v5256 = vunpack.c.l.b16 %v2142
      %v5257 = vunpack.c.h.b16 %v2142
      %v5258 = vunpack.c.l.b16 %v2143
      %v5259 = vunpack.c.h.b16 %v2143
      %v5260 = vunpack.c.l.b16 %v2144
      %v5261 = vunpack.c.h.b16 %v2144
      %v5262 = vunpack.c.l.b16 %v2145
      %v5263 = vunpack.c.h.b16 %v2145
      %v5264 = vunpack.c.l.b16 %v2146
      %v5265 = vunpack.c.h.b16 %v2146
      %v5266 = vunpack.c.l.b16 %v2147
      %v5267 = vunpack.c.h.b16 %v2147
      %v5268 = vunpack.c.l.b16 %v2148
      %v5269 = vunpack.c.h.b16 %v2148
      %v5270 = vunpack.c.l.b16 %v2149
      %v5271 = vunpack.c.h.b16 %v2149
      %v5272 = vunpack.c.l.b16 %v2150
      %v5273 = vunpack.c.h.b16 %v2150
      %v5274 = vunpack.c.l.b16 %v2151
      %v5275 = vunpack.c.h.b16 %v2151
      %v5276 = vunpack.c.l.b16 %v2152
      %v5277 = vunpack.c.h.b16 %v2152
      %v5278 = vunpack.c.l.b16 %v2153
      %v5279 = vunpack.c.h.b16 %v2153
      %v5280 = vunpack.c.l.b16 %v2154
      %v5281 = vunpack.c.h.b16 %v2154
      %v5282 = vunpack.c.l.b16 %v2155
      %v5283 = vunpack.c.h.b16 %v2155
      %v5284 = vunpack.c.l.b16 %v2156
      %v5285 = vunpack.c.h.b16 %v2156
      %v5286 = vunpack.c.l.b16 %v2157
      %v5287 = vunpack.c.h.b16 %v2157
      %v5288 = vunpack.c.l.b16 %v2158
      %v5289 = vunpack.c.h.b16 %v2158
      %v5290 = vunpack.c.l.b16 %v2159
      %v5291 = vunpack.c.h.b16 %v2159
      %v5292 = vunpack.c.l.b16 %v2160
      %v5293 = vunpack.c.h.b16 %v2160
      %v5294 = vunpack.c.l.b16 %v2161
      %v5295 = vunpack.c.h.b16 %v2161
      %v5296 = vunpack.c.l.b16 %v2162
      %v5297 = vunpack.c.h.b16 %v2162
      %v5298 = vunpack.c.l.b16 %v2163
      %v5299 = vunpack.c.h.b16 %v2163
      %v5300 = vunpack.c.l.b16 %v2164
      %v5301 = vunpack.c.h.b16 %v2164
      %v5302 = vunpack.c.l.b16 %v2165
      %v5303 = vunpack.c.h.b16 %v2165
      %v5304 = vunpack.c.l.b16 %v2166
      %v5305 = vunpack.c.h.b16 %v2166
      %v5306 = vunpack.c.l.b16 %v2167
      %v5307 = vunpack.c.h.b16 %v2167
      %v5308 = vunpack.c.l.b16 %v2168
      %v5309 = vunpack.c.h.b16 %v2168
      %v5310 = vunpack.c.l.b16 %v2169
      %v5311 = vunpack.c.h.b16 %v2169
      %v5312 = vunpack.c.l.b16 %v2170
      %v5313 = vunpack.c.h.b16 %v2170
      %v5314 = vunpack.c.l.b16 %v2171
      %v5315 = vunpack.c.h.b16 %v2171
      %v5316 = vunpack.c.l.b16 %v2172
      %v5317 = vunpack.c.h.b16 %v2172
      %v5318 = vunpack.c.l.b16 %v2173
      %v5319 = vunpack.c.h.b16 %v2173
      %v5320 = vunpack.c.l.b16 %v2174
      %v5321 = vunpack.c.h.b16 %v2174
      %v5322 = vunpack.c.l.b16 %v2175
      %v5323 = vunpack.c.h.b16 %v2175
      %v5324 = vunpack.c.l.b16 %v2176
      %v5325 = vunpack.c.h.b16 %v2176
      %v5326 = vunpack.c.l.b16 %v2177
      %v5327 = vunpack.c.h.b16 %v2177
      %v5328 = vunpack.c.l.b16 %v2178
      %v5329 = vunpack.c.h.b16 %v2178
      %v5330 = vunpack.c.l.b16 %v2179
      %v5331 = vunpack.c.h.b16 %v2179
      %v5332 = vunpack.c.l.b16 %v2180
      %v5333 = vunpack.c.h.b16 %v2180
      %v5334 = vunpack.c.l.b16 %v2181
      %v5335 = vunpack.c.h.b16 %v2181
      %v5336 = vunpack.c.l.b16 %v2182
      %v5337 = vunpack.c.h.b16 %v2182
      %v5338 = vunpack.c.l.b16 %v2183
      %v5339 = vunpack.c.h.b16 %v2183
      %v5340 = vpack.c.b16 %v3308, %v3292
      %v5341 = vpack.c.b16 %v3309, %v3293
      %v5342 = vpack.c.b16 %v3310, %v3294
      %v5343 = vpack.c.b16 %v3311, %v3295
      %v5344 = vpack.c.b16 %v3312, %v3296
      %v5345 = vpack.c.b16 %v3313, %v3297
      %v5346 = vpack.c.b16 %v3314, %v3298
      %v5347 = vpack.c.b16 %v3315, %v3299
      %v5348 = vpack.c.b16 %v3316, %v3300
      %v5349 = vpack.c.b16 %v3317, %v3301
      %v5350 = vpack.c.b16 %v3318, %v3302
      %v5351 = vpack.c.b16 %v3319, %v3303
      %v5352 = vpack.c.b16 %v3320, %v3304
      %v5353 = vpack.c.b16 %v3321, %v3305
      %v5354 = vpack.c.b16 %v3322, %v3306
      %v5355 = vpack.c.b16 %v3323, %v3307
      %v5356 = vpack.c.b16 %v3340, %v3324
      %v5357 = vpack.c.b16 %v3341, %v3325
      %v5358 = vpack.c.b16 %v3342, %v3326
      %v5359 = vpack.c.b16 %v3343, %v3327
      %v5360 = vpack.c.b16 %v3344, %v3328
      %v5361 = vpack.c.b16 %v3345, %v3329
      %v5362 = vpack.c.b16 %v3346, %v3330
      %v5363 = vpack.c.b16 %v3347, %v3331
      %v5364 = vpack.c.b16 %v3348, %v3332
      %v5365 = vpack.c.b16 %v3349, %v3333
      %v5366 = vpack.c.b16 %v3350, %v3334
      %v5367 = vpack.c.b16 %v3351, %v3335
      %v5368 = vpack.c.b16 %v3352, %v3336
      %v5369 = vpack.c.b16 %v3353, %v3337
      %v5370 = vpack.c.b16 %v3354, %v3338
      %v5371 = vpack.c.b16 %v3355, %v3339
      %v5372 = vpack.c.b16 %v3372, %v3356
      %v5373 = vpack.c.b16 %v3373, %v3357
      %v5374 = vpack.c.b16 %v3374, %v3358
      %v5375 = vpack.c.b16 %v3375, %v3359
      %v5376 = vpack.c.b16 %v3376, %v3360
      %v5377 = vpack.c.b16 %v3377, %v3361
      %v5378 = vpack.c.b16 %v3378, %v3362
      %v5379 = vpack.c.b16 %v3379, %v3363
      %v5380 = vpack.c.b16 %v3380, %v3364
      %v5381 = vpack.c.b16 %v3381, %v3365
      %v5382 = vpack.c.b16 %v3382, %v3366
      %v5383 = vpack.c.b16 %v3383, %v3367
      %v5384 = vpack.c.b16 %v3384, %v3368
      %v5385 = vpack.c.b16 %v3385, %v3369
      %v5386 = vpack.c.b16 %v3386, %v3370
      %v5387 = vpack.c.b16 %v3387, %v3371
      %v5388 = vpack.c.b16 %v3404, %v3388
      %v5389 = vpack.c.b16 %v3405, %v3389
      %v5390 = vpack.c.b16 %v3406, %v3390
      %v5391 = vpack.c.b16 %v3407, %v3391
      %v5392 = vpack.c.b16 %v3408, %v3392
      %v5393 = vpack.c.b16 %v3409, %v3393
      %v5394 = vpack.c.b16 %v3410, %v3394
      %v5395 = vpack.c.b16 %v3411, %v3395
      %v5396 = vpack.c.b16 %v3412, %v3396
      %v5397 = vpack.c.b16 %v3413, %v3397
      %v5398 = vpack.c.b16 %v3414, %v3398
      %v5399 = vpack.c.b16 %v3415, %v3399
      %v5400 = vpack.c.b16 %v3416, %v3400
      %v5401 = vpack.c.b16 %v3417, %v3401
      %v5402 = vpack.c.b16 %v3418, %v3402
      %v5403 = vpack.c.b16 %v3419, %v3403
      %v5404 = vpack.c.b16 %v3436, %v3420
      %v5405 = vpack.c.b16 %v3437, %v3421
      %v5406 = vpack.c.b16 %v3438, %v3422
      %v5407 = vpack.c.b16 %v3439, %v3423
      %v5408 = vpack.c.b16 %v3440, %v3424
      %v5409 = vpack.c.b16 %v3441, %v3425
      %v5410 = vpack.c.b16 %v3442, %v3426
      %v5411 = vpack.c.b16 %v3443, %v3427
      %v5412 = vpack.c.b16 %v3444, %v3428
      %v5413 = vpack.c.b16 %v3445, %v3429
      %v5414 = vpack.c.b16 %v3446, %v3430
      %v5415 = vpack.c.b16 %v3447, %v3431
      %v5416 = vpack.c.b16 %v3448, %v3432
      %v5417 = vpack.c.b16 %v3449, %v3433
      %v5418 = vpack.c.b16 %v3450, %v3434
      %v5419 = vpack.c.b16 %v3451, %v3435
      %v5420 = vpack.c.b16 %v3468, %v3452
      %v5421 = vpack.c.b16 %v3469, %v3453
      %v5422 = vpack.c.b16 %v3470, %v3454
      %v5423 = vpack.c.b16 %v3471, %v3455
      %v5424 = vpack.c.b16 %v3472, %v3456
      %v5425 = vpack.c.b16 %v3473, %v3457
      %v5426 = vpack.c.b16 %v3474, %v3458
      %v5427 = vpack.c.b16 %v3475, %v3459
      %v5428 = vpack.c.b16 %v3476, %v3460
      %v5429 = vpack.c.b16 %v3477, %v3461
      %v5430 = vpack.c.b16 %v3478, %v3462
      %v5431 = vpack.c.b16 %v3479, %v3463
      %v5432 = vpack.c.b16 %v3480, %v3464
      %v5433 = vpack.c.b16 %v3481, %v3465
      %v5434 = vpack.c.b16 %v3482, %v3466
      %v5435 = vpack.c.b16 %v3483, %v3467
      %v5436 = vpack.c.b16 %v3500, %v3484
      %v5437 = vpack.c.b16 %v3501, %v3485
      %v5438 = vpack.c.b16 %v3502, %v3486
      %v5439 = vpack.c.b16 %v3503, %v3487
      %v5440 = vpack.c.b16 %v3504, %v3488
      %v5441 = vpack.c.b16 %v3505, %v3489
      %v5442 = vpack.c.b16 %v3506, %v3490
      %v5443 = vpack.c.b16 %v3507, %v3491
      %v5444 = vpack.c.b16 %v3508, %v3492
      %v5445 = vpack.c.b16 %v3509, %v3493
      %v5446 = vpack.c.b16 %v3510, %v3494
      %v5447 = vpack.c.b16 %v3511, %v3495
      %v5448 = vpack.c.b16 %v3512, %v3496
      %v5449 = vpack.c.b16 %v3513, %v3497
      %v5450 = vpack.c.b16 %v3514, %v3498
      %v5451 = vpack.c.b16 %v3515, %v3499
      %v5452 = vpack.c.b16 %v3532, %v3516
      %v5453 = vpack.c.b16 %v3533, %v3517
      %v5454 = vpack.c.b16 %v3534, %v3518
      %v5455 = vpack.c.b16 %v3535, %v3519
      %v5456 = vpack.c.b16 %v3536, %v3520
      %v5457 = vpack.c.b16 %v3537, %v3521
      %v5458 = vpack.c.b16 %v3538, %v3522
      %v5459 = vpack.c.b16 %v3539, %v3523
      %v5460 = vpack.c.b16 %v3540, %v3524
      %v5461 = vpack.c.b16 %v3541, %v3525
      %v5462 = vpack.c.b16 %v3542, %v3526
      %v5463 = vpack.c.b16 %v3543, %v3527
      %v5464 = vpack.c.b16 %v3544, %v3528
      %v5465 = vpack.c.b16 %v3545, %v3529
      %v5466 = vpack.c.b16 %v3546, %v3530
      %v5467 = vpack.c.b16 %v3547, %v3531
      %v5468 = vpack.c.b16 %v3564, %v3548
      %v5469 = vpack.c.b16 %v3565, %v3549
      %v5470 = vpack.c.b16 %v3566, %v3550
      %v5471 = vpack.c.b16 %v3567, %v3551
      %v5472 = vpack.c.b16 %v3568, %v3552
      %v5473 = vpack.c.b16 %v3569, %v3553
      %v5474 = vpack.c.b16 %v3570, %v3554
      %v5475 = vpack.c.b16 %v3571, %v3555
      %v5476 = vpack.c.b16 %v3572, %v3556
      %v5477 = vpack.c.b16 %v3573, %v3557
      %v5478 = vpack.c.b16 %v3574, %v3558
      %v5479 = vpack.c.b16 %v3575, %v3559
      %v5480 = vpack.c.b16 %v3576, %v3560
      %v5481 = vpack.c.b16 %v3577, %v3561
      %v5482 = vpack.c.b16 %v3578, %v3562
      %v5483 = vpack.c.b16 %v3579, %v3563
      %v5484 = vpack.c.b16 %v3596, %v3580
      %v5485 = vpack.c.b16 %v3597, %v3581
      %v5486 = vpack.c.b16 %v3598, %v3582
      %v5487 = vpack.c.b16 %v3599, %v3583
      %v5488 = vpack.c.b16 %v3600, %v3584
      %v5489 = vpack.c.b16 %v3601, %v3585
      %v5490 = vpack.c.b16 %v3602, %v3586
      %v5491 = vpack.c.b16 %v3603, %v3587
      %v5492 = vpack.c.b16 %v3604, %v3588
      %v5493 = vpack.c.b16 %v3605, %v3589
      %v5494 = vpack.c.b16 %v3606, %v3590
      %v5495 = vpack.c.b16 %v3607, %v3591
      %v5496 = vpack.c.b16 %v3608, %v3592
      %v5497 = vpack.c.b16 %v3609, %v3593
      %v5498 = vpack.c.b16 %v3610, %v3594
      %v5499 = vpack.c.b16 %v3611, %v3595
      %v5500 = vpack.c.b16 %v3628, %v3612
      %v5501 = vpack.c.b16 %v3629, %v3613
      %v5502 = vpack.c.b16 %v3630, %v3614
      %v5503 = vpack.c.b16 %v3631, %v3615
      %v5504 = vpack.c.b16 %v3632, %v3616
      %v5505 = vpack.c.b16 %v3633, %v3617
      %v5506 = vpack.c.b16 %v3634, %v3618
      %v5507 = vpack.c.b16 %v3635, %v3619
      %v5508 = vpack.c.b16 %v3636, %v3620
      %v5509 = vpack.c.b16 %v3637, %v3621
      %v5510 = vpack.c.b16 %v3638, %v3622
      %v5511 = vpack.c.b16 %v3639, %v3623
      %v5512 = vpack.c.b16 %v3640, %v3624
      %v5513 = vpack.c.b16 %v3641, %v3625
      %v5514 = vpack.c.b16 %v3642, %v3626
      %v5515 = vpack.c.b16 %v3643, %v3627
      %v5516 = vpack.c.b16 %v3660, %v3644
      %v5517 = vpack.c.b16 %v3661, %v3645
      %v5518 = vpack.c.b16 %v3662, %v3646
      %v5519 = vpack.c.b16 %v3663, %v3647
      %v5520 = vpack.c.b16 %v3664, %v3648
      %v5521 = vpack.c.b16 %v3665, %v3649
      %v5522 = vpack.c.b16 %v3666, %v3650
      %v5523 = vpack.c.b16 %v3667, %v3651
      %v5524 = vpack.c.b16 %v3668, %v3652
      %v5525 = vpack.c.b16 %v3669, %v3653
      %v5526 = vpack.c.b16 %v3670, %v3654
      %v5527 = vpack.c.b16 %v3671, %v3655
      %v5528 = vpack.c.b16 %v3672, %v3656
      %v5529 = vpack.c.b16 %v3673, %v3657
      %v5530 = vpack.c.b16 %v3674, %v3658
      %v5531 = vpack.c.b16 %v3675, %v3659
      %v5532 = vpack.c.b16 %v3692, %v3676
      %v5533 = vpack.c.b16 %v3693, %v3677
      %v5534 = vpack.c.b16 %v3694, %v3678
      %v5535 = vpack.c.b16 %v3695, %v3679
      %v5536 = vpack.c.b16 %v3696, %v3680
      %v5537 = vpack.c.b16 %v3697, %v3681
      %v5538 = vpack.c.b16 %v3698, %v3682
      %v5539 = vpack.c.b16 %v3699, %v3683
      %v5540 = vpack.c.b16 %v3700, %v3684
      %v5541 = vpack.c.b16 %v3701, %v3685
      %v5542 = vpack.c.b16 %v3702, %v3686
      %v5543 = vpack.c.b16 %v3703, %v3687
      %v5544 = vpack.c.b16 %v3704, %v3688
      %v5545 = vpack.c.b16 %v3705, %v3689
      %v5546 = vpack.c.b16 %v3706, %v3690
      %v5547 = vpack.c.b16 %v3707, %v3691
      %v5548 = vpack.c.b16 %v3724, %v3708
      %v5549 = vpack.c.b16 %v3725, %v3709
      %v5550 = vpack.c.b16 %v3726, %v3710
      %v5551 = vpack.c.b16 %v3727, %v3711
      %v5552 = vpack.c.b16 %v3728, %v3712
      %v5553 = vpack.c.b16 %v3729, %v3713
      %v5554 = vpack.c.b16 %v3730, %v3714
      %v5555 = vpack.c.b16 %v3731, %v3715
      %v5556 = vpack.c.b16 %v3732, %v3716
      %v5557 = vpack.c.b16 %v3733, %v3717
      %v5558 = vpack.c.b16 %v3734, %v3718
      %v5559 = vpack.c.b16 %v3735, %v3719
      %v5560 = vpack.c.b16 %v3736, %v3720
      %v5561 = vpack.c.b16 %v3737, %v3721
      %v5562 = vpack.c.b16 %v3738, %v3722
      %v5563 = vpack.c.b16 %v3739, %v3723
      %v5564 = vpack.c.b16 %v3756, %v3740
      %v5565 = vpack.c.b16 %v3757, %v3741
      %v5566 = vpack.c.b16 %v3758, %v3742
      %v5567 = vpack.c.b16 %v3759, %v3743
      %v5568 = vpack.c.b16 %v3760, %v3744
      %v5569 = vpack.c.b16 %v3761, %v3745
      %v5570 = vpack.c.b16 %v3762, %v3746
      %v5571 = vpack.c.b16 %v3763, %v3747
      %v5572 = vpack.c.b16 %v3764, %v3748
      %v5573 = vpack.c.b16 %v3765, %v3749
      %v5574 = vpack.c.b16 %v3766, %v3750
      %v5575 = vpack.c.b16 %v3767, %v3751
      %v5576 = vpack.c.b16 %v3768, %v3752
      %v5577 = vpack.c.b16 %v3769, %v3753
      %v5578 = vpack.c.b16 %v3770, %v3754
      %v5579 = vpack.c.b16 %v3771, %v3755
      %v5580 = vpack.c.b16 %v3788, %v3772
      %v5581 = vpack.c.b16 %v3789, %v3773
      %v5582 = vpack.c.b16 %v3790, %v3774
      %v5583 = vpack.c.b16 %v3791, %v3775
      %v5584 = vpack.c.b16 %v3792, %v3776
      %v5585 = vpack.c.b16 %v3793, %v3777
      %v5586 = vpack.c.b16 %v3794, %v3778
      %v5587 = vpack.c.b16 %v3795, %v3779
      %v5588 = vpack.c.b16 %v3796, %v3780
      %v5589 = vpack.c.b16 %v3797, %v3781
      %v5590 = vpack.c.b16 %v3798, %v3782
      %v5591 = vpack.c.b16 %v3799, %v3783
      %v5592 = vpack.c.b16 %v3800, %v3784
      %v5593 = vpack.c.b16 %v3801, %v3785
      %v5594 = vpack.c.b16 %v3802, %v3786
      %v5595 = vpack.c.b16 %v3803, %v3787
      %v5596 = vpack.c.b16 %v3820, %v3804
      %v5597 = vpack.c.b16 %v3821, %v3805
      %v5598 = vpack.c.b16 %v3822, %v3806
      %v5599 = vpack.c.b16 %v3823, %v3807
      %v5600 = vpack.c.b16 %v3824, %v3808
      %v5601 = vpack.c.b16 %v3825, %v3809
      %v5602 = vpack.c.b16 %v3826, %v3810
      %v5603 = vpack.c.b16 %v3827, %v3811
      %v5604 = vpack.c.b16 %v3828, %v3812
      %v5605 = vpack.c.b16 %v3829, %v3813
      %v5606 = vpack.c.b16 %v3830, %v3814
      %v5607 = vpack.c.b16 %v3831, %v3815
      %v5608 = vpack.c.b16 %v3832, %v3816
      %v5609 = vpack.c.b16 %v3833, %v3817
      %v5610 = vpack.c.b16 %v3834, %v3818
      %v5611 = vpack.c.b16 %v3835, %v3819
      %v5612 = vpack.c.b16 %v3852, %v3836
      %v5613 = vpack.c.b16 %v3853, %v3837
      %v5614 = vpack.c.b16 %v3854, %v3838
      %v5615 = vpack.c.b16 %v3855, %v3839
      %v5616 = vpack.c.b16 %v3856, %v3840
      %v5617 = vpack.c.b16 %v3857, %v3841
      %v5618 = vpack.c.b16 %v3858, %v3842
      %v5619 = vpack.c.b16 %v3859, %v3843
      %v5620 = vpack.c.b16 %v3860, %v3844
      %v5621 = vpack.c.b16 %v3861, %v3845
      %v5622 = vpack.c.b16 %v3862, %v3846
      %v5623 = vpack.c.b16 %v3863, %v3847
      %v5624 = vpack.c.b16 %v3864, %v3848
      %v5625 = vpack.c.b16 %v3865, %v3849
      %v5626 = vpack.c.b16 %v3866, %v3850
      %v5627 = vpack.c.b16 %v3867, %v3851
      %v5628 = vpack.c.b16 %v3884, %v3868
      %v5629 = vpack.c.b16 %v3885, %v3869
      %v5630 = vpack.c.b16 %v3886, %v3870
      %v5631 = vpack.c.b16 %v3887, %v3871
      %v5632 = vpack.c.b16 %v3888, %v3872
      %v5633 = vpack.c.b16 %v3889, %v3873
      %v5634 = vpack.c.b16 %v3890, %v3874
      %v5635 = vpack.c.b16 %v3891, %v3875
      %v5636 = vpack.c.b16 %v3892, %v3876
      %v5637 = vpack.c.b16 %v3893, %v3877
      %v5638 = vpack.c.b16 %v3894, %v3878
      %v5639 = vpack.c.b16 %v3895, %v3879
      %v5640 = vpack.c.b16 %v3896, %v3880
      %v5641 = vpack.c.b16 %v3897, %v3881
      %v5642 = vpack.c.b16 %v3898, %v3882
      %v5643 = vpack.c.b16 %v3899, %v3883
      %v5644 = vpack.c.b16 %v3916, %v3900
      %v5645 = vpack.c.b16 %v3917, %v3901
      %v5646 = vpack.c.b16 %v3918, %v3902
      %v5647 = vpack.c.b16 %v3919, %v3903
      %v5648 = vpack.c.b16 %v3920, %v3904
      %v5649 = vpack.c.b16 %v3921, %v3905
      %v5650 = vpack.c.b16 %v3922, %v3906
      %v5651 = vpack.c.b16 %v3923, %v3907
      %v5652 = vpack.c.b16 %v3924, %v3908
      %v5653 = vpack.c.b16 %v3925, %v3909
      %v5654 = vpack.c.b16 %v3926, %v3910
      %v5655 = vpack.c.b16 %v3927, %v3911
      %v5656 = vpack.c.b16 %v3928, %v3912
      %v5657 = vpack.c.b16 %v3929, %v3913
      %v5658 = vpack.c.b16 %v3930, %v3914
      %v5659 = vpack.c.b16 %v3931, %v3915
      %v5660 = vpack.c.b16 %v3948, %v3932
      %v5661 = vpack.c.b16 %v3949, %v3933
      %v5662 = vpack.c.b16 %v3950, %v3934
      %v5663 = vpack.c.b16 %v3951, %v3935
      %v5664 = vpack.c.b16 %v3952, %v3936
      %v5665 = vpack.c.b16 %v3953, %v3937
      %v5666 = vpack.c.b16 %v3954, %v3938
      %v5667 = vpack.c.b16 %v3955, %v3939
      %v5668 = vpack.c.b16 %v3956, %v3940
      %v5669 = vpack.c.b16 %v3957, %v3941
      %v5670 = vpack.c.b16 %v3958, %v3942
      %v5671 = vpack.c.b16 %v3959, %v3943
      %v5672 = vpack.c.b16 %v3960, %v3944
      %v5673 = vpack.c.b16 %v3961, %v3945
      %v5674 = vpack.c.b16 %v3962, %v3946
      %v5675 = vpack.c.b16 %v3963, %v3947
      %v5676 = vpack.c.b16 %v3980, %v3964
      %v5677 = vpack.c.b16 %v3981, %v3965
      %v5678 = vpack.c.b16 %v3982, %v3966
      %v5679 = vpack.c.b16 %v3983, %v3967
      %v5680 = vpack.c.b16 %v3984, %v3968
      %v5681 = vpack.c.b16 %v3985, %v3969
      %v5682 = vpack.c.b16 %v3986, %v3970
      %v5683 = vpack.c.b16 %v3987, %v3971
      %v5684 = vpack.c.b16 %v3988, %v3972
      %v5685 = vpack.c.b16 %v3989, %v3973
      %v5686 = vpack.c.b16 %v3990, %v3974
      %v5687 = vpack.c.b16 %v3991, %v3975
      %v5688 = vpack.c.b16 %v3992, %v3976
      %v5689 = vpack.c.b16 %v3993, %v3977
      %v5690 = vpack.c.b16 %v3994, %v3978
      %v5691 = vpack.c.b16 %v3995, %v3979
      %v5692 = vpack.c.b16 %v4012, %v3996
      %v5693 = vpack.c.b16 %v4013, %v3997
      %v5694 = vpack.c.b16 %v4014, %v3998
      %v5695 = vpack.c.b16 %v4015, %v3999
      %v5696 = vpack.c.b16 %v4016, %v4000
      %v5697 = vpack.c.b16 %v4017, %v4001
      %v5698 = vpack.c.b16 %v4018, %v4002
      %v5699 = vpack.c.b16 %v4019, %v4003
      %v5700 = vpack.c.b16 %v4020, %v4004
      %v5701 = vpack.c.b16 %v4021, %v4005
      %v5702 = vpack.c.b16 %v4022, %v4006
      %v5703 = vpack.c.b16 %v4023, %v4007
      %v5704 = vpack.c.b16 %v4024, %v4008
      %v5705 = vpack.c.b16 %v4025, %v4009
      %v5706 = vpack.c.b16 %v4026, %v4010
      %v5707 = vpack.c.b16 %v4027, %v4011
      %v5708 = vpack.c.b16 %v4044, %v4028
      %v5709 = vpack.c.b16 %v4045, %v4029
      %v5710 = vpack.c.b16 %v4046, %v4030
      %v5711 = vpack.c.b16 %v4047, %v4031
      %v5712 = vpack.c.b16 %v4048, %v4032
      %v5713 = vpack.c.b16 %v4049, %v4033
      %v5714 = vpack.c.b16 %v4050, %v4034
      %v5715 = vpack.c.b16 %v4051, %v4035
      %v5716 = vpack.c.b16 %v4052, %v4036
      %v5717 = vpack.c.b16 %v4053, %v4037
      %v5718 = vpack.c.b16 %v4054, %v4038
      %v5719 = vpack.c.b16 %v4055, %v4039
      %v5720 = vpack.c.b16 %v4056, %v4040
      %v5721 = vpack.c.b16 %v4057, %v4041
      %v5722 = vpack.c.b16 %v4058, %v4042
      %v5723 = vpack.c.b16 %v4059, %v4043
      %v5724 = vpack.c.b16 %v4076, %v4060
      %v5725 = vpack.c.b16 %v4077, %v4061
      %v5726 = vpack.c.b16 %v4078, %v4062
      %v5727 = vpack.c.b16 %v4079, %v4063
      %v5728 = vpack.c.b16 %v4080, %v4064
      %v5729 = vpack.c.b16 %v4081, %v4065
      %v5730 = vpack.c.b16 %v4082, %v4066
      %v5731 = vpack.c.b16 %v4083, %v4067
      %v5732 = vpack.c.b16 %v4084, %v4068
      %v5733 = vpack.c.b16 %v4085, %v4069
      %v5734 = vpack.c.b16 %v4086, %v4070
      %v5735 = vpack.c.b16 %v4087, %v4071
      %v5736 = vpack.c.b16 %v4088, %v4072
      %v5737 = vpack.c.b16 %v4089, %v4073
      %v5738 = vpack.c.b16 %v4090, %v4074
      %v5739 = vpack.c.b16 %v4091, %v4075
      %v5740 = vpack.c.b16 %v4108, %v4092
      %v5741 = vpack.c.b16 %v4109, %v4093
      %v5742 = vpack.c.b16 %v4110, %v4094
      %v5743 = vpack.c.b16 %v4111, %v4095
      %v5744 = vpack.c.b16 %v4112, %v4096
      %v5745 = vpack.c.b16 %v4113, %v4097
      %v5746 = vpack.c.b16 %v4114, %v4098
      %v5747 = vpack.c.b16 %v4115, %v4099
      %v5748 = vpack.c.b16 %v4116, %v4100
      %v5749 = vpack.c.b16 %v4117, %v4101
      %v5750 = vpack.c.b16 %v4118, %v4102
      %v5751 = vpack.c.b16 %v4119, %v4103
      %v5752 = vpack.c.b16 %v4120, %v4104
      %v5753 = vpack.c.b16 %v4121, %v4105
      %v5754 = vpack.c.b16 %v4122, %v4106
      %v5755 = vpack.c.b16 %v4123, %v4107
      %v5756 = vpack.c.b16 %v4140, %v4124
      %v5757 = vpack.c.b16 %v4141, %v4125
      %v5758 = vpack.c.b16 %v4142, %v4126
      %v5759 = vpack.c.b16 %v4143, %v4127
      %v5760 = vpack.c.b16 %v4144, %v4128
      %v5761 = vpack.c.b16 %v4145, %v4129
      %v5762 = vpack.c.b16 %v4146, %v4130
      %v5763 = vpack.c.b16 %v4147, %v4131
      %v5764 = vpack.c.b16 %v4148, %v4132
      %v5765 = vpack.c.b16 %v4149, %v4133
      %v5766 = vpack.c.b16 %v4150, %v4134
      %v5767 = vpack.c.b16 %v4151, %v4135
      %v5768 = vpack.c.b16 %v4152, %v4136
      %v5769 = vpack.c.b16 %v4153, %v4137
      %v5770 = vpack.c.b16 %v4154, %v4138
      %v5771 = vpack.c.b16 %v4155, %v4139
      %v5772 = vpack.c.b16 %v4172, %v4156
      %v5773 = vpack.c.b16 %v4173, %v4157
      %v5774 = vpack.c.b16 %v4174, %v4158
      %v5775 = vpack.c.b16 %v4175, %v4159
      %v5776 = vpack.c.b16 %v4176, %v4160
      %v5777 = vpack.c.b16 %v4177, %v4161
      %v5778 = vpack.c.b16 %v4178, %v4162
      %v5779 = vpack.c.b16 %v4179, %v4163
      %v5780 = vpack.c.b16 %v4180, %v4164
      %v5781 = vpack.c.b16 %v4181, %v4165
      %v5782 = vpack.c.b16 %v4182, %v4166
      %v5783 = vpack.c.b16 %v4183, %v4167
      %v5784 = vpack.c.b16 %v4184, %v4168
      %v5785 = vpack.c.b16 %v4185, %v4169
      %v5786 = vpack.c.b16 %v4186, %v4170
      %v5787 = vpack.c.b16 %v4187, %v4171
      %v5788 = vpack.c.b16 %v4204, %v4188
      %v5789 = vpack.c.b16 %v4205, %v4189
      %v5790 = vpack.c.b16 %v4206, %v4190
      %v5791 = vpack.c.b16 %v4207, %v4191
      %v5792 = vpack.c.b16 %v4208, %v4192
      %v5793 = vpack.c.b16 %v4209, %v4193
      %v5794 = vpack.c.b16 %v4210, %v4194
      %v5795 = vpack.c.b16 %v4211, %v4195
      %v5796 = vpack.c.b16 %v4212, %v4196
      %v5797 = vpack.c.b16 %v4213, %v4197
      %v5798 = vpack.c.b16 %v4214, %v4198
      %v5799 = vpack.c.b16 %v4215, %v4199
      %v5800 = vpack.c.b16 %v4216, %v4200
      %v5801 = vpack.c.b16 %v4217, %v4201
      %v5802 = vpack.c.b16 %v4218, %v4202
      %v5803 = vpack.c.b16 %v4219, %v4203
      %v5804 = vpack.c.b16 %v4236, %v4220
      %v5805 = vpack.c.b16 %v4237, %v4221
      %v5806 = vpack.c.b16 %v4238, %v4222
      %v5807 = vpack.c.b16 %v4239, %v4223
      %v5808 = vpack.c.b16 %v4240, %v4224
      %v5809 = vpack.c.b16 %v4241, %v4225
      %v5810 = vpack.c.b16 %v4242, %v4226
      %v5811 = vpack.c.b16 %v4243, %v4227
      %v5812 = vpack.c.b16 %v4244, %v4228
      %v5813 = vpack.c.b16 %v4245, %v4229
      %v5814 = vpack.c.b16 %v4246, %v4230
      %v5815 = vpack.c.b16 %v4247, %v4231
      %v5816 = vpack.c.b16 %v4248, %v4232
      %v5817 = vpack.c.b16 %v4249, %v4233
      %v5818 = vpack.c.b16 %v4250, %v4234
      %v5819 = vpack.c.b16 %v4251, %v4235
      %v5820 = vpack.c.b16 %v4268, %v4252
      %v5821 = vpack.c.b16 %v4269, %v4253
      %v5822 = vpack.c.b16 %v4270, %v4254
      %v5823 = vpack.c.b16 %v4271, %v4255
      %v5824 = vpack.c.b16 %v4272, %v4256
      %v5825 = vpack.c.b16 %v4273, %v4257
      %v5826 = vpack.c.b16 %v4274, %v4258
      %v5827 = vpack.c.b16 %v4275, %v4259
      %v5828 = vpack.c.b16 %v4276, %v4260
      %v5829 = vpack.c.b16 %v4277, %v4261
      %v5830 = vpack.c.b16 %v4278, %v4262
      %v5831 = vpack.c.b16 %v4279, %v4263
      %v5832 = vpack.c.b16 %v4280, %v4264
      %v5833 = vpack.c.b16 %v4281, %v4265
      %v5834 = vpack.c.b16 %v4282, %v4266
      %v5835 = vpack.c.b16 %v4283, %v4267
      %v5836 = vpack.c.b16 %v4300, %v4284
      %v5837 = vpack.c.b16 %v4301, %v4285
      %v5838 = vpack.c.b16 %v4302, %v4286
      %v5839 = vpack.c.b16 %v4303, %v4287
      %v5840 = vpack.c.b16 %v4304, %v4288
      %v5841 = vpack.c.b16 %v4305, %v4289
      %v5842 = vpack.c.b16 %v4306, %v4290
      %v5843 = vpack.c.b16 %v4307, %v4291
      %v5844 = vpack.c.b16 %v4308, %v4292
      %v5845 = vpack.c.b16 %v4309, %v4293
      %v5846 = vpack.c.b16 %v4310, %v4294
      %v5847 = vpack.c.b16 %v4311, %v4295
      %v5848 = vpack.c.b16 %v4312, %v4296
      %v5849 = vpack.c.b16 %v4313, %v4297
      %v5850 = vpack.c.b16 %v4314, %v4298
      %v5851 = vpack.c.b16 %v4315, %v4299
      %v5852 = vpack.c.b16 %v4332, %v4316
      %v5853 = vpack.c.b16 %v4333, %v4317
      %v5854 = vpack.c.b16 %v4334, %v4318
      %v5855 = vpack.c.b16 %v4335, %v4319
      %v5856 = vpack.c.b16 %v4336, %v4320
      %v5857 = vpack.c.b16 %v4337, %v4321
      %v5858 = vpack.c.b16 %v4338, %v4322
      %v5859 = vpack.c.b16 %v4339, %v4323
      %v5860 = vpack.c.b16 %v4340, %v4324
      %v5861 = vpack.c.b16 %v4341, %v4325
      %v5862 = vpack.c.b16 %v4342, %v4326
      %v5863 = vpack.c.b16 %v4343, %v4327
      %v5864 = vpack.c.b16 %v4344, %v4328
      %v5865 = vpack.c.b16 %v4345, %v4329
      %v5866 = vpack.c.b16 %v4346, %v4330
      %v5867 = vpack.c.b16 %v4347, %v4331
      %v5868 = vpack.c.b16 %v4364, %v4348
      %v5869 = vpack.c.b16 %v4365, %v4349
      %v5870 = vpack.c.b16 %v4366, %v4350
      %v5871 = vpack.c.b16 %v4367, %v4351
      %v5872 = vpack.c.b16 %v4368, %v4352
      %v5873 = vpack.c.b16 %v4369, %v4353
      %v5874 = vpack.c.b16 %v4370, %v4354
      %v5875 = vpack.c.b16 %v4371, %v4355
      %v5876 = vpack.c.b16 %v4372, %v4356
      %v5877 = vpack.c.b16 %v4373, %v4357
      %v5878 = vpack.c.b16 %v4374, %v4358
      %v5879 = vpack.c.b16 %v4375, %v4359
      %v5880 = vpack.c.b16 %v4376, %v4360
      %v5881 = vpack.c.b16 %v4377, %v4361
      %v5882 = vpack.c.b16 %v4378, %v4362
      %v5883 = vpack.c.b16 %v4379, %v4363
      %v5884 = vpack.c.b16 %v4396, %v4380
      %v5885 = vpack.c.b16 %v4397, %v4381
      %v5886 = vpack.c.b16 %v4398, %v4382
      %v5887 = vpack.c.b16 %v4399, %v4383
      %v5888 = vpack.c.b16 %v4400, %v4384
      %v5889 = vpack.c.b16 %v4401, %v4385
      %v5890 = vpack.c.b16 %v4402, %v4386
      %v5891 = vpack.c.b16 %v4403, %v4387
      %v5892 = vpack.c.b16 %v4404, %v4388
      %v5893 = vpack.c.b16 %v4405, %v4389
      %v5894 = vpack.c.b16 %v4406, %v4390
      %v5895 = vpack.c.b16 %v4407, %v4391
      %v5896 = vpack.c.b16 %v4408, %v4392
      %v5897 = vpack.c.b16 %v4409, %v4393
      %v5898 = vpack.c.b16 %v4410, %v4394
      %v5899 = vpack.c.b16 %v4411, %v4395
      %v5900 = vpack.c.b16 %v4428, %v4412
      %v5901 = vpack.c.b16 %v4429, %v4413
      %v5902 = vpack.c.b16 %v4430, %v4414
      %v5903 = vpack.c.b16 %v4431, %v4415
      %v5904 = vpack.c.b16 %v4432, %v4416
      %v5905 = vpack.c.b16 %v4433, %v4417
      %v5906 = vpack.c.b16 %v4434, %v4418
      %v5907 = vpack.c.b16 %v4435, %v4419
      %v5908 = vpack.c.b16 %v4436, %v4420
      %v5909 = vpack.c.b16 %v4437, %v4421
      %v5910 = vpack.c.b16 %v4438, %v4422
      %v5911 = vpack.c.b16 %v4439, %v4423
      %v5912 = vpack.c.b16 %v4440, %v4424
      %v5913 = vpack.c.b16 %v4441, %v4425
      %v5914 = vpack.c.b16 %v4442, %v4426
      %v5915 = vpack.c.b16 %v4443, %v4427
      %v5916 = vpack.c.b16 %v4460, %v4444
      %v5917 = vpack.c.b16 %v4461, %v4445
      %v5918 = vpack.c.b16 %v4462, %v4446
      %v5919 = vpack.c.b16 %v4463, %v4447
      %v5920 = vpack.c.b16 %v4464, %v4448
      %v5921 = vpack.c.b16 %v4465, %v4449
      %v5922 = vpack.c.b16 %v4466, %v4450
      %v5923 = vpack.c.b16 %v4467, %v4451
      %v5924 = vpack.c.b16 %v4468, %v4452
      %v5925 = vpack.c.b16 %v4469, %v4453
      %v5926 = vpack.c.b16 %v4470, %v4454
      %v5927 = vpack.c.b16 %v4471, %v4455
      %v5928 = vpack.c.b16 %v4472, %v4456
      %v5929 = vpack.c.b16 %v4473, %v4457
      %v5930 = vpack.c.b16 %v4474, %v4458
      %v5931 = vpack.c.b16 %v4475, %v4459
      %v5932 = vpack.c.b16 %v4492, %v4476
      %v5933 = vpack.c.b16 %v4493, %v4477
      %v5934 = vpack.c.b16 %v4494, %v4478
      %v5935 = vpack.c.b16 %v4495, %v4479
      %v5936 = vpack.c.b16 %v4496, %v4480
      %v5937 = vpack.c.b16 %v4497, %v4481
      %v5938 = vpack.c.b16 %v4498, %v4482
      %v5939 = vpack.c.b16 %v4499, %v4483
      %v5940 = vpack.c.b16 %v4500, %v4484
      %v5941 = vpack.c.b16 %v4501, %v4485
      %v5942 = vpack.c.b16 %v4502, %v4486
      %v5943 = vpack.c.b16 %v4503, %v4487
      %v5944 = vpack.c.b16 %v4504, %v4488
      %v5945 = vpack.c.b16 %v4505, %v4489
      %v5946 = vpack.c.b16 %v4506, %v4490
      %v5947 = vpack.c.b16 %v4507, %v4491
      %v5948 = vpack.c.b16 %v4524, %v4508
      %v5949 = vpack.c.b16 %v4525, %v4509
      %v5950 = vpack.c.b16 %v4526, %v4510
      %v5951 = vpack.c.b16 %v4527, %v4511
      %v5952 = vpack.c.b16 %v4528, %v4512
      %v5953 = vpack.c.b16 %v4529, %v4513
      %v5954 = vpack.c.b16 %v4530, %v4514
      %v5955 = vpack.c.b16 %v4531, %v4515
      %v5956 = vpack.c.b16 %v4532, %v4516
      %v5957 = vpack.c.b16 %v4533, %v4517
      %v5958 = vpack.c.b16 %v4534, %v4518
      %v5959 = vpack.c.b16 %v4535, %v4519
      %v5960 = vpack.c.b16 %v4536, %v4520
      %v5961 = vpack.c.b16 %v4537, %v4521
      %v5962 = vpack.c.b16 %v4538, %v4522
      %v5963 = vpack.c.b16 %v4539, %v4523
      %v5964 = vpack.c.b16 %v4556, %v4540
      %v5965 = vpack.c.b16 %v4557, %v4541
      %v5966 = vpack.c.b16 %v4558, %v4542
      %v5967 = vpack.c.b16 %v4559, %v4543
      %v5968 = vpack.c.b16 %v4560, %v4544
      %v5969 = vpack.c.b16 %v4561, %v4545
      %v5970 = vpack.c.b16 %v4562, %v4546
      %v5971 = vpack.c.b16 %v4563, %v4547
      %v5972 = vpack.c.b16 %v4564, %v4548
      %v5973 = vpack.c.b16 %v4565, %v4549
      %v5974 = vpack.c.b16 %v4566, %v4550
      %v5975 = vpack.c.b16 %v4567, %v4551
      %v5976 = vpack.c.b16 %v4568, %v4552
      %v5977 = vpack.c.b16 %v4569, %v4553
      %v5978 = vpack.c.b16 %v4570, %v4554
      %v5979 = vpack.c.b16 %v4571, %v4555
      %v5980 = vpack.c.b16 %v4588, %v4572
      %v5981 = vpack.c.b16 %v4589, %v4573
      %v5982 = vpack.c.b16 %v4590, %v4574
      %v5983 = vpack.c.b16 %v4591, %v4575
      %v5984 = vpack.c.b16 %v4592, %v4576
      %v5985 = vpack.c.b16 %v4593, %v4577
      %v5986 = vpack.c.b16 %v4594, %v4578
      %v5987 = vpack.c.b16 %v4595, %v4579
      %v5988 = vpack.c.b16 %v4596, %v4580
      %v5989 = vpack.c.b16 %v4597, %v4581
      %v5990 = vpack.c.b16 %v4598, %v4582
      %v5991 = vpack.c.b16 %v4599, %v4583
      %v5992 = vpack.c.b16 %v4600, %v4584
      %v5993 = vpack.c.b16 %v4601, %v4585
      %v5994 = vpack.c.b16 %v4602, %v4586
      %v5995 = vpack.c.b16 %v4603, %v4587
      %v5996 = vpack.c.b16 %v4620, %v4604
      %v5997 = vpack.c.b16 %v4621, %v4605
      %v5998 = vpack.c.b16 %v4622, %v4606
      %v5999 = vpack.c.b16 %v4623, %v4607
      %v6000 = vpack.c.b16 %v4624, %v4608
      %v6001 = vpack.c.b16 %v4625, %v4609
      %v6002 = vpack.c.b16 %v4626, %v4610
      %v6003 = vpack.c.b16 %v4627, %v4611
      %v6004 = vpack.c.b16 %v4628, %v4612
      %v6005 = vpack.c.b16 %v4629, %v4613
      %v6006 = vpack.c.b16 %v4630, %v4614
      %v6007 = vpack.c.b16 %v4631, %v4615
      %v6008 = vpack.c.b16 %v4632, %v4616
      %v6009 = vpack.c.b16 %v4633, %v4617
      %v6010 = vpack.c.b16 %v4634, %v4618
      %v6011 = vpack.c.b16 %v4635, %v4619
      %v6012 = vpack.c.b16 %v4652, %v4636
      %v6013 = vpack.c.b16 %v4653, %v4637
      %v6014 = vpack.c.b16 %v4654, %v4638
      %v6015 = vpack.c.b16 %v4655, %v4639
      %v6016 = vpack.c.b16 %v4656, %v4640
      %v6017 = vpack.c.b16 %v4657, %v4641
      %v6018 = vpack.c.b16 %v4658, %v4642
      %v6019 = vpack.c.b16 %v4659, %v4643
      %v6020 = vpack.c.b16 %v4660, %v4644
      %v6021 = vpack.c.b16 %v4661, %v4645
      %v6022 = vpack.c.b16 %v4662, %v4646
      %v6023 = vpack.c.b16 %v4663, %v4647
      %v6024 = vpack.c.b16 %v4664, %v4648
      %v6025 = vpack.c.b16 %v4665, %v4649
      %v6026 = vpack.c.b16 %v4666, %v4650
      %v6027 = vpack.c.b16 %v4667, %v4651
      %v6028 = vpack.c.b16 %v4684, %v4668
      %v6029 = vpack.c.b16 %v4685, %v4669
      %v6030 = vpack.c.b16 %v4686, %v4670
      %v6031 = vpack.c.b16 %v4687, %v4671
      %v6032 = vpack.c.b16 %v4688, %v4672
      %v6033 = vpack.c.b16 %v4689, %v4673
      %v6034 = vpack.c.b16 %v4690, %v4674
      %v6035 = vpack.c.b16 %v4691, %v4675
      %v6036 = vpack.c.b16 %v4692, %v4676
      %v6037 = vpack.c.b16 %v4693, %v4677
      %v6038 = vpack.c.b16 %v4694, %v4678
      %v6039 = vpack.c.b16 %v4695, %v4679
      %v6040 = vpack.c.b16 %v4696, %v4680
      %v6041 = vpack.c.b16 %v4697, %v4681
      %v6042 = vpack.c.b16 %v4698, %v4682
      %v6043 = vpack.c.b16 %v4699, %v4683
      %v6044 = vpack.c.b16 %v4716, %v4700
      %v6045 = vpack.c.b16 %v4717, %v4701
      %v6046 = vpack.c.b16 %v4718, %v4702
      %v6047 = vpack.c.b16 %v4719, %v4703
      %v6048 = vpack.c.b16 %v4720, %v4704
      %v6049 = vpack.c.b16 %v4721, %v4705
      %v6050 = vpack.c.b16 %v4722, %v4706
      %v6051 = vpack.c.b16 %v4723, %v4707
      %v6052 = vpack.c.b16 %v4724, %v4708
      %v6053 = vpack.c.b16 %v4725, %v4709
      %v6054 = vpack.c.b16 %v4726, %v4710
      %v6055 = vpack.c.b16 %v4727, %v4711
      %v6056 = vpack.c.b16 %v4728, %v4712
      %v6057 = vpack.c.b16 %v4729, %v4713
      %v6058 = vpack.c.b16 %v4730, %v4714
      %v6059 = vpack.c.b16 %v4731, %v4715
      %v6060 = vpack.c.b16 %v4748, %v4732
      %v6061 = vpack.c.b16 %v4749, %v4733
      %v6062 = vpack.c.b16 %v4750, %v4734
      %v6063 = vpack.c.b16 %v4751, %v4735
      %v6064 = vpack.c.b16 %v4752, %v4736
      %v6065 = vpack.c.b16 %v4753, %v4737
      %v6066 = vpack.c.b16 %v4754, %v4738
      %v6067 = vpack.c.b16 %v4755, %v4739
      %v6068 = vpack.c.b16 %v4756, %v4740
      %v6069 = vpack.c.b16 %v4757, %v4741
      %v6070 = vpack.c.b16 %v4758, %v4742
      %v6071 = vpack.c.b16 %v4759, %v4743
      %v6072 = vpack.c.b16 %v4760, %v4744
      %v6073 = vpack.c.b16 %v4761, %v4745
      %v6074 = vpack.c.b16 %v4762, %v4746
      %v6075 = vpack.c.b16 %v4763, %v4747
      %v6076 = vpack.c.b16 %v4780, %v4764
      %v6077 = vpack.c.b16 %v4781, %v4765
      %v6078 = vpack.c.b16 %v4782, %v4766
      %v6079 = vpack.c.b16 %v4783, %v4767
      %v6080 = vpack.c.b16 %v4784, %v4768
      %v6081 = vpack.c.b16 %v4785, %v4769
      %v6082 = vpack.c.b16 %v4786, %v4770
      %v6083 = vpack.c.b16 %v4787, %v4771
      %v6084 = vpack.c.b16 %v4788, %v4772
      %v6085 = vpack.c.b16 %v4789, %v4773
      %v6086 = vpack.c.b16 %v4790, %v4774
      %v6087 = vpack.c.b16 %v4791, %v4775
      %v6088 = vpack.c.b16 %v4792, %v4776
      %v6089 = vpack.c.b16 %v4793, %v4777
      %v6090 = vpack.c.b16 %v4794, %v4778
      %v6091 = vpack.c.b16 %v4795, %v4779
      %v6092 = vpack.c.b16 %v4812, %v4796
      %v6093 = vpack.c.b16 %v4813, %v4797
      %v6094 = vpack.c.b16 %v4814, %v4798
      %v6095 = vpack.c.b16 %v4815, %v4799
      %v6096 = vpack.c.b16 %v4816, %v4800
      %v6097 = vpack.c.b16 %v4817, %v4801
      %v6098 = vpack.c.b16 %v4818, %v4802
      %v6099 = vpack.c.b16 %v4819, %v4803
      %v6100 = vpack.c.b16 %v4820, %v4804
      %v6101 = vpack.c.b16 %v4821, %v4805
      %v6102 = vpack.c.b16 %v4822, %v4806
      %v6103 = vpack.c.b16 %v4823, %v4807
      %v6104 = vpack.c.b16 %v4824, %v4808
      %v6105 = vpack.c.b16 %v4825, %v4809
      %v6106 = vpack.c.b16 %v4826, %v4810
      %v6107 = vpack.c.b16 %v4827, %v4811
      %v6108 = vpack.c.b16 %v4844, %v4828
      %v6109 = vpack.c.b16 %v4845, %v4829
      %v6110 = vpack.c.b16 %v4846, %v4830
      %v6111 = vpack.c.b16 %v4847, %v4831
      %v6112 = vpack.c.b16 %v4848, %v4832
      %v6113 = vpack.c.b16 %v4849, %v4833
      %v6114 = vpack.c.b16 %v4850, %v4834
      %v6115 = vpack.c.b16 %v4851, %v4835
      %v6116 = vpack.c.b16 %v4852, %v4836
      %v6117 = vpack.c.b16 %v4853, %v4837
      %v6118 = vpack.c.b16 %v4854, %v4838
      %v6119 = vpack.c.b16 %v4855, %v4839
      %v6120 = vpack.c.b16 %v4856, %v4840
      %v6121 = vpack.c.b16 %v4857, %v4841
      %v6122 = vpack.c.b16 %v4858, %v4842
      %v6123 = vpack.c.b16 %v4859, %v4843
      %v6124 = vpack.c.b16 %v4876, %v4860
      %v6125 = vpack.c.b16 %v4877, %v4861
      %v6126 = vpack.c.b16 %v4878, %v4862
      %v6127 = vpack.c.b16 %v4879, %v4863
      %v6128 = vpack.c.b16 %v4880, %v4864
      %v6129 = vpack.c.b16 %v4881, %v4865
      %v6130 = vpack.c.b16 %v4882, %v4866
      %v6131 = vpack.c.b16 %v4883, %v4867
      %v6132 = vpack.c.b16 %v4884, %v4868
      %v6133 = vpack.c.b16 %v4885, %v4869
      %v6134 = vpack.c.b16 %v4886, %v4870
      %v6135 = vpack.c.b16 %v4887, %v4871
      %v6136 = vpack.c.b16 %v4888, %v4872
      %v6137 = vpack.c.b16 %v4889, %v4873
      %v6138 = vpack.c.b16 %v4890, %v4874
      %v6139 = vpack.c.b16 %v4891, %v4875
      %v6140 = vpack.c.b16 %v4908, %v4892
      %v6141 = vpack.c.b16 %v4909, %v4893
      %v6142 = vpack.c.b16 %v4910, %v4894
      %v6143 = vpack.c.b16 %v4911, %v4895
      %v6144 = vpack.c.b16 %v4912, %v4896
      %v6145 = vpack.c.b16 %v4913, %v4897
      %v6146 = vpack.c.b16 %v4914, %v4898
      %v6147 = vpack.c.b16 %v4915, %v4899
      %v6148 = vpack.c.b16 %v4916, %v4900
      %v6149 = vpack.c.b16 %v4917, %v4901
      %v6150 = vpack.c.b16 %v4918, %v4902
      %v6151 = vpack.c.b16 %v4919, %v4903
      %v6152 = vpack.c.b16 %v4920, %v4904
      %v6153 = vpack.c.b16 %v4921, %v4905
      %v6154 = vpack.c.b16 %v4922, %v4906
      %v6155 = vpack.c.b16 %v4923, %v4907
      %v6156 = vpack.c.b16 %v4940, %v4924
      %v6157 = vpack.c.b16 %v4941, %v4925
      %v6158 = vpack.c.b16 %v4942, %v4926
      %v6159 = vpack.c.b16 %v4943, %v4927
      %v6160 = vpack.c.b16 %v4944, %v4928
      %v6161 = vpack.c.b16 %v4945, %v4929
      %v6162 = vpack.c.b16 %v4946, %v4930
      %v6163 = vpack.c.b16 %v4947, %v4931
      %v6164 = vpack.c.b16 %v4948, %v4932
      %v6165 = vpack.c.b16 %v4949, %v4933
      %v6166 = vpack.c.b16 %v4950, %v4934
      %v6167 = vpack.c.b16 %v4951, %v4935
      %v6168 = vpack.c.b16 %v4952, %v4936
      %v6169 = vpack.c.b16 %v4953, %v4937
      %v6170 = vpack.c.b16 %v4954, %v4938
      %v6171 = vpack.c.b16 %v4955, %v4939
      %v6172 = vpack.c.b16 %v4972, %v4956
      %v6173 = vpack.c.b16 %v4973, %v4957
      %v6174 = vpack.c.b16 %v4974, %v4958
      %v6175 = vpack.c.b16 %v4975, %v4959
      %v6176 = vpack.c.b16 %v4976, %v4960
      %v6177 = vpack.c.b16 %v4977, %v4961
      %v6178 = vpack.c.b16 %v4978, %v4962
      %v6179 = vpack.c.b16 %v4979, %v4963
      %v6180 = vpack.c.b16 %v4980, %v4964
      %v6181 = vpack.c.b16 %v4981, %v4965
      %v6182 = vpack.c.b16 %v4982, %v4966
      %v6183 = vpack.c.b16 %v4983, %v4967
      %v6184 = vpack.c.b16 %v4984, %v4968
      %v6185 = vpack.c.b16 %v4985, %v4969
      %v6186 = vpack.c.b16 %v4986, %v4970
      %v6187 = vpack.c.b16 %v4987, %v4971
      %v6188 = vpack.c.b16 %v5004, %v4988
      %v6189 = vpack.c.b16 %v5005, %v4989
      %v6190 = vpack.c.b16 %v5006, %v4990
      %v6191 = vpack.c.b16 %v5007, %v4991
      %v6192 = vpack.c.b16 %v5008, %v4992
      %v6193 = vpack.c.b16 %v5009, %v4993
      %v6194 = vpack.c.b16 %v5010, %v4994
      %v6195 = vpack.c.b16 %v5011, %v4995
      %v6196 = vpack.c.b16 %v5012, %v4996
      %v6197 = vpack.c.b16 %v5013, %v4997
      %v6198 = vpack.c.b16 %v5014, %v4998
      %v6199 = vpack.c.b16 %v5015, %v4999
      %v6200 = vpack.c.b16 %v5016, %v5000
      %v6201 = vpack.c.b16 %v5017, %v5001
      %v6202 = vpack.c.b16 %v5018, %v5002
      %v6203 = vpack.c.b16 %v5019, %v5003
      %v6204 = vpack.c.b16 %v5036, %v5020
      %v6205 = vpack.c.b16 %v5037, %v5021
      %v6206 = vpack.c.b16 %v5038, %v5022
      %v6207 = vpack.c.b16 %v5039, %v5023
      %v6208 = vpack.c.b16 %v5040, %v5024
      %v6209 = vpack.c.b16 %v5041, %v5025
      %v6210 = vpack.c.b16 %v5042, %v5026
      %v6211 = vpack.c.b16 %v5043, %v5027
      %v6212 = vpack.c.b16 %v5044, %v5028
      %v6213 = vpack.c.b16 %v5045, %v5029
      %v6214 = vpack.c.b16 %v5046, %v5030
      %v6215 = vpack.c.b16 %v5047, %v5031
      %v6216 = vpack.c.b16 %v5048, %v5032
      %v6217 = vpack.c.b16 %v5049, %v5033
      %v6218 = vpack.c.b16 %v5050, %v5034
      %v6219 = vpack.c.b16 %v5051, %v5035
      %v6220 = vpack.c.b16 %v5068, %v5052
      %v6221 = vpack.c.b16 %v5069, %v5053
      %v6222 = vpack.c.b16 %v5070, %v5054
      %v6223 = vpack.c.b16 %v5071, %v5055
      %v6224 = vpack.c.b16 %v5072, %v5056
      %v6225 = vpack.c.b16 %v5073, %v5057
      %v6226 = vpack.c.b16 %v5074, %v5058
      %v6227 = vpack.c.b16 %v5075, %v5059
      %v6228 = vpack.c.b16 %v5076, %v5060
      %v6229 = vpack.c.b16 %v5077, %v5061
      %v6230 = vpack.c.b16 %v5078, %v5062
      %v6231 = vpack.c.b16 %v5079, %v5063
      %v6232 = vpack.c.b16 %v5080, %v5064
      %v6233 = vpack.c.b16 %v5081, %v5065
      %v6234 = vpack.c.b16 %v5082, %v5066
      %v6235 = vpack.c.b16 %v5083, %v5067
      %v6236 = vpack.c.b16 %v5100, %v5084
      %v6237 = vpack.c.b16 %v5101, %v5085
      %v6238 = vpack.c.b16 %v5102, %v5086
      %v6239 = vpack.c.b16 %v5103, %v5087
      %v6240 = vpack.c.b16 %v5104, %v5088
      %v6241 = vpack.c.b16 %v5105, %v5089
      %v6242 = vpack.c.b16 %v5106, %v5090
      %v6243 = vpack.c.b16 %v5107, %v5091
      %v6244 = vpack.c.b16 %v5108, %v5092
      %v6245 = vpack.c.b16 %v5109, %v5093
      %v6246 = vpack.c.b16 %v5110, %v5094
      %v6247 = vpack.c.b16 %v5111, %v5095
      %v6248 = vpack.c.b16 %v5112, %v5096
      %v6249 = vpack.c.b16 %v5113, %v5097
      %v6250 = vpack.c.b16 %v5114, %v5098
      %v6251 = vpack.c.b16 %v5115, %v5099
      %v6252 = vpack.c.b16 %v5132, %v5116
      %v6253 = vpack.c.b16 %v5133, %v5117
      %v6254 = vpack.c.b16 %v5134, %v5118
      %v6255 = vpack.c.b16 %v5135, %v5119
      %v6256 = vpack.c.b16 %v5136, %v5120
      %v6257 = vpack.c.b16 %v5137, %v5121
      %v6258 = vpack.c.b16 %v5138, %v5122
      %v6259 = vpack.c.b16 %v5139, %v5123
      %v6260 = vpack.c.b16 %v5140, %v5124
      %v6261 = vpack.c.b16 %v5141, %v5125
      %v6262 = vpack.c.b16 %v5142, %v5126
      %v6263 = vpack.c.b16 %v5143, %v5127
      %v6264 = vpack.c.b16 %v5144, %v5128
      %v6265 = vpack.c.b16 %v5145, %v5129
      %v6266 = vpack.c.b16 %v5146, %v5130
      %v6267 = vpack.c.b16 %v5147, %v5131
      %v6268 = vpack.c.b16 %v5164, %v5148
      %v6269 = vpack.c.b16 %v5165, %v5149
      %v6270 = vpack.c.b16 %v5166, %v5150
      %v6271 = vpack.c.b16 %v5167, %v5151
      %v6272 = vpack.c.b16 %v5168, %v5152
      %v6273 = vpack.c.b16 %v5169, %v5153
      %v6274 = vpack.c.b16 %v5170, %v5154
      %v6275 = vpack.c.b16 %v5171, %v5155
      %v6276 = vpack.c.b16 %v5172, %v5156
      %v6277 = vpack.c.b16 %v5173, %v5157
      %v6278 = vpack.c.b16 %v5174, %v5158
      %v6279 = vpack.c.b16 %v5175, %v5159
      %v6280 = vpack.c.b16 %v5176, %v5160
      %v6281 = vpack.c.b16 %v5177, %v5161
      %v6282 = vpack.c.b16 %v5178, %v5162
      %v6283 = vpack.c.b16 %v5179, %v5163
      %v6284 = vpack.c.b16 %v5196, %v5180
      %v6285 = vpack.c.b16 %v5197, %v5181
      %v6286 = vpack.c.b16 %v5198, %v5182
      %v6287 = vpack.c.b16 %v5199, %v5183
      %v6288 = vpack.c.b16 %v5200, %v5184
      %v6289 = vpack.c.b16 %v5201, %v5185
      %v6290 = vpack.c.b16 %v5202, %v5186
      %v6291 = vpack.c.b16 %v5203, %v5187
      %v6292 = vpack.c.b16 %v5204, %v5188
      %v6293 = vpack.c.b16 %v5205, %v5189
      %v6294 = vpack.c.b16 %v5206, %v5190
      %v6295 = vpack.c.b16 %v5207, %v5191
      %v6296 = vpack.c.b16 %v5208, %v5192
      %v6297 = vpack.c.b16 %v5209, %v5193
      %v6298 = vpack.c.b16 %v5210, %v5194
      %v6299 = vpack.c.b16 %v5211, %v5195
      %v6300 = vpack.c.b16 %v5228, %v5212
      %v6301 = vpack.c.b16 %v5229, %v5213
      %v6302 = vpack.c.b16 %v5230, %v5214
      %v6303 = vpack.c.b16 %v5231, %v5215
      %v6304 = vpack.c.b16 %v5232, %v5216
      %v6305 = vpack.c.b16 %v5233, %v5217
      %v6306 = vpack.c.b16 %v5234, %v5218
      %v6307 = vpack.c.b16 %v5235, %v5219
      %v6308 = vpack.c.b16 %v5236, %v5220
      %v6309 = vpack.c.b16 %v5237, %v5221
      %v6310 = vpack.c.b16 %v5238, %v5222
      %v6311 = vpack.c.b16 %v5239, %v5223
      %v6312 = vpack.c.b16 %v5240, %v5224
      %v6313 = vpack.c.b16 %v5241, %v5225
      %v6314 = vpack.c.b16 %v5242, %v5226
      %v6315 = vpack.c.b16 %v5243, %v5227
      %v6316 = vpack.c.b16 %v5260, %v5244
      %v6317 = vpack.c.b16 %v5261, %v5245
      %v6318 = vpack.c.b16 %v5262, %v5246
      %v6319 = vpack.c.b16 %v5263, %v5247
      %v6320 = vpack.c.b16 %v5264, %v5248
      %v6321 = vpack.c.b16 %v5265, %v5249
      %v6322 = vpack.c.b16 %v5266, %v5250
      %v6323 = vpack.c.b16 %v5267, %v5251
      %v6324 = vpack.c.b16 %v5268, %v5252
      %v6325 = vpack.c.b16 %v5269, %v5253
      %v6326 = vpack.c.b16 %v5270, %v5254
      %v6327 = vpack.c.b16 %v5271, %v5255
      %v6328 = vpack.c.b16 %v5272, %v5256
      %v6329 = vpack.c.b16 %v5273, %v5257
      %v6330 = vpack.c.b16 %v5274, %v5258
      %v6331 = vpack.c.b16 %v5275, %v5259
      %v6332 = vpack.c.b16 %v5292, %v5276
      %v6333 = vpack.c.b16 %v5293, %v5277
      %v6334 = vpack.c.b16 %v5294, %v5278
      %v6335 = vpack.c.b16 %v5295, %v5279
      %v6336 = vpack.c.b16 %v5296, %v5280
      %v6337 = vpack.c.b16 %v5297, %v5281
      %v6338 = vpack.c.b16 %v5298, %v5282
      %v6339 = vpack.c.b16 %v5299, %v5283
      %v6340 = vpack.c.b16 %v5300, %v5284
      %v6341 = vpack.c.b16 %v5301, %v5285
      %v6342 = vpack.c.b16 %v5302, %v5286
      %v6343 = vpack.c.b16 %v5303, %v5287
      %v6344 = vpack.c.b16 %v5304, %v5288
      %v6345 = vpack.c.b16 %v5305, %v5289
      %v6346 = vpack.c.b16 %v5306, %v5290
      %v6347 = vpack.c.b16 %v5307, %v5291
      %v6348 = vpack.c.b16 %v5324, %v5308
      %v6349 = vpack.c.b16 %v5325, %v5309
      %v6350 = vpack.c.b16 %v5326, %v5310
      %v6351 = vpack.c.b16 %v5327, %v5311
      %v6352 = vpack.c.b16 %v5328, %v5312
      %v6353 = vpack.c.b16 %v5329, %v5313
      %v6354 = vpack.c.b16 %v5330, %v5314
      %v6355 = vpack.c.b16 %v5331, %v5315
      %v6356 = vpack.c.b16 %v5332, %v5316
      %v6357 = vpack.c.b16 %v5333, %v5317
      %v6358 = vpack.c.b16 %v5334, %v5318
      %v6359 = vpack.c.b16 %v5335, %v5319
      %v6360 = vpack.c.b16 %v5336, %v5320
      %v6361 = vpack.c.b16 %v5337, %v5321
      %v6362 = vpack.c.b16 %v5338, %v5322
      %v6363 = vpack.c.b16 %v5339, %v5323
      %7388 = vmatprep.subr.bf16.mxu0 %v5453
      %7389 = vmatpush1.bf16.msra.mxu0 %v5452
      %7390 = vmatprep.subr.bf16.mxu0 %v5437
      %7391 = vmatpush1.bf16.msra.mxu0 %v5436
      %7392 = vmatprep.subr.bf16.mxu0 %v5421
      %7393 = vmatpush1.bf16.msra.mxu0 %v5420
      %7394 = vmatprep.subr.bf16.mxu0 %v5405
      %7395 = vmatpush1.bf16.msra.mxu0 %v5404
      %7396 = vmatprep.subr.bf16.mxu0 %v5389
      %7397 = vmatpush1.bf16.msra.mxu0 %v5388
      %7398 = vmatprep.subr.bf16.mxu0 %v5373
      %7399 = vmatpush1.bf16.msra.mxu0 %v5372
      %7400 = vmatprep.subr.bf16.mxu0 %v5357
      %7401 = vmatpush1.bf16.msra.mxu0 %v5356
      %7402 = vmatprep.subr.bf16.mxu0 %v5341
      %7403 = vmatpush1.bf16.msra.mxu0 %v5340
      %7404 = vmatprep.subr.bf16.mxu0 %v5581
      %7405 = vmatpush2.bf16.msra.mxu0 %v5580
      %7406 = vmatprep.subr.bf16.mxu0 %v5565
      %7407 = vmatpush2.bf16.msra.mxu0 %v5564
      %7408 = vmatprep.subr.bf16.mxu0 %v5549
      %7409 = vmatpush2.bf16.msra.mxu0 %v5548
      %7410 = vmatprep.subr.bf16.mxu0 %v5533
      %7411 = vmatpush2.bf16.msra.mxu0 %v5532
      %7412 = vmatprep.subr.bf16.mxu0 %v5517
      %7413 = vmatpush2.bf16.msra.mxu0 %v5516
      %7414 = vmatprep.subr.bf16.mxu0 %v5501
      %7415 = vmatpush2.bf16.msra.mxu0 %v5500
      %7416 = vmatprep.subr.bf16.mxu0 %v5485
      %7417 = vmatpush2.bf16.msra.mxu0 %v5484
      %7418 = vmatprep.subr.bf16.mxu0 %v5469
      %7419 = vmatpush2.bf16.msra.mxu0 %v5468
      %7420 = vmatprep.mubr.bf16.mxu0 %v1153
      %7421 = vmatmul.mubr.bf16.gmra.mxu0 %v1152
      %v7422 = vpop.f32.mrf.mxu0
      %v7423 = vadd.f32 %v2191, %v7422
      %v7424 = vpop.f32.mrf.mxu0
      %v7425 = vadd.f32 %v2195, %v7424
      %v7426 = vpop.f32.mrf.mxu0
      %v7427 = vpop.f32.mrf.mxu0
      %7428 = vdwg.mxu0
      %7429 = vmatprep.subr.bf16.mxu0 %v5709
      %7430 = vmatpush1.bf16.msra.mxu0 %v5708
      %7431 = vmatprep.subr.bf16.mxu0 %v5693
      %7432 = vmatpush1.bf16.msra.mxu0 %v5692
      %7433 = vmatprep.subr.bf16.mxu0 %v5677
      %7434 = vmatpush1.bf16.msra.mxu0 %v5676
      %7435 = vmatprep.subr.bf16.mxu0 %v5661
      %7436 = vmatpush1.bf16.msra.mxu0 %v5660
      %7437 = vmatprep.subr.bf16.mxu0 %v5645
      %7438 = vmatpush1.bf16.msra.mxu0 %v5644
      %7439 = vmatprep.subr.bf16.mxu0 %v5629
      %7440 = vmatpush1.bf16.msra.mxu0 %v5628
      %7441 = vmatprep.subr.bf16.mxu0 %v5613
      %7442 = vmatpush1.bf16.msra.mxu0 %v5612
      %7443 = vmatprep.subr.bf16.mxu0 %v5597
      %7444 = vmatpush1.bf16.msra.mxu0 %v5596
      %7445 = vmatprep.subr.bf16.mxu0 %v5837
      %7446 = vmatpush2.bf16.msra.mxu0 %v5836
      %7447 = vmatprep.subr.bf16.mxu0 %v5821
      %7448 = vmatpush2.bf16.msra.mxu0 %v5820
      %7449 = vmatprep.subr.bf16.mxu0 %v5805
      %7450 = vmatpush2.bf16.msra.mxu0 %v5804
      %7451 = vmatprep.subr.bf16.mxu0 %v5789
      %7452 = vmatpush2.bf16.msra.mxu0 %v5788
      %7453 = vmatprep.subr.bf16.mxu0 %v5773
      %7454 = vmatpush2.bf16.msra.mxu0 %v5772
      %7455 = vmatprep.subr.bf16.mxu0 %v5757
      %7456 = vmatpush2.bf16.msra.mxu0 %v5756
      %7457 = vmatprep.subr.bf16.mxu0 %v5741
      %7458 = vmatpush2.bf16.msra.mxu0 %v5740
      %7459 = vmatprep.subr.bf16.mxu0 %v5725
      %7460 = vmatpush2.bf16.msra.mxu0 %v5724
      %7461 = vmatprep.mubr.bf16.mxu0 %v1155
      %7462 = vmatmul.mubr.bf16.gmra.mxu0 %v1154
      %v7463 = vpop.f32.mrf.mxu0
      %v7464 = vadd.f32 %v7423, %v7463
      %v7465 = vpop.f32.mrf.mxu0
      %v7466 = vadd.f32 %v7425, %v7465
      %v7467 = vpop.f32.mrf.mxu0
      %v7468 = vpop.f32.mrf.mxu0
      %7469 = vdwg.mxu0
      %7470 = vmatprep.subr.bf16.mxu0 %v5965
      %7471 = vmatpush1.bf16.msra.mxu0 %v5964
      %7472 = vmatprep.subr.bf16.mxu0 %v5949
      %7473 = vmatpush1.bf16.msra.mxu0 %v5948
      %7474 = vmatprep.subr.bf16.mxu0 %v5933
      %7475 = vmatpush1.bf16.msra.mxu0 %v5932
      %7476 = vmatprep.subr.bf16.mxu0 %v5917
      %7477 = vmatpush1.bf16.msra.mxu0 %v5916
      %7478 = vmatprep.subr.bf16.mxu0 %v5901
      %7479 = vmatpush1.bf16.msra.mxu0 %v5900
      %7480 = vmatprep.subr.bf16.mxu0 %v5885
      %7481 = vmatpush1.bf16.msra.mxu0 %v5884
      %7482 = vmatprep.subr.bf16.mxu0 %v5869
      %7483 = vmatpush1.bf16.msra.mxu0 %v5868
      %7484 = vmatprep.subr.bf16.mxu0 %v5853
      %7485 = vmatpush1.bf16.msra.mxu0 %v5852
      %7486 = vmatprep.subr.bf16.mxu0 %v6093
      %7487 = vmatpush2.bf16.msra.mxu0 %v6092
      %7488 = vmatprep.subr.bf16.mxu0 %v6077
      %7489 = vmatpush2.bf16.msra.mxu0 %v6076
      %7490 = vmatprep.subr.bf16.mxu0 %v6061
      %7491 = vmatpush2.bf16.msra.mxu0 %v6060
      %7492 = vmatprep.subr.bf16.mxu0 %v6045
      %7493 = vmatpush2.bf16.msra.mxu0 %v6044
      %7494 = vmatprep.subr.bf16.mxu0 %v6029
      %7495 = vmatpush2.bf16.msra.mxu0 %v6028
      %7496 = vmatprep.subr.bf16.mxu0 %v6013
      %7497 = vmatpush2.bf16.msra.mxu0 %v6012
      %7498 = vmatprep.subr.bf16.mxu0 %v5997
      %7499 = vmatpush2.bf16.msra.mxu0 %v5996
      %7500 = vmatprep.subr.bf16.mxu0 %v5981
      %7501 = vmatpush2.bf16.msra.mxu0 %v5980
      %7502 = vmatprep.mubr.bf16.mxu0 %v1157
      %7503 = vmatmul.mubr.bf16.gmra.mxu0 %v1156
      %v7504 = vpop.f32.mrf.mxu0
      %v7505 = vadd.f32 %v7464, %v7504
      %v7506 = vpop.f32.mrf.mxu0
      %v7507 = vadd.f32 %v7466, %v7506
      %v7508 = vpop.f32.mrf.mxu0
      %v7509 = vpop.f32.mrf.mxu0
      %7510 = vdwg.mxu0
      %7511 = vmatprep.subr.bf16.mxu0 %v6221
      %7512 = vmatpush1.bf16.msra.mxu0 %v6220
      %7513 = vmatprep.subr.bf16.mxu0 %v6205
      %7514 = vmatpush1.bf16.msra.mxu0 %v6204
      %7515 = vmatprep.subr.bf16.mxu0 %v6189
      %7516 = vmatpush1.bf16.msra.mxu0 %v6188
      %7517 = vmatprep.subr.bf16.mxu0 %v6173
      %7518 = vmatpush1.bf16.msra.mxu0 %v6172
      %7519 = vmatprep.subr.bf16.mxu0 %v6157
      %7520 = vmatpush1.bf16.msra.mxu0 %v6156
      %7521 = vmatprep.subr.bf16.mxu0 %v6141
      %7522 = vmatpush1.bf16.msra.mxu0 %v6140
      %7523 = vmatprep.subr.bf16.mxu0 %v6125
      %7524 = vmatpush1.bf16.msra.mxu0 %v6124
      %7525 = vmatprep.subr.bf16.mxu0 %v6109
      %7526 = vmatpush1.bf16.msra.mxu0 %v6108
      %7527 = vmatprep.subr.bf16.mxu0 %v6349
      %7528 = vmatpush2.bf16.msra.mxu0 %v6348
      %7529 = vmatprep.subr.bf16.mxu0 %v6333
      %7530 = vmatpush2.bf16.msra.mxu0 %v6332
      %7531 = vmatprep.subr.bf16.mxu0 %v6317
      %7532 = vmatpush2.bf16.msra.mxu0 %v6316
      %7533 = vmatprep.subr.bf16.mxu0 %v6301
      %7534 = vmatpush2.bf16.msra.mxu0 %v6300
      %7535 = vmatprep.subr.bf16.mxu0 %v6285
      %7536 = vmatpush2.bf16.msra.mxu0 %v6284
      %7537 = vmatprep.subr.bf16.mxu0 %v6269
      %7538 = vmatpush2.bf16.msra.mxu0 %v6268
      %7539 = vmatprep.subr.bf16.mxu0 %v6253
      %7540 = vmatpush2.bf16.msra.mxu0 %v6252
      %7541 = vmatprep.subr.bf16.mxu0 %v6237
      %7542 = vmatpush2.bf16.msra.mxu0 %v6236
      %7543 = vmatprep.mubr.bf16.mxu0 %v1159
      %7544 = vmatmul.mubr.bf16.gmra.mxu0 %v1158
      %v7545 = vpop.f32.mrf.mxu0
      %v7546 = vadd.f32 %v7505, %v7545
      %v7547 = vpop.f32.mrf.mxu0
      %v7548 = vadd.f32 %v7507, %v7547
      %v7549 = vpop.f32.mrf.mxu0
      %v7550 = vpop.f32.mrf.mxu0
      %7551 = vdwg.mxu0
      %7552 = vmatprep.subr.bf16.mxu0 %v5455
      %7553 = vmatpush1.bf16.msra.mxu0 %v5454
      %7554 = vmatprep.subr.bf16.mxu0 %v5439
      %7555 = vmatpush1.bf16.msra.mxu0 %v5438
      %7556 = vmatprep.subr.bf16.mxu0 %v5423
      %7557 = vmatpush1.bf16.msra.mxu0 %v5422
      %7558 = vmatprep.subr.bf16.mxu0 %v5407
      %7559 = vmatpush1.bf16.msra.mxu0 %v5406
      %7560 = vmatprep.subr.bf16.mxu0 %v5391
      %7561 = vmatpush1.bf16.msra.mxu0 %v5390
      %7562 = vmatprep.subr.bf16.mxu0 %v5375
      %7563 = vmatpush1.bf16.msra.mxu0 %v5374
      %7564 = vmatprep.subr.bf16.mxu0 %v5359
      %7565 = vmatpush1.bf16.msra.mxu0 %v5358
      %7566 = vmatprep.subr.bf16.mxu0 %v5343
      %7567 = vmatpush1.bf16.msra.mxu0 %v5342
      %7568 = vmatprep.subr.bf16.mxu0 %v5583
      %7569 = vmatpush2.bf16.msra.mxu0 %v5582
      %7570 = vmatprep.subr.bf16.mxu0 %v5567
      %7571 = vmatpush2.bf16.msra.mxu0 %v5566
      %7572 = vmatprep.subr.bf16.mxu0 %v5551
      %7573 = vmatpush2.bf16.msra.mxu0 %v5550
      %7574 = vmatprep.subr.bf16.mxu0 %v5535
      %7575 = vmatpush2.bf16.msra.mxu0 %v5534
      %7576 = vmatprep.subr.bf16.mxu0 %v5519
      %7577 = vmatpush2.bf16.msra.mxu0 %v5518
      %7578 = vmatprep.subr.bf16.mxu0 %v5503
      %7579 = vmatpush2.bf16.msra.mxu0 %v5502
      %7580 = vmatprep.subr.bf16.mxu0 %v5487
      %7581 = vmatpush2.bf16.msra.mxu0 %v5486
      %7582 = vmatprep.subr.bf16.mxu0 %v5471
      %7583 = vmatpush2.bf16.msra.mxu0 %v5470
      %7584 = vmatprep.mubr.bf16.mxu0 %v1153
      %7585 = vmatmul.mubr.bf16.gmra.mxu0 %v1152
      %v7586 = vpop.f32.mrf.mxu0
      %v7587 = vadd.f32 %v2199, %v7586
      %v7588 = vpop.f32.mrf.mxu0
      %v7589 = vadd.f32 %v2203, %v7588
      %v7590 = vpop.f32.mrf.mxu0
      %v7591 = vpop.f32.mrf.mxu0
      %7592 = vdwg.mxu0
      %7593 = vmatprep.subr.bf16.mxu0 %v5711
      %7594 = vmatpush1.bf16.msra.mxu0 %v5710
      %7595 = vmatprep.subr.bf16.mxu0 %v5695
      %7596 = vmatpush1.bf16.msra.mxu0 %v5694
      %7597 = vmatprep.subr.bf16.mxu0 %v5679
      %7598 = vmatpush1.bf16.msra.mxu0 %v5678
      %7599 = vmatprep.subr.bf16.mxu0 %v5663
      %7600 = vmatpush1.bf16.msra.mxu0 %v5662
      %7601 = vmatprep.subr.bf16.mxu0 %v5647
      %7602 = vmatpush1.bf16.msra.mxu0 %v5646
      %7603 = vmatprep.subr.bf16.mxu0 %v5631
      %7604 = vmatpush1.bf16.msra.mxu0 %v5630
      %7605 = vmatprep.subr.bf16.mxu0 %v5615
      %7606 = vmatpush1.bf16.msra.mxu0 %v5614
      %7607 = vmatprep.subr.bf16.mxu0 %v5599
      %7608 = vmatpush1.bf16.msra.mxu0 %v5598
      %7609 = vmatprep.subr.bf16.mxu0 %v5839
      %7610 = vmatpush2.bf16.msra.mxu0 %v5838
      %7611 = vmatprep.subr.bf16.mxu0 %v5823
      %7612 = vmatpush2.bf16.msra.mxu0 %v5822
      %7613 = vmatprep.subr.bf16.mxu0 %v5807
      %7614 = vmatpush2.bf16.msra.mxu0 %v5806
      %7615 = vmatprep.subr.bf16.mxu0 %v5791
      %7616 = vmatpush2.bf16.msra.mxu0 %v5790
      %7617 = vmatprep.subr.bf16.mxu0 %v5775
      %7618 = vmatpush2.bf16.msra.mxu0 %v5774
      %7619 = vmatprep.subr.bf16.mxu0 %v5759
      %7620 = vmatpush2.bf16.msra.mxu0 %v5758
      %7621 = vmatprep.subr.bf16.mxu0 %v5743
      %7622 = vmatpush2.bf16.msra.mxu0 %v5742
      %7623 = vmatprep.subr.bf16.mxu0 %v5727
      %7624 = vmatpush2.bf16.msra.mxu0 %v5726
      %7625 = vmatprep.mubr.bf16.mxu0 %v1155
      %7626 = vmatmul.mubr.bf16.gmra.mxu0 %v1154
      %v7627 = vpop.f32.mrf.mxu0
      %v7628 = vadd.f32 %v7587, %v7627
      %v7629 = vpop.f32.mrf.mxu0
      %v7630 = vadd.f32 %v7589, %v7629
      %v7631 = vpop.f32.mrf.mxu0
      %v7632 = vpop.f32.mrf.mxu0
      %7633 = vdwg.mxu0
      %7634 = vmatprep.subr.bf16.mxu0 %v5967
      %7635 = vmatpush1.bf16.msra.mxu0 %v5966
      %7636 = vmatprep.subr.bf16.mxu0 %v5951
      %7637 = vmatpush1.bf16.msra.mxu0 %v5950
      %7638 = vmatprep.subr.bf16.mxu0 %v5935
      %7639 = vmatpush1.bf16.msra.mxu0 %v5934
      %7640 = vmatprep.subr.bf16.mxu0 %v5919
      %7641 = vmatpush1.bf16.msra.mxu0 %v5918
      %7642 = vmatprep.subr.bf16.mxu0 %v5903
      %7643 = vmatpush1.bf16.msra.mxu0 %v5902
      %7644 = vmatprep.subr.bf16.mxu0 %v5887
      %7645 = vmatpush1.bf16.msra.mxu0 %v5886
      %7646 = vmatprep.subr.bf16.mxu0 %v5871
      %7647 = vmatpush1.bf16.msra.mxu0 %v5870
      %7648 = vmatprep.subr.bf16.mxu0 %v5855
      %7649 = vmatpush1.bf16.msra.mxu0 %v5854
      %7650 = vmatprep.subr.bf16.mxu0 %v6095
      %7651 = vmatpush2.bf16.msra.mxu0 %v6094
      %7652 = vmatprep.subr.bf16.mxu0 %v6079
      %7653 = vmatpush2.bf16.msra.mxu0 %v6078
      %7654 = vmatprep.subr.bf16.mxu0 %v6063
      %7655 = vmatpush2.bf16.msra.mxu0 %v6062
      %7656 = vmatprep.subr.bf16.mxu0 %v6047
      %7657 = vmatpush2.bf16.msra.mxu0 %v6046
      %7658 = vmatprep.subr.bf16.mxu0 %v6031
      %7659 = vmatpush2.bf16.msra.mxu0 %v6030
      %7660 = vmatprep.subr.bf16.mxu0 %v6015
      %7661 = vmatpush2.bf16.msra.mxu0 %v6014
      %7662 = vmatprep.subr.bf16.mxu0 %v5999
      %7663 = vmatpush2.bf16.msra.mxu0 %v5998
      %7664 = vmatprep.subr.bf16.mxu0 %v5983
      %7665 = vmatpush2.bf16.msra.mxu0 %v5982
      %7666 = vmatprep.mubr.bf16.mxu0 %v1157
      %7667 = vmatmul.mubr.bf16.gmra.mxu0 %v1156
      %v7668 = vpop.f32.mrf.mxu0
      %v7669 = vadd.f32 %v7628, %v7668
      %v7670 = vpop.f32.mrf.mxu0
      %v7671 = vadd.f32 %v7630, %v7670
      %v7672 = vpop.f32.mrf.mxu0
      %v7673 = vpop.f32.mrf.mxu0
      %7674 = vdwg.mxu0
      %7675 = vmatprep.subr.bf16.mxu0 %v6223
      %7676 = vmatpush1.bf16.msra.mxu0 %v6222
      %7677 = vmatprep.subr.bf16.mxu0 %v6207
      %7678 = vmatpush1.bf16.msra.mxu0 %v6206
      %7679 = vmatprep.subr.bf16.mxu0 %v6191
      %7680 = vmatpush1.bf16.msra.mxu0 %v6190
      %7681 = vmatprep.subr.bf16.mxu0 %v6175
      %7682 = vmatpush1.bf16.msra.mxu0 %v6174
      %7683 = vmatprep.subr.bf16.mxu0 %v6159
      %7684 = vmatpush1.bf16.msra.mxu0 %v6158
      %7685 = vmatprep.subr.bf16.mxu0 %v6143
      %7686 = vmatpush1.bf16.msra.mxu0 %v6142
      %7687 = vmatprep.subr.bf16.mxu0 %v6127
      %7688 = vmatpush1.bf16.msra.mxu0 %v6126
      %7689 = vmatprep.subr.bf16.mxu0 %v6111
      %7690 = vmatpush1.bf16.msra.mxu0 %v6110
      %7691 = vmatprep.subr.bf16.mxu0 %v6351
      %7692 = vmatpush2.bf16.msra.mxu0 %v6350
      %7693 = vmatprep.subr.bf16.mxu0 %v6335
      %7694 = vmatpush2.bf16.msra.mxu0 %v6334
      %7695 = vmatprep.subr.bf16.mxu0 %v6319
      %7696 = vmatpush2.bf16.msra.mxu0 %v6318
      %7697 = vmatprep.subr.bf16.mxu0 %v6303
      %7698 = vmatpush2.bf16.msra.mxu0 %v6302
      %7699 = vmatprep.subr.bf16.mxu0 %v6287
      %7700 = vmatpush2.bf16.msra.mxu0 %v6286
      %7701 = vmatprep.subr.bf16.mxu0 %v6271
      %7702 = vmatpush2.bf16.msra.mxu0 %v6270
      %7703 = vmatprep.subr.bf16.mxu0 %v6255
      %7704 = vmatpush2.bf16.msra.mxu0 %v6254
      %7705 = vmatprep.subr.bf16.mxu0 %v6239
      %7706 = vmatpush2.bf16.msra.mxu0 %v6238
      %7707 = vmatprep.mubr.bf16.mxu0 %v1159
      %7708 = vmatmul.mubr.bf16.gmra.mxu0 %v1158
      %v7709 = vpop.f32.mrf.mxu0
      %v7710 = vadd.f32 %v7669, %v7709
      %v7711 = vpop.f32.mrf.mxu0
      %v7712 = vadd.f32 %v7671, %v7711
      %v7713 = vpop.f32.mrf.mxu0
      %v7714 = vpop.f32.mrf.mxu0
      %7715 = vdwg.mxu0
      %7716 = vmatprep.subr.bf16.mxu0 %v5457
      %7717 = vmatpush1.bf16.msra.mxu0 %v5456
      %7718 = vmatprep.subr.bf16.mxu0 %v5441
      %7719 = vmatpush1.bf16.msra.mxu0 %v5440
      %7720 = vmatprep.subr.bf16.mxu0 %v5425
      %7721 = vmatpush1.bf16.msra.mxu0 %v5424
      %7722 = vmatprep.subr.bf16.mxu0 %v5409
      %7723 = vmatpush1.bf16.msra.mxu0 %v5408
      %7724 = vmatprep.subr.bf16.mxu0 %v5393
      %7725 = vmatpush1.bf16.msra.mxu0 %v5392
      %7726 = vmatprep.subr.bf16.mxu0 %v5377
      %7727 = vmatpush1.bf16.msra.mxu0 %v5376
      %7728 = vmatprep.subr.bf16.mxu0 %v5361
      %7729 = vmatpush1.bf16.msra.mxu0 %v5360
      %7730 = vmatprep.subr.bf16.mxu0 %v5345
      %7731 = vmatpush1.bf16.msra.mxu0 %v5344
      %7732 = vmatprep.subr.bf16.mxu0 %v5585
      %7733 = vmatpush2.bf16.msra.mxu0 %v5584
      %7734 = vmatprep.subr.bf16.mxu0 %v5569
      %7735 = vmatpush2.bf16.msra.mxu0 %v5568
      %7736 = vmatprep.subr.bf16.mxu0 %v5553
      %7737 = vmatpush2.bf16.msra.mxu0 %v5552
      %7738 = vmatprep.subr.bf16.mxu0 %v5537
      %7739 = vmatpush2.bf16.msra.mxu0 %v5536
      %7740 = vmatprep.subr.bf16.mxu0 %v5521
      %7741 = vmatpush2.bf16.msra.mxu0 %v5520
      %7742 = vmatprep.subr.bf16.mxu0 %v5505
      %7743 = vmatpush2.bf16.msra.mxu0 %v5504
      %7744 = vmatprep.subr.bf16.mxu0 %v5489
      %7745 = vmatpush2.bf16.msra.mxu0 %v5488
      %7746 = vmatprep.subr.bf16.mxu0 %v5473
      %7747 = vmatpush2.bf16.msra.mxu0 %v5472
      %7748 = vmatprep.mubr.bf16.mxu0 %v1153
      %7749 = vmatmul.mubr.bf16.gmra.mxu0 %v1152
      %v7750 = vpop.f32.mrf.mxu0
      %v7751 = vadd.f32 %v2207, %v7750
      %v7752 = vpop.f32.mrf.mxu0
      %v7753 = vadd.f32 %v2211, %v7752
      %v7754 = vpop.f32.mrf.mxu0
      %v7755 = vpop.f32.mrf.mxu0
      %7756 = vdwg.mxu0
      %7757 = vmatprep.subr.bf16.mxu0 %v5713
      %7758 = vmatpush1.bf16.msra.mxu0 %v5712
      %7759 = vmatprep.subr.bf16.mxu0 %v5697
      %7760 = vmatpush1.bf16.msra.mxu0 %v5696
      %7761 = vmatprep.subr.bf16.mxu0 %v5681
      %7762 = vmatpush1.bf16.msra.mxu0 %v5680
      %7763 = vmatprep.subr.bf16.mxu0 %v5665
      %7764 = vmatpush1.bf16.msra.mxu0 %v5664
      %7765 = vmatprep.subr.bf16.mxu0 %v5649
      %7766 = vmatpush1.bf16.msra.mxu0 %v5648
      %7767 = vmatprep.subr.bf16.mxu0 %v5633
      %7768 = vmatpush1.bf16.msra.mxu0 %v5632
      %7769 = vmatprep.subr.bf16.mxu0 %v5617
      %7770 = vmatpush1.bf16.msra.mxu0 %v5616
      %7771 = vmatprep.subr.bf16.mxu0 %v5601
      %7772 = vmatpush1.bf16.msra.mxu0 %v5600
      %7773 = vmatprep.subr.bf16.mxu0 %v5841
      %7774 = vmatpush2.bf16.msra.mxu0 %v5840
      %7775 = vmatprep.subr.bf16.mxu0 %v5825
      %7776 = vmatpush2.bf16.msra.mxu0 %v5824
      %7777 = vmatprep.subr.bf16.mxu0 %v5809
      %7778 = vmatpush2.bf16.msra.mxu0 %v5808
      %7779 = vmatprep.subr.bf16.mxu0 %v5793
      %7780 = vmatpush2.bf16.msra.mxu0 %v5792
      %7781 = vmatprep.subr.bf16.mxu0 %v5777
      %7782 = vmatpush2.bf16.msra.mxu0 %v5776
      %7783 = vmatprep.subr.bf16.mxu0 %v5761
      %7784 = vmatpush2.bf16.msra.mxu0 %v5760
      %7785 = vmatprep.subr.bf16.mxu0 %v5745
      %7786 = vmatpush2.bf16.msra.mxu0 %v5744
      %7787 = vmatprep.subr.bf16.mxu0 %v5729
      %7788 = vmatpush2.bf16.msra.mxu0 %v5728
      %7789 = vmatprep.mubr.bf16.mxu0 %v1155
      %7790 = vmatmul.mubr.bf16.gmra.mxu0 %v1154
      %v7791 = vpop.f32.mrf.mxu0
      %v7792 = vadd.f32 %v7751, %v7791
      %v7793 = vpop.f32.mrf.mxu0
      %v7794 = vadd.f32 %v7753, %v7793
      %v7795 = vpop.f32.mrf.mxu0
      %v7796 = vpop.f32.mrf.mxu0
      %7797 = vdwg.mxu0
      %7798 = vmatprep.subr.bf16.mxu0 %v5969
      %7799 = vmatpush1.bf16.msra.mxu0 %v5968
      %7800 = vmatprep.subr.bf16.mxu0 %v5953
      %7801 = vmatpush1.bf16.msra.mxu0 %v5952
      %7802 = vmatprep.subr.bf16.mxu0 %v5937
      %7803 = vmatpush1.bf16.msra.mxu0 %v5936
      %7804 = vmatprep.subr.bf16.mxu0 %v5921
      %7805 = vmatpush1.bf16.msra.mxu0 %v5920
      %7806 = vmatprep.subr.bf16.mxu0 %v5905
      %7807 = vmatpush1.bf16.msra.mxu0 %v5904
      %7808 = vmatprep.subr.bf16.mxu0 %v5889
      %7809 = vmatpush1.bf16.msra.mxu0 %v5888
      %7810 = vmatprep.subr.bf16.mxu0 %v5873
      %7811 = vmatpush1.bf16.msra.mxu0 %v5872
      %7812 = vmatprep.subr.bf16.mxu0 %v5857
      %7813 = vmatpush1.bf16.msra.mxu0 %v5856
      %7814 = vmatprep.subr.bf16.mxu0 %v6097
      %7815 = vmatpush2.bf16.msra.mxu0 %v6096
      %7816 = vmatprep.subr.bf16.mxu0 %v6081
      %7817 = vmatpush2.bf16.msra.mxu0 %v6080
      %7818 = vmatprep.subr.bf16.mxu0 %v6065
      %7819 = vmatpush2.bf16.msra.mxu0 %v6064
      %7820 = vmatprep.subr.bf16.mxu0 %v6049
      %7821 = vmatpush2.bf16.msra.mxu0 %v6048
      %7822 = vmatprep.subr.bf16.mxu0 %v6033
      %7823 = vmatpush2.bf16.msra.mxu0 %v6032
      %7824 = vmatprep.subr.bf16.mxu0 %v6017
      %7825 = vmatpush2.bf16.msra.mxu0 %v6016
      %7826 = vmatprep.subr.bf16.mxu0 %v6001
      %7827 = vmatpush2.bf16.msra.mxu0 %v6000
      %7828 = vmatprep.subr.bf16.mxu0 %v5985
      %7829 = vmatpush2.bf16.msra.mxu0 %v5984
      %7830 = vmatprep.mubr.bf16.mxu0 %v1157
      %7831 = vmatmul.mubr.bf16.gmra.mxu0 %v1156
      %v7832 = vpop.f32.mrf.mxu0
      %v7833 = vadd.f32 %v7792, %v7832
      %v7834 = vpop.f32.mrf.mxu0
      %v7835 = vadd.f32 %v7794, %v7834
      %v7836 = vpop.f32.mrf.mxu0
      %v7837 = vpop.f32.mrf.mxu0
      %7838 = vdwg.mxu0
      %7839 = vmatprep.subr.bf16.mxu0 %v6225
      %7840 = vmatpush1.bf16.msra.mxu0 %v6224
      %7841 = vmatprep.subr.bf16.mxu0 %v6209
      %7842 = vmatpush1.bf16.msra.mxu0 %v6208
      %7843 = vmatprep.subr.bf16.mxu0 %v6193
      %7844 = vmatpush1.bf16.msra.mxu0 %v6192
      %7845 = vmatprep.subr.bf16.mxu0 %v6177
      %7846 = vmatpush1.bf16.msra.mxu0 %v6176
      %7847 = vmatprep.subr.bf16.mxu0 %v6161
      %7848 = vmatpush1.bf16.msra.mxu0 %v6160
      %7849 = vmatprep.subr.bf16.mxu0 %v6145
      %7850 = vmatpush1.bf16.msra.mxu0 %v6144
      %7851 = vmatprep.subr.bf16.mxu0 %v6129
      %7852 = vmatpush1.bf16.msra.mxu0 %v6128
      %7853 = vmatprep.subr.bf16.mxu0 %v6113
      %7854 = vmatpush1.bf16.msra.mxu0 %v6112
      %7855 = vmatprep.subr.bf16.mxu0 %v6353
      %7856 = vmatpush2.bf16.msra.mxu0 %v6352
      %7857 = vmatprep.subr.bf16.mxu0 %v6337
      %7858 = vmatpush2.bf16.msra.mxu0 %v6336
      %7859 = vmatprep.subr.bf16.mxu0 %v6321
      %7860 = vmatpush2.bf16.msra.mxu0 %v6320
      %7861 = vmatprep.subr.bf16.mxu0 %v6305
      %7862 = vmatpush2.bf16.msra.mxu0 %v6304
      %7863 = vmatprep.subr.bf16.mxu0 %v6289
      %7864 = vmatpush2.bf16.msra.mxu0 %v6288
      %7865 = vmatprep.subr.bf16.mxu0 %v6273
      %7866 = vmatpush2.bf16.msra.mxu0 %v6272
      %7867 = vmatprep.subr.bf16.mxu0 %v6257
      %7868 = vmatpush2.bf16.msra.mxu0 %v6256
      %7869 = vmatprep.subr.bf16.mxu0 %v6241
      %7870 = vmatpush2.bf16.msra.mxu0 %v6240
      %7871 = vmatprep.mubr.bf16.mxu0 %v1159
      %7872 = vmatmul.mubr.bf16.gmra.mxu0 %v1158
      %v7873 = vpop.f32.mrf.mxu0
      %v7874 = vadd.f32 %v7833, %v7873
      %v7875 = vpop.f32.mrf.mxu0
      %v7876 = vadd.f32 %v7835, %v7875
      %v7877 = vpop.f32.mrf.mxu0
      %v7878 = vpop.f32.mrf.mxu0
      %7879 = vdwg.mxu0
      %7880 = vmatprep.subr.bf16.mxu0 %v5459
      %7881 = vmatpush1.bf16.msra.mxu0 %v5458
      %7882 = vmatprep.subr.bf16.mxu0 %v5443
      %7883 = vmatpush1.bf16.msra.mxu0 %v5442
      %7884 = vmatprep.subr.bf16.mxu0 %v5427
      %7885 = vmatpush1.bf16.msra.mxu0 %v5426
      %7886 = vmatprep.subr.bf16.mxu0 %v5411
      %7887 = vmatpush1.bf16.msra.mxu0 %v5410
      %7888 = vmatprep.subr.bf16.mxu0 %v5395
      %7889 = vmatpush1.bf16.msra.mxu0 %v5394
      %7890 = vmatprep.subr.bf16.mxu0 %v5379
      %7891 = vmatpush1.bf16.msra.mxu0 %v5378
      %7892 = vmatprep.subr.bf16.mxu0 %v5363
      %7893 = vmatpush1.bf16.msra.mxu0 %v5362
      %7894 = vmatprep.subr.bf16.mxu0 %v5347
      %7895 = vmatpush1.bf16.msra.mxu0 %v5346
      %7896 = vmatprep.subr.bf16.mxu0 %v5587
      %7897 = vmatpush2.bf16.msra.mxu0 %v5586
      %7898 = vmatprep.subr.bf16.mxu0 %v5571
      %7899 = vmatpush2.bf16.msra.mxu0 %v5570
      %7900 = vmatprep.subr.bf16.mxu0 %v5555
      %7901 = vmatpush2.bf16.msra.mxu0 %v5554
      %7902 = vmatprep.subr.bf16.mxu0 %v5539
      %7903 = vmatpush2.bf16.msra.mxu0 %v5538
      %7904 = vmatprep.subr.bf16.mxu0 %v5523
      %7905 = vmatpush2.bf16.msra.mxu0 %v5522
      %7906 = vmatprep.subr.bf16.mxu0 %v5507
      %7907 = vmatpush2.bf16.msra.mxu0 %v5506
      %7908 = vmatprep.subr.bf16.mxu0 %v5491
      %7909 = vmatpush2.bf16.msra.mxu0 %v5490
      %7910 = vmatprep.subr.bf16.mxu0 %v5475
      %7911 = vmatpush2.bf16.msra.mxu0 %v5474
      %7912 = vmatprep.mubr.bf16.mxu0 %v1153
      %7913 = vmatmul.mubr.bf16.gmra.mxu0 %v1152
      %v7914 = vpop.f32.mrf.mxu0
      %v7915 = vadd.f32 %v2215, %v7914
      %v7916 = vpop.f32.mrf.mxu0
      %v7917 = vadd.f32 %v2219, %v7916
      %v7918 = vpop.f32.mrf.mxu0
      %v7919 = vpop.f32.mrf.mxu0
      %7920 = vdwg.mxu0
      %7921 = vmatprep.subr.bf16.mxu0 %v5715
      %7922 = vmatpush1.bf16.msra.mxu0 %v5714
      %7923 = vmatprep.subr.bf16.mxu0 %v5699
      %7924 = vmatpush1.bf16.msra.mxu0 %v5698
      %7925 = vmatprep.subr.bf16.mxu0 %v5683
      %7926 = vmatpush1.bf16.msra.mxu0 %v5682
      %7927 = vmatprep.subr.bf16.mxu0 %v5667
      %7928 = vmatpush1.bf16.msra.mxu0 %v5666
      %7929 = vmatprep.subr.bf16.mxu0 %v5651
      %7930 = vmatpush1.bf16.msra.mxu0 %v5650
      %7931 = vmatprep.subr.bf16.mxu0 %v5635
      %7932 = vmatpush1.bf16.msra.mxu0 %v5634
      %7933 = vmatprep.subr.bf16.mxu0 %v5619
      %7934 = vmatpush1.bf16.msra.mxu0 %v5618
      %7935 = vmatprep.subr.bf16.mxu0 %v5603
      %7936 = vmatpush1.bf16.msra.mxu0 %v5602
      %7937 = vmatprep.subr.bf16.mxu0 %v5843
      %7938 = vmatpush2.bf16.msra.mxu0 %v5842
      %7939 = vmatprep.subr.bf16.mxu0 %v5827
      %7940 = vmatpush2.bf16.msra.mxu0 %v5826
      %7941 = vmatprep.subr.bf16.mxu0 %v5811
      %7942 = vmatpush2.bf16.msra.mxu0 %v5810
      %7943 = vmatprep.subr.bf16.mxu0 %v5795
      %7944 = vmatpush2.bf16.msra.mxu0 %v5794
      %7945 = vmatprep.subr.bf16.mxu0 %v5779
      %7946 = vmatpush2.bf16.msra.mxu0 %v5778
      %7947 = vmatprep.subr.bf16.mxu0 %v5763
      %7948 = vmatpush2.bf16.msra.mxu0 %v5762
      %7949 = vmatprep.subr.bf16.mxu0 %v5747
      %7950 = vmatpush2.bf16.msra.mxu0 %v5746
      %7951 = vmatprep.subr.bf16.mxu0 %v5731
      %7952 = vmatpush2.bf16.msra.mxu0 %v5730
      %7953 = vmatprep.mubr.bf16.mxu0 %v1155
      %7954 = vmatmul.mubr.bf16.gmra.mxu0 %v1154
      %v7955 = vpop.f32.mrf.mxu0
      %v7956 = vadd.f32 %v7915, %v7955
      %v7957 = vpop.f32.mrf.mxu0
      %v7958 = vadd.f32 %v7917, %v7957
      %v7959 = vpop.f32.mrf.mxu0
      %v7960 = vpop.f32.mrf.mxu0
      %7961 = vdwg.mxu0
      %7962 = vmatprep.subr.bf16.mxu0 %v5971
      %7963 = vmatpush1.bf16.msra.mxu0 %v5970
      %7964 = vmatprep.subr.bf16.mxu0 %v5955
      %7965 = vmatpush1.bf16.msra.mxu0 %v5954
      %7966 = vmatprep.subr.bf16.mxu0 %v5939
      %7967 = vmatpush1.bf16.msra.mxu0 %v5938
      %7968 = vmatprep.subr.bf16.mxu0 %v5923
      %7969 = vmatpush1.bf16.msra.mxu0 %v5922
      %7970 = vmatprep.subr.bf16.mxu0 %v5907
      %7971 = vmatpush1.bf16.msra.mxu0 %v5906
      %7972 = vmatprep.subr.bf16.mxu0 %v5891
      %7973 = vmatpush1.bf16.msra.mxu0 %v5890
      %7974 = vmatprep.subr.bf16.mxu0 %v5875
      %7975 = vmatpush1.bf16.msra.mxu0 %v5874
      %7976 = vmatprep.subr.bf16.mxu0 %v5859
      %7977 = vmatpush1.bf16.msra.mxu0 %v5858
      %7978 = vmatprep.subr.bf16.mxu0 %v6099
      %7979 = vmatpush2.bf16.msra.mxu0 %v6098
      %7980 = vmatprep.subr.bf16.mxu0 %v6083
      %7981 = vmatpush2.bf16.msra.mxu0 %v6082
      %7982 = vmatprep.subr.bf16.mxu0 %v6067
      %7983 = vmatpush2.bf16.msra.mxu0 %v6066
      %7984 = vmatprep.subr.bf16.mxu0 %v6051
      %7985 = vmatpush2.bf16.msra.mxu0 %v6050
      %7986 = vmatprep.subr.bf16.mxu0 %v6035
      %7987 = vmatpush2.bf16.msra.mxu0 %v6034
      %7988 = vmatprep.subr.bf16.mxu0 %v6019
      %7989 = vmatpush2.bf16.msra.mxu0 %v6018
      %7990 = vmatprep.subr.bf16.mxu0 %v6003
      %7991 = vmatpush2.bf16.msra.mxu0 %v6002
      %7992 = vmatprep.subr.bf16.mxu0 %v5987
      %7993 = vmatpush2.bf16.msra.mxu0 %v5986
      %7994 = vmatprep.mubr.bf16.mxu0 %v1157
      %7995 = vmatmul.mubr.bf16.gmra.mxu0 %v1156
      %v7996 = vpop.f32.mrf.mxu0
      %v7997 = vadd.f32 %v7956, %v7996
      %v7998 = vpop.f32.mrf.mxu0
      %v7999 = vadd.f32 %v7958, %v7998
      %v8000 = vpop.f32.mrf.mxu0
      %v8001 = vpop.f32.mrf.mxu0
      %8002 = vdwg.mxu0
      %8003 = vmatprep.subr.bf16.mxu0 %v6227
      %8004 = vmatpush1.bf16.msra.mxu0 %v6226
      %8005 = vmatprep.subr.bf16.mxu0 %v6211
      %8006 = vmatpush1.bf16.msra.mxu0 %v6210
      %8007 = vmatprep.subr.bf16.mxu0 %v6195
      %8008 = vmatpush1.bf16.msra.mxu0 %v6194
      %8009 = vmatprep.subr.bf16.mxu0 %v6179
      %8010 = vmatpush1.bf16.msra.mxu0 %v6178
      %8011 = vmatprep.subr.bf16.mxu0 %v6163
      %8012 = vmatpush1.bf16.msra.mxu0 %v6162
      %8013 = vmatprep.subr.bf16.mxu0 %v6147
      %8014 = vmatpush1.bf16.msra.mxu0 %v6146
      %8015 = vmatprep.subr.bf16.mxu0 %v6131
      %8016 = vmatpush1.bf16.msra.mxu0 %v6130
      %8017 = vmatprep.subr.bf16.mxu0 %v6115
      %8018 = vmatpush1.bf16.msra.mxu0 %v6114
      %8019 = vmatprep.subr.bf16.mxu0 %v6355
      %8020 = vmatpush2.bf16.msra.mxu0 %v6354
      %8021 = vmatprep.subr.bf16.mxu0 %v6339
      %8022 = vmatpush2.bf16.msra.mxu0 %v6338
      %8023 = vmatprep.subr.bf16.mxu0 %v6323
      %8024 = vmatpush2.bf16.msra.mxu0 %v6322
      %8025 = vmatprep.subr.bf16.mxu0 %v6307
      %8026 = vmatpush2.bf16.msra.mxu0 %v6306
      %8027 = vmatprep.subr.bf16.mxu0 %v6291
      %8028 = vmatpush2.bf16.msra.mxu0 %v6290
      %8029 = vmatprep.subr.bf16.mxu0 %v6275
      %8030 = vmatpush2.bf16.msra.mxu0 %v6274
      %8031 = vmatprep.subr.bf16.mxu0 %v6259
      %8032 = vmatpush2.bf16.msra.mxu0 %v6258
      %8033 = vmatprep.subr.bf16.mxu0 %v6243
      %8034 = vmatpush2.bf16.msra.mxu0 %v6242
      %8035 = vmatprep.mubr.bf16.mxu0 %v1159
      %8036 = vmatmul.mubr.bf16.gmra.mxu0 %v1158
      %v8037 = vpop.f32.mrf.mxu0
      %v8038 = vadd.f32 %v7997, %v8037
      %v8039 = vpop.f32.mrf.mxu0
      %v8040 = vadd.f32 %v7999, %v8039
      %v8041 = vpop.f32.mrf.mxu0
      %v8042 = vpop.f32.mrf.mxu0
      %8043 = vdwg.mxu0
      %8044 = vmatprep.subr.bf16.mxu0 %v5461
      %8045 = vmatpush1.bf16.msra.mxu0 %v5460
      %8046 = vmatprep.subr.bf16.mxu0 %v5445
      %8047 = vmatpush1.bf16.msra.mxu0 %v5444
      %8048 = vmatprep.subr.bf16.mxu0 %v5429
      %8049 = vmatpush1.bf16.msra.mxu0 %v5428
      %8050 = vmatprep.subr.bf16.mxu0 %v5413
      %8051 = vmatpush1.bf16.msra.mxu0 %v5412
      %8052 = vmatprep.subr.bf16.mxu0 %v5397
      %8053 = vmatpush1.bf16.msra.mxu0 %v5396
      %8054 = vmatprep.subr.bf16.mxu0 %v5381
      %8055 = vmatpush1.bf16.msra.mxu0 %v5380
      %8056 = vmatprep.subr.bf16.mxu0 %v5365
      %8057 = vmatpush1.bf16.msra.mxu0 %v5364
      %8058 = vmatprep.subr.bf16.mxu0 %v5349
      %8059 = vmatpush1.bf16.msra.mxu0 %v5348
      %8060 = vmatprep.subr.bf16.mxu0 %v5589
      %8061 = vmatpush2.bf16.msra.mxu0 %v5588
      %8062 = vmatprep.subr.bf16.mxu0 %v5573
      %8063 = vmatpush2.bf16.msra.mxu0 %v5572
      %8064 = vmatprep.subr.bf16.mxu0 %v5557
      %8065 = vmatpush2.bf16.msra.mxu0 %v5556
      %8066 = vmatprep.subr.bf16.mxu0 %v5541
      %8067 = vmatpush2.bf16.msra.mxu0 %v5540
      %8068 = vmatprep.subr.bf16.mxu0 %v5525
      %8069 = vmatpush2.bf16.msra.mxu0 %v5524
      %8070 = vmatprep.subr.bf16.mxu0 %v5509
      %8071 = vmatpush2.bf16.msra.mxu0 %v5508
      %8072 = vmatprep.subr.bf16.mxu0 %v5493
      %8073 = vmatpush2.bf16.msra.mxu0 %v5492
      %8074 = vmatprep.subr.bf16.mxu0 %v5477
      %8075 = vmatpush2.bf16.msra.mxu0 %v5476
      %8076 = vmatprep.mubr.bf16.mxu0 %v1153
      %8077 = vmatmul.mubr.bf16.gmra.mxu0 %v1152
      %v8078 = vpop.f32.mrf.mxu0
      %v8079 = vadd.f32 %v2223, %v8078
      %v8080 = vpop.f32.mrf.mxu0
      %v8081 = vadd.f32 %v2227, %v8080
      %v8082 = vpop.f32.mrf.mxu0
      %v8083 = vpop.f32.mrf.mxu0
      %8084 = vdwg.mxu0
      %8085 = vmatprep.subr.bf16.mxu0 %v5717
      %8086 = vmatpush1.bf16.msra.mxu0 %v5716
      %8087 = vmatprep.subr.bf16.mxu0 %v5701
      %8088 = vmatpush1.bf16.msra.mxu0 %v5700
      %8089 = vmatprep.subr.bf16.mxu0 %v5685
      %8090 = vmatpush1.bf16.msra.mxu0 %v5684
      %8091 = vmatprep.subr.bf16.mxu0 %v5669
      %8092 = vmatpush1.bf16.msra.mxu0 %v5668
      %8093 = vmatprep.subr.bf16.mxu0 %v5653
      %8094 = vmatpush1.bf16.msra.mxu0 %v5652
      %8095 = vmatprep.subr.bf16.mxu0 %v5637
      %8096 = vmatpush1.bf16.msra.mxu0 %v5636
      %8097 = vmatprep.subr.bf16.mxu0 %v5621
      %8098 = vmatpush1.bf16.msra.mxu0 %v5620
      %8099 = vmatprep.subr.bf16.mxu0 %v5605
      %8100 = vmatpush1.bf16.msra.mxu0 %v5604
      %8101 = vmatprep.subr.bf16.mxu0 %v5845
      %8102 = vmatpush2.bf16.msra.mxu0 %v5844
      %8103 = vmatprep.subr.bf16.mxu0 %v5829
      %8104 = vmatpush2.bf16.msra.mxu0 %v5828
      %8105 = vmatprep.subr.bf16.mxu0 %v5813
      %8106 = vmatpush2.bf16.msra.mxu0 %v5812
      %8107 = vmatprep.subr.bf16.mxu0 %v5797
      %8108 = vmatpush2.bf16.msra.mxu0 %v5796
      %8109 = vmatprep.subr.bf16.mxu0 %v5781
      %8110 = vmatpush2.bf16.msra.mxu0 %v5780
      %8111 = vmatprep.subr.bf16.mxu0 %v5765
      %8112 = vmatpush2.bf16.msra.mxu0 %v5764
      %8113 = vmatprep.subr.bf16.mxu0 %v5749
      %8114 = vmatpush2.bf16.msra.mxu0 %v5748
      %8115 = vmatprep.subr.bf16.mxu0 %v5733
      %8116 = vmatpush2.bf16.msra.mxu0 %v5732
      %8117 = vmatprep.mubr.bf16.mxu0 %v1155
      %8118 = vmatmul.mubr.bf16.gmra.mxu0 %v1154
      %v8119 = vpop.f32.mrf.mxu0
      %v8120 = vadd.f32 %v8079, %v8119
      %v8121 = vpop.f32.mrf.mxu0
      %v8122 = vadd.f32 %v8081, %v8121
      %v8123 = vpop.f32.mrf.mxu0
      %v8124 = vpop.f32.mrf.mxu0
      %8125 = vdwg.mxu0
      %8126 = vmatprep.subr.bf16.mxu0 %v5973
      %8127 = vmatpush1.bf16.msra.mxu0 %v5972
      %8128 = vmatprep.subr.bf16.mxu0 %v5957
      %8129 = vmatpush1.bf16.msra.mxu0 %v5956
      %8130 = vmatprep.subr.bf16.mxu0 %v5941
      %8131 = vmatpush1.bf16.msra.mxu0 %v5940
      %8132 = vmatprep.subr.bf16.mxu0 %v5925
      %8133 = vmatpush1.bf16.msra.mxu0 %v5924
      %8134 = vmatprep.subr.bf16.mxu0 %v5909
      %8135 = vmatpush1.bf16.msra.mxu0 %v5908
      %8136 = vmatprep.subr.bf16.mxu0 %v5893
      %8137 = vmatpush1.bf16.msra.mxu0 %v5892
      %8138 = vmatprep.subr.bf16.mxu0 %v5877
      %8139 = vmatpush1.bf16.msra.mxu0 %v5876
      %8140 = vmatprep.subr.bf16.mxu0 %v5861
      %8141 = vmatpush1.bf16.msra.mxu0 %v5860
      %8142 = vmatprep.subr.bf16.mxu0 %v6101
      %8143 = vmatpush2.bf16.msra.mxu0 %v6100
      %8144 = vmatprep.subr.bf16.mxu0 %v6085
      %8145 = vmatpush2.bf16.msra.mxu0 %v6084
      %8146 = vmatprep.subr.bf16.mxu0 %v6069
      %8147 = vmatpush2.bf16.msra.mxu0 %v6068
      %8148 = vmatprep.subr.bf16.mxu0 %v6053
      %8149 = vmatpush2.bf16.msra.mxu0 %v6052
      %8150 = vmatprep.subr.bf16.mxu0 %v6037
      %8151 = vmatpush2.bf16.msra.mxu0 %v6036
      %8152 = vmatprep.subr.bf16.mxu0 %v6021
      %8153 = vmatpush2.bf16.msra.mxu0 %v6020
      %8154 = vmatprep.subr.bf16.mxu0 %v6005
      %8155 = vmatpush2.bf16.msra.mxu0 %v6004
      %8156 = vmatprep.subr.bf16.mxu0 %v5989
      %8157 = vmatpush2.bf16.msra.mxu0 %v5988
      %8158 = vmatprep.mubr.bf16.mxu0 %v1157
      %8159 = vmatmul.mubr.bf16.gmra.mxu0 %v1156
      %v8160 = vpop.f32.mrf.mxu0
      %v8161 = vadd.f32 %v8120, %v8160
      %v8162 = vpop.f32.mrf.mxu0
      %v8163 = vadd.f32 %v8122, %v8162
      %v8164 = vpop.f32.mrf.mxu0
      %v8165 = vpop.f32.mrf.mxu0
      %8166 = vdwg.mxu0
      %8167 = vmatprep.subr.bf16.mxu0 %v6229
      %8168 = vmatpush1.bf16.msra.mxu0 %v6228
      %8169 = vmatprep.subr.bf16.mxu0 %v6213
      %8170 = vmatpush1.bf16.msra.mxu0 %v6212
      %8171 = vmatprep.subr.bf16.mxu0 %v6197
      %8172 = vmatpush1.bf16.msra.mxu0 %v6196
      %8173 = vmatprep.subr.bf16.mxu0 %v6181
      %8174 = vmatpush1.bf16.msra.mxu0 %v6180
      %8175 = vmatprep.subr.bf16.mxu0 %v6165
      %8176 = vmatpush1.bf16.msra.mxu0 %v6164
      %8177 = vmatprep.subr.bf16.mxu0 %v6149
      %8178 = vmatpush1.bf16.msra.mxu0 %v6148
      %8179 = vmatprep.subr.bf16.mxu0 %v6133
      %8180 = vmatpush1.bf16.msra.mxu0 %v6132
      %8181 = vmatprep.subr.bf16.mxu0 %v6117
      %8182 = vmatpush1.bf16.msra.mxu0 %v6116
      %8183 = vmatprep.subr.bf16.mxu0 %v6357
      %8184 = vmatpush2.bf16.msra.mxu0 %v6356
      %8185 = vmatprep.subr.bf16.mxu0 %v6341
      %8186 = vmatpush2.bf16.msra.mxu0 %v6340
      %8187 = vmatprep.subr.bf16.mxu0 %v6325
      %8188 = vmatpush2.bf16.msra.mxu0 %v6324
      %8189 = vmatprep.subr.bf16.mxu0 %v6309
      %8190 = vmatpush2.bf16.msra.mxu0 %v6308
      %8191 = vmatprep.subr.bf16.mxu0 %v6293
      %8192 = vmatpush2.bf16.msra.mxu0 %v6292
      %8193 = vmatprep.subr.bf16.mxu0 %v6277
      %8194 = vmatpush2.bf16.msra.mxu0 %v6276
      %8195 = vmatprep.subr.bf16.mxu0 %v6261
      %8196 = vmatpush2.bf16.msra.mxu0 %v6260
      %8197 = vmatprep.subr.bf16.mxu0 %v6245
      %8198 = vmatpush2.bf16.msra.mxu0 %v6244
      %8199 = vmatprep.mubr.bf16.mxu0 %v1159
      %8200 = vmatmul.mubr.bf16.gmra.mxu0 %v1158
      %v8201 = vpop.f32.mrf.mxu0
      %v8202 = vadd.f32 %v8161, %v8201
      %v8203 = vpop.f32.mrf.mxu0
      %v8204 = vadd.f32 %v8163, %v8203
      %v8205 = vpop.f32.mrf.mxu0
      %v8206 = vpop.f32.mrf.mxu0
      %8207 = vdwg.mxu0
      %8208 = vmatprep.subr.bf16.mxu0 %v5463
      %8209 = vmatpush1.bf16.msra.mxu0 %v5462
      %8210 = vmatprep.subr.bf16.mxu0 %v5447
      %8211 = vmatpush1.bf16.msra.mxu0 %v5446
      %8212 = vmatprep.subr.bf16.mxu0 %v5431
      %8213 = vmatpush1.bf16.msra.mxu0 %v5430
      %8214 = vmatprep.subr.bf16.mxu0 %v5415
      %8215 = vmatpush1.bf16.msra.mxu0 %v5414
      %8216 = vmatprep.subr.bf16.mxu0 %v5399
      %8217 = vmatpush1.bf16.msra.mxu0 %v5398
      %8218 = vmatprep.subr.bf16.mxu0 %v5383
      %8219 = vmatpush1.bf16.msra.mxu0 %v5382
      %8220 = vmatprep.subr.bf16.mxu0 %v5367
      %8221 = vmatpush1.bf16.msra.mxu0 %v5366
      %8222 = vmatprep.subr.bf16.mxu0 %v5351
      %8223 = vmatpush1.bf16.msra.mxu0 %v5350
      %8224 = vmatprep.subr.bf16.mxu0 %v5591
      %8225 = vmatpush2.bf16.msra.mxu0 %v5590
      %8226 = vmatprep.subr.bf16.mxu0 %v5575
      %8227 = vmatpush2.bf16.msra.mxu0 %v5574
      %8228 = vmatprep.subr.bf16.mxu0 %v5559
      %8229 = vmatpush2.bf16.msra.mxu0 %v5558
      %8230 = vmatprep.subr.bf16.mxu0 %v5543
      %8231 = vmatpush2.bf16.msra.mxu0 %v5542
      %8232 = vmatprep.subr.bf16.mxu0 %v5527
      %8233 = vmatpush2.bf16.msra.mxu0 %v5526
      %8234 = vmatprep.subr.bf16.mxu0 %v5511
      %8235 = vmatpush2.bf16.msra.mxu0 %v5510
      %8236 = vmatprep.subr.bf16.mxu0 %v5495
      %8237 = vmatpush2.bf16.msra.mxu0 %v5494
      %8238 = vmatprep.subr.bf16.mxu0 %v5479
      %8239 = vmatpush2.bf16.msra.mxu0 %v5478
      %8240 = vmatprep.mubr.bf16.mxu0 %v1153
      %8241 = vmatmul.mubr.bf16.gmra.mxu0 %v1152
      %v8242 = vpop.f32.mrf.mxu0
      %v8243 = vadd.f32 %v2231, %v8242
      %v8244 = vpop.f32.mrf.mxu0
      %v8245 = vadd.f32 %v2235, %v8244
      %v8246 = vpop.f32.mrf.mxu0
      %v8247 = vpop.f32.mrf.mxu0
      %8248 = vdwg.mxu0
      %8249 = vmatprep.subr.bf16.mxu0 %v5719
      %8250 = vmatpush1.bf16.msra.mxu0 %v5718
      %8251 = vmatprep.subr.bf16.mxu0 %v5703
      %8252 = vmatpush1.bf16.msra.mxu0 %v5702
      %8253 = vmatprep.subr.bf16.mxu0 %v5687
      %8254 = vmatpush1.bf16.msra.mxu0 %v5686
      %8255 = vmatprep.subr.bf16.mxu0 %v5671
      %8256 = vmatpush1.bf16.msra.mxu0 %v5670
      %8257 = vmatprep.subr.bf16.mxu0 %v5655
      %8258 = vmatpush1.bf16.msra.mxu0 %v5654
      %8259 = vmatprep.subr.bf16.mxu0 %v5639
      %8260 = vmatpush1.bf16.msra.mxu0 %v5638
      %8261 = vmatprep.subr.bf16.mxu0 %v5623
      %8262 = vmatpush1.bf16.msra.mxu0 %v5622
      %8263 = vmatprep.subr.bf16.mxu0 %v5607
      %8264 = vmatpush1.bf16.msra.mxu0 %v5606
      %8265 = vmatprep.subr.bf16.mxu0 %v5847
      %8266 = vmatpush2.bf16.msra.mxu0 %v5846
      %8267 = vmatprep.subr.bf16.mxu0 %v5831
      %8268 = vmatpush2.bf16.msra.mxu0 %v5830
      %8269 = vmatprep.subr.bf16.mxu0 %v5815
      %8270 = vmatpush2.bf16.msra.mxu0 %v5814
      %8271 = vmatprep.subr.bf16.mxu0 %v5799
      %8272 = vmatpush2.bf16.msra.mxu0 %v5798
      %8273 = vmatprep.subr.bf16.mxu0 %v5783
      %8274 = vmatpush2.bf16.msra.mxu0 %v5782
      %8275 = vmatprep.subr.bf16.mxu0 %v5767
      %8276 = vmatpush2.bf16.msra.mxu0 %v5766
      %8277 = vmatprep.subr.bf16.mxu0 %v5751
      %8278 = vmatpush2.bf16.msra.mxu0 %v5750
      %8279 = vmatprep.subr.bf16.mxu0 %v5735
      %8280 = vmatpush2.bf16.msra.mxu0 %v5734
      %8281 = vmatprep.mubr.bf16.mxu0 %v1155
      %8282 = vmatmul.mubr.bf16.gmra.mxu0 %v1154
      %v8283 = vpop.f32.mrf.mxu0
      %v8284 = vadd.f32 %v8243, %v8283
      %v8285 = vpop.f32.mrf.mxu0
      %v8286 = vadd.f32 %v8245, %v8285
      %v8287 = vpop.f32.mrf.mxu0
      %v8288 = vpop.f32.mrf.mxu0
      %8289 = vdwg.mxu0
      %8290 = vmatprep.subr.bf16.mxu0 %v5975
      %8291 = vmatpush1.bf16.msra.mxu0 %v5974
      %8292 = vmatprep.subr.bf16.mxu0 %v5959
      %8293 = vmatpush1.bf16.msra.mxu0 %v5958
      %8294 = vmatprep.subr.bf16.mxu0 %v5943
      %8295 = vmatpush1.bf16.msra.mxu0 %v5942
      %8296 = vmatprep.subr.bf16.mxu0 %v5927
      %8297 = vmatpush1.bf16.msra.mxu0 %v5926
      %8298 = vmatprep.subr.bf16.mxu0 %v5911
      %8299 = vmatpush1.bf16.msra.mxu0 %v5910
      %8300 = vmatprep.subr.bf16.mxu0 %v5895
      %8301 = vmatpush1.bf16.msra.mxu0 %v5894
      %8302 = vmatprep.subr.bf16.mxu0 %v5879
      %8303 = vmatpush1.bf16.msra.mxu0 %v5878
      %8304 = vmatprep.subr.bf16.mxu0 %v5863
      %8305 = vmatpush1.bf16.msra.mxu0 %v5862
      %8306 = vmatprep.subr.bf16.mxu0 %v6103
      %8307 = vmatpush2.bf16.msra.mxu0 %v6102
      %8308 = vmatprep.subr.bf16.mxu0 %v6087
      %8309 = vmatpush2.bf16.msra.mxu0 %v6086
      %8310 = vmatprep.subr.bf16.mxu0 %v6071
      %8311 = vmatpush2.bf16.msra.mxu0 %v6070
      %8312 = vmatprep.subr.bf16.mxu0 %v6055
      %8313 = vmatpush2.bf16.msra.mxu0 %v6054
      %8314 = vmatprep.subr.bf16.mxu0 %v6039
      %8315 = vmatpush2.bf16.msra.mxu0 %v6038
      %8316 = vmatprep.subr.bf16.mxu0 %v6023
      %8317 = vmatpush2.bf16.msra.mxu0 %v6022
      %8318 = vmatprep.subr.bf16.mxu0 %v6007
      %8319 = vmatpush2.bf16.msra.mxu0 %v6006
      %8320 = vmatprep.subr.bf16.mxu0 %v5991
      %8321 = vmatpush2.bf16.msra.mxu0 %v5990
      %8322 = vmatprep.mubr.bf16.mxu0 %v1157
      %8323 = vmatmul.mubr.bf16.gmra.mxu0 %v1156
      %v8324 = vpop.f32.mrf.mxu0
      %v8325 = vadd.f32 %v8284, %v8324
      %v8326 = vpop.f32.mrf.mxu0
      %v8327 = vadd.f32 %v8286, %v8326
      %v8328 = vpop.f32.mrf.mxu0
      %v8329 = vpop.f32.mrf.mxu0
      %8330 = vdwg.mxu0
      %8331 = vmatprep.subr.bf16.mxu0 %v6231
      %8332 = vmatpush1.bf16.msra.mxu0 %v6230
      %8333 = vmatprep.subr.bf16.mxu0 %v6215
      %8334 = vmatpush1.bf16.msra.mxu0 %v6214
      %8335 = vmatprep.subr.bf16.mxu0 %v6199
      %8336 = vmatpush1.bf16.msra.mxu0 %v6198
      %8337 = vmatprep.subr.bf16.mxu0 %v6183
      %8338 = vmatpush1.bf16.msra.mxu0 %v6182
      %8339 = vmatprep.subr.bf16.mxu0 %v6167
      %8340 = vmatpush1.bf16.msra.mxu0 %v6166
      %8341 = vmatprep.subr.bf16.mxu0 %v6151
      %8342 = vmatpush1.bf16.msra.mxu0 %v6150
      %8343 = vmatprep.subr.bf16.mxu0 %v6135
      %8344 = vmatpush1.bf16.msra.mxu0 %v6134
      %8345 = vmatprep.subr.bf16.mxu0 %v6119
      %8346 = vmatpush1.bf16.msra.mxu0 %v6118
      %8347 = vmatprep.subr.bf16.mxu0 %v6359
      %8348 = vmatpush2.bf16.msra.mxu0 %v6358
      %8349 = vmatprep.subr.bf16.mxu0 %v6343
      %8350 = vmatpush2.bf16.msra.mxu0 %v6342
      %8351 = vmatprep.subr.bf16.mxu0 %v6327
      %8352 = vmatpush2.bf16.msra.mxu0 %v6326
      %8353 = vmatprep.subr.bf16.mxu0 %v6311
      %8354 = vmatpush2.bf16.msra.mxu0 %v6310
      %8355 = vmatprep.subr.bf16.mxu0 %v6295
      %8356 = vmatpush2.bf16.msra.mxu0 %v6294
      %8357 = vmatprep.subr.bf16.mxu0 %v6279
      %8358 = vmatpush2.bf16.msra.mxu0 %v6278
      %8359 = vmatprep.subr.bf16.mxu0 %v6263
      %8360 = vmatpush2.bf16.msra.mxu0 %v6262
      %8361 = vmatprep.subr.bf16.mxu0 %v6247
      %8362 = vmatpush2.bf16.msra.mxu0 %v6246
      %8363 = vmatprep.mubr.bf16.mxu0 %v1159
      %8364 = vmatmul.mubr.bf16.gmra.mxu0 %v1158
      %v8365 = vpop.f32.mrf.mxu0
      %v8366 = vadd.f32 %v8325, %v8365
      %v8367 = vpop.f32.mrf.mxu0
      %v8368 = vadd.f32 %v8327, %v8367
      %v8369 = vpop.f32.mrf.mxu0
      %v8370 = vpop.f32.mrf.mxu0
      %8371 = vdwg.mxu0
      %8372 = vmatprep.subr.bf16.mxu0 %v5465
      %8373 = vmatpush1.bf16.msra.mxu0 %v5464
      %8374 = vmatprep.subr.bf16.mxu0 %v5449
      %8375 = vmatpush1.bf16.msra.mxu0 %v5448
      %8376 = vmatprep.subr.bf16.mxu0 %v5433
      %8377 = vmatpush1.bf16.msra.mxu0 %v5432
      %8378 = vmatprep.subr.bf16.mxu0 %v5417
      %8379 = vmatpush1.bf16.msra.mxu0 %v5416
      %8380 = vmatprep.subr.bf16.mxu0 %v5401
      %8381 = vmatpush1.bf16.msra.mxu0 %v5400
      %8382 = vmatprep.subr.bf16.mxu0 %v5385
      %8383 = vmatpush1.bf16.msra.mxu0 %v5384
      %8384 = vmatprep.subr.bf16.mxu0 %v5369
      %8385 = vmatpush1.bf16.msra.mxu0 %v5368
      %8386 = vmatprep.subr.bf16.mxu0 %v5353
      %8387 = vmatpush1.bf16.msra.mxu0 %v5352
      %8388 = vmatprep.subr.bf16.mxu0 %v5593
      %8389 = vmatpush2.bf16.msra.mxu0 %v5592
      %8390 = vmatprep.subr.bf16.mxu0 %v5577
      %8391 = vmatpush2.bf16.msra.mxu0 %v5576
      %8392 = vmatprep.subr.bf16.mxu0 %v5561
      %8393 = vmatpush2.bf16.msra.mxu0 %v5560
      %8394 = vmatprep.subr.bf16.mxu0 %v5545
      %8395 = vmatpush2.bf16.msra.mxu0 %v5544
      %8396 = vmatprep.subr.bf16.mxu0 %v5529
      %8397 = vmatpush2.bf16.msra.mxu0 %v5528
      %8398 = vmatprep.subr.bf16.mxu0 %v5513
      %8399 = vmatpush2.bf16.msra.mxu0 %v5512
      %8400 = vmatprep.subr.bf16.mxu0 %v5497
      %8401 = vmatpush2.bf16.msra.mxu0 %v5496
      %8402 = vmatprep.subr.bf16.mxu0 %v5481
      %8403 = vmatpush2.bf16.msra.mxu0 %v5480
      %8404 = vmatprep.mubr.bf16.mxu0 %v1153
      %8405 = vmatmul.mubr.bf16.gmra.mxu0 %v1152
      %v8406 = vpop.f32.mrf.mxu0
      %v8407 = vadd.f32 %v2239, %v8406
      %v8408 = vpop.f32.mrf.mxu0
      %v8409 = vadd.f32 %v2243, %v8408
      %v8410 = vpop.f32.mrf.mxu0
      %v8411 = vpop.f32.mrf.mxu0
      %8412 = vdwg.mxu0
      %8413 = vmatprep.subr.bf16.mxu0 %v5721
      %8414 = vmatpush1.bf16.msra.mxu0 %v5720
      %8415 = vmatprep.subr.bf16.mxu0 %v5705
      %8416 = vmatpush1.bf16.msra.mxu0 %v5704
      %8417 = vmatprep.subr.bf16.mxu0 %v5689
      %8418 = vmatpush1.bf16.msra.mxu0 %v5688
      %8419 = vmatprep.subr.bf16.mxu0 %v5673
      %8420 = vmatpush1.bf16.msra.mxu0 %v5672
      %8421 = vmatprep.subr.bf16.mxu0 %v5657
      %8422 = vmatpush1.bf16.msra.mxu0 %v5656
      %8423 = vmatprep.subr.bf16.mxu0 %v5641
      %8424 = vmatpush1.bf16.msra.mxu0 %v5640
      %8425 = vmatprep.subr.bf16.mxu0 %v5625
      %8426 = vmatpush1.bf16.msra.mxu0 %v5624
      %8427 = vmatprep.subr.bf16.mxu0 %v5609
      %8428 = vmatpush1.bf16.msra.mxu0 %v5608
      %8429 = vmatprep.subr.bf16.mxu0 %v5849
      %8430 = vmatpush2.bf16.msra.mxu0 %v5848
      %8431 = vmatprep.subr.bf16.mxu0 %v5833
      %8432 = vmatpush2.bf16.msra.mxu0 %v5832
      %8433 = vmatprep.subr.bf16.mxu0 %v5817
      %8434 = vmatpush2.bf16.msra.mxu0 %v5816
      %8435 = vmatprep.subr.bf16.mxu0 %v5801
      %8436 = vmatpush2.bf16.msra.mxu0 %v5800
      %8437 = vmatprep.subr.bf16.mxu0 %v5785
      %8438 = vmatpush2.bf16.msra.mxu0 %v5784
      %8439 = vmatprep.subr.bf16.mxu0 %v5769
      %8440 = vmatpush2.bf16.msra.mxu0 %v5768
      %8441 = vmatprep.subr.bf16.mxu0 %v5753
      %8442 = vmatpush2.bf16.msra.mxu0 %v5752
      %8443 = vmatprep.subr.bf16.mxu0 %v5737
      %8444 = vmatpush2.bf16.msra.mxu0 %v5736
      %8445 = vmatprep.mubr.bf16.mxu0 %v1155
      %8446 = vmatmul.mubr.bf16.gmra.mxu0 %v1154
      %v8447 = vpop.f32.mrf.mxu0
      %v8448 = vadd.f32 %v8407, %v8447
      %v8449 = vpop.f32.mrf.mxu0
      %v8450 = vadd.f32 %v8409, %v8449
      %v8451 = vpop.f32.mrf.mxu0
      %v8452 = vpop.f32.mrf.mxu0
      %8453 = vdwg.mxu0
      %8454 = vmatprep.subr.bf16.mxu0 %v5977
      %8455 = vmatpush1.bf16.msra.mxu0 %v5976
      %8456 = vmatprep.subr.bf16.mxu0 %v5961
      %8457 = vmatpush1.bf16.msra.mxu0 %v5960
      %8458 = vmatprep.subr.bf16.mxu0 %v5945
      %8459 = vmatpush1.bf16.msra.mxu0 %v5944
      %8460 = vmatprep.subr.bf16.mxu0 %v5929
      %8461 = vmatpush1.bf16.msra.mxu0 %v5928
      %8462 = vmatprep.subr.bf16.mxu0 %v5913
      %8463 = vmatpush1.bf16.msra.mxu0 %v5912
      %8464 = vmatprep.subr.bf16.mxu0 %v5897
      %8465 = vmatpush1.bf16.msra.mxu0 %v5896
      %8466 = vmatprep.subr.bf16.mxu0 %v5881
      %8467 = vmatpush1.bf16.msra.mxu0 %v5880
      %8468 = vmatprep.subr.bf16.mxu0 %v5865
      %8469 = vmatpush1.bf16.msra.mxu0 %v5864
      %8470 = vmatprep.subr.bf16.mxu0 %v6105
      %8471 = vmatpush2.bf16.msra.mxu0 %v6104
      %8472 = vmatprep.subr.bf16.mxu0 %v6089
      %8473 = vmatpush2.bf16.msra.mxu0 %v6088
      %8474 = vmatprep.subr.bf16.mxu0 %v6073
      %8475 = vmatpush2.bf16.msra.mxu0 %v6072
      %8476 = vmatprep.subr.bf16.mxu0 %v6057
      %8477 = vmatpush2.bf16.msra.mxu0 %v6056
      %8478 = vmatprep.subr.bf16.mxu0 %v6041
      %8479 = vmatpush2.bf16.msra.mxu0 %v6040
      %8480 = vmatprep.subr.bf16.mxu0 %v6025
      %8481 = vmatpush2.bf16.msra.mxu0 %v6024
      %8482 = vmatprep.subr.bf16.mxu0 %v6009
      %8483 = vmatpush2.bf16.msra.mxu0 %v6008
      %8484 = vmatprep.subr.bf16.mxu0 %v5993
      %8485 = vmatpush2.bf16.msra.mxu0 %v5992
      %8486 = vmatprep.mubr.bf16.mxu0 %v1157
      %8487 = vmatmul.mubr.bf16.gmra.mxu0 %v1156
      %v8488 = vpop.f32.mrf.mxu0
      %v8489 = vadd.f32 %v8448, %v8488
      %v8490 = vpop.f32.mrf.mxu0
      %v8491 = vadd.f32 %v8450, %v8490
      %v8492 = vpop.f32.mrf.mxu0
      %v8493 = vpop.f32.mrf.mxu0
      %8494 = vdwg.mxu0
      %8495 = vmatprep.subr.bf16.mxu0 %v6233
      %8496 = vmatpush1.bf16.msra.mxu0 %v6232
      %8497 = vmatprep.subr.bf16.mxu0 %v6217
      %8498 = vmatpush1.bf16.msra.mxu0 %v6216
      %8499 = vmatprep.subr.bf16.mxu0 %v6201
      %8500 = vmatpush1.bf16.msra.mxu0 %v6200
      %8501 = vmatprep.subr.bf16.mxu0 %v6185
      %8502 = vmatpush1.bf16.msra.mxu0 %v6184
      %8503 = vmatprep.subr.bf16.mxu0 %v6169
      %8504 = vmatpush1.bf16.msra.mxu0 %v6168
      %8505 = vmatprep.subr.bf16.mxu0 %v6153
      %8506 = vmatpush1.bf16.msra.mxu0 %v6152
      %8507 = vmatprep.subr.bf16.mxu0 %v6137
      %8508 = vmatpush1.bf16.msra.mxu0 %v6136
      %8509 = vmatprep.subr.bf16.mxu0 %v6121
      %8510 = vmatpush1.bf16.msra.mxu0 %v6120
      %8511 = vmatprep.subr.bf16.mxu0 %v6361
      %8512 = vmatpush2.bf16.msra.mxu0 %v6360
      %8513 = vmatprep.subr.bf16.mxu0 %v6345
      %8514 = vmatpush2.bf16.msra.mxu0 %v6344
      %8515 = vmatprep.subr.bf16.mxu0 %v6329
      %8516 = vmatpush2.bf16.msra.mxu0 %v6328
      %8517 = vmatprep.subr.bf16.mxu0 %v6313
      %8518 = vmatpush2.bf16.msra.mxu0 %v6312
      %8519 = vmatprep.subr.bf16.mxu0 %v6297
      %8520 = vmatpush2.bf16.msra.mxu0 %v6296
      %8521 = vmatprep.subr.bf16.mxu0 %v6281
      %8522 = vmatpush2.bf16.msra.mxu0 %v6280
      %8523 = vmatprep.subr.bf16.mxu0 %v6265
      %8524 = vmatpush2.bf16.msra.mxu0 %v6264
      %8525 = vmatprep.subr.bf16.mxu0 %v6249
      %8526 = vmatpush2.bf16.msra.mxu0 %v6248
      %8527 = vmatprep.mubr.bf16.mxu0 %v1159
      %8528 = vmatmul.mubr.bf16.gmra.mxu0 %v1158
      %v8529 = vpop.f32.mrf.mxu0
      %v8530 = vadd.f32 %v8489, %v8529
      %v8531 = vpop.f32.mrf.mxu0
      %v8532 = vadd.f32 %v8491, %v8531
      %v8533 = vpop.f32.mrf.mxu0
      %v8534 = vpop.f32.mrf.mxu0
      %8535 = vdwg.mxu0
      %8536 = vmatprep.subr.bf16.mxu0 %v5467
      %8537 = vmatpush1.bf16.msra.mxu0 %v5466
      %8538 = vmatprep.subr.bf16.mxu0 %v5451
      %8539 = vmatpush1.bf16.msra.mxu0 %v5450
      %8540 = vmatprep.subr.bf16.mxu0 %v5435
      %8541 = vmatpush1.bf16.msra.mxu0 %v5434
      %8542 = vmatprep.subr.bf16.mxu0 %v5419
      %8543 = vmatpush1.bf16.msra.mxu0 %v5418
      %8544 = vmatprep.subr.bf16.mxu0 %v5403
      %8545 = vmatpush1.bf16.msra.mxu0 %v5402
      %8546 = vmatprep.subr.bf16.mxu0 %v5387
      %8547 = vmatpush1.bf16.msra.mxu0 %v5386
      %8548 = vmatprep.subr.bf16.mxu0 %v5371
      %8549 = vmatpush1.bf16.msra.mxu0 %v5370
      %8550 = vmatprep.subr.bf16.mxu0 %v5355
      %8551 = vmatpush1.bf16.msra.mxu0 %v5354
      %8552 = vmatprep.subr.bf16.mxu0 %v5595
      %8553 = vmatpush2.bf16.msra.mxu0 %v5594
      %8554 = vmatprep.subr.bf16.mxu0 %v5579
      %8555 = vmatpush2.bf16.msra.mxu0 %v5578
      %8556 = vmatprep.subr.bf16.mxu0 %v5563
      %8557 = vmatpush2.bf16.msra.mxu0 %v5562
      %8558 = vmatprep.subr.bf16.mxu0 %v5547
      %8559 = vmatpush2.bf16.msra.mxu0 %v5546
      %8560 = vmatprep.subr.bf16.mxu0 %v5531
      %8561 = vmatpush2.bf16.msra.mxu0 %v5530
      %8562 = vmatprep.subr.bf16.mxu0 %v5515
      %8563 = vmatpush2.bf16.msra.mxu0 %v5514
      %8564 = vmatprep.subr.bf16.mxu0 %v5499
      %8565 = vmatpush2.bf16.msra.mxu0 %v5498
      %8566 = vmatprep.subr.bf16.mxu0 %v5483
      %8567 = vmatpush2.bf16.msra.mxu0 %v5482
      %8568 = vmatprep.mubr.bf16.mxu0 %v1153
      %8569 = vmatmul.mubr.bf16.gmra.mxu0 %v1152
      %v8570 = vpop.f32.mrf.mxu0
      %v8571 = vadd.f32 %v2247, %v8570
      %v8572 = vpop.f32.mrf.mxu0
      %v8573 = vadd.f32 %v2251, %v8572
      %v8574 = vpop.f32.mrf.mxu0
      %v8575 = vpop.f32.mrf.mxu0
      %8576 = vdwg.mxu0
      %8577 = vmatprep.subr.bf16.mxu0 %v5723
      %8578 = vmatpush1.bf16.msra.mxu0 %v5722
      %8579 = vmatprep.subr.bf16.mxu0 %v5707
      %8580 = vmatpush1.bf16.msra.mxu0 %v5706
      %8581 = vmatprep.subr.bf16.mxu0 %v5691
      %8582 = vmatpush1.bf16.msra.mxu0 %v5690
      %8583 = vmatprep.subr.bf16.mxu0 %v5675
      %8584 = vmatpush1.bf16.msra.mxu0 %v5674
      %8585 = vmatprep.subr.bf16.mxu0 %v5659
      %8586 = vmatpush1.bf16.msra.mxu0 %v5658
      %8587 = vmatprep.subr.bf16.mxu0 %v5643
      %8588 = vmatpush1.bf16.msra.mxu0 %v5642
      %8589 = vmatprep.subr.bf16.mxu0 %v5627
      %8590 = vmatpush1.bf16.msra.mxu0 %v5626
      %8591 = vmatprep.subr.bf16.mxu0 %v5611
      %8592 = vmatpush1.bf16.msra.mxu0 %v5610
      %8593 = vmatprep.subr.bf16.mxu0 %v5851
      %8594 = vmatpush2.bf16.msra.mxu0 %v5850
      %8595 = vmatprep.subr.bf16.mxu0 %v5835
      %8596 = vmatpush2.bf16.msra.mxu0 %v5834
      %8597 = vmatprep.subr.bf16.mxu0 %v5819
      %8598 = vmatpush2.bf16.msra.mxu0 %v5818
      %8599 = vmatprep.subr.bf16.mxu0 %v5803
      %8600 = vmatpush2.bf16.msra.mxu0 %v5802
      %8601 = vmatprep.subr.bf16.mxu0 %v5787
      %8602 = vmatpush2.bf16.msra.mxu0 %v5786
      %8603 = vmatprep.subr.bf16.mxu0 %v5771
      %8604 = vmatpush2.bf16.msra.mxu0 %v5770
      %8605 = vmatprep.subr.bf16.mxu0 %v5755
      %8606 = vmatpush2.bf16.msra.mxu0 %v5754
      %8607 = vmatprep.subr.bf16.mxu0 %v5739
      %8608 = vmatpush2.bf16.msra.mxu0 %v5738
      %8609 = vmatprep.mubr.bf16.mxu0 %v1155
      %8610 = vmatmul.mubr.bf16.gmra.mxu0 %v1154
      %v8611 = vpop.f32.mrf.mxu0
      %v8612 = vadd.f32 %v8571, %v8611
      %v8613 = vpop.f32.mrf.mxu0
      %v8614 = vadd.f32 %v8573, %v8613
      %v8615 = vpop.f32.mrf.mxu0
      %v8616 = vpop.f32.mrf.mxu0
      %8617 = vdwg.mxu0
      %8618 = vmatprep.subr.bf16.mxu0 %v5979
      %8619 = vmatpush1.bf16.msra.mxu0 %v5978
      %8620 = vmatprep.subr.bf16.mxu0 %v5963
      %8621 = vmatpush1.bf16.msra.mxu0 %v5962
      %8622 = vmatprep.subr.bf16.mxu0 %v5947
      %8623 = vmatpush1.bf16.msra.mxu0 %v5946
      %8624 = vmatprep.subr.bf16.mxu0 %v5931
      %8625 = vmatpush1.bf16.msra.mxu0 %v5930
      %8626 = vmatprep.subr.bf16.mxu0 %v5915
      %8627 = vmatpush1.bf16.msra.mxu0 %v5914
      %8628 = vmatprep.subr.bf16.mxu0 %v5899
      %8629 = vmatpush1.bf16.msra.mxu0 %v5898
      %8630 = vmatprep.subr.bf16.mxu0 %v5883
      %8631 = vmatpush1.bf16.msra.mxu0 %v5882
      %8632 = vmatprep.subr.bf16.mxu0 %v5867
      %8633 = vmatpush1.bf16.msra.mxu0 %v5866
      %8634 = vmatprep.subr.bf16.mxu0 %v6107
      %8635 = vmatpush2.bf16.msra.mxu0 %v6106
      %8636 = vmatprep.subr.bf16.mxu0 %v6091
      %8637 = vmatpush2.bf16.msra.mxu0 %v6090
      %8638 = vmatprep.subr.bf16.mxu0 %v6075
      %8639 = vmatpush2.bf16.msra.mxu0 %v6074
      %8640 = vmatprep.subr.bf16.mxu0 %v6059
      %8641 = vmatpush2.bf16.msra.mxu0 %v6058
      %8642 = vmatprep.subr.bf16.mxu0 %v6043
      %8643 = vmatpush2.bf16.msra.mxu0 %v6042
      %8644 = vmatprep.subr.bf16.mxu0 %v6027
      %8645 = vmatpush2.bf16.msra.mxu0 %v6026
      %8646 = vmatprep.subr.bf16.mxu0 %v6011
      %8647 = vmatpush2.bf16.msra.mxu0 %v6010
      %8648 = vmatprep.subr.bf16.mxu0 %v5995
      %8649 = vmatpush2.bf16.msra.mxu0 %v5994
      %8650 = vmatprep.mubr.bf16.mxu0 %v1157
      %8651 = vmatmul.mubr.bf16.gmra.mxu0 %v1156
      %v8652 = vpop.f32.mrf.mxu0
      %v8653 = vadd.f32 %v8612, %v8652
      %v8654 = vpop.f32.mrf.mxu0
      %v8655 = vadd.f32 %v8614, %v8654
      %v8656 = vpop.f32.mrf.mxu0
      %v8657 = vpop.f32.mrf.mxu0
      %8658 = vdwg.mxu0
      %8659 = vmatprep.subr.bf16.mxu0 %v6235
      %8660 = vmatpush1.bf16.msra.mxu0 %v6234
      %8661 = vmatprep.subr.bf16.mxu0 %v6219
      %8662 = vmatpush1.bf16.msra.mxu0 %v6218
      %8663 = vmatprep.subr.bf16.mxu0 %v6203
      %8664 = vmatpush1.bf16.msra.mxu0 %v6202
      %8665 = vmatprep.subr.bf16.mxu0 %v6187
      %8666 = vmatpush1.bf16.msra.mxu0 %v6186
      %8667 = vmatprep.subr.bf16.mxu0 %v6171
      %8668 = vmatpush1.bf16.msra.mxu0 %v6170
      %8669 = vmatprep.subr.bf16.mxu0 %v6155
      %8670 = vmatpush1.bf16.msra.mxu0 %v6154
      %8671 = vmatprep.subr.bf16.mxu0 %v6139
      %8672 = vmatpush1.bf16.msra.mxu0 %v6138
      %8673 = vmatprep.subr.bf16.mxu0 %v6123
      %8674 = vmatpush1.bf16.msra.mxu0 %v6122
      %8675 = vmatprep.subr.bf16.mxu0 %v6363
      %8676 = vmatpush2.bf16.msra.mxu0 %v6362
      %8677 = vmatprep.subr.bf16.mxu0 %v6347
      %8678 = vmatpush2.bf16.msra.mxu0 %v6346
      %8679 = vmatprep.subr.bf16.mxu0 %v6331
      %8680 = vmatpush2.bf16.msra.mxu0 %v6330
      %8681 = vmatprep.subr.bf16.mxu0 %v6315
      %8682 = vmatpush2.bf16.msra.mxu0 %v6314
      %8683 = vmatprep.subr.bf16.mxu0 %v6299
      %8684 = vmatpush2.bf16.msra.mxu0 %v6298
      %8685 = vmatprep.subr.bf16.mxu0 %v6283
      %8686 = vmatpush2.bf16.msra.mxu0 %v6282
      %8687 = vmatprep.subr.bf16.mxu0 %v6267
      %8688 = vmatpush2.bf16.msra.mxu0 %v6266
      %8689 = vmatprep.subr.bf16.mxu0 %v6251
      %8690 = vmatpush2.bf16.msra.mxu0 %v6250
      %8691 = vmatprep.mubr.bf16.mxu0 %v1159
      %8692 = vmatmul.mubr.bf16.gmra.mxu0 %v1158
      %v8693 = vpop.f32.mrf.mxu0
      %v8694 = vadd.f32 %v8653, %v8693
      %v8695 = vpop.f32.mrf.mxu0
      %v8696 = vadd.f32 %v8655, %v8695
      %v8697 = vpop.f32.mrf.mxu0
      %v8698 = vpop.f32.mrf.mxu0
      %8699 = vdwg.mxu0
      %v8700 = vmax.f32 %v7546, 0.0
      %v8701 = vmax.f32 %v7548, 0.0
      %v8702 = vmax.f32 %v7710, 0.0
      %v8703 = vmax.f32 %v7712, 0.0
      %v8704 = vmax.f32 %v7874, 0.0
      %v8705 = vmax.f32 %v7876, 0.0
      %v8706 = vmax.f32 %v8038, 0.0
      %v8707 = vmax.f32 %v8040, 0.0
      %v8708 = vmax.f32 %v8202, 0.0
      %v8709 = vmax.f32 %v8204, 0.0
      %v8710 = vmax.f32 %v8366, 0.0
      %v8711 = vmax.f32 %v8368, 0.0
      %v8712 = vmax.f32 %v8530, 0.0
      %v8713 = vmax.f32 %v8532, 0.0
      %v8714 = vmax.f32 %v8694, 0.0
      %v8715 = vmax.f32 %v8696, 0.0
      %v8716 = vpack.c.bf16 %v8700, %v8700
      %v8717 = vpack.c.bf16 %v8701, %v8701
      %v8718 = vpack.c.bf16 %v8702, %v8702
      %v8719 = vpack.c.bf16 %v8703, %v8703
      %v8720 = vpack.c.bf16 %v8704, %v8704
      %v8721 = vpack.c.bf16 %v8705, %v8705
      %v8722 = vpack.c.bf16 %v8706, %v8706
      %v8723 = vpack.c.bf16 %v8707, %v8707
      %v8724 = vpack.c.bf16 %v8708, %v8708
      %v8725 = vpack.c.bf16 %v8709, %v8709
      %v8726 = vpack.c.bf16 %v8710, %v8710
      %v8727 = vpack.c.bf16 %v8711, %v8711
      %v8728 = vpack.c.bf16 %v8712, %v8712
      %v8729 = vpack.c.bf16 %v8713, %v8713
      %v8730 = vpack.c.bf16 %v8714, %v8714
      %v8731 = vpack.c.bf16 %v8715, %v8715
      %v8732 = vld [vmem:[#allocation12] sm:$0xf]
      %v8733 = vld [vmem:[#allocation12 + $0x4] sm:$0xf]
      %v8734 = vld [vmem:[#allocation12 + $0x8] sm:$0xf]
      %v8735 = vld [vmem:[#allocation12 + $0xc] sm:$0xf]
      %v8736 = vld [vmem:[#allocation12 + $0x10] sm:$0xf]
      %v8737 = vld [vmem:[#allocation12 + $0x14] sm:$0xf]
      %v8738 = vld [vmem:[#allocation12 + $0x18] sm:$0xf]
      %v8739 = vld [vmem:[#allocation12 + $0x1c] sm:$0xf]
      %v8740 = vld [vmem:[#allocation12 + $0x20] sm:$0xf]
      %v8741 = vld [vmem:[#allocation12 + $0x24] sm:$0xf]
      %v8742 = vld [vmem:[#allocation12 + $0x28] sm:$0xf]
      %v8743 = vld [vmem:[#allocation12 + $0x2c] sm:$0xf]
      %v8744 = vld [vmem:[#allocation12 + $0x30] sm:$0xf]
      %v8745 = vld [vmem:[#allocation12 + $0x34] sm:$0xf]
      %v8746 = vld [vmem:[#allocation12 + $0x38] sm:$0xf]
      %v8747 = vld [vmem:[#allocation12 + $0x3c] sm:$0xf]
      %v8748 = vld [vmem:[#allocation12 + $0x40] sm:$0xf]
      %v8749 = vld [vmem:[#allocation12 + $0x44] sm:$0xf]
      %v8750 = vld [vmem:[#allocation12 + $0x48] sm:$0xf]
      %v8751 = vld [vmem:[#allocation12 + $0x4c] sm:$0xf]
      %v8752 = vld [vmem:[#allocation12 + $0x50] sm:$0xf]
      %v8753 = vld [vmem:[#allocation12 + $0x54] sm:$0xf]
      %v8754 = vld [vmem:[#allocation12 + $0x58] sm:$0xf]
      %v8755 = vld [vmem:[#allocation12 + $0x5c] sm:$0xf]
      %v8756 = vld [vmem:[#allocation12 + $0x60] sm:$0xf]
      %v8757 = vld [vmem:[#allocation12 + $0x64] sm:$0xf]
      %v8758 = vld [vmem:[#allocation12 + $0x68] sm:$0xf]
      %v8759 = vld [vmem:[#allocation12 + $0x6c] sm:$0xf]
      %v8760 = vld [vmem:[#allocation12 + $0x70] sm:$0xf]
      %v8761 = vld [vmem:[#allocation12 + $0x74] sm:$0xf]
      %v8762 = vld [vmem:[#allocation12 + $0x78] sm:$0xf]
      %v8763 = vld [vmem:[#allocation12 + $0x7c] sm:$0xf]
      %v8764 = vld [vmem:[#allocation12 + $0x80] sm:$0xf]
      %v8765 = vld [vmem:[#allocation12 + $0x84] sm:$0xf]
      %v8766 = vld [vmem:[#allocation12 + $0x88] sm:$0xf]
      %v8767 = vld [vmem:[#allocation12 + $0x8c] sm:$0xf]
      %v8768 = vld [vmem:[#allocation12 + $0x90] sm:$0xf]
      %v8769 = vld [vmem:[#allocation12 + $0x94] sm:$0xf]
      %v8770 = vld [vmem:[#allocation12 + $0x98] sm:$0xf]
      %v8771 = vld [vmem:[#allocation12 + $0x9c] sm:$0xf]
      %v8772 = vld [vmem:[#allocation12 + $0xa0] sm:$0xf]
      %v8773 = vld [vmem:[#allocation12 + $0xa4] sm:$0xf]
      %v8774 = vld [vmem:[#allocation12 + $0xa8] sm:$0xf]
      %v8775 = vld [vmem:[#allocation12 + $0xac] sm:$0xf]
      %v8776 = vld [vmem:[#allocation12 + $0xb0] sm:$0xf]
      %v8777 = vld [vmem:[#allocation12 + $0xb4] sm:$0xf]
      %v8778 = vld [vmem:[#allocation12 + $0xb8] sm:$0xf]
      %v8779 = vld [vmem:[#allocation12 + $0xbc] sm:$0xf]
      %v8780 = vld [vmem:[#allocation12 + $0xc0] sm:$0xf]
      %v8781 = vld [vmem:[#allocation12 + $0xc4] sm:$0xf]
      %v8782 = vld [vmem:[#allocation12 + $0xc8] sm:$0xf]
      %v8783 = vld [vmem:[#allocation12 + $0xcc] sm:$0xf]
      %v8784 = vld [vmem:[#allocation12 + $0xd0] sm:$0xf]
      %v8785 = vld [vmem:[#allocation12 + $0xd4] sm:$0xf]
      %v8786 = vld [vmem:[#allocation12 + $0xd8] sm:$0xf]
      %v8787 = vld [vmem:[#allocation12 + $0xdc] sm:$0xf]
      %v8788 = vld [vmem:[#allocation12 + $0xe0] sm:$0xf]
      %v8789 = vld [vmem:[#allocation12 + $0xe4] sm:$0xf]
      %v8790 = vld [vmem:[#allocation12 + $0xe8] sm:$0xf]
      %v8791 = vld [vmem:[#allocation12 + $0xec] sm:$0xf]
      %v8792 = vld [vmem:[#allocation12 + $0xf0] sm:$0xf]
      %v8793 = vld [vmem:[#allocation12 + $0xf4] sm:$0xf]
      %v8794 = vld [vmem:[#allocation12 + $0xf8] sm:$0xf]
      %v8795 = vld [vmem:[#allocation12 + $0xfc] sm:$0xf]
      %v8796 = vld [vmem:[#allocation12 + $0x100] sm:$0xf]
      %v8797 = vld [vmem:[#allocation12 + $0x104] sm:$0xf]
      %v8798 = vld [vmem:[#allocation12 + $0x108] sm:$0xf]
      %v8799 = vld [vmem:[#allocation12 + $0x10c] sm:$0xf]
      %v8800 = vld [vmem:[#allocation12 + $0x110] sm:$0xf]
      %v8801 = vld [vmem:[#allocation12 + $0x114] sm:$0xf]
      %v8802 = vld [vmem:[#allocation12 + $0x118] sm:$0xf]
      %v8803 = vld [vmem:[#allocation12 + $0x11c] sm:$0xf]
      %v8804 = vld [vmem:[#allocation12 + $0x120] sm:$0xf]
      %v8805 = vld [vmem:[#allocation12 + $0x124] sm:$0xf]
      %v8806 = vld [vmem:[#allocation12 + $0x128] sm:$0xf]
      %v8807 = vld [vmem:[#allocation12 + $0x12c] sm:$0xf]
      %v8808 = vld [vmem:[#allocation12 + $0x130] sm:$0xf]
      %v8809 = vld [vmem:[#allocation12 + $0x134] sm:$0xf]
      %v8810 = vld [vmem:[#allocation12 + $0x138] sm:$0xf]
      %v8811 = vld [vmem:[#allocation12 + $0x13c] sm:$0xf]
      %v8812 = vld [vmem:[#allocation12 + $0x140] sm:$0xf]
      %v8813 = vld [vmem:[#allocation12 + $0x144] sm:$0xf]
      %v8814 = vld [vmem:[#allocation12 + $0x148] sm:$0xf]
      %v8815 = vld [vmem:[#allocation12 + $0x14c] sm:$0xf]
      %v8816 = vld [vmem:[#allocation12 + $0x150] sm:$0xf]
      %v8817 = vld [vmem:[#allocation12 + $0x154] sm:$0xf]
      %v8818 = vld [vmem:[#allocation12 + $0x158] sm:$0xf]
      %v8819 = vld [vmem:[#allocation12 + $0x15c] sm:$0xf]
      %v8820 = vld [vmem:[#allocation12 + $0x160] sm:$0xf]
      %v8821 = vld [vmem:[#allocation12 + $0x164] sm:$0xf]
      %v8822 = vld [vmem:[#allocation12 + $0x168] sm:$0xf]
      %v8823 = vld [vmem:[#allocation12 + $0x16c] sm:$0xf]
      %v8824 = vld [vmem:[#allocation12 + $0x170] sm:$0xf]
      %v8825 = vld [vmem:[#allocation12 + $0x174] sm:$0xf]
      %v8826 = vld [vmem:[#allocation12 + $0x178] sm:$0xf]
      %v8827 = vld [vmem:[#allocation12 + $0x17c] sm:$0xf]
      %v8828 = vld [vmem:[#allocation12 + $0x180] sm:$0xf]
      %v8829 = vld [vmem:[#allocation12 + $0x184] sm:$0xf]
      %v8830 = vld [vmem:[#allocation12 + $0x188] sm:$0xf]
      %v8831 = vld [vmem:[#allocation12 + $0x18c] sm:$0xf]
      %v8832 = vld [vmem:[#allocation12 + $0x190] sm:$0xf]
      %v8833 = vld [vmem:[#allocation12 + $0x194] sm:$0xf]
      %v8834 = vld [vmem:[#allocation12 + $0x198] sm:$0xf]
      %v8835 = vld [vmem:[#allocation12 + $0x19c] sm:$0xf]
      %v8836 = vld [vmem:[#allocation12 + $0x1a0] sm:$0xf]
      %v8837 = vld [vmem:[#allocation12 + $0x1a4] sm:$0xf]
      %v8838 = vld [vmem:[#allocation12 + $0x1a8] sm:$0xf]
      %v8839 = vld [vmem:[#allocation12 + $0x1ac] sm:$0xf]
      %v8840 = vld [vmem:[#allocation12 + $0x1b0] sm:$0xf]
      %v8841 = vld [vmem:[#allocation12 + $0x1b4] sm:$0xf]
      %v8842 = vld [vmem:[#allocation12 + $0x1b8] sm:$0xf]
      %v8843 = vld [vmem:[#allocation12 + $0x1bc] sm:$0xf]
      %v8844 = vld [vmem:[#allocation12 + $0x1c0] sm:$0xf]
      %v8845 = vld [vmem:[#allocation12 + $0x1c4] sm:$0xf]
      %v8846 = vld [vmem:[#allocation12 + $0x1c8] sm:$0xf]
      %v8847 = vld [vmem:[#allocation12 + $0x1cc] sm:$0xf]
      %v8848 = vld [vmem:[#allocation12 + $0x1d0] sm:$0xf]
      %v8849 = vld [vmem:[#allocation12 + $0x1d4] sm:$0xf]
      %v8850 = vld [vmem:[#allocation12 + $0x1d8] sm:$0xf]
      %v8851 = vld [vmem:[#allocation12 + $0x1dc] sm:$0xf]
      %v8852 = vld [vmem:[#allocation12 + $0x1e0] sm:$0xf]
      %v8853 = vld [vmem:[#allocation12 + $0x1e4] sm:$0xf]
      %v8854 = vld [vmem:[#allocation12 + $0x1e8] sm:$0xf]
      %v8855 = vld [vmem:[#allocation12 + $0x1ec] sm:$0xf]
      %v8856 = vld [vmem:[#allocation12 + $0x1f0] sm:$0xf]
      %v8857 = vld [vmem:[#allocation12 + $0x1f4] sm:$0xf]
      %v8858 = vld [vmem:[#allocation12 + $0x1f8] sm:$0xf]
      %v8859 = vld [vmem:[#allocation12 + $0x1fc] sm:$0xf]
      %v8860 = vld [vmem:[#allocation12 + $0x200] sm:$0xf]
      %v8861 = vld [vmem:[#allocation12 + $0x204] sm:$0xf]
      %v8862 = vld [vmem:[#allocation12 + $0x208] sm:$0xf]
      %v8863 = vld [vmem:[#allocation12 + $0x20c] sm:$0xf]
      %v8864 = vld [vmem:[#allocation12 + $0x210] sm:$0xf]
      %v8865 = vld [vmem:[#allocation12 + $0x214] sm:$0xf]
      %v8866 = vld [vmem:[#allocation12 + $0x218] sm:$0xf]
      %v8867 = vld [vmem:[#allocation12 + $0x21c] sm:$0xf]
      %v8868 = vld [vmem:[#allocation12 + $0x220] sm:$0xf]
      %v8869 = vld [vmem:[#allocation12 + $0x224] sm:$0xf]
      %v8870 = vld [vmem:[#allocation12 + $0x228] sm:$0xf]
      %v8871 = vld [vmem:[#allocation12 + $0x22c] sm:$0xf]
      %v8872 = vld [vmem:[#allocation12 + $0x230] sm:$0xf]
      %v8873 = vld [vmem:[#allocation12 + $0x234] sm:$0xf]
      %v8874 = vld [vmem:[#allocation12 + $0x238] sm:$0xf]
      %v8875 = vld [vmem:[#allocation12 + $0x23c] sm:$0xf]
      %v8876 = vld [vmem:[#allocation12 + $0x240] sm:$0xf]
      %v8877 = vld [vmem:[#allocation12 + $0x244] sm:$0xf]
      %v8878 = vld [vmem:[#allocation12 + $0x248] sm:$0xf]
      %v8879 = vld [vmem:[#allocation12 + $0x24c] sm:$0xf]
      %v8880 = vld [vmem:[#allocation12 + $0x250] sm:$0xf]
      %v8881 = vld [vmem:[#allocation12 + $0x254] sm:$0xf]
      %v8882 = vld [vmem:[#allocation12 + $0x258] sm:$0xf]
      %v8883 = vld [vmem:[#allocation12 + $0x25c] sm:$0xf]
      %v8884 = vld [vmem:[#allocation12 + $0x260] sm:$0xf]
      %v8885 = vld [vmem:[#allocation12 + $0x264] sm:$0xf]
      %v8886 = vld [vmem:[#allocation12 + $0x268] sm:$0xf]
      %v8887 = vld [vmem:[#allocation12 + $0x26c] sm:$0xf]
      %v8888 = vld [vmem:[#allocation12 + $0x270] sm:$0xf]
      %v8889 = vld [vmem:[#allocation12 + $0x274] sm:$0xf]
      %v8890 = vld [vmem:[#allocation12 + $0x278] sm:$0xf]
      %v8891 = vld [vmem:[#allocation12 + $0x27c] sm:$0xf]
      %v8892 = vld [vmem:[#allocation12 + $0x280] sm:$0xf]
      %v8893 = vld [vmem:[#allocation12 + $0x284] sm:$0xf]
      %v8894 = vld [vmem:[#allocation12 + $0x288] sm:$0xf]
      %v8895 = vld [vmem:[#allocation12 + $0x28c] sm:$0xf]
      %v8896 = vld [vmem:[#allocation12 + $0x290] sm:$0xf]
      %v8897 = vld [vmem:[#allocation12 + $0x294] sm:$0xf]
      %v8898 = vld [vmem:[#allocation12 + $0x298] sm:$0xf]
      %v8899 = vld [vmem:[#allocation12 + $0x29c] sm:$0xf]
      %v8900 = vld [vmem:[#allocation12 + $0x2a0] sm:$0xf]
      %v8901 = vld [vmem:[#allocation12 + $0x2a4] sm:$0xf]
      %v8902 = vld [vmem:[#allocation12 + $0x2a8] sm:$0xf]
      %v8903 = vld [vmem:[#allocation12 + $0x2ac] sm:$0xf]
      %v8904 = vld [vmem:[#allocation12 + $0x2b0] sm:$0xf]
      %v8905 = vld [vmem:[#allocation12 + $0x2b4] sm:$0xf]
      %v8906 = vld [vmem:[#allocation12 + $0x2b8] sm:$0xf]
      %v8907 = vld [vmem:[#allocation12 + $0x2bc] sm:$0xf]
      %v8908 = vld [vmem:[#allocation12 + $0x2c0] sm:$0xf]
      %v8909 = vld [vmem:[#allocation12 + $0x2c4] sm:$0xf]
      %v8910 = vld [vmem:[#allocation12 + $0x2c8] sm:$0xf]
      %v8911 = vld [vmem:[#allocation12 + $0x2cc] sm:$0xf]
      %v8912 = vld [vmem:[#allocation12 + $0x2d0] sm:$0xf]
      %v8913 = vld [vmem:[#allocation12 + $0x2d4] sm:$0xf]
      %v8914 = vld [vmem:[#allocation12 + $0x2d8] sm:$0xf]
      %v8915 = vld [vmem:[#allocation12 + $0x2dc] sm:$0xf]
      %v8916 = vld [vmem:[#allocation12 + $0x2e0] sm:$0xf]
      %v8917 = vld [vmem:[#allocation12 + $0x2e4] sm:$0xf]
      %v8918 = vld [vmem:[#allocation12 + $0x2e8] sm:$0xf]
      %v8919 = vld [vmem:[#allocation12 + $0x2ec] sm:$0xf]
      %v8920 = vld [vmem:[#allocation12 + $0x2f0] sm:$0xf]
      %v8921 = vld [vmem:[#allocation12 + $0x2f4] sm:$0xf]
      %v8922 = vld [vmem:[#allocation12 + $0x2f8] sm:$0xf]
      %v8923 = vld [vmem:[#allocation12 + $0x2fc] sm:$0xf]
      %v8924 = vld [vmem:[#allocation12 + $0x300] sm:$0xf]
      %v8925 = vld [vmem:[#allocation12 + $0x304] sm:$0xf]
      %v8926 = vld [vmem:[#allocation12 + $0x308] sm:$0xf]
      %v8927 = vld [vmem:[#allocation12 + $0x30c] sm:$0xf]
      %v8928 = vld [vmem:[#allocation12 + $0x310] sm:$0xf]
      %v8929 = vld [vmem:[#allocation12 + $0x314] sm:$0xf]
      %v8930 = vld [vmem:[#allocation12 + $0x318] sm:$0xf]
      %v8931 = vld [vmem:[#allocation12 + $0x31c] sm:$0xf]
      %v8932 = vld [vmem:[#allocation12 + $0x320] sm:$0xf]
      %v8933 = vld [vmem:[#allocation12 + $0x324] sm:$0xf]
      %v8934 = vld [vmem:[#allocation12 + $0x328] sm:$0xf]
      %v8935 = vld [vmem:[#allocation12 + $0x32c] sm:$0xf]
      %v8936 = vld [vmem:[#allocation12 + $0x330] sm:$0xf]
      %v8937 = vld [vmem:[#allocation12 + $0x334] sm:$0xf]
      %v8938 = vld [vmem:[#allocation12 + $0x338] sm:$0xf]
      %v8939 = vld [vmem:[#allocation12 + $0x33c] sm:$0xf]
      %v8940 = vld [vmem:[#allocation12 + $0x340] sm:$0xf]
      %v8941 = vld [vmem:[#allocation12 + $0x344] sm:$0xf]
      %v8942 = vld [vmem:[#allocation12 + $0x348] sm:$0xf]
      %v8943 = vld [vmem:[#allocation12 + $0x34c] sm:$0xf]
      %v8944 = vld [vmem:[#allocation12 + $0x350] sm:$0xf]
      %v8945 = vld [vmem:[#allocation12 + $0x354] sm:$0xf]
      %v8946 = vld [vmem:[#allocation12 + $0x358] sm:$0xf]
      %v8947 = vld [vmem:[#allocation12 + $0x35c] sm:$0xf]
      %v8948 = vld [vmem:[#allocation12 + $0x360] sm:$0xf]
      %v8949 = vld [vmem:[#allocation12 + $0x364] sm:$0xf]
      %v8950 = vld [vmem:[#allocation12 + $0x368] sm:$0xf]
      %v8951 = vld [vmem:[#allocation12 + $0x36c] sm:$0xf]
      %v8952 = vld [vmem:[#allocation12 + $0x370] sm:$0xf]
      %v8953 = vld [vmem:[#allocation12 + $0x374] sm:$0xf]
      %v8954 = vld [vmem:[#allocation12 + $0x378] sm:$0xf]
      %v8955 = vld [vmem:[#allocation12 + $0x37c] sm:$0xf]
      %v8956 = vld [vmem:[#allocation12 + $0x380] sm:$0xf]
      %v8957 = vld [vmem:[#allocation12 + $0x384] sm:$0xf]
      %v8958 = vld [vmem:[#allocation12 + $0x388] sm:$0xf]
      %v8959 = vld [vmem:[#allocation12 + $0x38c] sm:$0xf]
      %v8960 = vld [vmem:[#allocation12 + $0x390] sm:$0xf]
      %v8961 = vld [vmem:[#allocation12 + $0x394] sm:$0xf]
      %v8962 = vld [vmem:[#allocation12 + $0x398] sm:$0xf]
      %v8963 = vld [vmem:[#allocation12 + $0x39c] sm:$0xf]
      %v8964 = vld [vmem:[#allocation12 + $0x3a0] sm:$0xf]
      %v8965 = vld [vmem:[#allocation12 + $0x3a4] sm:$0xf]
      %v8966 = vld [vmem:[#allocation12 + $0x3a8] sm:$0xf]
      %v8967 = vld [vmem:[#allocation12 + $0x3ac] sm:$0xf]
      %v8968 = vld [vmem:[#allocation12 + $0x3b0] sm:$0xf]
      %v8969 = vld [vmem:[#allocation12 + $0x3b4] sm:$0xf]
      %v8970 = vld [vmem:[#allocation12 + $0x3b8] sm:$0xf]
      %v8971 = vld [vmem:[#allocation12 + $0x3bc] sm:$0xf]
      %v8972 = vld [vmem:[#allocation12 + $0x3c0] sm:$0xf]
      %v8973 = vld [vmem:[#allocation12 + $0x3c4] sm:$0xf]
      %v8974 = vld [vmem:[#allocation12 + $0x3c8] sm:$0xf]
      %v8975 = vld [vmem:[#allocation12 + $0x3cc] sm:$0xf]
      %v8976 = vld [vmem:[#allocation12 + $0x3d0] sm:$0xf]
      %v8977 = vld [vmem:[#allocation12 + $0x3d4] sm:$0xf]
      %v8978 = vld [vmem:[#allocation12 + $0x3d8] sm:$0xf]
      %v8979 = vld [vmem:[#allocation12 + $0x3dc] sm:$0xf]
      %v8980 = vld [vmem:[#allocation12 + $0x3e0] sm:$0xf]
      %v8981 = vld [vmem:[#allocation12 + $0x3e4] sm:$0xf]
      %v8982 = vld [vmem:[#allocation12 + $0x3e8] sm:$0xf]
      %v8983 = vld [vmem:[#allocation12 + $0x3ec] sm:$0xf]
      %v8984 = vld [vmem:[#allocation12 + $0x3f0] sm:$0xf]
      %v8985 = vld [vmem:[#allocation12 + $0x3f4] sm:$0xf]
      %v8986 = vld [vmem:[#allocation12 + $0x3f8] sm:$0xf]
      %v8987 = vld [vmem:[#allocation12 + $0x3fc] sm:$0xf]
      %v8988 = vld [vmem:[#allocation14] sm:$0x1]
      %v8990 = vlaneseq
      %v8991 = vshrl.u32 %v8990, 7
      %v8992 = vsub.s32 0, %v8991
      %v8993 = vrot.slane %v8988, %v8992
      %v9251 = vunpack.c.l.b16 %v8732
      %v9252 = vunpack.c.l.b16 %v8733
      %v9253 = vunpack.c.l.b16 %v8734
      %v9254 = vunpack.c.l.b16 %v8735
      %v9255 = vunpack.c.l.b16 %v8736
      %v9256 = vunpack.c.l.b16 %v8737
      %v9257 = vunpack.c.l.b16 %v8738
      %v9258 = vunpack.c.l.b16 %v8739
      %v9259 = vunpack.c.l.b16 %v8740
      %v9260 = vunpack.c.l.b16 %v8741
      %v9261 = vunpack.c.l.b16 %v8742
      %v9262 = vunpack.c.l.b16 %v8743
      %v9263 = vunpack.c.l.b16 %v8744
      %v9264 = vunpack.c.l.b16 %v8745
      %v9265 = vunpack.c.l.b16 %v8746
      %v9266 = vunpack.c.l.b16 %v8747
      %v9267 = vunpack.c.l.b16 %v8748
      %v9268 = vunpack.c.l.b16 %v8749
      %v9269 = vunpack.c.l.b16 %v8750
      %v9270 = vunpack.c.l.b16 %v8751
      %v9271 = vunpack.c.l.b16 %v8752
      %v9272 = vunpack.c.l.b16 %v8753
      %v9273 = vunpack.c.l.b16 %v8754
      %v9274 = vunpack.c.l.b16 %v8755
      %v9275 = vunpack.c.l.b16 %v8756
      %v9276 = vunpack.c.l.b16 %v8757
      %v9277 = vunpack.c.l.b16 %v8758
      %v9278 = vunpack.c.l.b16 %v8759
      %v9279 = vunpack.c.l.b16 %v8760
      %v9280 = vunpack.c.l.b16 %v8761
      %v9281 = vunpack.c.l.b16 %v8762
      %v9282 = vunpack.c.l.b16 %v8763
      %v9283 = vunpack.c.l.b16 %v8764
      %v9284 = vunpack.c.l.b16 %v8765
      %v9285 = vunpack.c.l.b16 %v8766
      %v9286 = vunpack.c.l.b16 %v8767
      %v9287 = vunpack.c.l.b16 %v8768
      %v9288 = vunpack.c.l.b16 %v8769
      %v9289 = vunpack.c.l.b16 %v8770
      %v9290 = vunpack.c.l.b16 %v8771
      %v9291 = vunpack.c.l.b16 %v8772
      %v9292 = vunpack.c.l.b16 %v8773
      %v9293 = vunpack.c.l.b16 %v8774
      %v9294 = vunpack.c.l.b16 %v8775
      %v9295 = vunpack.c.l.b16 %v8776
      %v9296 = vunpack.c.l.b16 %v8777
      %v9297 = vunpack.c.l.b16 %v8778
      %v9298 = vunpack.c.l.b16 %v8779
      %v9299 = vunpack.c.l.b16 %v8780
      %v9300 = vunpack.c.l.b16 %v8781
      %v9301 = vunpack.c.l.b16 %v8782
      %v9302 = vunpack.c.l.b16 %v8783
      %v9303 = vunpack.c.l.b16 %v8784
      %v9304 = vunpack.c.l.b16 %v8785
      %v9305 = vunpack.c.l.b16 %v8786
      %v9306 = vunpack.c.l.b16 %v8787
      %v9307 = vunpack.c.l.b16 %v8788
      %v9308 = vunpack.c.l.b16 %v8789
      %v9309 = vunpack.c.l.b16 %v8790
      %v9310 = vunpack.c.l.b16 %v8791
      %v9311 = vunpack.c.l.b16 %v8792
      %v9312 = vunpack.c.l.b16 %v8793
      %v9313 = vunpack.c.l.b16 %v8794
      %v9314 = vunpack.c.l.b16 %v8795
      %v9315 = vunpack.c.l.b16 %v8796
      %v9316 = vunpack.c.l.b16 %v8797
      %v9317 = vunpack.c.l.b16 %v8798
      %v9318 = vunpack.c.l.b16 %v8799
      %v9319 = vunpack.c.l.b16 %v8800
      %v9320 = vunpack.c.l.b16 %v8801
      %v9321 = vunpack.c.l.b16 %v8802
      %v9322 = vunpack.c.l.b16 %v8803
      %v9323 = vunpack.c.l.b16 %v8804
      %v9324 = vunpack.c.l.b16 %v8805
      %v9325 = vunpack.c.l.b16 %v8806
      %v9326 = vunpack.c.l.b16 %v8807
      %v9327 = vunpack.c.l.b16 %v8808
      %v9328 = vunpack.c.l.b16 %v8809
      %v9329 = vunpack.c.l.b16 %v8810
      %v9330 = vunpack.c.l.b16 %v8811
      %v9331 = vunpack.c.l.b16 %v8812
      %v9332 = vunpack.c.l.b16 %v8813
      %v9333 = vunpack.c.l.b16 %v8814
      %v9334 = vunpack.c.l.b16 %v8815
      %v9335 = vunpack.c.l.b16 %v8816
      %v9336 = vunpack.c.l.b16 %v8817
      %v9337 = vunpack.c.l.b16 %v8818
      %v9338 = vunpack.c.l.b16 %v8819
      %v9339 = vunpack.c.l.b16 %v8820
      %v9340 = vunpack.c.l.b16 %v8821
      %v9341 = vunpack.c.l.b16 %v8822
      %v9342 = vunpack.c.l.b16 %v8823
      %v9343 = vunpack.c.l.b16 %v8824
      %v9344 = vunpack.c.l.b16 %v8825
      %v9345 = vunpack.c.l.b16 %v8826
      %v9346 = vunpack.c.l.b16 %v8827
      %v9347 = vunpack.c.l.b16 %v8828
      %v9348 = vunpack.c.l.b16 %v8829
      %v9349 = vunpack.c.l.b16 %v8830
      %v9350 = vunpack.c.l.b16 %v8831
      %v9351 = vunpack.c.l.b16 %v8832
      %v9352 = vunpack.c.l.b16 %v8833
      %v9353 = vunpack.c.l.b16 %v8834
      %v9354 = vunpack.c.l.b16 %v8835
      %v9355 = vunpack.c.l.b16 %v8836
      %v9356 = vunpack.c.l.b16 %v8837
      %v9357 = vunpack.c.l.b16 %v8838
      %v9358 = vunpack.c.l.b16 %v8839
      %v9359 = vunpack.c.l.b16 %v8840
      %v9360 = vunpack.c.l.b16 %v8841
      %v9361 = vunpack.c.l.b16 %v8842
      %v9362 = vunpack.c.l.b16 %v8843
      %v9363 = vunpack.c.l.b16 %v8844
      %v9364 = vunpack.c.l.b16 %v8845
      %v9365 = vunpack.c.l.b16 %v8846
      %v9366 = vunpack.c.l.b16 %v8847
      %v9367 = vunpack.c.l.b16 %v8848
      %v9368 = vunpack.c.l.b16 %v8849
      %v9369 = vunpack.c.l.b16 %v8850
      %v9370 = vunpack.c.l.b16 %v8851
      %v9371 = vunpack.c.l.b16 %v8852
      %v9372 = vunpack.c.l.b16 %v8853
      %v9373 = vunpack.c.l.b16 %v8854
      %v9374 = vunpack.c.l.b16 %v8855
      %v9375 = vunpack.c.l.b16 %v8856
      %v9376 = vunpack.c.l.b16 %v8857
      %v9377 = vunpack.c.l.b16 %v8858
      %v9378 = vunpack.c.l.b16 %v8859
      %v9379 = vunpack.c.l.b16 %v8860
      %v9380 = vunpack.c.l.b16 %v8861
      %v9381 = vunpack.c.l.b16 %v8862
      %v9382 = vunpack.c.l.b16 %v8863
      %v9383 = vunpack.c.l.b16 %v8864
      %v9384 = vunpack.c.l.b16 %v8865
      %v9385 = vunpack.c.l.b16 %v8866
      %v9386 = vunpack.c.l.b16 %v8867
      %v9387 = vunpack.c.l.b16 %v8868
      %v9388 = vunpack.c.l.b16 %v8869
      %v9389 = vunpack.c.l.b16 %v8870
      %v9390 = vunpack.c.l.b16 %v8871
      %v9391 = vunpack.c.l.b16 %v8872
      %v9392 = vunpack.c.l.b16 %v8873
      %v9393 = vunpack.c.l.b16 %v8874
      %v9394 = vunpack.c.l.b16 %v8875
      %v9395 = vunpack.c.l.b16 %v8876
      %v9396 = vunpack.c.l.b16 %v8877
      %v9397 = vunpack.c.l.b16 %v8878
      %v9398 = vunpack.c.l.b16 %v8879
      %v9399 = vunpack.c.l.b16 %v8880
      %v9400 = vunpack.c.l.b16 %v8881
      %v9401 = vunpack.c.l.b16 %v8882
      %v9402 = vunpack.c.l.b16 %v8883
      %v9403 = vunpack.c.l.b16 %v8884
      %v9404 = vunpack.c.l.b16 %v8885
      %v9405 = vunpack.c.l.b16 %v8886
      %v9406 = vunpack.c.l.b16 %v8887
      %v9407 = vunpack.c.l.b16 %v8888
      %v9408 = vunpack.c.l.b16 %v8889
      %v9409 = vunpack.c.l.b16 %v8890
      %v9410 = vunpack.c.l.b16 %v8891
      %v9411 = vunpack.c.l.b16 %v8892
      %v9412 = vunpack.c.l.b16 %v8893
      %v9413 = vunpack.c.l.b16 %v8894
      %v9414 = vunpack.c.l.b16 %v8895
      %v9415 = vunpack.c.l.b16 %v8896
      %v9416 = vunpack.c.l.b16 %v8897
      %v9417 = vunpack.c.l.b16 %v8898
      %v9418 = vunpack.c.l.b16 %v8899
      %v9419 = vunpack.c.l.b16 %v8900
      %v9420 = vunpack.c.l.b16 %v8901
      %v9421 = vunpack.c.l.b16 %v8902
      %v9422 = vunpack.c.l.b16 %v8903
      %v9423 = vunpack.c.l.b16 %v8904
      %v9424 = vunpack.c.l.b16 %v8905
      %v9425 = vunpack.c.l.b16 %v8906
      %v9426 = vunpack.c.l.b16 %v8907
      %v9427 = vunpack.c.l.b16 %v8908
      %v9428 = vunpack.c.l.b16 %v8909
      %v9429 = vunpack.c.l.b16 %v8910
      %v9430 = vunpack.c.l.b16 %v8911
      %v9431 = vunpack.c.l.b16 %v8912
      %v9432 = vunpack.c.l.b16 %v8913
      %v9433 = vunpack.c.l.b16 %v8914
      %v9434 = vunpack.c.l.b16 %v8915
      %v9435 = vunpack.c.l.b16 %v8916
      %v9436 = vunpack.c.l.b16 %v8917
      %v9437 = vunpack.c.l.b16 %v8918
      %v9438 = vunpack.c.l.b16 %v8919
      %v9439 = vunpack.c.l.b16 %v8920
      %v9440 = vunpack.c.l.b16 %v8921
      %v9441 = vunpack.c.l.b16 %v8922
      %v9442 = vunpack.c.l.b16 %v8923
      %v9443 = vunpack.c.l.b16 %v8924
      %v9444 = vunpack.c.l.b16 %v8925
      %v9445 = vunpack.c.l.b16 %v8926
      %v9446 = vunpack.c.l.b16 %v8927
      %v9447 = vunpack.c.l.b16 %v8928
      %v9448 = vunpack.c.l.b16 %v8929
      %v9449 = vunpack.c.l.b16 %v8930
      %v9450 = vunpack.c.l.b16 %v8931
      %v9451 = vunpack.c.l.b16 %v8932
      %v9452 = vunpack.c.l.b16 %v8933
      %v9453 = vunpack.c.l.b16 %v8934
      %v9454 = vunpack.c.l.b16 %v8935
      %v9455 = vunpack.c.l.b16 %v8936
      %v9456 = vunpack.c.l.b16 %v8937
      %v9457 = vunpack.c.l.b16 %v8938
      %v9458 = vunpack.c.l.b16 %v8939
      %v9459 = vunpack.c.l.b16 %v8940
      %v9460 = vunpack.c.l.b16 %v8941
      %v9461 = vunpack.c.l.b16 %v8942
      %v9462 = vunpack.c.l.b16 %v8943
      %v9463 = vunpack.c.l.b16 %v8944
      %v9464 = vunpack.c.l.b16 %v8945
      %v9465 = vunpack.c.l.b16 %v8946
      %v9466 = vunpack.c.l.b16 %v8947
      %v9467 = vunpack.c.l.b16 %v8948
      %v9468 = vunpack.c.l.b16 %v8949
      %v9469 = vunpack.c.l.b16 %v8950
      %v9470 = vunpack.c.l.b16 %v8951
      %v9471 = vunpack.c.l.b16 %v8952
      %v9472 = vunpack.c.l.b16 %v8953
      %v9473 = vunpack.c.l.b16 %v8954
      %v9474 = vunpack.c.l.b16 %v8955
      %v9475 = vunpack.c.l.b16 %v8956
      %v9476 = vunpack.c.l.b16 %v8957
      %v9477 = vunpack.c.l.b16 %v8958
      %v9478 = vunpack.c.l.b16 %v8959
      %v9479 = vunpack.c.l.b16 %v8960
      %v9480 = vunpack.c.l.b16 %v8961
      %v9481 = vunpack.c.l.b16 %v8962
      %v9482 = vunpack.c.l.b16 %v8963
      %v9483 = vunpack.c.l.b16 %v8964
      %v9484 = vunpack.c.l.b16 %v8965
      %v9485 = vunpack.c.l.b16 %v8966
      %v9486 = vunpack.c.l.b16 %v8967
      %v9487 = vunpack.c.l.b16 %v8968
      %v9488 = vunpack.c.l.b16 %v8969
      %v9489 = vunpack.c.l.b16 %v8970
      %v9490 = vunpack.c.l.b16 %v8971
      %v9491 = vunpack.c.l.b16 %v8972
      %v9492 = vunpack.c.l.b16 %v8973
      %v9493 = vunpack.c.l.b16 %v8974
      %v9494 = vunpack.c.l.b16 %v8975
      %v9495 = vunpack.c.l.b16 %v8976
      %v9496 = vunpack.c.l.b16 %v8977
      %v9497 = vunpack.c.l.b16 %v8978
      %v9498 = vunpack.c.l.b16 %v8979
      %v9499 = vunpack.c.l.b16 %v8980
      %v9500 = vunpack.c.l.b16 %v8981
      %v9501 = vunpack.c.l.b16 %v8982
      %v9502 = vunpack.c.l.b16 %v8983
      %v9503 = vunpack.c.l.b16 %v8984
      %v9504 = vunpack.c.l.b16 %v8985
      %v9505 = vunpack.c.l.b16 %v8986
      %v9506 = vunpack.c.l.b16 %v8987
      %v9507 = vpack.c.b16 %v9252, %v9251
      %v9508 = vpack.c.b16 %v9254, %v9253
      %v9509 = vpack.c.b16 %v9256, %v9255
      %v9510 = vpack.c.b16 %v9258, %v9257
      %v9511 = vpack.c.b16 %v9260, %v9259
      %v9512 = vpack.c.b16 %v9262, %v9261
      %v9513 = vpack.c.b16 %v9264, %v9263
      %v9514 = vpack.c.b16 %v9266, %v9265
      %v9515 = vpack.c.b16 %v9268, %v9267
      %v9516 = vpack.c.b16 %v9270, %v9269
      %v9517 = vpack.c.b16 %v9272, %v9271
      %v9518 = vpack.c.b16 %v9274, %v9273
      %v9519 = vpack.c.b16 %v9276, %v9275
      %v9520 = vpack.c.b16 %v9278, %v9277
      %v9521 = vpack.c.b16 %v9280, %v9279
      %v9522 = vpack.c.b16 %v9282, %v9281
      %v9523 = vpack.c.b16 %v9284, %v9283
      %v9524 = vpack.c.b16 %v9286, %v9285
      %v9525 = vpack.c.b16 %v9288, %v9287
      %v9526 = vpack.c.b16 %v9290, %v9289
      %v9527 = vpack.c.b16 %v9292, %v9291
      %v9528 = vpack.c.b16 %v9294, %v9293
      %v9529 = vpack.c.b16 %v9296, %v9295
      %v9530 = vpack.c.b16 %v9298, %v9297
      %v9531 = vpack.c.b16 %v9300, %v9299
      %v9532 = vpack.c.b16 %v9302, %v9301
      %v9533 = vpack.c.b16 %v9304, %v9303
      %v9534 = vpack.c.b16 %v9306, %v9305
      %v9535 = vpack.c.b16 %v9308, %v9307
      %v9536 = vpack.c.b16 %v9310, %v9309
      %v9537 = vpack.c.b16 %v9312, %v9311
      %v9538 = vpack.c.b16 %v9314, %v9313
      %v9539 = vpack.c.b16 %v9316, %v9315
      %v9540 = vpack.c.b16 %v9318, %v9317
      %v9541 = vpack.c.b16 %v9320, %v9319
      %v9542 = vpack.c.b16 %v9322, %v9321
      %v9543 = vpack.c.b16 %v9324, %v9323
      %v9544 = vpack.c.b16 %v9326, %v9325
      %v9545 = vpack.c.b16 %v9328, %v9327
      %v9546 = vpack.c.b16 %v9330, %v9329
      %v9547 = vpack.c.b16 %v9332, %v9331
      %v9548 = vpack.c.b16 %v9334, %v9333
      %v9549 = vpack.c.b16 %v9336, %v9335
      %v9550 = vpack.c.b16 %v9338, %v9337
      %v9551 = vpack.c.b16 %v9340, %v9339
      %v9552 = vpack.c.b16 %v9342, %v9341
      %v9553 = vpack.c.b16 %v9344, %v9343
      %v9554 = vpack.c.b16 %v9346, %v9345
      %v9555 = vpack.c.b16 %v9348, %v9347
      %v9556 = vpack.c.b16 %v9350, %v9349
      %v9557 = vpack.c.b16 %v9352, %v9351
      %v9558 = vpack.c.b16 %v9354, %v9353
      %v9559 = vpack.c.b16 %v9356, %v9355
      %v9560 = vpack.c.b16 %v9358, %v9357
      %v9561 = vpack.c.b16 %v9360, %v9359
      %v9562 = vpack.c.b16 %v9362, %v9361
      %v9563 = vpack.c.b16 %v9364, %v9363
      %v9564 = vpack.c.b16 %v9366, %v9365
      %v9565 = vpack.c.b16 %v9368, %v9367
      %v9566 = vpack.c.b16 %v9370, %v9369
      %v9567 = vpack.c.b16 %v9372, %v9371
      %v9568 = vpack.c.b16 %v9374, %v9373
      %v9569 = vpack.c.b16 %v9376, %v9375
      %v9570 = vpack.c.b16 %v9378, %v9377
      %v9571 = vpack.c.b16 %v9380, %v9379
      %v9572 = vpack.c.b16 %v9382, %v9381
      %v9573 = vpack.c.b16 %v9384, %v9383
      %v9574 = vpack.c.b16 %v9386, %v9385
      %v9575 = vpack.c.b16 %v9388, %v9387
      %v9576 = vpack.c.b16 %v9390, %v9389
      %v9577 = vpack.c.b16 %v9392, %v9391
      %v9578 = vpack.c.b16 %v9394, %v9393
      %v9579 = vpack.c.b16 %v9396, %v9395
      %v9580 = vpack.c.b16 %v9398, %v9397
      %v9581 = vpack.c.b16 %v9400, %v9399
      %v9582 = vpack.c.b16 %v9402, %v9401
      %v9583 = vpack.c.b16 %v9404, %v9403
      %v9584 = vpack.c.b16 %v9406, %v9405
      %v9585 = vpack.c.b16 %v9408, %v9407
      %v9586 = vpack.c.b16 %v9410, %v9409
      %v9587 = vpack.c.b16 %v9412, %v9411
      %v9588 = vpack.c.b16 %v9414, %v9413
      %v9589 = vpack.c.b16 %v9416, %v9415
      %v9590 = vpack.c.b16 %v9418, %v9417
      %v9591 = vpack.c.b16 %v9420, %v9419
      %v9592 = vpack.c.b16 %v9422, %v9421
      %v9593 = vpack.c.b16 %v9424, %v9423
      %v9594 = vpack.c.b16 %v9426, %v9425
      %v9595 = vpack.c.b16 %v9428, %v9427
      %v9596 = vpack.c.b16 %v9430, %v9429
      %v9597 = vpack.c.b16 %v9432, %v9431
      %v9598 = vpack.c.b16 %v9434, %v9433
      %v9599 = vpack.c.b16 %v9436, %v9435
      %v9600 = vpack.c.b16 %v9438, %v9437
      %v9601 = vpack.c.b16 %v9440, %v9439
      %v9602 = vpack.c.b16 %v9442, %v9441
      %v9603 = vpack.c.b16 %v9444, %v9443
      %v9604 = vpack.c.b16 %v9446, %v9445
      %v9605 = vpack.c.b16 %v9448, %v9447
      %v9606 = vpack.c.b16 %v9450, %v9449
      %v9607 = vpack.c.b16 %v9452, %v9451
      %v9608 = vpack.c.b16 %v9454, %v9453
      %v9609 = vpack.c.b16 %v9456, %v9455
      %v9610 = vpack.c.b16 %v9458, %v9457
      %v9611 = vpack.c.b16 %v9460, %v9459
      %v9612 = vpack.c.b16 %v9462, %v9461
      %v9613 = vpack.c.b16 %v9464, %v9463
      %v9614 = vpack.c.b16 %v9466, %v9465
      %v9615 = vpack.c.b16 %v9468, %v9467
      %v9616 = vpack.c.b16 %v9470, %v9469
      %v9617 = vpack.c.b16 %v9472, %v9471
      %v9618 = vpack.c.b16 %v9474, %v9473
      %v9619 = vpack.c.b16 %v9476, %v9475
      %v9620 = vpack.c.b16 %v9478, %v9477
      %v9621 = vpack.c.b16 %v9480, %v9479
      %v9622 = vpack.c.b16 %v9482, %v9481
      %v9623 = vpack.c.b16 %v9484, %v9483
      %v9624 = vpack.c.b16 %v9486, %v9485
      %v9625 = vpack.c.b16 %v9488, %v9487
      %v9626 = vpack.c.b16 %v9490, %v9489
      %v9627 = vpack.c.b16 %v9492, %v9491
      %v9628 = vpack.c.b16 %v9494, %v9493
      %v9629 = vpack.c.b16 %v9496, %v9495
      %v9630 = vpack.c.b16 %v9498, %v9497
      %v9631 = vpack.c.b16 %v9500, %v9499
      %v9632 = vpack.c.b16 %v9502, %v9501
      %v9633 = vpack.c.b16 %v9504, %v9503
      %v9634 = vpack.c.b16 %v9506, %v9505
      %9763 = vmatprep.subr.bf16.mxu0 0
      %9764 = vmatpush1.bf16.msra.mxu0 %v9514
      %9765 = vmatprep.subr.bf16.mxu0 0
      %9766 = vmatpush1.bf16.msra.mxu0 %v9513
      %9767 = vmatprep.subr.bf16.mxu0 0
      %9768 = vmatpush1.bf16.msra.mxu0 %v9512
      %9769 = vmatprep.subr.bf16.mxu0 0
      %9770 = vmatpush1.bf16.msra.mxu0 %v9511
      %9771 = vmatprep.subr.bf16.mxu0 0
      %9772 = vmatpush1.bf16.msra.mxu0 %v9510
      %9773 = vmatprep.subr.bf16.mxu0 0
      %9774 = vmatpush1.bf16.msra.mxu0 %v9509
      %9775 = vmatprep.subr.bf16.mxu0 0
      %9776 = vmatpush1.bf16.msra.mxu0 %v9508
      %9777 = vmatprep.subr.bf16.mxu0 0
      %9778 = vmatpush1.bf16.msra.mxu0 %v9507
      %9779 = vmatprep.subr.bf16.mxu0 0
      %9780 = vmatpush2.bf16.msra.mxu0 %v9522
      %9781 = vmatprep.subr.bf16.mxu0 0
      %9782 = vmatpush2.bf16.msra.mxu0 %v9521
      %9783 = vmatprep.subr.bf16.mxu0 0
      %9784 = vmatpush2.bf16.msra.mxu0 %v9520
      %9785 = vmatprep.subr.bf16.mxu0 0
      %9786 = vmatpush2.bf16.msra.mxu0 %v9519
      %9787 = vmatprep.subr.bf16.mxu0 0
      %9788 = vmatpush2.bf16.msra.mxu0 %v9518
      %9789 = vmatprep.subr.bf16.mxu0 0
      %9790 = vmatpush2.bf16.msra.mxu0 %v9517
      %9791 = vmatprep.subr.bf16.mxu0 0
      %9792 = vmatpush2.bf16.msra.mxu0 %v9516
      %9793 = vmatprep.subr.bf16.mxu0 0
      %9794 = vmatpush2.bf16.msra.mxu0 %v9515
      %9795 = vmatprep.mubr.bf16.mxu0 %v8717
      %9796 = vmatmul.mubr.bf16.gmra.mxu0 %v8716
      %v9797 = vpop.f32.mrf.mxu0
      %v9798 = vadd.f32 %v8993, %v9797
      %v9799 = vpop.f32.mrf.mxu0
      %v9800 = vpop.f32.mrf.mxu0
      %v9801 = vpop.f32.mrf.mxu0
      %9802 = vdwg.mxu0
      %9803 = vmatprep.subr.bf16.mxu0 0
      %9804 = vmatpush1.bf16.msra.mxu0 %v9530
      %9805 = vmatprep.subr.bf16.mxu0 0
      %9806 = vmatpush1.bf16.msra.mxu0 %v9529
      %9807 = vmatprep.subr.bf16.mxu0 0
      %9808 = vmatpush1.bf16.msra.mxu0 %v9528
      %9809 = vmatprep.subr.bf16.mxu0 0
      %9810 = vmatpush1.bf16.msra.mxu0 %v9527
      %9811 = vmatprep.subr.bf16.mxu0 0
      %9812 = vmatpush1.bf16.msra.mxu0 %v9526
      %9813 = vmatprep.subr.bf16.mxu0 0
      %9814 = vmatpush1.bf16.msra.mxu0 %v9525
      %9815 = vmatprep.subr.bf16.mxu0 0
      %9816 = vmatpush1.bf16.msra.mxu0 %v9524
      %9817 = vmatprep.subr.bf16.mxu0 0
      %9818 = vmatpush1.bf16.msra.mxu0 %v9523
      %9819 = vmatprep.subr.bf16.mxu0 0
      %9820 = vmatpush2.bf16.msra.mxu0 %v9538
      %9821 = vmatprep.subr.bf16.mxu0 0
      %9822 = vmatpush2.bf16.msra.mxu0 %v9537
      %9823 = vmatprep.subr.bf16.mxu0 0
      %9824 = vmatpush2.bf16.msra.mxu0 %v9536
      %9825 = vmatprep.subr.bf16.mxu0 0
      %9826 = vmatpush2.bf16.msra.mxu0 %v9535
      %9827 = vmatprep.subr.bf16.mxu0 0
      %9828 = vmatpush2.bf16.msra.mxu0 %v9534
      %9829 = vmatprep.subr.bf16.mxu0 0
      %9830 = vmatpush2.bf16.msra.mxu0 %v9533
      %9831 = vmatprep.subr.bf16.mxu0 0
      %9832 = vmatpush2.bf16.msra.mxu0 %v9532
      %9833 = vmatprep.subr.bf16.mxu0 0
      %9834 = vmatpush2.bf16.msra.mxu0 %v9531
      %9835 = vmatprep.mubr.bf16.mxu0 %v8719
      %9836 = vmatmul.mubr.bf16.gmra.mxu0 %v8718
      %v9837 = vpop.f32.mrf.mxu0
      %v9838 = vadd.f32 %v9798, %v9837
      %v9839 = vpop.f32.mrf.mxu0
      %v9840 = vpop.f32.mrf.mxu0
      %v9841 = vpop.f32.mrf.mxu0
      %9842 = vdwg.mxu0
      %9843 = vmatprep.subr.bf16.mxu0 0
      %9844 = vmatpush1.bf16.msra.mxu0 %v9546
      %9845 = vmatprep.subr.bf16.mxu0 0
      %9846 = vmatpush1.bf16.msra.mxu0 %v9545
      %9847 = vmatprep.subr.bf16.mxu0 0
      %9848 = vmatpush1.bf16.msra.mxu0 %v9544
      %9849 = vmatprep.subr.bf16.mxu0 0
      %9850 = vmatpush1.bf16.msra.mxu0 %v9543
      %9851 = vmatprep.subr.bf16.mxu0 0
      %9852 = vmatpush1.bf16.msra.mxu0 %v9542
      %9853 = vmatprep.subr.bf16.mxu0 0
      %9854 = vmatpush1.bf16.msra.mxu0 %v9541
      %9855 = vmatprep.subr.bf16.mxu0 0
      %9856 = vmatpush1.bf16.msra.mxu0 %v9540
      %9857 = vmatprep.subr.bf16.mxu0 0
      %9858 = vmatpush1.bf16.msra.mxu0 %v9539
      %9859 = vmatprep.subr.bf16.mxu0 0
      %9860 = vmatpush2.bf16.msra.mxu0 %v9554
      %9861 = vmatprep.subr.bf16.mxu0 0
      %9862 = vmatpush2.bf16.msra.mxu0 %v9553
      %9863 = vmatprep.subr.bf16.mxu0 0
      %9864 = vmatpush2.bf16.msra.mxu0 %v9552
      %9865 = vmatprep.subr.bf16.mxu0 0
      %9866 = vmatpush2.bf16.msra.mxu0 %v9551
      %9867 = vmatprep.subr.bf16.mxu0 0
      %9868 = vmatpush2.bf16.msra.mxu0 %v9550
      %9869 = vmatprep.subr.bf16.mxu0 0
      %9870 = vmatpush2.bf16.msra.mxu0 %v9549
      %9871 = vmatprep.subr.bf16.mxu0 0
      %9872 = vmatpush2.bf16.msra.mxu0 %v9548
      %9873 = vmatprep.subr.bf16.mxu0 0
      %9874 = vmatpush2.bf16.msra.mxu0 %v9547
      %9875 = vmatprep.mubr.bf16.mxu0 %v8721
      %9876 = vmatmul.mubr.bf16.gmra.mxu0 %v8720
      %v9877 = vpop.f32.mrf.mxu0
      %v9878 = vadd.f32 %v9838, %v9877
      %v9879 = vpop.f32.mrf.mxu0
      %v9880 = vpop.f32.mrf.mxu0
      %v9881 = vpop.f32.mrf.mxu0
      %9882 = vdwg.mxu0
      %9883 = vmatprep.subr.bf16.mxu0 0
      %9884 = vmatpush1.bf16.msra.mxu0 %v9562
      %9885 = vmatprep.subr.bf16.mxu0 0
      %9886 = vmatpush1.bf16.msra.mxu0 %v9561
      %9887 = vmatprep.subr.bf16.mxu0 0
      %9888 = vmatpush1.bf16.msra.mxu0 %v9560
      %9889 = vmatprep.subr.bf16.mxu0 0
      %9890 = vmatpush1.bf16.msra.mxu0 %v9559
      %9891 = vmatprep.subr.bf16.mxu0 0
      %9892 = vmatpush1.bf16.msra.mxu0 %v9558
      %9893 = vmatprep.subr.bf16.mxu0 0
      %9894 = vmatpush1.bf16.msra.mxu0 %v9557
      %9895 = vmatprep.subr.bf16.mxu0 0
      %9896 = vmatpush1.bf16.msra.mxu0 %v9556
      %9897 = vmatprep.subr.bf16.mxu0 0
      %9898 = vmatpush1.bf16.msra.mxu0 %v9555
      %9899 = vmatprep.subr.bf16.mxu0 0
      %9900 = vmatpush2.bf16.msra.mxu0 %v9570
      %9901 = vmatprep.subr.bf16.mxu0 0
      %9902 = vmatpush2.bf16.msra.mxu0 %v9569
      %9903 = vmatprep.subr.bf16.mxu0 0
      %9904 = vmatpush2.bf16.msra.mxu0 %v9568
      %9905 = vmatprep.subr.bf16.mxu0 0
      %9906 = vmatpush2.bf16.msra.mxu0 %v9567
      %9907 = vmatprep.subr.bf16.mxu0 0
      %9908 = vmatpush2.bf16.msra.mxu0 %v9566
      %9909 = vmatprep.subr.bf16.mxu0 0
      %9910 = vmatpush2.bf16.msra.mxu0 %v9565
      %9911 = vmatprep.subr.bf16.mxu0 0
      %9912 = vmatpush2.bf16.msra.mxu0 %v9564
      %9913 = vmatprep.subr.bf16.mxu0 0
      %9914 = vmatpush2.bf16.msra.mxu0 %v9563
      %9915 = vmatprep.mubr.bf16.mxu0 %v8723
      %9916 = vmatmul.mubr.bf16.gmra.mxu0 %v8722
      %v9917 = vpop.f32.mrf.mxu0
      %v9918 = vadd.f32 %v9878, %v9917
      %v9919 = vpop.f32.mrf.mxu0
      %v9920 = vpop.f32.mrf.mxu0
      %v9921 = vpop.f32.mrf.mxu0
      %9922 = vdwg.mxu0
      %9923 = vmatprep.subr.bf16.mxu0 0
      %9924 = vmatpush1.bf16.msra.mxu0 %v9578
      %9925 = vmatprep.subr.bf16.mxu0 0
      %9926 = vmatpush1.bf16.msra.mxu0 %v9577
      %9927 = vmatprep.subr.bf16.mxu0 0
      %9928 = vmatpush1.bf16.msra.mxu0 %v9576
      %9929 = vmatprep.subr.bf16.mxu0 0
      %9930 = vmatpush1.bf16.msra.mxu0 %v9575
      %9931 = vmatprep.subr.bf16.mxu0 0
      %9932 = vmatpush1.bf16.msra.mxu0 %v9574
      %9933 = vmatprep.subr.bf16.mxu0 0
      %9934 = vmatpush1.bf16.msra.mxu0 %v9573
      %9935 = vmatprep.subr.bf16.mxu0 0
      %9936 = vmatpush1.bf16.msra.mxu0 %v9572
      %9937 = vmatprep.subr.bf16.mxu0 0
      %9938 = vmatpush1.bf16.msra.mxu0 %v9571
      %9939 = vmatprep.subr.bf16.mxu0 0
      %9940 = vmatpush2.bf16.msra.mxu0 %v9586
      %9941 = vmatprep.subr.bf16.mxu0 0
      %9942 = vmatpush2.bf16.msra.mxu0 %v9585
      %9943 = vmatprep.subr.bf16.mxu0 0
      %9944 = vmatpush2.bf16.msra.mxu0 %v9584
      %9945 = vmatprep.subr.bf16.mxu0 0
      %9946 = vmatpush2.bf16.msra.mxu0 %v9583
      %9947 = vmatprep.subr.bf16.mxu0 0
      %9948 = vmatpush2.bf16.msra.mxu0 %v9582
      %9949 = vmatprep.subr.bf16.mxu0 0
      %9950 = vmatpush2.bf16.msra.mxu0 %v9581
      %9951 = vmatprep.subr.bf16.mxu0 0
      %9952 = vmatpush2.bf16.msra.mxu0 %v9580
      %9953 = vmatprep.subr.bf16.mxu0 0
      %9954 = vmatpush2.bf16.msra.mxu0 %v9579
      %9955 = vmatprep.mubr.bf16.mxu0 %v8725
      %9956 = vmatmul.mubr.bf16.gmra.mxu0 %v8724
      %v9957 = vpop.f32.mrf.mxu0
      %v9958 = vadd.f32 %v9918, %v9957
      %v9959 = vpop.f32.mrf.mxu0
      %v9960 = vpop.f32.mrf.mxu0
      %v9961 = vpop.f32.mrf.mxu0
      %9962 = vdwg.mxu0
      %9963 = vmatprep.subr.bf16.mxu0 0
      %9964 = vmatpush1.bf16.msra.mxu0 %v9594
      %9965 = vmatprep.subr.bf16.mxu0 0
      %9966 = vmatpush1.bf16.msra.mxu0 %v9593
      %9967 = vmatprep.subr.bf16.mxu0 0
      %9968 = vmatpush1.bf16.msra.mxu0 %v9592
      %9969 = vmatprep.subr.bf16.mxu0 0
      %9970 = vmatpush1.bf16.msra.mxu0 %v9591
      %9971 = vmatprep.subr.bf16.mxu0 0
      %9972 = vmatpush1.bf16.msra.mxu0 %v9590
      %9973 = vmatprep.subr.bf16.mxu0 0
      %9974 = vmatpush1.bf16.msra.mxu0 %v9589
      %9975 = vmatprep.subr.bf16.mxu0 0
      %9976 = vmatpush1.bf16.msra.mxu0 %v9588
      %9977 = vmatprep.subr.bf16.mxu0 0
      %9978 = vmatpush1.bf16.msra.mxu0 %v9587
      %9979 = vmatprep.subr.bf16.mxu0 0
      %9980 = vmatpush2.bf16.msra.mxu0 %v9602
      %9981 = vmatprep.subr.bf16.mxu0 0
      %9982 = vmatpush2.bf16.msra.mxu0 %v9601
      %9983 = vmatprep.subr.bf16.mxu0 0
      %9984 = vmatpush2.bf16.msra.mxu0 %v9600
      %9985 = vmatprep.subr.bf16.mxu0 0
      %9986 = vmatpush2.bf16.msra.mxu0 %v9599
      %9987 = vmatprep.subr.bf16.mxu0 0
      %9988 = vmatpush2.bf16.msra.mxu0 %v9598
      %9989 = vmatprep.subr.bf16.mxu0 0
      %9990 = vmatpush2.bf16.msra.mxu0 %v9597
      %9991 = vmatprep.subr.bf16.mxu0 0
      %9992 = vmatpush2.bf16.msra.mxu0 %v9596
      %9993 = vmatprep.subr.bf16.mxu0 0
      %9994 = vmatpush2.bf16.msra.mxu0 %v9595
      %9995 = vmatprep.mubr.bf16.mxu0 %v8727
      %9996 = vmatmul.mubr.bf16.gmra.mxu0 %v8726
      %v9997 = vpop.f32.mrf.mxu0
      %v9998 = vadd.f32 %v9958, %v9997
      %v9999 = vpop.f32.mrf.mxu0
      %v10000 = vpop.f32.mrf.mxu0
      %v10001 = vpop.f32.mrf.mxu0
      %10002 = vdwg.mxu0
      %10003 = vmatprep.subr.bf16.mxu0 0
      %10004 = vmatpush1.bf16.msra.mxu0 %v9610
      %10005 = vmatprep.subr.bf16.mxu0 0
      %10006 = vmatpush1.bf16.msra.mxu0 %v9609
      %10007 = vmatprep.subr.bf16.mxu0 0
      %10008 = vmatpush1.bf16.msra.mxu0 %v9608
      %10009 = vmatprep.subr.bf16.mxu0 0
      %10010 = vmatpush1.bf16.msra.mxu0 %v9607
      %10011 = vmatprep.subr.bf16.mxu0 0
      %10012 = vmatpush1.bf16.msra.mxu0 %v9606
      %10013 = vmatprep.subr.bf16.mxu0 0
      %10014 = vmatpush1.bf16.msra.mxu0 %v9605
      %10015 = vmatprep.subr.bf16.mxu0 0
      %10016 = vmatpush1.bf16.msra.mxu0 %v9604
      %10017 = vmatprep.subr.bf16.mxu0 0
      %10018 = vmatpush1.bf16.msra.mxu0 %v9603
      %10019 = vmatprep.subr.bf16.mxu0 0
      %10020 = vmatpush2.bf16.msra.mxu0 %v9618
      %10021 = vmatprep.subr.bf16.mxu0 0
      %10022 = vmatpush2.bf16.msra.mxu0 %v9617
      %10023 = vmatprep.subr.bf16.mxu0 0
      %10024 = vmatpush2.bf16.msra.mxu0 %v9616
      %10025 = vmatprep.subr.bf16.mxu0 0
      %10026 = vmatpush2.bf16.msra.mxu0 %v9615
      %10027 = vmatprep.subr.bf16.mxu0 0
      %10028 = vmatpush2.bf16.msra.mxu0 %v9614
      %10029 = vmatprep.subr.bf16.mxu0 0
      %10030 = vmatpush2.bf16.msra.mxu0 %v9613
      %10031 = vmatprep.subr.bf16.mxu0 0
      %10032 = vmatpush2.bf16.msra.mxu0 %v9612
      %10033 = vmatprep.subr.bf16.mxu0 0
      %10034 = vmatpush2.bf16.msra.mxu0 %v9611
      %10035 = vmatprep.mubr.bf16.mxu0 %v8729
      %10036 = vmatmul.mubr.bf16.gmra.mxu0 %v8728
      %v10037 = vpop.f32.mrf.mxu0
      %v10038 = vadd.f32 %v9998, %v10037
      %v10039 = vpop.f32.mrf.mxu0
      %v10040 = vpop.f32.mrf.mxu0
      %v10041 = vpop.f32.mrf.mxu0
      %10042 = vdwg.mxu0
      %10043 = vmatprep.subr.bf16.mxu0 0
      %10044 = vmatpush1.bf16.msra.mxu0 %v9626
      %10045 = vmatprep.subr.bf16.mxu0 0
      %10046 = vmatpush1.bf16.msra.mxu0 %v9625
      %10047 = vmatprep.subr.bf16.mxu0 0
      %10048 = vmatpush1.bf16.msra.mxu0 %v9624
      %10049 = vmatprep.subr.bf16.mxu0 0
      %10050 = vmatpush1.bf16.msra.mxu0 %v9623
      %10051 = vmatprep.subr.bf16.mxu0 0
      %10052 = vmatpush1.bf16.msra.mxu0 %v9622
      %10053 = vmatprep.subr.bf16.mxu0 0
      %10054 = vmatpush1.bf16.msra.mxu0 %v9621
      %10055 = vmatprep.subr.bf16.mxu0 0
      %10056 = vmatpush1.bf16.msra.mxu0 %v9620
      %10057 = vmatprep.subr.bf16.mxu0 0
      %10058 = vmatpush1.bf16.msra.mxu0 %v9619
      %10059 = vmatprep.subr.bf16.mxu0 0
      %10060 = vmatpush2.bf16.msra.mxu0 %v9634
      %10061 = vmatprep.subr.bf16.mxu0 0
      %10062 = vmatpush2.bf16.msra.mxu0 %v9633
      %10063 = vmatprep.subr.bf16.mxu0 0
      %10064 = vmatpush2.bf16.msra.mxu0 %v9632
      %10065 = vmatprep.subr.bf16.mxu0 0
      %10066 = vmatpush2.bf16.msra.mxu0 %v9631
      %10067 = vmatprep.subr.bf16.mxu0 0
      %10068 = vmatpush2.bf16.msra.mxu0 %v9630
      %10069 = vmatprep.subr.bf16.mxu0 0
      %10070 = vmatpush2.bf16.msra.mxu0 %v9629
      %10071 = vmatprep.subr.bf16.mxu0 0
      %10072 = vmatpush2.bf16.msra.mxu0 %v9628
      %10073 = vmatprep.subr.bf16.mxu0 0
      %10074 = vmatpush2.bf16.msra.mxu0 %v9627
      %10075 = vmatprep.mubr.bf16.mxu0 %v8731
      %10076 = vmatmul.mubr.bf16.gmra.mxu0 %v8730
      %v10077 = vpop.f32.mrf.mxu0
      %v10078 = vadd.f32 %v10038, %v10077
      %v10079 = vpop.f32.mrf.mxu0
      %v10080 = vpop.f32.mrf.mxu0
      %v10081 = vpop.f32.mrf.mxu0
      %10082 = vdwg.mxu0
      %10083 = vst [vmem:[#allocation15] sm:$0xff] %v10078
    $region65: #{tpu_custom_call.1} parent=1 // pred_fallthru
      _
    // Predicated region
    $region66: #{tpu_custom_call.1} parent=1 // pred_check
      _
    $region67: #{tpu_custom_call.1} parent=1 // pred_check_branch
      %10085 = sbr.rel (0) target = $region69
    $region68: #{tpu_custom_call.1} parent=1 // pred_region
      %s10087 = ssub.s32 128, 128
      %10088 = vsyncadd [#allocation5], %s10087
      %s10090 = sshll.u32 [#allocation15], 4
      %s10091 = int_to_ptr.vmem [resolvable:$true] %s10090
      %10093 = dma.vmem_to_hbm [thread:$0]  %s10091, 128, %s7, [#allocation5]
    $region69: #{tpu_custom_call.1} parent=1 // pred_fallthru
      _
    // Predicated region
    $region70: #{tpu_custom_call.1} parent=1 // pred_check
      _
    $region71: #{tpu_custom_call.1} parent=1 // pred_check_branch
      %10095 = sbr.rel (0) target = $region73
    $region72: #{tpu_custom_call.1} parent=1 // pred_region
      %10096 = dma.done [#allocation5], 128
    $region73: #{tpu_custom_call.1} parent=1 // pred_fallthru
      _
    %10097 = vsyncpa [#allocation4], 1
    %10098 = vsyncpa [#allocation7], 1
    %10099 = vsyncpa [#allocation10], 1
    %10100 = vsyncpa [#allocation13], 1
    %10101 = vsyncpa [#allocation5], 1

</llo_original>
